<compile_context>
chip_gen: v6e
topology: v6e:2x2x1
jax: 0.10.0
libtpu: 0.0.40
codegen_flags: <defaults>
</compile_context>

<pallas_src>
import functools

import jax
import jax.numpy as jnp
from jax.experimental import pallas as pl
from jax.experimental.pallas import tpu as pltpu


IMAGENET_MEAN = jnp.array([0.485, 0.456, 0.406], jnp.float32)
IMAGENET_STD = jnp.array([0.229, 0.224, 0.225], jnp.float32)

_VGG_LAYERS = ('conv1_1', 'relu1_1', 'conv1_2', 'relu1_2', 'pool1',
               'conv2_1', 'relu2_1', 'conv2_2', 'relu2_2', 'pool2')
_VGG_CONV_CFG = [('conv1_1', 3, 64), ('conv1_2', 64, 64),
                 ('conv2_1', 64, 128), ('conv2_2', 128, 128)]


def _derive_vmem_budgets():
    """Generation-aware VMEM budgets (v5e/v6e: 128 MiB physical, v7x: 64 MiB)."""
    cap = None
    try:
        info = pltpu.get_tpu_info()
        cap = getattr(info, 'vmem_capacity_bytes', None)
    except Exception:
        cap = None
    if not cap:
        cap = 64 << 20                       # conservative default (v7x-sized)
    if cap >= (100 << 20):                   # v5e / v6e: big VMEM, big tiles
        return 96 << 20, 8 << 20
    return 44 << 20, 3 << 20                 # v7x / unknown: stay well under 64 MiB


_VMEM_LIMIT_BYTES, _CONV_BYTES_BUDGET = _derive_vmem_budgets()
_LOSS_TILE_BYTES = 2 << 20


# ---------------------------------------------------------------------------
# tiling helpers
# ---------------------------------------------------------------------------

def _largest_divisor(n, limit, multiple_of=1):
    """Largest d | n with d <= limit and (d % multiple_of == 0 or d == n)."""
    best = None
    for d in range(1, n + 1):
        if n % d == 0 and d <= limit and (d % multiple_of == 0 or d == n):
            best = d
    return best if best is not None else n


def _pick_tile_rows(H, W, cin, cout, in_itemsize, out_itemsize, *, even,
                    bytes_budget):
    """Rows per conv tile: accounts for double-buffered input/output blocks plus
    the in-kernel f32 accumulator / ReLU temporary and one tap-window copy."""
    row_bytes = ((W + 2) * cin * in_itemsize * 2     # input block, double buffered
                 + W * cout * out_itemsize * 2       # feature/pool outputs
                 + W * cout * 4 * 2                  # f32 acc + relu temporary
                 + W * cin * in_itemsize)            # one tap-window copy
    limit = max(2 if even else 1, bytes_budget // row_bytes)
    return _largest_divisor(H, limit, multiple_of=2 if even else 1)


# ---------------------------------------------------------------------------
# 3x3 conv (+bias, +fused ReLU, +optional fused 2x2 maxpool)
# ---------------------------------------------------------------------------

def _conv3x3_kernel(x_ref, w_ref, b_ref, *out_refs, taps, relu_feat,
                    emit_feat, emit_relu, emit_pool):
    """One (batch, row-tile) step of a 3x3 'same' conv.

    taps=True : x_ref (1, TH+2, W+2, Cin) overlapping tile, w_ref (9, Cin, Cout)
    taps=False: x_ref (1, TH, W, K) pre-im2col'd tile,      w_ref (K, Cout)
    b_ref     : (1, Cout) f32 bias.
    Outputs (in order, if enabled): pre/post-ReLU feature, post-ReLU feature,
    2x2-maxpooled post-ReLU feature.
    """
    if taps:
        TH = x_ref.shape[1] - 2
        W = x_ref.shape[2] - 2
        Cin = x_ref.shape[3]
        Cout = w_ref.shape[2]
        x = x_ref[0]                                         # (TH+2, W+2, Cin)
        acc = jnp.zeros((TH * W, Cout), jnp.float32)
        for t in range(9):                                   # 9 tap matmuls, K = Cin
            dh, dw = divmod(t, 3)
            win = x[dh:dh + TH, dw:dw + W, :].reshape(TH * W, Cin)
            acc = acc + jnp.dot(win, w_ref[t], preferred_element_type=jnp.float32)
    else:
        TH = x_ref.shape[1]
        W = x_ref.shape[2]
        K = x_ref.shape[3]
        Cout = w_ref.shape[1]
        acc = jnp.dot(x_ref[0].reshape(TH * W, K), w_ref[...],
                      preferred_element_type=jnp.float32)

    acc = acc + b_ref[...]                                   # f32 bias
    need_relu_val = emit_relu or emit_pool or (emit_feat and relu_feat)
    r = jnp.maximum(acc, 0.0) if need_relu_val else None

    idx = 0
    if emit_feat:
        f = r if relu_feat else acc
        out_refs[idx][0] = f.reshape(TH, W, Cout).astype(out_refs[idx].dtype)
        idx += 1
    if emit_relu:
        out_refs[idx][0] = r.reshape(TH, W, Cout).astype(out_refs[idx].dtype)
        idx += 1
    if emit_pool:
        # fused 2x2 maxpool of the post-ReLU activation (row pairs, then col pairs)
        mrow = jnp.max(r.reshape(TH // 2, 2, W, Cout), axis=1)
        pool = jnp.max(mrow.reshape(TH // 2, W // 2, 2, Cout), axis=2)
        out_refs[idx][0] = pool.astype(out_refs[idx].dtype)


def conv3x3_pallas(x, w, b, *, relu_feat, emit_feat, emit_relu, emit_pool,
                   out_dtype):
    """x: (N,H,W,Cin) NHWC, w: (3,3,Cin,Cout), b: (Cout,) f32."""
    assert emit_feat or emit_relu or emit_pool
    N, H, W, Cin = x.shape
    Cout = w.shape[-1]
    in_isz = jnp.dtype(x.dtype).itemsize
    out_isz = jnp.dtype(out_dtype).itemsize
    glue_im2col = (9 * Cin <= 128)            # conv1_1: tiny Cin -> plain K=9*Cin matmul
    eff_cin = 9 * Cin if glue_im2col else Cin
    TH = _pick_tile_rows(H, W, eff_cin, Cout, in_isz, out_isz,
                         even=emit_pool, bytes_budget=_CONV_BYTES_BUDGET)
    Mt = H // TH

    xp = jnp.pad(x, ((0, 0), (1, 1), (1, 1), (0, 0)))         # zero pad ('same')
    if glue_im2col:
        cols = [xp[:, dh:dh + H, dw:dw + W, :] for dh in range(3) for dw in range(3)]
        xin = jnp.concatenate(cols, axis=-1)                   # (N, H, W, 9*Cin)
        w_in = w.reshape(9 * Cin, Cout).astype(x.dtype)
        in_spec = pl.BlockSpec((1, TH, W, 9 * Cin), lambda n, m: (n, m, 0, 0))
        w_spec = pl.BlockSpec((9 * Cin, Cout), lambda n, m: (0, 0))
    else:
        # pre-tiled overlapping row slabs: tile m covers padded rows [m*TH, m*TH+TH+2)
        xin = jnp.concatenate(
            [xp[:, None, m * TH:m * TH + TH + 2] for m in range(Mt)],
            axis=1).reshape(N * Mt, TH + 2, W + 2, Cin)
        w_in = w.reshape(9, Cin, Cout).astype(x.dtype)
        in_spec = pl.BlockSpec((1, TH + 2, W + 2, Cin),
                               lambda n, m: (n * Mt + m, 0, 0, 0))
        w_spec = pl.BlockSpec((9, Cin, Cout), lambda n, m: (0, 0, 0))
    b2 = b.reshape(1, Cout).astype(jnp.float32)

    out_shapes, out_specs, names = [], [], []
    if emit_feat:
        names.append('feat')
        out_shapes.append(jax.ShapeDtypeStruct((N, H, W, Cout), out_dtype))
        out_specs.append(pl.BlockSpec((1, TH, W, Cout), lambda n, m: (n, m, 0, 0)))
    if emit_relu:
        names.append('relu')
        out_shapes.append(jax.ShapeDtypeStruct((N, H, W, Cout), out_dtype))
        out_specs.append(pl.BlockSpec((1, TH, W, Cout), lambda n, m: (n, m, 0, 0)))
    if emit_pool:
        names.append('pool')
        out_shapes.append(jax.ShapeDtypeStruct((N, H // 2, W // 2, Cout), out_dtype))
        out_specs.append(pl.BlockSpec((1, TH // 2, W // 2, Cout),
                                      lambda n, m: (n, m, 0, 0)))
    multi = len(out_shapes) > 1

    outs = pl.pallas_call(
        functools.partial(_conv3x3_kernel, taps=not glue_im2col,
                          relu_feat=relu_feat, emit_feat=emit_feat,
                          emit_relu=emit_relu, emit_pool=emit_pool),
        out_shape=tuple(out_shapes) if multi else out_shapes[0],
        grid=(N, Mt),
        in_specs=[in_spec, w_spec, pl.BlockSpec((1, Cout), lambda n, m: (0, 0))],
        out_specs=tuple(out_specs) if multi else out_specs[0],
        compiler_params=pltpu.CompilerParams(
            dimension_semantics=("parallel", "parallel"),
            vmem_limit_bytes=_VMEM_LIMIT_BYTES),
    )(xin, w_in, b2)

    if not multi:
        outs = (outs,)
    return dict(zip(names, outs))


def _maxpool2x2_glue(x):
    """Fallback 2x2 maxpool in glue (only used for odd spatial sizes)."""
    N, H, W, C = x.shape
    H2, W2 = H // 2, W // 2
    x = x[:, :H2 * 2, :W2 * 2, :]
    return x.reshape(N, H2, 2, W2, 2, C).max(axis=(2, 4))


# ---------------------------------------------------------------------------
# fused per-layer loss kernel: perceptual diff + gram style, one feature pass
# ---------------------------------------------------------------------------

def _layer_loss_kernel(fx_ref, fg_ref, *rest, want_percep, want_style,
                       percep_abs, style_abs, gram_scale):
    n_out = int(want_percep) + int(want_style)
    outs, scratch = rest[:n_out], rest[n_out:]
    k = pl.program_id(1)
    k_last = pl.num_programs(1) - 1
    fx = fx_ref[0]                                            # (TK, C)
    fg = fg_ref[0]

    o_idx = 0
    s_idx = 0
    if want_percep:
        out_p = outs[o_idx]; o_idx += 1
        acc_p = scratch[s_idx]; s_idx += 1

        @pl.when(k == 0)
        def _():
            acc_p[...] = jnp.zeros_like(acc_p)

        d = fx.astype(jnp.float32) - fg.astype(jnp.float32)
        mag = jnp.abs(d) if percep_abs else d * d
        acc_p[...] += jnp.sum(mag, axis=0, keepdims=True)     # (1, C) sublane reduce

        @pl.when(k == k_last)
        def _():
            out_p[...] = jnp.broadcast_to(jnp.sum(acc_p[...]), out_p.shape)

    if want_style:
        out_s = outs[o_idx]; o_idx += 1
        acc_gx = scratch[s_idx]
        acc_gg = scratch[s_idx + 1]; s_idx += 2

        @pl.when(k == 0)
        def _():
            acc_gx[...] = jnp.zeros_like(acc_gx)
            acc_gg[...] = jnp.zeros_like(acc_gg)

        dn = (((0,), (0,)), ((), ()))                         # f^T f over the HW tile
        acc_gx[...] += jax.lax.dot_general(fx, fx, dn,
                                           preferred_element_type=jnp.float32)
        acc_gg[...] += jax.lax.dot_general(fg, fg, dn,
                                           preferred_element_type=jnp.float32)

        @pl.when(k == k_last)
        def _():
            gd = (acc_gx[...] - acc_gg[...]) * gram_scale
            mag = jnp.abs(gd) if style_abs else gd * gd
            out_s[...] = jnp.broadcast_to(jnp.sum(mag), out_s.shape)


def layer_losses_pallas(feat, n_x, *, want_percep, percep_mode,
                        want_style, style_mode):
    """`feat` holds the x-half then the gt-half along axis 0 (shape (2N, H, W, C)).

    Streams the feature once and returns {'percep': criterion(fx, fgt),
    'style': style_criterion(gram(fx), gram(fgt))} (only the requested entries).
    Gram matrices stay in VMEM accumulators and never touch HBM.
    """
    assert want_percep or want_style
    two_n, H, W, C = feat.shape
    assert two_n == 2 * n_x
    HW = H * W
    f = feat.reshape(two_n, HW, C)                            # free reshape (NHWC)
    itemsize = jnp.dtype(f.dtype).itemsize
    mult = 16 if itemsize == 2 else 8                         # bf16 sublane packing
    limit = max(mult, _LOSS_TILE_BYTES // (max(C, 128) * itemsize))
    TK = _largest_divisor(HW, limit, multiple_of=mult)
    gram_scale = 1.0 / float(C * HW)

    out_shapes, out_specs, scratch = [], [], []
    if want_percep:
        out_shapes.append(jax.ShapeDtypeStruct((n_x, 8, 128), jnp.float32))
        out_specs.append(pl.BlockSpec((1, 8, 128), lambda i, k: (i, 0, 0)))
        scratch.append(pltpu.VMEM((1, C), jnp.float32))
    if want_style:
        out_shapes.append(jax.ShapeDtypeStruct((n_x, 8, 128), jnp.float32))
        out_specs.append(pl.BlockSpec((1, 8, 128), lambda i, k: (i, 0, 0)))
        scratch.append(pltpu.VMEM((C, C), jnp.float32))
        scratch.append(pltpu.VMEM((C, C), jnp.float32))
    multi = len(out_shapes) > 1

    outs = pl.pallas_call(
        functools.partial(_layer_loss_kernel, want_percep=want_percep,
                          want_style=want_style,
                          percep_abs=(percep_mode == 'l1'),
                          style_abs=(style_mode == 'l1'),
                          gram_scale=gram_scale),
        out_shape=tuple(out_shapes) if multi else out_shapes[0],
        grid=(n_x, HW // TK),
        in_specs=[pl.BlockSpec((1, TK, C), lambda i, k: (i, k, 0)),
                  pl.BlockSpec((1, TK, C), lambda i, k: (i + n_x, k, 0))],
        out_specs=tuple(out_specs) if multi else out_specs[0],
        scratch_shapes=scratch,
        compiler_params=pltpu.CompilerParams(
            dimension_semantics=("parallel", "arbitrary"),
            vmem_limit_bytes=_VMEM_LIMIT_BYTES),
    )(f, f)

    if not multi:
        outs = (outs,)
    res = {}
    idx = 0
    if want_percep:
        tot = jnp.sum(outs[idx][:, 0, 0]); idx += 1
        res['percep'] = (jnp.sqrt(tot) if percep_mode == 'fro'
                         else tot / float(n_x * HW * C))
    if want_style:
        tot = jnp.sum(outs[idx][:, 0, 0]); idx += 1
        res['style'] = (jnp.sqrt(tot) if style_mode == 'fro'
                        else tot / float(n_x * C * C))
    return res


# ---------------------------------------------------------------------------
# Synthetic (deterministic) VGG trunk
# ---------------------------------------------------------------------------

def init_vgg_params(key):
    params = {}
    for name, cin, cout in _VGG_CONV_CFG:
        key, kw = jax.random.split(key)
        std = (2.0 / (9 * cin)) ** 0.5
        params[name] = (std * jax.random.normal(kw, (3, 3, cin, cout), jnp.float32),
                        jnp.zeros((cout,), jnp.float32))
    return params


def vgg_features(x_nchw, params, layer_names, use_input_norm=True,
                 range_norm=False, compute_dtype=jnp.bfloat16):
    for nm in layer_names:
        if nm not in _VGG_LAYERS:
            raise ValueError(f'unknown VGG layer {nm!r} '
                             '(only the conv1_x/conv2_x trunk is implemented)')
    want = set(layer_names)
    deepest = max(_VGG_LAYERS.index(nm) for nm in layer_names)

    # layout: NCHW (torch) -> NHWC so channels sit on the 128-lane axis.
    x = jnp.transpose(x_nchw, (0, 2, 3, 1)).astype(jnp.float32)
    if range_norm:
        x = (x + 1.0) * 0.5
    if use_input_norm:
        # Stays in glue (XLA fuses it into the conv1_1 im2col producers) so the
        # zero 'same' padding happens in normalized space, exactly like torch.
        x = (x - IMAGENET_MEAN) / IMAGENET_STD
    x = x.astype(compute_dtype)

    feats = {}
    i = 0
    while i <= deepest:
        name = _VGG_LAYERS[i]
        w, b = params[name]
        relu_name = _VGG_LAYERS[i + 1]
        pool_idx = i + 2
        pool_name = (_VGG_LAYERS[pool_idx]
                     if pool_idx < len(_VGG_LAYERS)
                     and _VGG_LAYERS[pool_idx].startswith('pool') else None)

        need_conv = name in want
        need_relu = relu_name in want
        do_pool = pool_name is not None and deepest >= pool_idx
        continue_unpooled = pool_name is None and deepest > i + 1
        H, W = x.shape[1], x.shape[2]
        can_fuse_pool = do_pool and H % 2 == 0 and W % 2 == 0
        need_post_relu = (need_relu or continue_unpooled
                          or (do_pool and not can_fuse_pool))

        emit_feat = need_conv or need_post_relu
        relu_feat = not need_conv            # basicsr extracts conv output pre-ReLU
        emit_relu = need_conv and need_post_relu
        emit_pool = can_fuse_pool
        if not (emit_feat or emit_relu or emit_pool):
            emit_feat = True                 # safety; unreachable for valid configs

        outs = conv3x3_pallas(x, w.astype(compute_dtype), b,
                              relu_feat=relu_feat, emit_feat=emit_feat,
                              emit_relu=emit_relu, emit_pool=emit_pool,
                              out_dtype=compute_dtype)
        if need_conv:
            feats[name] = outs['feat']
        post_relu = None
        if need_post_relu:
            post_relu = outs['relu'] if emit_relu else outs['feat']
        if need_relu:
            feats[relu_name] = post_relu

        if do_pool:
            pooled = outs['pool'] if can_fuse_pool else _maxpool2x2_glue(post_relu)
            if pool_name in want:
                feats[pool_name] = pooled
            x = pooled
            i = pool_idx + 1
        else:
            if i + 2 <= deepest:
                x = post_relu
            i += 2
    return feats


# ---------------------------------------------------------------------------
# PerceptualLoss2
# ---------------------------------------------------------------------------

class PerceptualLoss2:
    """JAX/Pallas port of pl_modules.losses.PerceptualLoss2 (forward semantics)."""

    def __init__(self, layer_weights, vgg_type='vgg19', use_input_norm=True,
                 range_norm=False, perceptual_weight=1.0, style_weight=0.0,
                 criterion='l1', style_criterion=None, norm_gram=False, eig=False,
                 compute_dtype=jnp.bfloat16, param_key=None):
        if criterion not in ('l1', 'l2', 'fro'):
            raise NotImplementedError(f'{criterion} criterion has not been supported.')
        self.criterion_type = criterion
        self.style_criterion_type = criterion if style_criterion is None else style_criterion
        if self.style_criterion_type not in ('l1', 'l2', 'fro'):
            raise NotImplementedError(f'{style_criterion} criterion has not been supported.')
        if norm_gram or eig:
            # TODO(synk): F.normalize'd gram and torch.linalg.eigvalsh branches not ported.
            raise NotImplementedError('norm_gram / eig gram variants are not implemented.')
        self.layer_weights = dict(layer_weights)
        self.perceptual_weight = perceptual_weight
        self.style_weight = style_weight
        self.use_input_norm = use_input_norm
        self.range_norm = range_norm
        self.norm_gram = norm_gram
        self.eig = eig
        # bf16 features/weights = MXU fast path on v6e/v7x and half the HBM/VMEM
        # traffic; all accumulation and loss math stay f32.  Pass jnp.float32 for
        # bit-closer-to-torch numerics.
        self.compute_dtype = compute_dtype
        if param_key is None:
            param_key = jax.random.PRNGKey(42)
        self.params = init_vgg_params(param_key)   # deterministic synthetic VGG weights

    def __call__(self, x, gt):
        want_p = self.perceptual_weight > 0
        want_s = self.style_weight > 0
        if not (want_p or want_s):
            return None, None
        names = list(self.layer_weights.keys())
        n = x.shape[0]
        # Single fused VGG pass over [x ; stop_gradient(gt)].
        both = jnp.concatenate([x, jax.lax.stop_gradient(gt)], axis=0)
        feats = vgg_features(both, self.params, names, self.use_input_norm,
                             self.range_norm, self.compute_dtype)

        percep_loss = jnp.zeros((), jnp.float32) if want_p else None
        style_loss = jnp.zeros((), jnp.float32) if want_s else None
        for k in names:
            res = layer_losses_pallas(feats[k], n, want_percep=want_p,
                                      percep_mode=self.criterion_type,
                                      want_style=want_s,
                                      style_mode=self.style_criterion_type)
            if want_p:
                percep_loss = percep_loss + res['percep'] * self.layer_weights[k]
            if want_s:
                style_loss = style_loss + res['style'] * self.layer_weights[k]
        if want_p:
            percep_loss = percep_loss * self.perceptual_weight
        if want_s:
            style_loss = style_loss * self.style_weight
        return percep_loss, style_loss


# ---------------------------------------------------------------------------
# pure-jnp reference (for the demo layer set) + demo
# ---------------------------------------------------------------------------

def _reference_losses(x, gt, mod):
    """Pure XLA reference mirroring the kernel's casting points (demo layers only)."""
    cdt = mod.compute_dtype

    def features(img):
        h = jnp.transpose(img, (0, 2, 3, 1)).astype(jnp.float32)
        if mod.range_norm:
            h = (h + 1.0) * 0.5
        if mod.use_input_norm:
            h = (h - IMAGENET_MEAN) / IMAGENET_STD
        h = h.astype(cdt)
        feats = {}
        for name, _, _ in _VGG_CONV_CFG:
            w, b = mod.params[name]
            out = jax.lax.conv_general_dilated(
                h, w.astype(cdt), (1, 1), 'SAME',
                dimension_numbers=('NHWC', 'HWIO', 'NHWC'),
                preferred_element_type=jnp.float32) + b
            out = out.astype(cdt)
            if name in mod.layer_weights:
                feats[name] = out
            h = jnp.maximum(out, 0.0)
            if name == 'conv1_2':                      # pool1
                N, H, W, C = h.shape
                h = h.reshape(N, H // 2, 2, W // 2, 2, C).max(axis=(2, 4))
        return feats

    def crit(a, b, mode):
        d = a.astype(jnp.float32) - b.astype(jnp.float32)
        if mode == 'l1':
            return jnp.mean(jnp.abs(d))
        if mode == 'l2':
            return jnp.mean(d * d)
        return jnp.sqrt(jnp.sum(d * d))

    def gram(f):
        N, H, W, C = f.shape
        fm = f.reshape(N, H * W, C)
        return jnp.einsum('npc,npd->ncd', fm, fm,
                          preferred_element_type=jnp.float32) / (C * H * W)

    fx, fg = features(x), features(gt)
    p = sum(crit(fx[k], fg[k], mod.criterion_type) * mod.layer_weights[k]
            for k in mod.layer_weights) * mod.perceptual_weight
    s = sum(crit(gram(fx[k]), gram(fg[k]), mod.style_criterion_type) * mod.layer_weights[k]
            for k in mod.layer_weights) * mod.style_weight
    return p, s


if __name__ == "__main__":
    key = jax.random.PRNGKey(0)
    kx, kg = jax.random.split(key)
    x = jax.random.uniform(kx, (2, 3, 16, 16), jnp.float32)   # NCHW, like torch
    gt = jax.random.uniform(kg, (2, 3, 16, 16), jnp.float32)

    loss_mod = PerceptualLoss2(layer_weights={'conv1_2': 1.0, 'conv2_2': 0.5},
                               perceptual_weight=1.0, style_weight=1.0,
                               criterion='l1')
    percep, style = jax.jit(loss_mod.__call__)(x, gt)
    jax.block_until_ready((percep, style))

    ref_p, ref_s = _reference_losses(x, gt, loss_mod)
    for tag, got, ref in (('perceptual', percep, ref_p), ('style', style, ref_s)):
        if not jnp.allclose(got, ref, rtol=0.1, atol=2e-3):
            raise RuntimeError(f'{tag} loss mismatch: pallas={float(got)} ref={float(ref)}')

    print("KERNEL_OK")
</pallas_src>

<mosaic_0001>
module attributes {stable_mosaic.version = 11 : i64} {
  func.func @_conv3x3_kernel(%arg0: i32, %arg1: i32, %arg2: memref<1x16x16x27xbf16, #tpu.memory_space<vmem>>, %arg3: memref<27x64xbf16, #tpu.memory_space<vmem>>, %arg4: memref<1x64xf32, #tpu.memory_space<vmem>>, %arg5: memref<1x16x16x64xbf16, #tpu.memory_space<vmem>>) attributes {dimension_semantics = [#tpu.dimension_semantics<parallel>, #tpu.dimension_semantics<parallel>], iteration_bounds = array<i64: 4, 1>, scalar_prefetch = 0 : i64, scratch_operands = 0 : i64, tpu.core_type = #tpu.core_type<tc>, window_params = [{transform_indices = @transform_0, window_bounds = array<i64: 1, 16, 16, 27>}, {pipeline_mode = #tpu.pipeline_mode<synchronous>, transform_indices = @transform_1, window_bounds = array<i64: 27, 64>}, {pipeline_mode = #tpu.pipeline_mode<synchronous>, transform_indices = @transform_2, window_bounds = array<i64: 1, 64>}, {transform_indices = @transform_3, window_bounds = array<i64: 1, 16, 16, 64>}]} {
    %c0 = arith.constant 0 : index
    %c0_0 = arith.constant 0 : index
    %c0_1 = arith.constant 0 : index
    %c0_2 = arith.constant 0 : index
    %0 = vector.load %arg2[%c0, %c0_0, %c0_1, %c0_2] : memref<1x16x16x27xbf16, #tpu.memory_space<vmem>>, vector<1x16x16x27xbf16>
    %1 = vector.shape_cast %0 : vector<1x16x16x27xbf16> to vector<16x16x27xbf16>
    %2 = vector.shape_cast %1 : vector<16x16x27xbf16> to vector<256x27xbf16>
    %c0_3 = arith.constant 0 : index
    %c0_4 = arith.constant 0 : index
    %3 = vector.load %arg3[%c0_3, %c0_4] : memref<27x64xbf16, #tpu.memory_space<vmem>>, vector<27x64xbf16>
    %cst = arith.constant dense<0.000000e+00> : vector<256x64xf32>
    %4 = tpu.matmul %2, %3, %cst {dimension_numbers = #tpu.dot_dimension_numbers<[1], [0], [0], [1], [0, 0, 1, 1], [], []>} : vector<256x27xbf16>, vector<27x64xbf16>, vector<256x64xf32> -> vector<256x64xf32>
    %c0_5 = arith.constant 0 : index
    %c0_6 = arith.constant 0 : index
    %5 = vector.load %arg4[%c0_5, %c0_6] : memref<1x64xf32, #tpu.memory_space<vmem>>, vector<1x64xf32>
    %6 = vector.broadcast %5 : vector<1x64xf32> to vector<256x64xf32>
    %7 = arith.addf %4, %6 : vector<256x64xf32>
    %cst_7 = arith.constant 0.000000e+00 : f32
    %8 = vector.broadcast %cst_7 : f32 to vector<256x64xf32>
    %9 = arith.maximumf %7, %8 : vector<256x64xf32>
    %10 = vector.shape_cast %9 : vector<256x64xf32> to vector<16x16x64xf32>
    %11 = arith.truncf %10 : vector<16x16x64xf32> to vector<16x16x64xbf16>
    %c0_8 = arith.constant 0 : index
    %c0_9 = arith.constant 0 : index
    %c0_10 = arith.constant 0 : index
    %c0_11 = arith.constant 0 : index
    %12 = vector.load %arg5[%c0_8, %c0_9, %c0_10, %c0_11] : memref<1x16x16x64xbf16, #tpu.memory_space<vmem>>, vector<1x16x16x64xbf16>
    %13 = vector.shape_cast %12 : vector<1x16x16x64xbf16> to vector<16x16x64xbf16>
    %14 = vector.shape_cast %11 : vector<16x16x64xbf16> to vector<1x16x16x64xbf16>
    tpu.vector_store %arg5[%c0_8, %c0_9, %c0_10, %c0_11], %14 {strides = array<i32>} : memref<1x16x16x64xbf16, #tpu.memory_space<vmem>>, vector<1x16x16x64xbf16>,
    return
  }
  func.func @transform_0(%arg0: i32, %arg1: i32) -> (i32, i32, i32, i32) {
    %c0_i32 = arith.constant 0 : i32
    %c0_i32_0 = arith.constant 0 : i32
    %c0_i32_1 = arith.constant 0 : i32
    return %arg0, %arg1, %c0_i32, %c0_i32_0 : i32, i32, i32, i32
  }
  func.func @transform_1(%arg0: i32, %arg1: i32) -> (i32, i32) {
    %c0_i32 = arith.constant 0 : i32
    %c0_i32_0 = arith.constant 0 : i32
    %c0_i32_1 = arith.constant 0 : i32
    return %c0_i32, %c0_i32_0 : i32, i32
  }
  func.func @transform_2(%arg0: i32, %arg1: i32) -> (i32, i32) {
    %c0_i32 = arith.constant 0 : i32
    %c0_i32_0 = arith.constant 0 : i32
    %c0_i32_1 = arith.constant 0 : i32
    return %c0_i32, %c0_i32_0 : i32, i32
  }
  func.func @transform_3(%arg0: i32, %arg1: i32) -> (i32, i32, i32, i32) {
    %c0_i32 = arith.constant 0 : i32
    %c0_i32_0 = arith.constant 0 : i32
    %c0_i32_1 = arith.constant 0 : i32
    return %arg0, %arg1, %c0_i32, %c0_i32_0 : i32, i32, i32, i32
  }
}

module attributes {stable_mosaic.version = 11 : i64} {
  func.func @_conv3x3_kernel(%arg0: i32, %arg1: i32, %arg2: memref<1x18x18x64xbf16, #tpu.memory_space<vmem>>, %arg3: memref<9x64x64xbf16, #tpu.memory_space<vmem>>, %arg4: memref<1x64xf32, #tpu.memory_space<vmem>>, %arg5: memref<1x16x16x64xbf16, #tpu.memory_space<vmem>>, %arg6: memref<1x8x8x64xbf16, #tpu.memory_space<vmem>>) attributes {dimension_semantics = [#tpu.dimension_semantics<parallel>, #tpu.dimension_semantics<parallel>], iteration_bounds = array<i64: 4, 1>, scalar_prefetch = 0 : i64, scratch_operands = 0 : i64, tpu.core_type = #tpu.core_type<tc>, window_params = [{transform_indices = @transform_0, window_bounds = array<i64: 1, 18, 18, 64>}, {pipeline_mode = #tpu.pipeline_mode<synchronous>, transform_indices = @transform_1, window_bounds = array<i64: 9, 64, 64>}, {pipeline_mode = #tpu.pipeline_mode<synchronous>, transform_indices = @transform_2, window_bounds = array<i64: 1, 64>}, {transform_indices = @transform_3, window_bounds = array<i64: 1, 16, 16, 64>}, {transform_indices = @transform_4, window_bounds = array<i64: 1, 8, 8, 64>}]} {
    %c0 = arith.constant 0 : index
    %c0_0 = arith.constant 0 : index
    %c0_1 = arith.constant 0 : index
    %c0_2 = arith.constant 0 : index
    %0 = vector.load %arg2[%c0, %c0_0, %c0_1, %c0_2] : memref<1x18x18x64xbf16, #tpu.memory_space<vmem>>, vector<1x18x18x64xbf16>
    %1 = vector.shape_cast %0 : vector<1x18x18x64xbf16> to vector<18x18x64xbf16>
    %cst = arith.constant 0.000000e+00 : f32
    %2 = vector.broadcast %cst : f32 to vector<256x64xf32>
    %3 = vector.extract_strided_slice %1 {offsets = [0, 0, 0], sizes = [16, 16, 64], strides = [1, 1, 1]} : vector<18x18x64xbf16> to vector<16x16x64xbf16>
    %4 = vector.shape_cast %3 : vector<16x16x64xbf16> to vector<256x64xbf16>
    %c0_3 = arith.constant 0 : index
    %c0_4 = arith.constant 0 : index
    %c0_5 = arith.constant 0 : index
    %5 = vector.load %arg3[%c0_3, %c0_4, %c0_5] : memref<9x64x64xbf16, #tpu.memory_space<vmem>>, vector<1x64x64xbf16>
    %6 = vector.shape_cast %5 : vector<1x64x64xbf16> to vector<64x64xbf16>
    %cst_6 = arith.constant dense<0.000000e+00> : vector<256x64xf32>
    %7 = tpu.matmul %4, %6, %cst_6 {dimension_numbers = #tpu.dot_dimension_numbers<[1], [0], [0], [1], [0, 0, 1, 1], [], []>} : vector<256x64xbf16>, vector<64x64xbf16>, vector<256x64xf32> -> vector<256x64xf32>
    %8 = arith.addf %2, %7 : vector<256x64xf32>
    %9 = vector.extract_strided_slice %1 {offsets = [0, 1, 0], sizes = [16, 16, 64], strides = [1, 1, 1]} : vector<18x18x64xbf16> to vector<16x16x64xbf16>
    %10 = vector.shape_cast %9 : vector<16x16x64xbf16> to vector<256x64xbf16>
    %c1 = arith.constant 1 : index
    %c0_7 = arith.constant 0 : index
    %c0_8 = arith.constant 0 : index
    %11 = vector.load %arg3[%c1, %c0_7, %c0_8] : memref<9x64x64xbf16, #tpu.memory_space<vmem>>, vector<1x64x64xbf16>
    %12 = vector.shape_cast %11 : vector<1x64x64xbf16> to vector<64x64xbf16>
    %cst_9 = arith.constant dense<0.000000e+00> : vector<256x64xf32>
    %13 = tpu.matmul %10, %12, %cst_9 {dimension_numbers = #tpu.dot_dimension_numbers<[1], [0], [0], [1], [0, 0, 1, 1], [], []>} : vector<256x64xbf16>, vector<64x64xbf16>, vector<256x64xf32> -> vector<256x64xf32>
    %14 = arith.addf %8, %13 : vector<256x64xf32>
    %15 = vector.extract_strided_slice %1 {offsets = [0, 2, 0], sizes = [16, 16, 64], strides = [1, 1, 1]} : vector<18x18x64xbf16> to vector<16x16x64xbf16>
    %16 = vector.shape_cast %15 : vector<16x16x64xbf16> to vector<256x64xbf16>
    %c2 = arith.constant 2 : index
    %c0_10 = arith.constant 0 : index
    %c0_11 = arith.constant 0 : index
    %17 = vector.load %arg3[%c2, %c0_10, %c0_11] : memref<9x64x64xbf16, #tpu.memory_space<vmem>>, vector<1x64x64xbf16>
    %18 = vector.shape_cast %17 : vector<1x64x64xbf16> to vector<64x64xbf16>
    %cst_12 = arith.constant dense<0.000000e+00> : vector<256x64xf32>
    %19 = tpu.matmul %16, %18, %cst_12 {dimension_numbers = #tpu.dot_dimension_numbers<[1], [0], [0], [1], [0, 0, 1, 1], [], []>} : vector<256x64xbf16>, vector<64x64xbf16>, vector<256x64xf32> -> vector<256x64xf32>
    %20 = arith.addf %14, %19 : vector<256x64xf32>
    %21 = vector.extract_strided_slice %1 {offsets = [1, 0, 0], sizes = [16, 16, 64], strides = [1, 1, 1]} : vector<18x18x64xbf16> to vector<16x16x64xbf16>
    %22 = vector.shape_cast %21 : vector<16x16x64xbf16> to vector<256x64xbf16>
    %c3 = arith.constant 3 : index
    %c0_13 = arith.constant 0 : index
    %c0_14 = arith.constant 0 : index
    %23 = vector.load %arg3[%c3, %c0_13, %c0_14] : memref<9x64x64xbf16, #tpu.memory_space<vmem>>, vector<1x64x64xbf16>
    %24 = vector.shape_cast %23 : vector<1x64x64xbf16> to vector<64x64xbf16>
    %cst_15 = arith.constant dense<0.000000e+00> : vector<256x64xf32>
    %25 = tpu.matmul %22, %24, %cst_15 {dimension_numbers = #tpu.dot_dimension_numbers<[1], [0], [0], [1], [0, 0, 1, 1], [], []>} : vector<256x64xbf16>, vector<64x64xbf16>, vector<256x64xf32> -> vector<256x64xf32>
    %26 = arith.addf %20, %25 : vector<256x64xf32>
    %27 = vector.extract_strided_slice %1 {offsets = [1, 1, 0], sizes = [16, 16, 64], strides = [1, 1, 1]} : vector<18x18x64xbf16> to vector<16x16x64xbf16>
    %28 = vector.shape_cast %27 : vector<16x16x64xbf16> to vector<256x64xbf16>
    %c4 = arith.constant 4 : index
    %c0_16 = arith.constant 0 : index
    %c0_17 = arith.constant 0 : index
    %29 = vector.load %arg3[%c4, %c0_16, %c0_17] : memref<9x64x64xbf16, #tpu.memory_space<vmem>>, vector<1x64x64xbf16>
    %30 = vector.shape_cast %29 : vector<1x64x64xbf16> to vector<64x64xbf16>
    %cst_18 = arith.constant dense<0.000000e+00> : vector<256x64xf32>
    %31 = tpu.matmul %28, %30, %cst_18 {dimension_numbers = #tpu.dot_dimension_numbers<[1], [0], [0], [1], [0, 0, 1, 1], [], []>} : vector<256x64xbf16>, vector<64x64xbf16>, vector<256x64xf32> -> vector<256x64xf32>
    %32 = arith.addf %26, %31 : vector<256x64xf32>
    %33 = vector.extract_strided_slice %1 {offsets = [1, 2, 0], sizes = [16, 16, 64], strides = [1, 1, 1]} : vector<18x18x64xbf16> to vector<16x16x64xbf16>
    %34 = vector.shape_cast %33 : vector<16x16x64xbf16> to vector<256x64xbf16>
    %c5 = arith.constant 5 : index
    %c0_19 = arith.constant 0 : index
    %c0_20 = arith.constant 0 : index
    %35 = vector.load %arg3[%c5, %c0_19, %c0_20] : memref<9x64x64xbf16, #tpu.memory_space<vmem>>, vector<1x64x64xbf16>
    %36 = vector.shape_cast %35 : vector<1x64x64xbf16> to vector<64x64xbf16>
    %cst_21 = arith.constant dense<0.000000e+00> : vector<256x64xf32>
    %37 = tpu.matmul %34, %36, %cst_21 {dimension_numbers = #tpu.dot_dimension_numbers<[1], [0], [0], [1], [0, 0, 1, 1], [], []>} : vector<256x64xbf16>, vector<64x64xbf16>, vector<256x64xf32> -> vector<256x64xf32>
    %38 = arith.addf %32, %37 : vector<256x64xf32>
    %39 = vector.extract_strided_slice %1 {offsets = [2, 0, 0], sizes = [16, 16, 64], strides = [1, 1, 1]} : vector<18x18x64xbf16> to vector<16x16x64xbf16>
    %40 = vector.shape_cast %39 : vector<16x16x64xbf16> to vector<256x64xbf16>
    %c6 = arith.constant 6 : index
    %c0_22 = arith.constant 0 : index
    %c0_23 = arith.constant 0 : index
    %41 = vector.load %arg3[%c6, %c0_22, %c0_23] : memref<9x64x64xbf16, #tpu.memory_space<vmem>>, vector<1x64x64xbf16>
    %42 = vector.shape_cast %41 : vector<1x64x64xbf16> to vector<64x64xbf16>
    %cst_24 = arith.constant dense<0.000000e+00> : vector<256x64xf32>
    %43 = tpu.matmul %40, %42, %cst_24 {dimension_numbers = #tpu.dot_dimension_numbers<[1], [0], [0], [1], [0, 0, 1, 1], [], []>} : vector<256x64xbf16>, vector<64x64xbf16>, vector<256x64xf32> -> vector<256x64xf32>
    %44 = arith.addf %38, %43 : vector<256x64xf32>
    %45 = vector.extract_strided_slice %1 {offsets = [2, 1, 0], sizes = [16, 16, 64], strides = [1, 1, 1]} : vector<18x18x64xbf16> to vector<16x16x64xbf16>
    %46 = vector.shape_cast %45 : vector<16x16x64xbf16> to vector<256x64xbf16>
    %c7 = arith.constant 7 : index
    %c0_25 = arith.constant 0 : index
    %c0_26 = arith.constant 0 : index
    %47 = vector.load %arg3[%c7, %c0_25, %c0_26] : memref<9x64x64xbf16, #tpu.memory_space<vmem>>, vector<1x64x64xbf16>
    %48 = vector.shape_cast %47 : vector<1x64x64xbf16> to vector<64x64xbf16>
    %cst_27 = arith.constant dense<0.000000e+00> : vector<256x64xf32>
    %49 = tpu.matmul %46, %48, %cst_27 {dimension_numbers = #tpu.dot_dimension_numbers<[1], [0], [0], [1], [0, 0, 1, 1], [], []>} : vector<256x64xbf16>, vector<64x64xbf16>, vector<256x64xf32> -> vector<256x64xf32>
    %50 = arith.addf %44, %49 : vector<256x64xf32>
    %51 = vector.extract_strided_slice %1 {offsets = [2, 2, 0], sizes = [16, 16, 64], strides = [1, 1, 1]} : vector<18x18x64xbf16> to vector<16x16x64xbf16>
    %52 = vector.shape_cast %51 : vector<16x16x64xbf16> to vector<256x64xbf16>
    %c8 = arith.constant 8 : index
    %c0_28 = arith.constant 0 : index
    %c0_29 = arith.constant 0 : index
    %53 = vector.load %arg3[%c8, %c0_28, %c0_29] : memref<9x64x64xbf16, #tpu.memory_space<vmem>>, vector<1x64x64xbf16>
    %54 = vector.shape_cast %53 : vector<1x64x64xbf16> to vector<64x64xbf16>
    %cst_30 = arith.constant dense<0.000000e+00> : vector<256x64xf32>
    %55 = tpu.matmul %52, %54, %cst_30 {dimension_numbers = #tpu.dot_dimension_numbers<[1], [0], [0], [1], [0, 0, 1, 1], [], []>} : vector<256x64xbf16>, vector<64x64xbf16>, vector<256x64xf32> -> vector<256x64xf32>
    %56 = arith.addf %50, %55 : vector<256x64xf32>
    %c0_31 = arith.constant 0 : index
    %c0_32 = arith.constant 0 : index
    %57 = vector.load %arg4[%c0_31, %c0_32] : memref<1x64xf32, #tpu.memory_space<vmem>>, vector<1x64xf32>
    %58 = vector.broadcast %57 : vector<1x64xf32> to vector<256x64xf32>
    %59 = arith.addf %56, %58 : vector<256x64xf32>
    %cst_33 = arith.constant 0.000000e+00 : f32
    %60 = vector.broadcast %cst_33 : f32 to vector<256x64xf32>
    %61 = arith.maximumf %59, %60 : vector<256x64xf32>
    %62 = vector.shape_cast %59 : vector<256x64xf32> to vector<16x16x64xf32>
    %63 = arith.truncf %62 : vector<16x16x64xf32> to vector<16x16x64xbf16>
    %c0_34 = arith.constant 0 : index
    %c0_35 = arith.constant 0 : index
    %c0_36 = arith.constant 0 : index
    %c0_37 = arith.constant 0 : index
    %64 = vector.load %arg5[%c0_34, %c0_35, %c0_36, %c0_37] : memref<1x16x16x64xbf16, #tpu.memory_space<vmem>>, vector<1x16x16x64xbf16>
    %65 = vector.shape_cast %64 : vector<1x16x16x64xbf16> to vector<16x16x64xbf16>
    %66 = vector.shape_cast %63 : vector<16x16x64xbf16> to vector<1x16x16x64xbf16>
    tpu.vector_store %arg5[%c0_34, %c0_35, %c0_36, %c0_37], %66 {strides = array<i32>} : memref<1x16x16x64xbf16, #tpu.memory_space<vmem>>, vector<1x16x16x64xbf16>,
    %67 = vector.shape_cast %61 : vector<256x64xf32> to vector<8x2x16x64xf32>
    %cst_38 = arith.constant dense<0xFF800000> : vector<8x16x64xf32>
    %68 = vector.multi_reduction <maximumf>, %67, %cst_38 [1] : vector<8x2x16x64xf32> to vector<8x16x64xf32>
    %69 = vector.shape_cast %68 : vector<8x16x64xf32> to vector<8x8x2x64xf32>
    %cst_39 = arith.constant dense<0xFF800000> : vector<8x8x64xf32>
    %70 = vector.multi_reduction <maximumf>, %69, %cst_39 [2] : vector<8x8x2x64xf32> to vector<8x8x64xf32>
    %71 = arith.truncf %70 : vector<8x8x64xf32> to vector<8x8x64xbf16>
    %c0_40 = arith.constant 0 : index
    %c0_41 = arith.constant 0 : index
    %c0_42 = arith.constant 0 : index
    %c0_43 = arith.constant 0 : index
    %72 = vector.load %arg6[%c0_40, %c0_41, %c0_42, %c0_43] : memref<1x8x8x64xbf16, #tpu.memory_space<vmem>>, vector<1x8x8x64xbf16>
    %73 = vector.shape_cast %72 : vector<1x8x8x64xbf16> to vector<8x8x64xbf16>
    %74 = vector.shape_cast %71 : vector<8x8x64xbf16> to vector<1x8x8x64xbf16>
    tpu.vector_store %arg6[%c0_40, %c0_41, %c0_42, %c0_43], %74 {strides = array<i32>} : memref<1x8x8x64xbf16, #tpu.memory_space<vmem>>, vector<1x8x8x64xbf16>,
    return
  }
  func.func @transform_0(%arg0: i32, %arg1: i32) -> (i32, i32, i32, i32) {
    %c1_i32 = arith.constant 1 : i32
    %0 = arith.muli %arg0, %c1_i32 : i32
    %1 = arith.addi %0, %arg1 : i32
    %c0_i32 = arith.constant 0 : i32
    %c0_i32_0 = arith.constant 0 : i32
    %c0_i32_1 = arith.constant 0 : i32
    %c0_i32_2 = arith.constant 0 : i32
    return %1, %c0_i32, %c0_i32_0, %c0_i32_1 : i32, i32, i32, i32
  }
  func.func @transform_1(%arg0: i32, %arg1: i32) -> (i32, i32, i32) {
    %c0_i32 = arith.constant 0 : i32
    %c0_i32_0 = arith.constant 0 : i32
    %c0_i32_1 = arith.constant 0 : i32
    %c0_i32_2 = arith.constant 0 : i32
    return %c0_i32, %c0_i32_0, %c0_i32_1 : i32, i32, i32
  }
  func.func @transform_2(%arg0: i32, %arg1: i32) -> (i32, i32) {
    %c0_i32 = arith.constant 0 : i32
    %c0_i32_0 = arith.constant 0 : i32
    %c0_i32_1 = arith.constant 0 : i32
    return %c0_i32, %c0_i32_0 : i32, i32
  }
  func.func @transform_3(%arg0: i32, %arg1: i32) -> (i32, i32, i32, i32) {
    %c0_i32 = arith.constant 0 : i32
    %c0_i32_0 = arith.constant 0 : i32
    %c0_i32_1 = arith.constant 0 : i32
    return %arg0, %arg1, %c0_i32, %c0_i32_0 : i32, i32, i32, i32
  }
  func.func @transform_4(%arg0: i32, %arg1: i32) -> (i32, i32, i32, i32) {
    %c0_i32 = arith.constant 0 : i32
    %c0_i32_0 = arith.constant 0 : i32
    %c0_i32_1 = arith.constant 0 : i32
    return %arg0, %arg1, %c0_i32, %c0_i32_0 : i32, i32, i32, i32
  }
}

module attributes {stable_mosaic.version = 11 : i64} {
  func.func @_conv3x3_kernel(%arg0: i32, %arg1: i32, %arg2: memref<1x10x10x64xbf16, #tpu.memory_space<vmem>>, %arg3: memref<9x64x128xbf16, #tpu.memory_space<vmem>>, %arg4: memref<1x128xf32, #tpu.memory_space<vmem>>, %arg5: memref<1x8x8x128xbf16, #tpu.memory_space<vmem>>) attributes {dimension_semantics = [#tpu.dimension_semantics<parallel>, #tpu.dimension_semantics<parallel>], iteration_bounds = array<i64: 4, 1>, scalar_prefetch = 0 : i64, scratch_operands = 0 : i64, tpu.core_type = #tpu.core_type<tc>, window_params = [{transform_indices = @transform_0, window_bounds = array<i64: 1, 10, 10, 64>}, {pipeline_mode = #tpu.pipeline_mode<synchronous>, transform_indices = @transform_1, window_bounds = array<i64: 9, 64, 128>}, {pipeline_mode = #tpu.pipeline_mode<synchronous>, transform_indices = @transform_2, window_bounds = array<i64: 1, 128>}, {transform_indices = @transform_3, window_bounds = array<i64: 1, 8, 8, 128>}]} {
    %c0 = arith.constant 0 : index
    %c0_0 = arith.constant 0 : index
    %c0_1 = arith.constant 0 : index
    %c0_2 = arith.constant 0 : index
    %0 = vector.load %arg2[%c0, %c0_0, %c0_1, %c0_2] : memref<1x10x10x64xbf16, #tpu.memory_space<vmem>>, vector<1x10x10x64xbf16>
    %1 = vector.shape_cast %0 : vector<1x10x10x64xbf16> to vector<10x10x64xbf16>
    %cst = arith.constant 0.000000e+00 : f32
    %2 = vector.broadcast %cst : f32 to vector<64x128xf32>
    %3 = vector.extract_strided_slice %1 {offsets = [0, 0, 0], sizes = [8, 8, 64], strides = [1, 1, 1]} : vector<10x10x64xbf16> to vector<8x8x64xbf16>
    %4 = vector.shape_cast %3 : vector<8x8x64xbf16> to vector<64x64xbf16>
    %c0_3 = arith.constant 0 : index
    %c0_4 = arith.constant 0 : index
    %c0_5 = arith.constant 0 : index
    %5 = vector.load %arg3[%c0_3, %c0_4, %c0_5] : memref<9x64x128xbf16, #tpu.memory_space<vmem>>, vector<1x64x128xbf16>
    %6 = vector.shape_cast %5 : vector<1x64x128xbf16> to vector<64x128xbf16>
    %cst_6 = arith.constant dense<0.000000e+00> : vector<64x128xf32>
    %7 = tpu.matmul %4, %6, %cst_6 {dimension_numbers = #tpu.dot_dimension_numbers<[1], [0], [0], [1], [0, 0, 1, 1], [], []>} : vector<64x64xbf16>, vector<64x128xbf16>, vector<64x128xf32> -> vector<64x128xf32>
    %8 = arith.addf %2, %7 : vector<64x128xf32>
    %9 = vector.extract_strided_slice %1 {offsets = [0, 1, 0], sizes = [8, 8, 64], strides = [1, 1, 1]} : vector<10x10x64xbf16> to vector<8x8x64xbf16>
    %10 = vector.shape_cast %9 : vector<8x8x64xbf16> to vector<64x64xbf16>
    %c1 = arith.constant 1 : index
    %c0_7 = arith.constant 0 : index
    %c0_8 = arith.constant 0 : index
    %11 = vector.load %arg3[%c1, %c0_7, %c0_8] : memref<9x64x128xbf16, #tpu.memory_space<vmem>>, vector<1x64x128xbf16>
    %12 = vector.shape_cast %11 : vector<1x64x128xbf16> to vector<64x128xbf16>
    %cst_9 = arith.constant dense<0.000000e+00> : vector<64x128xf32>
    %13 = tpu.matmul %10, %12, %cst_9 {dimension_numbers = #tpu.dot_dimension_numbers<[1], [0], [0], [1], [0, 0, 1, 1], [], []>} : vector<64x64xbf16>, vector<64x128xbf16>, vector<64x128xf32> -> vector<64x128xf32>
    %14 = arith.addf %8, %13 : vector<64x128xf32>
    %15 = vector.extract_strided_slice %1 {offsets = [0, 2, 0], sizes = [8, 8, 64], strides = [1, 1, 1]} : vector<10x10x64xbf16> to vector<8x8x64xbf16>
    %16 = vector.shape_cast %15 : vector<8x8x64xbf16> to vector<64x64xbf16>
    %c2 = arith.constant 2 : index
    %c0_10 = arith.constant 0 : index
    %c0_11 = arith.constant 0 : index
    %17 = vector.load %arg3[%c2, %c0_10, %c0_11] : memref<9x64x128xbf16, #tpu.memory_space<vmem>>, vector<1x64x128xbf16>
    %18 = vector.shape_cast %17 : vector<1x64x128xbf16> to vector<64x128xbf16>
    %cst_12 = arith.constant dense<0.000000e+00> : vector<64x128xf32>
    %19 = tpu.matmul %16, %18, %cst_12 {dimension_numbers = #tpu.dot_dimension_numbers<[1], [0], [0], [1], [0, 0, 1, 1], [], []>} : vector<64x64xbf16>, vector<64x128xbf16>, vector<64x128xf32> -> vector<64x128xf32>
    %20 = arith.addf %14, %19 : vector<64x128xf32>
    %21 = vector.extract_strided_slice %1 {offsets = [1, 0, 0], sizes = [8, 8, 64], strides = [1, 1, 1]} : vector<10x10x64xbf16> to vector<8x8x64xbf16>
    %22 = vector.shape_cast %21 : vector<8x8x64xbf16> to vector<64x64xbf16>
    %c3 = arith.constant 3 : index
    %c0_13 = arith.constant 0 : index
    %c0_14 = arith.constant 0 : index
    %23 = vector.load %arg3[%c3, %c0_13, %c0_14] : memref<9x64x128xbf16, #tpu.memory_space<vmem>>, vector<1x64x128xbf16>
    %24 = vector.shape_cast %23 : vector<1x64x128xbf16> to vector<64x128xbf16>
    %cst_15 = arith.constant dense<0.000000e+00> : vector<64x128xf32>
    %25 = tpu.matmul %22, %24, %cst_15 {dimension_numbers = #tpu.dot_dimension_numbers<[1], [0], [0], [1], [0, 0, 1, 1], [], []>} : vector<64x64xbf16>, vector<64x128xbf16>, vector<64x128xf32> -> vector<64x128xf32>
    %26 = arith.addf %20, %25 : vector<64x128xf32>
    %27 = vector.extract_strided_slice %1 {offsets = [1, 1, 0], sizes = [8, 8, 64], strides = [1, 1, 1]} : vector<10x10x64xbf16> to vector<8x8x64xbf16>
    %28 = vector.shape_cast %27 : vector<8x8x64xbf16> to vector<64x64xbf16>
    %c4 = arith.constant 4 : index
    %c0_16 = arith.constant 0 : index
    %c0_17 = arith.constant 0 : index
    %29 = vector.load %arg3[%c4, %c0_16, %c0_17] : memref<9x64x128xbf16, #tpu.memory_space<vmem>>, vector<1x64x128xbf16>
    %30 = vector.shape_cast %29 : vector<1x64x128xbf16> to vector<64x128xbf16>
    %cst_18 = arith.constant dense<0.000000e+00> : vector<64x128xf32>
    %31 = tpu.matmul %28, %30, %cst_18 {dimension_numbers = #tpu.dot_dimension_numbers<[1], [0], [0], [1], [0, 0, 1, 1], [], []>} : vector<64x64xbf16>, vector<64x128xbf16>, vector<64x128xf32> -> vector<64x128xf32>
    %32 = arith.addf %26, %31 : vector<64x128xf32>
    %33 = vector.extract_strided_slice %1 {offsets = [1, 2, 0], sizes = [8, 8, 64], strides = [1, 1, 1]} : vector<10x10x64xbf16> to vector<8x8x64xbf16>
    %34 = vector.shape_cast %33 : vector<8x8x64xbf16> to vector<64x64xbf16>
    %c5 = arith.constant 5 : index
    %c0_19 = arith.constant 0 : index
    %c0_20 = arith.constant 0 : index
    %35 = vector.load %arg3[%c5, %c0_19, %c0_20] : memref<9x64x128xbf16, #tpu.memory_space<vmem>>, vector<1x64x128xbf16>
    %36 = vector.shape_cast %35 : vector<1x64x128xbf16> to vector<64x128xbf16>
    %cst_21 = arith.constant dense<0.000000e+00> : vector<64x128xf32>
    %37 = tpu.matmul %34, %36, %cst_21 {dimension_numbers = #tpu.dot_dimension_numbers<[1], [0], [0], [1], [0, 0, 1, 1], [], []>} : vector<64x64xbf16>, vector<64x128xbf16>, vector<64x128xf32> -> vector<64x128xf32>
    %38 = arith.addf %32, %37 : vector<64x128xf32>
    %39 = vector.extract_strided_slice %1 {offsets = [2, 0, 0], sizes = [8, 8, 64], strides = [1, 1, 1]} : vector<10x10x64xbf16> to vector<8x8x64xbf16>
    %40 = vector.shape_cast %39 : vector<8x8x64xbf16> to vector<64x64xbf16>
    %c6 = arith.constant 6 : index
    %c0_22 = arith.constant 0 : index
    %c0_23 = arith.constant 0 : index
    %41 = vector.load %arg3[%c6, %c0_22, %c0_23] : memref<9x64x128xbf16, #tpu.memory_space<vmem>>, vector<1x64x128xbf16>
    %42 = vector.shape_cast %41 : vector<1x64x128xbf16> to vector<64x128xbf16>
    %cst_24 = arith.constant dense<0.000000e+00> : vector<64x128xf32>
    %43 = tpu.matmul %40, %42, %cst_24 {dimension_numbers = #tpu.dot_dimension_numbers<[1], [0], [0], [1], [0, 0, 1, 1], [], []>} : vector<64x64xbf16>, vector<64x128xbf16>, vector<64x128xf32> -> vector<64x128xf32>
    %44 = arith.addf %38, %43 : vector<64x128xf32>
    %45 = vector.extract_strided_slice %1 {offsets = [2, 1, 0], sizes = [8, 8, 64], strides = [1, 1, 1]} : vector<10x10x64xbf16> to vector<8x8x64xbf16>
    %46 = vector.shape_cast %45 : vector<8x8x64xbf16> to vector<64x64xbf16>
    %c7 = arith.constant 7 : index
    %c0_25 = arith.constant 0 : index
    %c0_26 = arith.constant 0 : index
    %47 = vector.load %arg3[%c7, %c0_25, %c0_26] : memref<9x64x128xbf16, #tpu.memory_space<vmem>>, vector<1x64x128xbf16>
    %48 = vector.shape_cast %47 : vector<1x64x128xbf16> to vector<64x128xbf16>
    %cst_27 = arith.constant dense<0.000000e+00> : vector<64x128xf32>
    %49 = tpu.matmul %46, %48, %cst_27 {dimension_numbers = #tpu.dot_dimension_numbers<[1], [0], [0], [1], [0, 0, 1, 1], [], []>} : vector<64x64xbf16>, vector<64x128xbf16>, vector<64x128xf32> -> vector<64x128xf32>
    %50 = arith.addf %44, %49 : vector<64x128xf32>
    %51 = vector.extract_strided_slice %1 {offsets = [2, 2, 0], sizes = [8, 8, 64], strides = [1, 1, 1]} : vector<10x10x64xbf16> to vector<8x8x64xbf16>
    %52 = vector.shape_cast %51 : vector<8x8x64xbf16> to vector<64x64xbf16>
    %c8 = arith.constant 8 : index
    %c0_28 = arith.constant 0 : index
    %c0_29 = arith.constant 0 : index
    %53 = vector.load %arg3[%c8, %c0_28, %c0_29] : memref<9x64x128xbf16, #tpu.memory_space<vmem>>, vector<1x64x128xbf16>
    %54 = vector.shape_cast %53 : vector<1x64x128xbf16> to vector<64x128xbf16>
    %cst_30 = arith.constant dense<0.000000e+00> : vector<64x128xf32>
    %55 = tpu.matmul %52, %54, %cst_30 {dimension_numbers = #tpu.dot_dimension_numbers<[1], [0], [0], [1], [0, 0, 1, 1], [], []>} : vector<64x64xbf16>, vector<64x128xbf16>, vector<64x128xf32> -> vector<64x128xf32>
    %56 = arith.addf %50, %55 : vector<64x128xf32>
    %c0_31 = arith.constant 0 : index
    %c0_32 = arith.constant 0 : index
    %57 = vector.load %arg4[%c0_31, %c0_32] : memref<1x128xf32, #tpu.memory_space<vmem>>, vector<1x128xf32>
    %58 = vector.broadcast %57 : vector<1x128xf32> to vector<64x128xf32>
    %59 = arith.addf %56, %58 : vector<64x128xf32>
    %cst_33 = arith.constant 0.000000e+00 : f32
    %60 = vector.broadcast %cst_33 : f32 to vector<64x128xf32>
    %61 = arith.maximumf %59, %60 : vector<64x128xf32>
    %62 = vector.shape_cast %61 : vector<64x128xf32> to vector<8x8x128xf32>
    %63 = arith.truncf %62 : vector<8x8x128xf32> to vector<8x8x128xbf16>
    %c0_34 = arith.constant 0 : index
    %c0_35 = arith.constant 0 : index
    %c0_36 = arith.constant 0 : index
    %c0_37 = arith.constant 0 : index
    %64 = vector.load %arg5[%c0_34, %c0_35, %c0_36, %c0_37] : memref<1x8x8x128xbf16, #tpu.memory_space<vmem>>, vector<1x8x8x128xbf16>
    %65 = vector.shape_cast %64 : vector<1x8x8x128xbf16> to vector<8x8x128xbf16>
    %66 = vector.shape_cast %63 : vector<8x8x128xbf16> to vector<1x8x8x128xbf16>
    tpu.vector_store %arg5[%c0_34, %c0_35, %c0_36, %c0_37], %66 {strides = array<i32>} : memref<1x8x8x128xbf16, #tpu.memory_space<vmem>>, vector<1x8x8x128xbf16>,
    return
  }
  func.func @transform_0(%arg0: i32, %arg1: i32) -> (i32, i32, i32, i32) {
    %c1_i32 = arith.constant 1 : i32
    %0 = arith.muli %arg0, %c1_i32 : i32
    %1 = arith.addi %0, %arg1 : i32
    %c0_i32 = arith.constant 0 : i32
    %c0_i32_0 = arith.constant 0 : i32
    %c0_i32_1 = arith.constant 0 : i32
    %c0_i32_2 = arith.constant 0 : i32
    return %1, %c0_i32, %c0_i32_0, %c0_i32_1 : i32, i32, i32, i32
  }
  func.func @transform_1(%arg0: i32, %arg1: i32) -> (i32, i32, i32) {
    %c0_i32 = arith.constant 0 : i32
    %c0_i32_0 = arith.constant 0 : i32
    %c0_i32_1 = arith.constant 0 : i32
    %c0_i32_2 = arith.constant 0 : i32
    return %c0_i32, %c0_i32_0, %c0_i32_1 : i32, i32, i32
  }
  func.func @transform_2(%arg0: i32, %arg1: i32) -> (i32, i32) {
    %c0_i32 = arith.constant 0 : i32
    %c0_i32_0 = arith.constant 0 : i32
    %c0_i32_1 = arith.constant 0 : i32
    return %c0_i32, %c0_i32_0 : i32, i32
  }
  func.func @transform_3(%arg0: i32, %arg1: i32) -> (i32, i32, i32, i32) {
    %c0_i32 = arith.constant 0 : i32
    %c0_i32_0 = arith.constant 0 : i32
    %c0_i32_1 = arith.constant 0 : i32
    return %arg0, %arg1, %c0_i32, %c0_i32_0 : i32, i32, i32, i32
  }
}

module attributes {stable_mosaic.version = 11 : i64} {
  func.func @_layer_loss_kernel(%arg0: i32, %arg1: i32, %arg2: memref<1x64x128xbf16, #tpu.memory_space<vmem>>, %arg3: memref<1x64x128xbf16, #tpu.memory_space<vmem>>, %arg4: memref<1x8x128xf32, #tpu.memory_space<vmem>>, %arg5: memref<1x8x128xf32, #tpu.memory_space<vmem>>, %arg6: memref<1x128xf32, #tpu.memory_space<vmem>>, %arg7: memref<128x128xf32, #tpu.memory_space<vmem>>, %arg8: memref<128x128xf32, #tpu.memory_space<vmem>>) attributes {dimension_semantics = [#tpu.dimension_semantics<parallel>, #tpu.dimension_semantics<arbitrary>], iteration_bounds = array<i64: 2, 1>, scalar_prefetch = 0 : i64, scratch_operands = 3 : i64, tpu.core_type = #tpu.core_type<tc>, window_params = [{transform_indices = @transform_0, window_bounds = array<i64: 1, 64, 128>}, {transform_indices = @transform_1, window_bounds = array<i64: 1, 64, 128>}, {transform_indices = @transform_2, window_bounds = array<i64: 1, 8, 128>}, {transform_indices = @transform_3, window_bounds = array<i64: 1, 8, 128>}]} {
    %c0 = arith.constant 0 : index
    %c0_0 = arith.constant 0 : index
    %c0_1 = arith.constant 0 : index
    %0 = vector.load %arg2[%c0, %c0_0, %c0_1] : memref<1x64x128xbf16, #tpu.memory_space<vmem>>, vector<1x64x128xbf16>
    %1 = vector.shape_cast %0 : vector<1x64x128xbf16> to vector<64x128xbf16>
    %c0_2 = arith.constant 0 : index
    %c0_3 = arith.constant 0 : index
    %c0_4 = arith.constant 0 : index
    %2 = vector.load %arg3[%c0_2, %c0_3, %c0_4] : memref<1x64x128xbf16, #tpu.memory_space<vmem>>, vector<1x64x128xbf16>
    %3 = vector.shape_cast %2 : vector<1x64x128xbf16> to vector<64x128xbf16>
    %c0_i32 = arith.constant 0 : i32
    %4 = arith.cmpi eq, %arg1, %c0_i32 : i32
    %5 = arith.extui %4 : i1 to i32
    %c0_i32_5 = arith.constant 0 : i32
    %6 = arith.cmpi ne, %5, %c0_i32_5 : i32
    scf.if %6 {
      %cst_26 = arith.constant 0.000000e+00 : f32
      %33 = vector.broadcast %cst_26 : f32 to vector<1x128xf32>
      %c0_27 = arith.constant 0 : index
      %c0_28 = arith.constant 0 : index
      %34 = vector.load %arg6[%c0_27, %c0_28] : memref<1x128xf32, #tpu.memory_space<vmem>>, vector<1x128xf32>
      tpu.vector_store %arg6[%c0_27, %c0_28], %33 {strides = array<i32>} : memref<1x128xf32, #tpu.memory_space<vmem>>, vector<1x128xf32>,
    } else {
    }
    %7 = arith.extf %1 : vector<64x128xbf16> to vector<64x128xf32>
    %8 = arith.extf %3 : vector<64x128xbf16> to vector<64x128xf32>
    %9 = arith.subf %7, %8 : vector<64x128xf32>
    %10 = math.absf %9 : vector<64x128xf32>
    %c0_6 = arith.constant 0 : index
    %c0_7 = arith.constant 0 : index
    %11 = vector.load %arg6[%c0_6, %c0_7] : memref<1x128xf32, #tpu.memory_space<vmem>>, vector<1x128xf32>
    %cst = arith.constant dense<0.000000e+00> : vector<128xf32>
    %12 = vector.multi_reduction <add>, %10, %cst [0] : vector<64x128xf32> to vector<128xf32>
    %13 = vector.shape_cast %12 : vector<128xf32> to vector<1x128xf32>
    %14 = arith.addf %11, %13 : vector<1x128xf32>
    %c0_8 = arith.constant 0 : index
    %c0_9 = arith.constant 0 : index
    %15 = vector.load %arg6[%c0_8, %c0_9] : memref<1x128xf32, #tpu.memory_space<vmem>>, vector<1x128xf32>
    tpu.vector_store %arg6[%c0_8, %c0_9], %14 {strides = array<i32>} : memref<1x128xf32, #tpu.memory_space<vmem>>, vector<1x128xf32>,
    %c0_i32_10 = arith.constant 0 : i32
    %16 = arith.cmpi eq, %arg1, %c0_i32_10 : i32
    %17 = arith.extui %16 : i1 to i32
    %c0_i32_11 = arith.constant 0 : i32
    %18 = arith.cmpi ne, %17, %c0_i32_11 : i32
    scf.if %18 {
      %c0_26 = arith.constant 0 : index
      %c0_27 = arith.constant 0 : index
      %33 = vector.load %arg6[%c0_26, %c0_27] : memref<1x128xf32, #tpu.memory_space<vmem>>, vector<1x128xf32>
      %34 = vector.shape_cast %33 : vector<1x128xf32> to vector<1x1x128xf32>
      %cst_28 = arith.constant dense<0.000000e+00> : vector<1xf32>
      %35 = vector.multi_reduction <add>, %34, %cst_28 [1, 2] : vector<1x1x128xf32> to vector<1xf32>
      %36 = vector.shape_cast %35 : vector<1xf32> to vector<1x1x1xf32>
      %37 = vector.extract %36[0, 0, 0] : f32 from vector<1x1x1xf32>
      %38 = vector.broadcast %37 : f32 to vector<1x8x128xf32>
      %c0_29 = arith.constant 0 : index
      %c0_30 = arith.constant 0 : index
      %c0_31 = arith.constant 0 : index
      %39 = vector.load %arg4[%c0_29, %c0_30, %c0_31] : memref<1x8x128xf32, #tpu.memory_space<vmem>>, vector<1x8x128xf32>
      tpu.vector_store %arg4[%c0_29, %c0_30, %c0_31], %38 {strides = array<i32>} : memref<1x8x128xf32, #tpu.memory_space<vmem>>, vector<1x8x128xf32>,
    } else {
    }
    %c0_i32_12 = arith.constant 0 : i32
    %19 = arith.cmpi eq, %arg1, %c0_i32_12 : i32
    %20 = arith.extui %19 : i1 to i32
    %c0_i32_13 = arith.constant 0 : i32
    %21 = arith.cmpi ne, %20, %c0_i32_13 : i32
    scf.if %21 {
      %cst_26 = arith.constant 0.000000e+00 : f32
      %33 = vector.broadcast %cst_26 : f32 to vector<128x128xf32>
      %c0_27 = arith.constant 0 : index
      %c0_28 = arith.constant 0 : index
      %34 = vector.load %arg7[%c0_27, %c0_28] : memref<128x128xf32, #tpu.memory_space<vmem>>, vector<128x128xf32>
      tpu.vector_store %arg7[%c0_27, %c0_28], %33 {strides = array<i32>} : memref<128x128xf32, #tpu.memory_space<vmem>>, vector<128x128xf32>,
      %cst_29 = arith.constant 0.000000e+00 : f32
      %35 = vector.broadcast %cst_29 : f32 to vector<128x128xf32>
      %c0_30 = arith.constant 0 : index
      %c0_31 = arith.constant 0 : index
      %36 = vector.load %arg8[%c0_30, %c0_31] : memref<128x128xf32, #tpu.memory_space<vmem>>, vector<128x128xf32>
      tpu.vector_store %arg8[%c0_30, %c0_31], %35 {strides = array<i32>} : memref<128x128xf32, #tpu.memory_space<vmem>>, vector<128x128xf32>,
    } else {
    }
    %c0_14 = arith.constant 0 : index
    %c0_15 = arith.constant 0 : index
    %22 = vector.load %arg7[%c0_14, %c0_15] : memref<128x128xf32, #tpu.memory_space<vmem>>, vector<128x128xf32>
    %cst_16 = arith.constant dense<0.000000e+00> : vector<128x128xf32>
    %23 = tpu.matmul %1, %1, %cst_16 {dimension_numbers = #tpu.dot_dimension_numbers<[0], [0], [1], [1], [0, 1, 1, 1], [], []>} : vector<64x128xbf16>, vector<64x128xbf16>, vector<128x128xf32> -> vector<128x128xf32>
    %24 = arith.addf %22, %23 : vector<128x128xf32>
    %c0_17 = arith.constant 0 : index
    %c0_18 = arith.constant 0 : index
    %25 = vector.load %arg7[%c0_17, %c0_18] : memref<128x128xf32, #tpu.memory_space<vmem>>, vector<128x128xf32>
    tpu.vector_store %arg7[%c0_17, %c0_18], %24 {strides = array<i32>} : memref<128x128xf32, #tpu.memory_space<vmem>>, vector<128x128xf32>,
    %c0_19 = arith.constant 0 : index
    %c0_20 = arith.constant 0 : index
    %26 = vector.load %arg8[%c0_19, %c0_20] : memref<128x128xf32, #tpu.memory_space<vmem>>, vector<128x128xf32>
    %cst_21 = arith.constant dense<0.000000e+00> : vector<128x128xf32>
    %27 = tpu.matmul %3, %3, %cst_21 {dimension_numbers = #tpu.dot_dimension_numbers<[0], [0], [1], [1], [0, 1, 1, 1], [], []>} : vector<64x128xbf16>, vector<64x128xbf16>, vector<128x128xf32> -> vector<128x128xf32>
    %28 = arith.addf %26, %27 : vector<128x128xf32>
    %c0_22 = arith.constant 0 : index
    %c0_23 = arith.constant 0 : index
    %29 = vector.load %arg8[%c0_22, %c0_23] : memref<128x128xf32, #tpu.memory_space<vmem>>, vector<128x128xf32>
    tpu.vector_store %arg8[%c0_22, %c0_23], %28 {strides = array<i32>} : memref<128x128xf32, #tpu.memory_space<vmem>>, vector<128x128xf32>,
    %c0_i32_24 = arith.constant 0 : i32
    %30 = arith.cmpi eq, %arg1, %c0_i32_24 : i32
    %31 = arith.extui %30 : i1 to i32
    %c0_i32_25 = arith.constant 0 : i32
    %32 = arith.cmpi ne, %31, %c0_i32_25 : i32
    scf.if %32 {
      %c0_26 = arith.constant 0 : index
      %c0_27 = arith.constant 0 : index
      %33 = vector.load %arg7[%c0_26, %c0_27] : memref<128x128xf32, #tpu.memory_space<vmem>>, vector<128x128xf32>
      %c0_28 = arith.constant 0 : index
      %c0_29 = arith.constant 0 : index
      %34 = vector.load %arg8[%c0_28, %c0_29] : memref<128x128xf32, #tpu.memory_space<vmem>>, vector<128x128xf32>
      %35 = arith.subf %33, %34 : vector<128x128xf32>
      %cst_30 = arith.constant 1.22070313E-4 : f32
      %36 = vector.broadcast %cst_30 : f32 to vector<128x128xf32>
      %37 = arith.mulf %35, %36 : vector<128x128xf32>
      %38 = math.absf %37 : vector<128x128xf32>
      %39 = vector.shape_cast %38 : vector<128x128xf32> to vector<1x128x128xf32>
      %cst_31 = arith.constant dense<0.000000e+00> : vector<1xf32>
      %40 = vector.multi_reduction <add>, %39, %cst_31 [1, 2] : vector<1x128x128xf32> to vector<1xf32>
      %41 = vector.shape_cast %40 : vector<1xf32> to vector<1x1x1xf32>
      %42 = vector.extract %41[0, 0, 0] : f32 from vector<1x1x1xf32>
      %43 = vector.broadcast %42 : f32 to vector<1x8x128xf32>
      %c0_32 = arith.constant 0 : index
      %c0_33 = arith.constant 0 : index
      %c0_34 = arith.constant 0 : index
      %44 = vector.load %arg5[%c0_32, %c0_33, %c0_34] : memref<1x8x128xf32, #tpu.memory_space<vmem>>, vector<1x8x128xf32>
      tpu.vector_store %arg5[%c0_32, %c0_33, %c0_34], %43 {strides = array<i32>} : memref<1x8x128xf32, #tpu.memory_space<vmem>>, vector<1x8x128xf32>,
    } else {
    }
    return
  }
  func.func @transform_0(%arg0: i32, %arg1: i32) -> (i32, i32, i32) {
    %c0_i32 = arith.constant 0 : i32
    %c0_i32_0 = arith.constant 0 : i32
    return %arg0, %arg1, %c0_i32 : i32, i32, i32
  }
  func.func @transform_1(%arg0: i32, %arg1: i32) -> (i32, i32, i32) {
    %c2_i32 = arith.constant 2 : i32
    %0 = arith.addi %arg0, %c2_i32 : i32
    %c0_i32 = arith.constant 0 : i32
    %c0_i32_0 = arith.constant 0 : i32
    return %0, %arg1, %c0_i32 : i32, i32, i32
  }
  func.func @transform_2(%arg0: i32, %arg1: i32) -> (i32, i32, i32) {
    %c0_i32 = arith.constant 0 : i32
    %c0_i32_0 = arith.constant 0 : i32
    %c0_i32_1 = arith.constant 0 : i32
    return %arg0, %c0_i32, %c0_i32_0 : i32, i32, i32
  }
  func.func @transform_3(%arg0: i32, %arg1: i32) -> (i32, i32, i32) {
    %c0_i32 = arith.constant 0 : i32
    %c0_i32_0 = arith.constant 0 : i32
    %c0_i32_1 = arith.constant 0 : i32
    return %arg0, %c0_i32, %c0_i32_0 : i32, i32, i32
  }
}

module attributes {stable_mosaic.version = 11 : i64} {
  func.func @_conv3x3_kernel(%arg0: i32, %arg1: i32, %arg2: memref<1x10x10x128xbf16, #tpu.memory_space<vmem>>, %arg3: memref<9x128x128xbf16, #tpu.memory_space<vmem>>, %arg4: memref<1x128xf32, #tpu.memory_space<vmem>>, %arg5: memref<1x8x8x128xbf16, #tpu.memory_space<vmem>>) attributes {dimension_semantics = [#tpu.dimension_semantics<parallel>, #tpu.dimension_semantics<parallel>], iteration_bounds = array<i64: 4, 1>, scalar_prefetch = 0 : i64, scratch_operands = 0 : i64, tpu.core_type = #tpu.core_type<tc>, window_params = [{transform_indices = @transform_0, window_bounds = array<i64: 1, 10, 10, 128>}, {pipeline_mode = #tpu.pipeline_mode<synchronous>, transform_indices = @transform_1, window_bounds = array<i64: 9, 128, 128>}, {pipeline_mode = #tpu.pipeline_mode<synchronous>, transform_indices = @transform_2, window_bounds = array<i64: 1, 128>}, {transform_indices = @transform_3, window_bounds = array<i64: 1, 8, 8, 128>}]} {
    %c0 = arith.constant 0 : index
    %c0_0 = arith.constant 0 : index
    %c0_1 = arith.constant 0 : index
    %c0_2 = arith.constant 0 : index
    %0 = vector.load %arg2[%c0, %c0_0, %c0_1, %c0_2] : memref<1x10x10x128xbf16, #tpu.memory_space<vmem>>, vector<1x10x10x128xbf16>
    %1 = vector.shape_cast %0 : vector<1x10x10x128xbf16> to vector<10x10x128xbf16>
    %cst = arith.constant 0.000000e+00 : f32
    %2 = vector.broadcast %cst : f32 to vector<64x128xf32>
    %3 = vector.extract_strided_slice %1 {offsets = [0, 0, 0], sizes = [8, 8, 128], strides = [1, 1, 1]} : vector<10x10x128xbf16> to vector<8x8x128xbf16>
    %4 = vector.shape_cast %3 : vector<8x8x128xbf16> to vector<64x128xbf16>
    %c0_3 = arith.constant 0 : index
    %c0_4 = arith.constant 0 : index
    %c0_5 = arith.constant 0 : index
    %5 = vector.load %arg3[%c0_3, %c0_4, %c0_5] : memref<9x128x128xbf16, #tpu.memory_space<vmem>>, vector<1x128x128xbf16>
    %6 = vector.shape_cast %5 : vector<1x128x128xbf16> to vector<128x128xbf16>
    %cst_6 = arith.constant dense<0.000000e+00> : vector<64x128xf32>
    %7 = tpu.matmul %4, %6, %cst_6 {dimension_numbers = #tpu.dot_dimension_numbers<[1], [0], [0], [1], [0, 0, 1, 1], [], []>} : vector<64x128xbf16>, vector<128x128xbf16>, vector<64x128xf32> -> vector<64x128xf32>
    %8 = arith.addf %2, %7 : vector<64x128xf32>
    %9 = vector.extract_strided_slice %1 {offsets = [0, 1, 0], sizes = [8, 8, 128], strides = [1, 1, 1]} : vector<10x10x128xbf16> to vector<8x8x128xbf16>
    %10 = vector.shape_cast %9 : vector<8x8x128xbf16> to vector<64x128xbf16>
    %c1 = arith.constant 1 : index
    %c0_7 = arith.constant 0 : index
    %c0_8 = arith.constant 0 : index
    %11 = vector.load %arg3[%c1, %c0_7, %c0_8] : memref<9x128x128xbf16, #tpu.memory_space<vmem>>, vector<1x128x128xbf16>
    %12 = vector.shape_cast %11 : vector<1x128x128xbf16> to vector<128x128xbf16>
    %cst_9 = arith.constant dense<0.000000e+00> : vector<64x128xf32>
    %13 = tpu.matmul %10, %12, %cst_9 {dimension_numbers = #tpu.dot_dimension_numbers<[1], [0], [0], [1], [0, 0, 1, 1], [], []>} : vector<64x128xbf16>, vector<128x128xbf16>, vector<64x128xf32> -> vector<64x128xf32>
    %14 = arith.addf %8, %13 : vector<64x128xf32>
    %15 = vector.extract_strided_slice %1 {offsets = [0, 2, 0], sizes = [8, 8, 128], strides = [1, 1, 1]} : vector<10x10x128xbf16> to vector<8x8x128xbf16>
    %16 = vector.shape_cast %15 : vector<8x8x128xbf16> to vector<64x128xbf16>
    %c2 = arith.constant 2 : index
    %c0_10 = arith.constant 0 : index
    %c0_11 = arith.constant 0 : index
    %17 = vector.load %arg3[%c2, %c0_10, %c0_11] : memref<9x128x128xbf16, #tpu.memory_space<vmem>>, vector<1x128x128xbf16>
    %18 = vector.shape_cast %17 : vector<1x128x128xbf16> to vector<128x128xbf16>
    %cst_12 = arith.constant dense<0.000000e+00> : vector<64x128xf32>
    %19 = tpu.matmul %16, %18, %cst_12 {dimension_numbers = #tpu.dot_dimension_numbers<[1], [0], [0], [1], [0, 0, 1, 1], [], []>} : vector<64x128xbf16>, vector<128x128xbf16>, vector<64x128xf32> -> vector<64x128xf32>
    %20 = arith.addf %14, %19 : vector<64x128xf32>
    %21 = vector.extract_strided_slice %1 {offsets = [1, 0, 0], sizes = [8, 8, 128], strides = [1, 1, 1]} : vector<10x10x128xbf16> to vector<8x8x128xbf16>
    %22 = vector.shape_cast %21 : vector<8x8x128xbf16> to vector<64x128xbf16>
    %c3 = arith.constant 3 : index
    %c0_13 = arith.constant 0 : index
    %c0_14 = arith.constant 0 : index
    %23 = vector.load %arg3[%c3, %c0_13, %c0_14] : memref<9x128x128xbf16, #tpu.memory_space<vmem>>, vector<1x128x128xbf16>
    %24 = vector.shape_cast %23 : vector<1x128x128xbf16> to vector<128x128xbf16>
    %cst_15 = arith.constant dense<0.000000e+00> : vector<64x128xf32>
    %25 = tpu.matmul %22, %24, %cst_15 {dimension_numbers = #tpu.dot_dimension_numbers<[1], [0], [0], [1], [0, 0, 1, 1], [], []>} : vector<64x128xbf16>, vector<128x128xbf16>, vector<64x128xf32> -> vector<64x128xf32>
    %26 = arith.addf %20, %25 : vector<64x128xf32>
    %27 = vector.extract_strided_slice %1 {offsets = [1, 1, 0], sizes = [8, 8, 128], strides = [1, 1, 1]} : vector<10x10x128xbf16> to vector<8x8x128xbf16>
    %28 = vector.shape_cast %27 : vector<8x8x128xbf16> to vector<64x128xbf16>
    %c4 = arith.constant 4 : index
    %c0_16 = arith.constant 0 : index
    %c0_17 = arith.constant 0 : index
    %29 = vector.load %arg3[%c4, %c0_16, %c0_17] : memref<9x128x128xbf16, #tpu.memory_space<vmem>>, vector<1x128x128xbf16>
    %30 = vector.shape_cast %29 : vector<1x128x128xbf16> to vector<128x128xbf16>
    %cst_18 = arith.constant dense<0.000000e+00> : vector<64x128xf32>
    %31 = tpu.matmul %28, %30, %cst_18 {dimension_numbers = #tpu.dot_dimension_numbers<[1], [0], [0], [1], [0, 0, 1, 1], [], []>} : vector<64x128xbf16>, vector<128x128xbf16>, vector<64x128xf32> -> vector<64x128xf32>
    %32 = arith.addf %26, %31 : vector<64x128xf32>
    %33 = vector.extract_strided_slice %1 {offsets = [1, 2, 0], sizes = [8, 8, 128], strides = [1, 1, 1]} : vector<10x10x128xbf16> to vector<8x8x128xbf16>
    %34 = vector.shape_cast %33 : vector<8x8x128xbf16> to vector<64x128xbf16>
    %c5 = arith.constant 5 : index
    %c0_19 = arith.constant 0 : index
    %c0_20 = arith.constant 0 : index
    %35 = vector.load %arg3[%c5, %c0_19, %c0_20] : memref<9x128x128xbf16, #tpu.memory_space<vmem>>, vector<1x128x128xbf16>
    %36 = vector.shape_cast %35 : vector<1x128x128xbf16> to vector<128x128xbf16>
    %cst_21 = arith.constant dense<0.000000e+00> : vector<64x128xf32>
    %37 = tpu.matmul %34, %36, %cst_21 {dimension_numbers = #tpu.dot_dimension_numbers<[1], [0], [0], [1], [0, 0, 1, 1], [], []>} : vector<64x128xbf16>, vector<128x128xbf16>, vector<64x128xf32> -> vector<64x128xf32>
    %38 = arith.addf %32, %37 : vector<64x128xf32>
    %39 = vector.extract_strided_slice %1 {offsets = [2, 0, 0], sizes = [8, 8, 128], strides = [1, 1, 1]} : vector<10x10x128xbf16> to vector<8x8x128xbf16>
    %40 = vector.shape_cast %39 : vector<8x8x128xbf16> to vector<64x128xbf16>
    %c6 = arith.constant 6 : index
    %c0_22 = arith.constant 0 : index
    %c0_23 = arith.constant 0 : index
    %41 = vector.load %arg3[%c6, %c0_22, %c0_23] : memref<9x128x128xbf16, #tpu.memory_space<vmem>>, vector<1x128x128xbf16>
    %42 = vector.shape_cast %41 : vector<1x128x128xbf16> to vector<128x128xbf16>
    %cst_24 = arith.constant dense<0.000000e+00> : vector<64x128xf32>
    %43 = tpu.matmul %40, %42, %cst_24 {dimension_numbers = #tpu.dot_dimension_numbers<[1], [0], [0], [1], [0, 0, 1, 1], [], []>} : vector<64x128xbf16>, vector<128x128xbf16>, vector<64x128xf32> -> vector<64x128xf32>
    %44 = arith.addf %38, %43 : vector<64x128xf32>
    %45 = vector.extract_strided_slice %1 {offsets = [2, 1, 0], sizes = [8, 8, 128], strides = [1, 1, 1]} : vector<10x10x128xbf16> to vector<8x8x128xbf16>
    %46 = vector.shape_cast %45 : vector<8x8x128xbf16> to vector<64x128xbf16>
    %c7 = arith.constant 7 : index
    %c0_25 = arith.constant 0 : index
    %c0_26 = arith.constant 0 : index
    %47 = vector.load %arg3[%c7, %c0_25, %c0_26] : memref<9x128x128xbf16, #tpu.memory_space<vmem>>, vector<1x128x128xbf16>
    %48 = vector.shape_cast %47 : vector<1x128x128xbf16> to vector<128x128xbf16>
    %cst_27 = arith.constant dense<0.000000e+00> : vector<64x128xf32>
    %49 = tpu.matmul %46, %48, %cst_27 {dimension_numbers = #tpu.dot_dimension_numbers<[1], [0], [0], [1], [0, 0, 1, 1], [], []>} : vector<64x128xbf16>, vector<128x128xbf16>, vector<64x128xf32> -> vector<64x128xf32>
    %50 = arith.addf %44, %49 : vector<64x128xf32>
    %51 = vector.extract_strided_slice %1 {offsets = [2, 2, 0], sizes = [8, 8, 128], strides = [1, 1, 1]} : vector<10x10x128xbf16> to vector<8x8x128xbf16>
    %52 = vector.shape_cast %51 : vector<8x8x128xbf16> to vector<64x128xbf16>
    %c8 = arith.constant 8 : index
    %c0_28 = arith.constant 0 : index
    %c0_29 = arith.constant 0 : index
    %53 = vector.load %arg3[%c8, %c0_28, %c0_29] : memref<9x128x128xbf16, #tpu.memory_space<vmem>>, vector<1x128x128xbf16>
    %54 = vector.shape_cast %53 : vector<1x128x128xbf16> to vector<128x128xbf16>
    %cst_30 = arith.constant dense<0.000000e+00> : vector<64x128xf32>
    %55 = tpu.matmul %52, %54, %cst_30 {dimension_numbers = #tpu.dot_dimension_numbers<[1], [0], [0], [1], [0, 0, 1, 1], [], []>} : vector<64x128xbf16>, vector<128x128xbf16>, vector<64x128xf32> -> vector<64x128xf32>
    %56 = arith.addf %50, %55 : vector<64x128xf32>
    %c0_31 = arith.constant 0 : index
    %c0_32 = arith.constant 0 : index
    %57 = vector.load %arg4[%c0_31, %c0_32] : memref<1x128xf32, #tpu.memory_space<vmem>>, vector<1x128xf32>
    %58 = vector.broadcast %57 : vector<1x128xf32> to vector<64x128xf32>
    %59 = arith.addf %56, %58 : vector<64x128xf32>
    %60 = vector.shape_cast %59 : vector<64x128xf32> to vector<8x8x128xf32>
    %61 = arith.truncf %60 : vector<8x8x128xf32> to vector<8x8x128xbf16>
    %c0_33 = arith.constant 0 : index
    %c0_34 = arith.constant 0 : index
    %c0_35 = arith.constant 0 : index
    %c0_36 = arith.constant 0 : index
    %62 = vector.load %arg5[%c0_33, %c0_34, %c0_35, %c0_36] : memref<1x8x8x128xbf16, #tpu.memory_space<vmem>>, vector<1x8x8x128xbf16>
    %63 = vector.shape_cast %62 : vector<1x8x8x128xbf16> to vector<8x8x128xbf16>
    %64 = vector.shape_cast %61 : vector<8x8x128xbf16> to vector<1x8x8x128xbf16>
    tpu.vector_store %arg5[%c0_33, %c0_34, %c0_35, %c0_36], %64 {strides = array<i32>} : memref<1x8x8x128xbf16, #tpu.memory_space<vmem>>, vector<1x8x8x128xbf16>,
    return
  }
  func.func @transform_0(%arg0: i32, %arg1: i32) -> (i32, i32, i32, i32) {
    %c1_i32 = arith.constant 1 : i32
    %0 = arith.muli %arg0, %c1_i32 : i32
    %1 = arith.addi %0, %arg1 : i32
    %c0_i32 = arith.constant 0 : i32
    %c0_i32_0 = arith.constant 0 : i32
    %c0_i32_1 = arith.constant 0 : i32
    %c0_i32_2 = arith.constant 0 : i32
    return %1, %c0_i32, %c0_i32_0, %c0_i32_1 : i32, i32, i32, i32
  }
  func.func @transform_1(%arg0: i32, %arg1: i32) -> (i32, i32, i32) {
    %c0_i32 = arith.constant 0 : i32
    %c0_i32_0 = arith.constant 0 : i32
    %c0_i32_1 = arith.constant 0 : i32
    %c0_i32_2 = arith.constant 0 : i32
    return %c0_i32, %c0_i32_0, %c0_i32_1 : i32, i32, i32
  }
  func.func @transform_2(%arg0: i32, %arg1: i32) -> (i32, i32) {
    %c0_i32 = arith.constant 0 : i32
    %c0_i32_0 = arith.constant 0 : i32
    %c0_i32_1 = arith.constant 0 : i32
    return %c0_i32, %c0_i32_0 : i32, i32
  }
  func.func @transform_3(%arg0: i32, %arg1: i32) -> (i32, i32, i32, i32) {
    %c0_i32 = arith.constant 0 : i32
    %c0_i32_0 = arith.constant 0 : i32
    %c0_i32_1 = arith.constant 0 : i32
    return %arg0, %arg1, %c0_i32, %c0_i32_0 : i32, i32, i32, i32
  }
}

module attributes {stable_mosaic.version = 11 : i64} {
  func.func @_layer_loss_kernel(%arg0: i32, %arg1: i32, %arg2: memref<1x256x64xbf16, #tpu.memory_space<vmem>>, %arg3: memref<1x256x64xbf16, #tpu.memory_space<vmem>>, %arg4: memref<1x8x128xf32, #tpu.memory_space<vmem>>, %arg5: memref<1x8x128xf32, #tpu.memory_space<vmem>>, %arg6: memref<1x64xf32, #tpu.memory_space<vmem>>, %arg7: memref<64x64xf32, #tpu.memory_space<vmem>>, %arg8: memref<64x64xf32, #tpu.memory_space<vmem>>) attributes {dimension_semantics = [#tpu.dimension_semantics<parallel>, #tpu.dimension_semantics<arbitrary>], iteration_bounds = array<i64: 2, 1>, scalar_prefetch = 0 : i64, scratch_operands = 3 : i64, tpu.core_type = #tpu.core_type<tc>, window_params = [{transform_indices = @transform_0, window_bounds = array<i64: 1, 256, 64>}, {transform_indices = @transform_1, window_bounds = array<i64: 1, 256, 64>}, {transform_indices = @transform_2, window_bounds = array<i64: 1, 8, 128>}, {transform_indices = @transform_3, window_bounds = array<i64: 1, 8, 128>}]} {
    %c0 = arith.constant 0 : index
    %c0_0 = arith.constant 0 : index
    %c0_1 = arith.constant 0 : index
    %0 = vector.load %arg2[%c0, %c0_0, %c0_1] : memref<1x256x64xbf16, #tpu.memory_space<vmem>>, vector<1x256x64xbf16>
    %1 = vector.shape_cast %0 : vector<1x256x64xbf16> to vector<256x64xbf16>
    %c0_2 = arith.constant 0 : index
    %c0_3 = arith.constant 0 : index
    %c0_4 = arith.constant 0 : index
    %2 = vector.load %arg3[%c0_2, %c0_3, %c0_4] : memref<1x256x64xbf16, #tpu.memory_space<vmem>>, vector<1x256x64xbf16>
    %3 = vector.shape_cast %2 : vector<1x256x64xbf16> to vector<256x64xbf16>
    %c0_i32 = arith.constant 0 : i32
    %4 = arith.cmpi eq, %arg1, %c0_i32 : i32
    %5 = arith.extui %4 : i1 to i32
    %c0_i32_5 = arith.constant 0 : i32
    %6 = arith.cmpi ne, %5, %c0_i32_5 : i32
    scf.if %6 {
      %cst_26 = arith.constant 0.000000e+00 : f32
      %33 = vector.broadcast %cst_26 : f32 to vector<1x64xf32>
      %c0_27 = arith.constant 0 : index
      %c0_28 = arith.constant 0 : index
      %34 = vector.load %arg6[%c0_27, %c0_28] : memref<1x64xf32, #tpu.memory_space<vmem>>, vector<1x64xf32>
      tpu.vector_store %arg6[%c0_27, %c0_28], %33 {strides = array<i32>} : memref<1x64xf32, #tpu.memory_space<vmem>>, vector<1x64xf32>,
    } else {
    }
    %7 = arith.extf %1 : vector<256x64xbf16> to vector<256x64xf32>
    %8 = arith.extf %3 : vector<256x64xbf16> to vector<256x64xf32>
    %9 = arith.subf %7, %8 : vector<256x64xf32>
    %10 = math.absf %9 : vector<256x64xf32>
    %c0_6 = arith.constant 0 : index
    %c0_7 = arith.constant 0 : index
    %11 = vector.load %arg6[%c0_6, %c0_7] : memref<1x64xf32, #tpu.memory_space<vmem>>, vector<1x64xf32>
    %cst = arith.constant dense<0.000000e+00> : vector<64xf32>
    %12 = vector.multi_reduction <add>, %10, %cst [0] : vector<256x64xf32> to vector<64xf32>
    %13 = vector.shape_cast %12 : vector<64xf32> to vector<1x64xf32>
    %14 = arith.addf %11, %13 : vector<1x64xf32>
    %c0_8 = arith.constant 0 : index
    %c0_9 = arith.constant 0 : index
    %15 = vector.load %arg6[%c0_8, %c0_9] : memref<1x64xf32, #tpu.memory_space<vmem>>, vector<1x64xf32>
    tpu.vector_store %arg6[%c0_8, %c0_9], %14 {strides = array<i32>} : memref<1x64xf32, #tpu.memory_space<vmem>>, vector<1x64xf32>,
    %c0_i32_10 = arith.constant 0 : i32
    %16 = arith.cmpi eq, %arg1, %c0_i32_10 : i32
    %17 = arith.extui %16 : i1 to i32
    %c0_i32_11 = arith.constant 0 : i32
    %18 = arith.cmpi ne, %17, %c0_i32_11 : i32
    scf.if %18 {
      %c0_26 = arith.constant 0 : index
      %c0_27 = arith.constant 0 : index
      %33 = vector.load %arg6[%c0_26, %c0_27] : memref<1x64xf32, #tpu.memory_space<vmem>>, vector<1x64xf32>
      %34 = vector.shape_cast %33 : vector<1x64xf32> to vector<1x1x64xf32>
      %cst_28 = arith.constant dense<0.000000e+00> : vector<1xf32>
      %35 = vector.multi_reduction <add>, %34, %cst_28 [1, 2] : vector<1x1x64xf32> to vector<1xf32>
      %36 = vector.shape_cast %35 : vector<1xf32> to vector<1x1x1xf32>
      %37 = vector.extract %36[0, 0, 0] : f32 from vector<1x1x1xf32>
      %38 = vector.broadcast %37 : f32 to vector<1x8x128xf32>
      %c0_29 = arith.constant 0 : index
      %c0_30 = arith.constant 0 : index
      %c0_31 = arith.constant 0 : index
      %39 = vector.load %arg4[%c0_29, %c0_30, %c0_31] : memref<1x8x128xf32, #tpu.memory_space<vmem>>, vector<1x8x128xf32>
      tpu.vector_store %arg4[%c0_29, %c0_30, %c0_31], %38 {strides = array<i32>} : memref<1x8x128xf32, #tpu.memory_space<vmem>>, vector<1x8x128xf32>,
    } else {
    }
    %c0_i32_12 = arith.constant 0 : i32
    %19 = arith.cmpi eq, %arg1, %c0_i32_12 : i32
    %20 = arith.extui %19 : i1 to i32
    %c0_i32_13 = arith.constant 0 : i32
    %21 = arith.cmpi ne, %20, %c0_i32_13 : i32
    scf.if %21 {
      %cst_26 = arith.constant 0.000000e+00 : f32
      %33 = vector.broadcast %cst_26 : f32 to vector<64x64xf32>
      %c0_27 = arith.constant 0 : index
      %c0_28 = arith.constant 0 : index
      %34 = vector.load %arg7[%c0_27, %c0_28] : memref<64x64xf32, #tpu.memory_space<vmem>>, vector<64x64xf32>
      tpu.vector_store %arg7[%c0_27, %c0_28], %33 {strides = array<i32>} : memref<64x64xf32, #tpu.memory_space<vmem>>, vector<64x64xf32>,
      %cst_29 = arith.constant 0.000000e+00 : f32
      %35 = vector.broadcast %cst_29 : f32 to vector<64x64xf32>
      %c0_30 = arith.constant 0 : index
      %c0_31 = arith.constant 0 : index
      %36 = vector.load %arg8[%c0_30, %c0_31] : memref<64x64xf32, #tpu.memory_space<vmem>>, vector<64x64xf32>
      tpu.vector_store %arg8[%c0_30, %c0_31], %35 {strides = array<i32>} : memref<64x64xf32, #tpu.memory_space<vmem>>, vector<64x64xf32>,
    } else {
    }
    %c0_14 = arith.constant 0 : index
    %c0_15 = arith.constant 0 : index
    %22 = vector.load %arg7[%c0_14, %c0_15] : memref<64x64xf32, #tpu.memory_space<vmem>>, vector<64x64xf32>
    %cst_16 = arith.constant dense<0.000000e+00> : vector<64x64xf32>
    %23 = tpu.matmul %1, %1, %cst_16 {dimension_numbers = #tpu.dot_dimension_numbers<[0], [0], [1], [1], [0, 1, 1, 1], [], []>} : vector<256x64xbf16>, vector<256x64xbf16>, vector<64x64xf32> -> vector<64x64xf32>
    %24 = arith.addf %22, %23 : vector<64x64xf32>
    %c0_17 = arith.constant 0 : index
    %c0_18 = arith.constant 0 : index
    %25 = vector.load %arg7[%c0_17, %c0_18] : memref<64x64xf32, #tpu.memory_space<vmem>>, vector<64x64xf32>
    tpu.vector_store %arg7[%c0_17, %c0_18], %24 {strides = array<i32>} : memref<64x64xf32, #tpu.memory_space<vmem>>, vector<64x64xf32>,
    %c0_19 = arith.constant 0 : index
    %c0_20 = arith.constant 0 : index
    %26 = vector.load %arg8[%c0_19, %c0_20] : memref<64x64xf32, #tpu.memory_space<vmem>>, vector<64x64xf32>
    %cst_21 = arith.constant dense<0.000000e+00> : vector<64x64xf32>
    %27 = tpu.matmul %3, %3, %cst_21 {dimension_numbers = #tpu.dot_dimension_numbers<[0], [0], [1], [1], [0, 1, 1, 1], [], []>} : vector<256x64xbf16>, vector<256x64xbf16>, vector<64x64xf32> -> vector<64x64xf32>
    %28 = arith.addf %26, %27 : vector<64x64xf32>
    %c0_22 = arith.constant 0 : index
    %c0_23 = arith.constant 0 : index
    %29 = vector.load %arg8[%c0_22, %c0_23] : memref<64x64xf32, #tpu.memory_space<vmem>>, vector<64x64xf32>
    tpu.vector_store %arg8[%c0_22, %c0_23], %28 {strides = array<i32>} : memref<64x64xf32, #tpu.memory_space<vmem>>, vector<64x64xf32>,
    %c0_i32_24 = arith.constant 0 : i32
    %30 = arith.cmpi eq, %arg1, %c0_i32_24 : i32
    %31 = arith.extui %30 : i1 to i32
    %c0_i32_25 = arith.constant 0 : i32
    %32 = arith.cmpi ne, %31, %c0_i32_25 : i32
    scf.if %32 {
      %c0_26 = arith.constant 0 : index
      %c0_27 = arith.constant 0 : index
      %33 = vector.load %arg7[%c0_26, %c0_27] : memref<64x64xf32, #tpu.memory_space<vmem>>, vector<64x64xf32>
      %c0_28 = arith.constant 0 : index
      %c0_29 = arith.constant 0 : index
      %34 = vector.load %arg8[%c0_28, %c0_29] : memref<64x64xf32, #tpu.memory_space<vmem>>, vector<64x64xf32>
      %35 = arith.subf %33, %34 : vector<64x64xf32>
      %cst_30 = arith.constant 6.10351563E-5 : f32
      %36 = vector.broadcast %cst_30 : f32 to vector<64x64xf32>
      %37 = arith.mulf %35, %36 : vector<64x64xf32>
      %38 = math.absf %37 : vector<64x64xf32>
      %39 = vector.shape_cast %38 : vector<64x64xf32> to vector<1x64x64xf32>
      %cst_31 = arith.constant dense<0.000000e+00> : vector<1xf32>
      %40 = vector.multi_reduction <add>, %39, %cst_31 [1, 2] : vector<1x64x64xf32> to vector<1xf32>
      %41 = vector.shape_cast %40 : vector<1xf32> to vector<1x1x1xf32>
      %42 = vector.extract %41[0, 0, 0] : f32 from vector<1x1x1xf32>
      %43 = vector.broadcast %42 : f32 to vector<1x8x128xf32>
      %c0_32 = arith.constant 0 : index
      %c0_33 = arith.constant 0 : index
      %c0_34 = arith.constant 0 : index
      %44 = vector.load %arg5[%c0_32, %c0_33, %c0_34] : memref<1x8x128xf32, #tpu.memory_space<vmem>>, vector<1x8x128xf32>
      tpu.vector_store %arg5[%c0_32, %c0_33, %c0_34], %43 {strides = array<i32>} : memref<1x8x128xf32, #tpu.memory_space<vmem>>, vector<1x8x128xf32>,
    } else {
    }
    return
  }
  func.func @transform_0(%arg0: i32, %arg1: i32) -> (i32, i32, i32) {
    %c0_i32 = arith.constant 0 : i32
    %c0_i32_0 = arith.constant 0 : i32
    return %arg0, %arg1, %c0_i32 : i32, i32, i32
  }
  func.func @transform_1(%arg0: i32, %arg1: i32) -> (i32, i32, i32) {
    %c2_i32 = arith.constant 2 : i32
    %0 = arith.addi %arg0, %c2_i32 : i32
    %c0_i32 = arith.constant 0 : i32
    %c0_i32_0 = arith.constant 0 : i32
    return %0, %arg1, %c0_i32 : i32, i32, i32
  }
  func.func @transform_2(%arg0: i32, %arg1: i32) -> (i32, i32, i32) {
    %c0_i32 = arith.constant 0 : i32
    %c0_i32_0 = arith.constant 0 : i32
    %c0_i32_1 = arith.constant 0 : i32
    return %arg0, %c0_i32, %c0_i32_0 : i32, i32, i32
  }
  func.func @transform_3(%arg0: i32, %arg1: i32) -> (i32, i32, i32) {
    %c0_i32 = arith.constant 0 : i32
    %c0_i32_0 = arith.constant 0 : i32
    %c0_i32_1 = arith.constant 0 : i32
    return %arg0, %c0_i32, %c0_i32_0 : i32, i32, i32
  }
}

</mosaic_0001>

<llo_original>
// kernel: a_call__.6
$region0: #{a_call__.6}
  #allocation0 [shape = 'u32[]', space=smem, size = 0x4, offset = 0x4, fixed_abs, tag = 'smem constant byte address 0x4 - core index']
  #allocation1 [shape = 'u32[144,128]{1,0:T(1,128)}', space=vmem, size = 0x12000, scoped, tag = 'internal scratch']
  %s0 = inlined_call_operand.vmem [shape: bf16[4,16,16,27], index: 0, kind: input, shape index: {}]
  %s1 = inlined_call_operand.vmem [shape: bf16[27,64], index: 1, kind: input, shape index: {}]
  %s2 = inlined_call_operand.vmem [shape: f32[1,64], index: 2, kind: input, shape index: {}]
  %s3 = inlined_call_operand.vmem [shape: bf16[4,16,16,64], index: 3, kind: output, shape index: {}]
  %s4 = sld [smem:[#allocation0]]
  $region45: #{a_call__.6} parent=0
    _
  %s6 = ssub.s32 1, %s4
  %s7 = scalar_select 0, %s6, %s4
  loop: start=0, step=1, limit=6
  $region2: #{a_call__.6} parent=0 // loop_pre_header
    _
  $region3: #{a_call__.6} parent=0 // loop_header
    %s9 = sphi 0, %s13
    %p10 = scmp.ge.s32.totalorder %s9, 6
    %s16 = sphi 0, %s28
    %s17 = sphi 0, %s24
    %s18 = sphi 0, %s16
    %s19 = sphi 0, %s17
    %s20 = sphi 0, %s18
    %s21 = sphi 0, %s19
    %s33 = sphi 0, %s35
    %s36 = sphi 0, %s33
    %s37 = sphi 0, %s36
    %s53 = sphi 0, %s37
    %s57 = sphi 0, %s57
    %s59 = sphi 0, %s57
    %s60 = sphi 0, %s59
    %s74 = sphi 0, %s60
    %s78 = sphi 0, %s78
    %s80 = sphi 0, %s78
    %s81 = sphi 0, %s80
    %s95 = sphi 0, %s81
    %s103 = sphi 0, %s105
    %s106 = sphi 0, %s103
    %s107 = sphi 0, %s106
    %s123 = sphi 0, %s107
  $region4: #{a_call__.6} parent=0 // loop_header_branch
    %12 = sbr.rel (%p10) target = $region8
  $region5: #{a_call__.6} parent=0 // loop_body
    %s14 = ssub.s32 %s9, 1
    %s15 = ssub.s32 %s9, 2
    %s22 = sadd.s32 1, %s17
    %p23 = scmp.ge.s32.totalorder %s22, 1
    %s24 = scalar_select %p23, 0, %s22
    %s25 = sadd.s32 1, %s16
    %s26 = scalar_select %p23, %s25, %s16
    %p27 = scmp.ge.s32.totalorder %s26, 4
    %s28 = scalar_select %p27, 0, %s26
    %s29 = ssub.s32 %s16, %s28
    %s30 = ssub.s32 %s17, %s24
    %s31 = sor.u32 %s29, %s30
    %p32 = scmp.eq.s32.totalorder %s31, 0
    %s34 = sadd.s32 %s33, 1
    %s35 = scalar_select %p32, %s33, %s34
    %p38 = pneg %p32
    %p39 = scmp.eq.s32.totalorder %s9, 3
    %p40 = por %p38, %p39
    %p41 = scmp.ne.s32.totalorder %s33, %s36
    %p42 = scmp.eq.s32.totalorder %s9, 0
    %p43 = por %p41, %p42
    %p44 = scmp.ne.s32.totalorder %s33, %s36
    %p45 = scmp.eq.s32.totalorder %s14, 3
    %p46 = por %p44, %p45
    %p47 = scmp.ne.s32.totalorder %s36, %s37
    %p48 = scmp.eq.s32.totalorder %s14, 0
    %p49 = por %p47, %p48
    %p50 = scmp.ne.s32.totalorder %s36, %s37
    %p51 = scmp.eq.s32.totalorder %s15, 3
    %p52 = por %p50, %p51
    %p54 = scmp.ne.s32.totalorder %s37, %s53
    %p55 = scmp.eq.s32.totalorder %s15, 0
    %p56 = por %p54, %p55
    %s58 = sadd.s32 %s57, 1
    %p61 = scmp.eq.s32.totalorder %s9, 3
    %p62 = scmp.ne.s32.totalorder %s57, %s59
    %p63 = scmp.eq.s32.totalorder %s9, 0
    %p64 = por %p62, %p63
    %p65 = scmp.ne.s32.totalorder %s57, %s59
    %p66 = scmp.eq.s32.totalorder %s14, 3
    %p67 = por %p65, %p66
    %p68 = scmp.ne.s32.totalorder %s59, %s60
    %p69 = scmp.eq.s32.totalorder %s14, 0
    %p70 = por %p68, %p69
    %p71 = scmp.ne.s32.totalorder %s59, %s60
    %p72 = scmp.eq.s32.totalorder %s15, 3
    %p73 = por %p71, %p72
    %p75 = scmp.ne.s32.totalorder %s60, %s74
    %p76 = scmp.eq.s32.totalorder %s15, 0
    %p77 = por %p75, %p76
    %s79 = sadd.s32 %s78, 1
    %p82 = scmp.eq.s32.totalorder %s9, 3
    %p83 = scmp.ne.s32.totalorder %s78, %s80
    %p84 = scmp.eq.s32.totalorder %s9, 0
    %p85 = por %p83, %p84
    %p86 = scmp.ne.s32.totalorder %s78, %s80
    %p87 = scmp.eq.s32.totalorder %s14, 3
    %p88 = por %p86, %p87
    %p89 = scmp.ne.s32.totalorder %s80, %s81
    %p90 = scmp.eq.s32.totalorder %s14, 0
    %p91 = por %p89, %p90
    %p92 = scmp.ne.s32.totalorder %s80, %s81
    %p93 = scmp.eq.s32.totalorder %s15, 3
    %p94 = por %p92, %p93
    %p96 = scmp.ne.s32.totalorder %s81, %s95
    %p97 = scmp.eq.s32.totalorder %s15, 0
    %p98 = por %p96, %p97
    %s99 = ssub.s32 %s16, %s28
    %s100 = ssub.s32 %s17, %s24
    %s101 = sor.u32 %s99, %s100
    %p102 = scmp.eq.s32.totalorder %s101, 0
    %s104 = sadd.s32 %s103, 1
    %s105 = scalar_select %p102, %s103, %s104
    %p108 = pneg %p102
    %p109 = scmp.eq.s32.totalorder %s9, 3
    %p110 = por %p108, %p109
    %p111 = scmp.ne.s32.totalorder %s103, %s106
    %p112 = scmp.eq.s32.totalorder %s9, 0
    %p113 = por %p111, %p112
    %p114 = scmp.ne.s32.totalorder %s103, %s106
    %p115 = scmp.eq.s32.totalorder %s14, 3
    %p116 = por %p114, %p115
    %p117 = scmp.ne.s32.totalorder %s106, %s107
    %p118 = scmp.eq.s32.totalorder %s14, 0
    %p119 = por %p117, %p118
    %p120 = scmp.ne.s32.totalorder %s106, %s107
    %p121 = scmp.eq.s32.totalorder %s15, 3
    %p122 = por %p120, %p121
    %p124 = scmp.ne.s32.totalorder %s107, %s123
    %p125 = scmp.eq.s32.totalorder %s15, 0
    %p126 = por %p124, %p125
    %p127 = scmp.le.s32.totalorder 1, %s9
    %p128 = scmp.lt.s32.totalorder %s9, 5
    %p129 = pnand %p127, %p128
    %p130 = pneg %p129
    // Predicated region
    $region9: #{a_call__.6} parent=5 // pred_check
      _
    $region10: #{a_call__.6} parent=5 // pred_check_branch
      %132 = sbr.rel (%p129) target = $region12
    $region11: #{a_call__.6} parent=5 // pred_region
      %s133 = ssub.s32 %s9, 1
      // Predicated region
      $region13: #{a_call__.6} parent=11 // pred_check
        %p134 = pneg %p70
      $region14: #{a_call__.6} parent=11 // pred_check_branch
        %136 = sbr.rel (%p134) target = $region16
      $region15: #{a_call__.6} parent=11 // pred_region
        _
      $region16: #{a_call__.6} parent=11 // pred_fallthru
        _
      // Predicated region
      $region17: #{a_call__.6} parent=11 // pred_check
        %p137 = pneg %p91
      $region18: #{a_call__.6} parent=11 // pred_check_branch
        %139 = sbr.rel (%p137) target = $region20
      $region19: #{a_call__.6} parent=11 // pred_region
        _
      $region20: #{a_call__.6} parent=11 // pred_fallthru
        _
    $region12: #{a_call__.6} parent=5 // pred_fallthru
      _
    %p140 = scmp.lt.s32.totalorder %s9, 4
    // Predicated region
    $region21: #{a_call__.6} parent=5 // pred_check
      %p141 = pneg %p140
    $region22: #{a_call__.6} parent=5 // pred_check_branch
      %143 = sbr.rel (%p141) target = $region24
    $region23: #{a_call__.6} parent=5 // pred_region
      // Predicated region
      $region25: #{a_call__.6} parent=23 // pred_check
        %p144 = pneg %p43
      $region26: #{a_call__.6} parent=23 // pred_check_branch
        %146 = sbr.rel (%p144) target = $region28
      $region27: #{a_call__.6} parent=23 // pred_region
        %s147 = smul.u32 16, %s17
        %p148 = scmp.lt.s32.totalorder %s16, 3
        %s149 = scalar_select %p148, %s16, 3
        %p150 = scmp.lt.s32.totalorder %s147, 15
        %s151 = scalar_select %p150, %s147, 15
        %s152 = smul.addr %s151, 2
        %s153 = smul.addr %s149, 32
        %s154 = sadd.s32 %s152, %s153
        %s155 = smul.addr %s154, 4
        %s156 = scalar_lea.vmem %s0, %s155
        %s157 = smul.u32 16, %s17
      $region28: #{a_call__.6} parent=23 // pred_fallthru
        _
    $region24: #{a_call__.6} parent=5 // pred_fallthru
      _
    %p158 = scmp.le.s32.totalorder 1, %s9
    %p159 = scmp.lt.s32.totalorder %s9, 5
    %p160 = pnand %p158, %p159
    %p161 = pneg %p160
    // Predicated region
    $region29: #{a_call__.6} parent=5 // pred_check
      _
    $region30: #{a_call__.6} parent=5 // pred_check_branch
      %163 = sbr.rel (%p160) target = $region32
    $region31: #{a_call__.6} parent=5 // pred_region
      %s164 = ssub.s32 %s9, 1
      %s165 = smul.u32 16, %s19
      %p166 = scmp.lt.s32.totalorder %s18, 3
      %s167 = scalar_select %p166, %s18, 3
      %p168 = scmp.lt.s32.totalorder %s165, 15
      %s169 = scalar_select %p168, %s165, 15
      %s170 = smul.addr %s169, 2
      %s171 = smul.addr %s167, 32
      %s172 = sadd.s32 %s170, %s171
      %s173 = smul.addr %s172, 4
      %s174 = scalar_lea.vmem %s0, %s173
      %p175 = pneg %p49
      %p176 = pneg %p46
      %p177 = pneg %p70
      %p178 = pneg %p67
      %p179 = pneg %p91
      %p180 = pneg %p88
      %p181 = pneg %p119
      %p182 = pneg %p116
      %s183 = smul.u32 16, %s19
      %p184 = scmp.lt.s32.totalorder %s18, 3
      %s185 = scalar_select %p184, %s18, 3
      %p186 = scmp.lt.s32.totalorder %s183, 15
      %s187 = scalar_select %p186, %s183, 15
      %s188 = smul.addr %s187, 2
      %s189 = smul.addr %s185, 32
      %s190 = sadd.s32 %s188, %s189
      %s191 = smul.addr %s190, 4
      %s192 = scalar_lea.vmem %s3, %s191
      %s193 = smul.u32 16, %s19
      %p194 = scmp.lt.s32.totalorder %s18, 3
      %s195 = scalar_select %p194, %s18, 3
      %p196 = scmp.lt.s32.totalorder %s193, 15
      %s197 = scalar_select %p196, %s193, 15
      %s198 = smul.addr %s197, 2
      %s199 = smul.addr %s195, 32
      %s200 = sadd.s32 %s198, %s199
      %s201 = smul.addr %s200, 4
      %s202 = scalar_lea.vmem %s0, %s201
      %s203 = smul.u32 16, %s19
      %s204 = smul.u32 16, %s19
      %p205 = scmp.lt.s32.totalorder %s18, 3
      %s206 = scalar_select %p205, %s18, 3
      %p207 = scmp.lt.s32.totalorder %s204, 15
      %s208 = scalar_select %p207, %s204, 15
      %s209 = smul.addr %s208, 2
      %s210 = smul.addr %s206, 32
      %s211 = sadd.s32 %s209, %s210
      %s212 = smul.addr %s211, 4
      %s213 = scalar_lea.vmem %s3, %s212
      %s214 = smul.u32 16, %s19
      %v216 = vld [vmem:[%s202] sm:$0xf]
      %v217 = vld [vmem:[%s202 + $0x4] sm:$0xf]
      %v218 = vld [vmem:[%s202 + $0x8] sm:$0xf]
      %v219 = vld [vmem:[%s202 + $0xc] sm:$0xf]
      %v220 = vld [vmem:[%s202 + $0x10] sm:$0xf]
      %v221 = vld [vmem:[%s202 + $0x14] sm:$0xf]
      %v222 = vld [vmem:[%s202 + $0x18] sm:$0xf]
      %v223 = vld [vmem:[%s202 + $0x1c] sm:$0xf]
      %v224 = vld [vmem:[%s202 + $0x20] sm:$0xf]
      %v225 = vld [vmem:[%s202 + $0x24] sm:$0xf]
      %v226 = vld [vmem:[%s202 + $0x28] sm:$0xf]
      %v227 = vld [vmem:[%s202 + $0x2c] sm:$0xf]
      %v228 = vld [vmem:[%s202 + $0x30] sm:$0xf]
      %v229 = vld [vmem:[%s202 + $0x34] sm:$0xf]
      %v230 = vld [vmem:[%s202 + $0x38] sm:$0xf]
      %v231 = vld [vmem:[%s202 + $0x3c] sm:$0xf]
      %v232 = vld [vmem:[%s202 + $0x40] sm:$0xf]
      %v233 = vld [vmem:[%s202 + $0x44] sm:$0xf]
      %v234 = vld [vmem:[%s202 + $0x48] sm:$0xf]
      %v235 = vld [vmem:[%s202 + $0x4c] sm:$0xf]
      %v236 = vld [vmem:[%s202 + $0x50] sm:$0xf]
      %v237 = vld [vmem:[%s202 + $0x54] sm:$0xf]
      %v238 = vld [vmem:[%s202 + $0x58] sm:$0xf]
      %v239 = vld [vmem:[%s202 + $0x5c] sm:$0xf]
      %v240 = vld [vmem:[%s202 + $0x60] sm:$0xf]
      %v241 = vld [vmem:[%s202 + $0x64] sm:$0xf]
      %v242 = vld [vmem:[%s202 + $0x68] sm:$0xf]
      %v243 = vld [vmem:[%s202 + $0x6c] sm:$0xf]
      %v244 = vld [vmem:[%s202 + $0x70] sm:$0xf]
      %v245 = vld [vmem:[%s202 + $0x74] sm:$0xf]
      %v246 = vld [vmem:[%s202 + $0x78] sm:$0xf]
      %v247 = vld [vmem:[%s202 + $0x7c] sm:$0xf]
      %v248 = vld [vmem:[%s1] sm:$0xf]
      %v249 = vld [vmem:[%s1 + $0x4] sm:$0xf]
      %v250 = vld [vmem:[%s1 + $0x8] sm:$0xf]
      %v251 = vld [vmem:[%s1 + $0xc] sm:$0x3]
      %v252 = vld [vmem:[%s2] sm:$0x1]
      %v254 = vlaneseq
      %v255 = vshrl.u32 %v254, 7
      %v256 = vsub.s32 0, %v255
      %v257 = vrot.slane %v252, %v256
      %v291 = vunpack.c.l.b16 %v216
      %v292 = vunpack.c.l.b16 %v217
      %v293 = vunpack.c.l.b16 %v218
      %v294 = vunpack.c.l.b16 %v219
      %v295 = vunpack.c.l.b16 %v220
      %v296 = vunpack.c.l.b16 %v221
      %v297 = vunpack.c.l.b16 %v222
      %v298 = vunpack.c.l.b16 %v223
      %v299 = vunpack.c.l.b16 %v224
      %v300 = vunpack.c.l.b16 %v225
      %v301 = vunpack.c.l.b16 %v226
      %v302 = vunpack.c.l.b16 %v227
      %v303 = vunpack.c.l.b16 %v228
      %v304 = vunpack.c.l.b16 %v229
      %v305 = vunpack.c.l.b16 %v230
      %v306 = vunpack.c.l.b16 %v231
      %v307 = vunpack.c.l.b16 %v232
      %v308 = vunpack.c.l.b16 %v233
      %v309 = vunpack.c.l.b16 %v234
      %v310 = vunpack.c.l.b16 %v235
      %v311 = vunpack.c.l.b16 %v236
      %v312 = vunpack.c.l.b16 %v237
      %v313 = vunpack.c.l.b16 %v238
      %v314 = vunpack.c.l.b16 %v239
      %v315 = vunpack.c.l.b16 %v240
      %v316 = vunpack.c.l.b16 %v241
      %v317 = vunpack.c.l.b16 %v242
      %v318 = vunpack.c.l.b16 %v243
      %v319 = vunpack.c.l.b16 %v244
      %v320 = vunpack.c.l.b16 %v245
      %v321 = vunpack.c.l.b16 %v246
      %v322 = vunpack.c.l.b16 %v247
      %v323 = vpack.c.b16 %v292, %v291
      %v324 = vpack.c.b16 %v294, %v293
      %v325 = vpack.c.b16 %v296, %v295
      %v326 = vpack.c.b16 %v298, %v297
      %v327 = vpack.c.b16 %v300, %v299
      %v328 = vpack.c.b16 %v302, %v301
      %v329 = vpack.c.b16 %v304, %v303
      %v330 = vpack.c.b16 %v306, %v305
      %v331 = vpack.c.b16 %v308, %v307
      %v332 = vpack.c.b16 %v310, %v309
      %v333 = vpack.c.b16 %v312, %v311
      %v334 = vpack.c.b16 %v314, %v313
      %v335 = vpack.c.b16 %v316, %v315
      %v336 = vpack.c.b16 %v318, %v317
      %v337 = vpack.c.b16 %v320, %v319
      %v338 = vpack.c.b16 %v322, %v321
      %v343 = vunpack.c.l.b16 %v248
      %v344 = vunpack.c.l.b16 %v249
      %v345 = vunpack.c.l.b16 %v250
      %v346 = vunpack.c.l.b16 %v251
      %v347 = vpack.c.b16 %v344, %v343
      %v348 = vpack.c.b16 %v346, %v345
      %vm350 = vcmask 220160
      %v352 = vsel %vm350, %v323, 0
      %v355 = vsel %vm350, %v324, 0
      %v358 = vsel %vm350, %v325, 0
      %v361 = vsel %vm350, %v326, 0
      %v364 = vsel %vm350, %v327, 0
      %v367 = vsel %vm350, %v328, 0
      %v370 = vsel %vm350, %v329, 0
      %v373 = vsel %vm350, %v330, 0
      %v376 = vsel %vm350, %v331, 0
      %v379 = vsel %vm350, %v332, 0
      %v382 = vsel %vm350, %v333, 0
      %v385 = vsel %vm350, %v334, 0
      %v388 = vsel %vm350, %v335, 0
      %v391 = vsel %vm350, %v336, 0
      %v394 = vsel %vm350, %v337, 0
      %v397 = vsel %vm350, %v338, 0
      %vm399 = vcmask 1044480
      %vm400 = vcmask 1045504
      %v401 = vsel %vm399, 4294967295, 65535
      %v402 = vsel %vm400, %v401, 0
      %v404 = vand.u32 %v348, %v402
      %406 = vmatprep.subr.bf16.mxu0 0
      %407 = vmatpush1.bf16.msra.mxu0 0
      %408 = vmatprep.subr.bf16.mxu0 0
      %409 = vmatpush1.bf16.msra.mxu0 0
      %410 = vmatprep.subr.bf16.mxu0 0
      %411 = vmatpush1.bf16.msra.mxu0 0
      %412 = vmatprep.subr.bf16.mxu0 0
      %413 = vmatpush1.bf16.msra.mxu0 0
      %414 = vmatprep.subr.bf16.mxu0 0
      %415 = vmatpush1.bf16.msra.mxu0 0
      %416 = vmatprep.subr.bf16.mxu0 0
      %417 = vmatpush1.bf16.msra.mxu0 0
      %418 = vmatprep.subr.bf16.mxu0 0
      %419 = vmatpush1.bf16.msra.mxu0 %v404
      %420 = vmatprep.subr.bf16.mxu0 0
      %421 = vmatpush1.bf16.msra.mxu0 %v347
      %422 = vmatprep.subr.bf16.mxu0 0
      %423 = vmatpush2.bf16.msra.mxu0 0
      %424 = vmatprep.subr.bf16.mxu0 0
      %425 = vmatpush2.bf16.msra.mxu0 0
      %426 = vmatprep.subr.bf16.mxu0 0
      %427 = vmatpush2.bf16.msra.mxu0 0
      %428 = vmatprep.subr.bf16.mxu0 0
      %429 = vmatpush2.bf16.msra.mxu0 0
      %430 = vmatprep.subr.bf16.mxu0 0
      %431 = vmatpush2.bf16.msra.mxu0 0
      %432 = vmatprep.subr.bf16.mxu0 0
      %433 = vmatpush2.bf16.msra.mxu0 0
      %434 = vmatprep.subr.bf16.mxu0 0
      %435 = vmatpush2.bf16.msra.mxu0 0
      %436 = vmatprep.subr.bf16.mxu0 0
      %437 = vmatpush2.bf16.msra.mxu0 0
      %438 = vmatprep.mubr.bf16.mxu0 0
      %439 = vmatmul.mubr.bf16.gmra.mxu0 %v352
      %v440 = vpop.f32.mrf.mxu0
      %v441 = vadd.f32 %v257, %v440
      %v442 = vpop.f32.mrf.mxu0
      %v443 = vpop.f32.mrf.mxu0
      %v444 = vadd.f32 %v257, %v443
      %v445 = vpop.f32.mrf.mxu0
      %446 = vmatprep.mubr.bf16.mxu0 0
      %447 = vmatmul.mubr.bf16.gmra.mxu0 %v355
      %v448 = vpop.f32.mrf.mxu0
      %v449 = vadd.f32 %v257, %v448
      %v450 = vpop.f32.mrf.mxu0
      %v451 = vpop.f32.mrf.mxu0
      %v452 = vadd.f32 %v257, %v451
      %v453 = vpop.f32.mrf.mxu0
      %454 = vmatprep.mubr.bf16.mxu0 0
      %455 = vmatmul.mubr.bf16.gmra.mxu0 %v358
      %v456 = vpop.f32.mrf.mxu0
      %v457 = vadd.f32 %v257, %v456
      %v458 = vpop.f32.mrf.mxu0
      %v459 = vpop.f32.mrf.mxu0
      %v460 = vadd.f32 %v257, %v459
      %v461 = vpop.f32.mrf.mxu0
      %462 = vmatprep.mubr.bf16.mxu0 0
      %463 = vmatmul.mubr.bf16.gmra.mxu0 %v361
      %v464 = vpop.f32.mrf.mxu0
      %v465 = vadd.f32 %v257, %v464
      %v466 = vpop.f32.mrf.mxu0
      %v467 = vpop.f32.mrf.mxu0
      %v468 = vadd.f32 %v257, %v467
      %v469 = vpop.f32.mrf.mxu0
      %470 = vmatprep.mubr.bf16.mxu0 0
      %471 = vmatmul.mubr.bf16.gmra.mxu0 %v364
      %v472 = vpop.f32.mrf.mxu0
      %v473 = vadd.f32 %v257, %v472
      %v474 = vpop.f32.mrf.mxu0
      %v475 = vpop.f32.mrf.mxu0
      %v476 = vadd.f32 %v257, %v475
      %v477 = vpop.f32.mrf.mxu0
      %478 = vmatprep.mubr.bf16.mxu0 0
      %479 = vmatmul.mubr.bf16.gmra.mxu0 %v367
      %v480 = vpop.f32.mrf.mxu0
      %v481 = vadd.f32 %v257, %v480
      %v482 = vpop.f32.mrf.mxu0
      %v483 = vpop.f32.mrf.mxu0
      %v484 = vadd.f32 %v257, %v483
      %v485 = vpop.f32.mrf.mxu0
      %486 = vmatprep.mubr.bf16.mxu0 0
      %487 = vmatmul.mubr.bf16.gmra.mxu0 %v370
      %v488 = vpop.f32.mrf.mxu0
      %v489 = vadd.f32 %v257, %v488
      %v490 = vpop.f32.mrf.mxu0
      %v491 = vpop.f32.mrf.mxu0
      %v492 = vadd.f32 %v257, %v491
      %v493 = vpop.f32.mrf.mxu0
      %494 = vmatprep.mubr.bf16.mxu0 0
      %495 = vmatmul.mubr.bf16.gmra.mxu0 %v373
      %v496 = vpop.f32.mrf.mxu0
      %v497 = vadd.f32 %v257, %v496
      %v498 = vpop.f32.mrf.mxu0
      %v499 = vpop.f32.mrf.mxu0
      %v500 = vadd.f32 %v257, %v499
      %v501 = vpop.f32.mrf.mxu0
      %502 = vmatprep.mubr.bf16.mxu0 0
      %503 = vmatmul.mubr.bf16.gmra.mxu0 %v376
      %v504 = vpop.f32.mrf.mxu0
      %v505 = vadd.f32 %v257, %v504
      %v506 = vpop.f32.mrf.mxu0
      %v507 = vpop.f32.mrf.mxu0
      %v508 = vadd.f32 %v257, %v507
      %v509 = vpop.f32.mrf.mxu0
      %510 = vmatprep.mubr.bf16.mxu0 0
      %511 = vmatmul.mubr.bf16.gmra.mxu0 %v379
      %v512 = vpop.f32.mrf.mxu0
      %v513 = vadd.f32 %v257, %v512
      %v514 = vpop.f32.mrf.mxu0
      %v515 = vpop.f32.mrf.mxu0
      %v516 = vadd.f32 %v257, %v515
      %v517 = vpop.f32.mrf.mxu0
      %518 = vmatprep.mubr.bf16.mxu0 0
      %519 = vmatmul.mubr.bf16.gmra.mxu0 %v382
      %v520 = vpop.f32.mrf.mxu0
      %v521 = vadd.f32 %v257, %v520
      %v522 = vpop.f32.mrf.mxu0
      %v523 = vpop.f32.mrf.mxu0
      %v524 = vadd.f32 %v257, %v523
      %v525 = vpop.f32.mrf.mxu0
      %526 = vmatprep.mubr.bf16.mxu0 0
      %527 = vmatmul.mubr.bf16.gmra.mxu0 %v385
      %v528 = vpop.f32.mrf.mxu0
      %v529 = vadd.f32 %v257, %v528
      %v530 = vpop.f32.mrf.mxu0
      %v531 = vpop.f32.mrf.mxu0
      %v532 = vadd.f32 %v257, %v531
      %v533 = vpop.f32.mrf.mxu0
      %534 = vmatprep.mubr.bf16.mxu0 0
      %535 = vmatmul.mubr.bf16.gmra.mxu0 %v388
      %v536 = vpop.f32.mrf.mxu0
      %v537 = vadd.f32 %v257, %v536
      %v538 = vpop.f32.mrf.mxu0
      %v539 = vpop.f32.mrf.mxu0
      %v540 = vadd.f32 %v257, %v539
      %v541 = vpop.f32.mrf.mxu0
      %542 = vmatprep.mubr.bf16.mxu0 0
      %543 = vmatmul.mubr.bf16.gmra.mxu0 %v391
      %v544 = vpop.f32.mrf.mxu0
      %v545 = vadd.f32 %v257, %v544
      %v546 = vpop.f32.mrf.mxu0
      %v547 = vpop.f32.mrf.mxu0
      %v548 = vadd.f32 %v257, %v547
      %v549 = vpop.f32.mrf.mxu0
      %550 = vmatprep.mubr.bf16.mxu0 0
      %551 = vmatmul.mubr.bf16.gmra.mxu0 %v394
      %v552 = vpop.f32.mrf.mxu0
      %v553 = vadd.f32 %v257, %v552
      %v554 = vpop.f32.mrf.mxu0
      %v555 = vpop.f32.mrf.mxu0
      %v556 = vadd.f32 %v257, %v555
      %v557 = vpop.f32.mrf.mxu0
      %558 = vmatprep.mubr.bf16.mxu0 0
      %559 = vmatmul.mubr.bf16.gmra.mxu0 %v397
      %v560 = vpop.f32.mrf.mxu0
      %v561 = vadd.f32 %v257, %v560
      %v562 = vpop.f32.mrf.mxu0
      %v563 = vpop.f32.mrf.mxu0
      %v564 = vadd.f32 %v257, %v563
      %v565 = vpop.f32.mrf.mxu0
      %566 = vdwg.mxu0
      %v567 = vmax.f32 %v441, 0.0
      %v568 = vmax.f32 %v444, 0.0
      %v569 = vmax.f32 %v449, 0.0
      %v570 = vmax.f32 %v452, 0.0
      %v571 = vmax.f32 %v457, 0.0
      %v572 = vmax.f32 %v460, 0.0
      %v573 = vmax.f32 %v465, 0.0
      %v574 = vmax.f32 %v468, 0.0
      %v575 = vmax.f32 %v473, 0.0
      %v576 = vmax.f32 %v476, 0.0
      %v577 = vmax.f32 %v481, 0.0
      %v578 = vmax.f32 %v484, 0.0
      %v579 = vmax.f32 %v489, 0.0
      %v580 = vmax.f32 %v492, 0.0
      %v581 = vmax.f32 %v497, 0.0
      %v582 = vmax.f32 %v500, 0.0
      %v583 = vmax.f32 %v505, 0.0
      %v584 = vmax.f32 %v508, 0.0
      %v585 = vmax.f32 %v513, 0.0
      %v586 = vmax.f32 %v516, 0.0
      %v587 = vmax.f32 %v521, 0.0
      %v588 = vmax.f32 %v524, 0.0
      %v589 = vmax.f32 %v529, 0.0
      %v590 = vmax.f32 %v532, 0.0
      %v591 = vmax.f32 %v537, 0.0
      %v592 = vmax.f32 %v540, 0.0
      %v593 = vmax.f32 %v545, 0.0
      %v594 = vmax.f32 %v548, 0.0
      %v595 = vmax.f32 %v553, 0.0
      %v596 = vmax.f32 %v556, 0.0
      %v597 = vmax.f32 %v561, 0.0
      %v598 = vmax.f32 %v564, 0.0
      %v599 = vpack.c.bf16 %v568, %v567
      %v600 = vpack.c.bf16 %v570, %v569
      %v601 = vpack.c.bf16 %v572, %v571
      %v602 = vpack.c.bf16 %v574, %v573
      %v603 = vpack.c.bf16 %v576, %v575
      %v604 = vpack.c.bf16 %v578, %v577
      %v605 = vpack.c.bf16 %v580, %v579
      %v606 = vpack.c.bf16 %v582, %v581
      %v607 = vpack.c.bf16 %v584, %v583
      %v608 = vpack.c.bf16 %v586, %v585
      %v609 = vpack.c.bf16 %v588, %v587
      %v610 = vpack.c.bf16 %v590, %v589
      %v611 = vpack.c.bf16 %v592, %v591
      %v612 = vpack.c.bf16 %v594, %v593
      %v613 = vpack.c.bf16 %v596, %v595
      %v614 = vpack.c.bf16 %v598, %v597
      %v631 = vunpack.c.l.b16 %v599
      %v632 = vunpack.c.h.b16 %v599
      %v633 = vunpack.c.l.b16 %v600
      %v634 = vunpack.c.h.b16 %v600
      %v635 = vunpack.c.l.b16 %v601
      %v636 = vunpack.c.h.b16 %v601
      %v637 = vunpack.c.l.b16 %v602
      %v638 = vunpack.c.h.b16 %v602
      %v639 = vunpack.c.l.b16 %v603
      %v640 = vunpack.c.h.b16 %v603
      %v641 = vunpack.c.l.b16 %v604
      %v642 = vunpack.c.h.b16 %v604
      %v643 = vunpack.c.l.b16 %v605
      %v644 = vunpack.c.h.b16 %v605
      %v645 = vunpack.c.l.b16 %v606
      %v646 = vunpack.c.h.b16 %v606
      %v647 = vunpack.c.l.b16 %v607
      %v648 = vunpack.c.h.b16 %v607
      %v649 = vunpack.c.l.b16 %v608
      %v650 = vunpack.c.h.b16 %v608
      %v651 = vunpack.c.l.b16 %v609
      %v652 = vunpack.c.h.b16 %v609
      %v653 = vunpack.c.l.b16 %v610
      %v654 = vunpack.c.h.b16 %v610
      %v655 = vunpack.c.l.b16 %v611
      %v656 = vunpack.c.h.b16 %v611
      %v657 = vunpack.c.l.b16 %v612
      %v658 = vunpack.c.h.b16 %v612
      %v659 = vunpack.c.l.b16 %v613
      %v660 = vunpack.c.h.b16 %v613
      %v661 = vunpack.c.l.b16 %v614
      %v662 = vunpack.c.h.b16 %v614
      %v663 = vpack.c.b16 %v631, %v631
      %v664 = vpack.c.b16 %v632, %v632
      %v665 = vpack.c.b16 %v633, %v633
      %v666 = vpack.c.b16 %v634, %v634
      %v667 = vpack.c.b16 %v635, %v635
      %v668 = vpack.c.b16 %v636, %v636
      %v669 = vpack.c.b16 %v637, %v637
      %v670 = vpack.c.b16 %v638, %v638
      %v671 = vpack.c.b16 %v639, %v639
      %v672 = vpack.c.b16 %v640, %v640
      %v673 = vpack.c.b16 %v641, %v641
      %v674 = vpack.c.b16 %v642, %v642
      %v675 = vpack.c.b16 %v643, %v643
      %v676 = vpack.c.b16 %v644, %v644
      %v677 = vpack.c.b16 %v645, %v645
      %v678 = vpack.c.b16 %v646, %v646
      %v679 = vpack.c.b16 %v647, %v647
      %v680 = vpack.c.b16 %v648, %v648
      %v681 = vpack.c.b16 %v649, %v649
      %v682 = vpack.c.b16 %v650, %v650
      %v683 = vpack.c.b16 %v651, %v651
      %v684 = vpack.c.b16 %v652, %v652
      %v685 = vpack.c.b16 %v653, %v653
      %v686 = vpack.c.b16 %v654, %v654
      %v687 = vpack.c.b16 %v655, %v655
      %v688 = vpack.c.b16 %v656, %v656
      %v689 = vpack.c.b16 %v657, %v657
      %v690 = vpack.c.b16 %v658, %v658
      %v691 = vpack.c.b16 %v659, %v659
      %v692 = vpack.c.b16 %v660, %v660
      %v693 = vpack.c.b16 %v661, %v661
      %v694 = vpack.c.b16 %v662, %v662
      %vm727 = vcmask 519168
      %728 = vst.msk [vmem:[%s213] sm:$0xf] %vm727, %v663
      %729 = vst.msk [vmem:[%s213 + $0x4] sm:$0xf] %vm727, %v664
      %730 = vst.msk [vmem:[%s213 + $0x8] sm:$0xf] %vm727, %v665
      %731 = vst.msk [vmem:[%s213 + $0xc] sm:$0xf] %vm727, %v666
      %732 = vst.msk [vmem:[%s213 + $0x10] sm:$0xf] %vm727, %v667
      %733 = vst.msk [vmem:[%s213 + $0x14] sm:$0xf] %vm727, %v668
      %734 = vst.msk [vmem:[%s213 + $0x18] sm:$0xf] %vm727, %v669
      %735 = vst.msk [vmem:[%s213 + $0x1c] sm:$0xf] %vm727, %v670
      %736 = vst.msk [vmem:[%s213 + $0x20] sm:$0xf] %vm727, %v671
      %737 = vst.msk [vmem:[%s213 + $0x24] sm:$0xf] %vm727, %v672
      %738 = vst.msk [vmem:[%s213 + $0x28] sm:$0xf] %vm727, %v673
      %739 = vst.msk [vmem:[%s213 + $0x2c] sm:$0xf] %vm727, %v674
      %740 = vst.msk [vmem:[%s213 + $0x30] sm:$0xf] %vm727, %v675
      %741 = vst.msk [vmem:[%s213 + $0x34] sm:$0xf] %vm727, %v676
      %742 = vst.msk [vmem:[%s213 + $0x38] sm:$0xf] %vm727, %v677
      %743 = vst.msk [vmem:[%s213 + $0x3c] sm:$0xf] %vm727, %v678
      %744 = vst.msk [vmem:[%s213 + $0x40] sm:$0xf] %vm727, %v679
      %745 = vst.msk [vmem:[%s213 + $0x44] sm:$0xf] %vm727, %v680
      %746 = vst.msk [vmem:[%s213 + $0x48] sm:$0xf] %vm727, %v681
      %747 = vst.msk [vmem:[%s213 + $0x4c] sm:$0xf] %vm727, %v682
      %748 = vst.msk [vmem:[%s213 + $0x50] sm:$0xf] %vm727, %v683
      %749 = vst.msk [vmem:[%s213 + $0x54] sm:$0xf] %vm727, %v684
      %750 = vst.msk [vmem:[%s213 + $0x58] sm:$0xf] %vm727, %v685
      %751 = vst.msk [vmem:[%s213 + $0x5c] sm:$0xf] %vm727, %v686
      %752 = vst.msk [vmem:[%s213 + $0x60] sm:$0xf] %vm727, %v687
      %753 = vst.msk [vmem:[%s213 + $0x64] sm:$0xf] %vm727, %v688
      %754 = vst.msk [vmem:[%s213 + $0x68] sm:$0xf] %vm727, %v689
      %755 = vst.msk [vmem:[%s213 + $0x6c] sm:$0xf] %vm727, %v690
      %756 = vst.msk [vmem:[%s213 + $0x70] sm:$0xf] %vm727, %v691
      %757 = vst.msk [vmem:[%s213 + $0x74] sm:$0xf] %vm727, %v692
      %758 = vst.msk [vmem:[%s213 + $0x78] sm:$0xf] %vm727, %v693
      %759 = vst.msk [vmem:[%s213 + $0x7c] sm:$0xf] %vm727, %v694
      %s760 = smul.u32 16, %s19
      %p761 = scmp.lt.s32.totalorder %s18, 3
      %s762 = scalar_select %p761, %s18, 3
      %p763 = scmp.lt.s32.totalorder %s760, 15
      %s764 = scalar_select %p763, %s760, 15
      %s765 = smul.addr %s764, 2
      %s766 = smul.addr %s762, 32
      %s767 = sadd.s32 %s765, %s766
      %s768 = smul.addr %s767, 4
      %s769 = scalar_lea.vmem %s3, %s768
      // Predicated region
      $region33: #{a_call__.6} parent=31 // pred_check
        %p770 = pneg %p116
      $region34: #{a_call__.6} parent=31 // pred_check_branch
        %772 = sbr.rel (%p770) target = $region36
      $region35: #{a_call__.6} parent=31 // pred_region
        %s773 = smul.u32 16, %s19
      $region36: #{a_call__.6} parent=31 // pred_fallthru
        _
    $region32: #{a_call__.6} parent=5 // pred_fallthru
      _
    %p774 = scmp.le.s32.totalorder 2, %s9
    // Predicated region
    $region37: #{a_call__.6} parent=5 // pred_check
      %p775 = pneg %p774
    $region38: #{a_call__.6} parent=5 // pred_check_branch
      %777 = sbr.rel (%p775) target = $region40
    $region39: #{a_call__.6} parent=5 // pred_region
      %s778 = ssub.s32 %s9, 2
      // Predicated region
      $region41: #{a_call__.6} parent=39 // pred_check
        %p779 = pneg %p122
      $region42: #{a_call__.6} parent=39 // pred_check_branch
        %781 = sbr.rel (%p779) target = $region44
      $region43: #{a_call__.6} parent=39 // pred_region
        %s782 = smul.u32 16, %s21
        %p783 = scmp.lt.s32.totalorder %s20, 3
        %s784 = scalar_select %p783, %s20, 3
        %p785 = scmp.lt.s32.totalorder %s782, 15
        %s786 = scalar_select %p785, %s782, 15
        %s787 = smul.addr %s786, 2
        %s788 = smul.addr %s784, 32
        %s789 = sadd.s32 %s787, %s788
        %s790 = smul.addr %s789, 4
        %s791 = scalar_lea.vmem %s3, %s790
      $region44: #{a_call__.6} parent=39 // pred_fallthru
        _
    $region40: #{a_call__.6} parent=5 // pred_fallthru
      _
  $region6: #{a_call__.6} parent=0 // loop_footer
    %s13 = sadd.s32 1, %s9
  $region7: #{a_call__.6} parent=0 // loop_footer_branch
    %8 = sbr.rel target = $region3
  $region8: #{a_call__.6} parent=0 // loop_exit
    _

// kernel: a_call__.8
$region0: #{a_call__.8}
  #allocation0 [shape = 'u32[]', space=smem, size = 0x4, offset = 0x4, fixed_abs, tag = 'smem constant byte address 0x4 - core index']
  #allocation1 [shape = 'u32[144,128]{1,0:T(1,128)}', space=vmem, size = 0x12000, scoped, tag = 'internal scratch']
  %s0 = inlined_call_operand.vmem [shape: bf16[4,10,10,64], index: 0, kind: input, shape index: {}]
  %s1 = inlined_call_operand.vmem [shape: bf16[9,64,128], index: 1, kind: input, shape index: {}]
  %s2 = inlined_call_operand.vmem [shape: f32[1,128], index: 2, kind: input, shape index: {}]
  %s3 = inlined_call_operand.vmem [shape: bf16[4,8,8,128], index: 3, kind: output, shape index: {}]
  %s4 = sld [smem:[#allocation0]]
  $region45: #{a_call__.8} parent=0
    _
  %s6 = ssub.s32 1, %s4
  %s7 = scalar_select 0, %s6, %s4
  loop: start=0, step=1, limit=6
  $region2: #{a_call__.8} parent=0 // loop_pre_header
    _
  $region3: #{a_call__.8} parent=0 // loop_header
    %s9 = sphi 0, %s13
    %p10 = scmp.ge.s32.totalorder %s9, 6
    %s16 = sphi 0, %s28
    %s17 = sphi 0, %s24
    %s18 = sphi 0, %s16
    %s19 = sphi 0, %s17
    %s20 = sphi 0, %s18
    %s21 = sphi 0, %s19
    %s33 = sphi 0, %s35
    %s36 = sphi 0, %s33
    %s37 = sphi 0, %s36
    %s53 = sphi 0, %s37
    %s57 = sphi 0, %s57
    %s59 = sphi 0, %s57
    %s60 = sphi 0, %s59
    %s74 = sphi 0, %s60
    %s78 = sphi 0, %s78
    %s80 = sphi 0, %s78
    %s81 = sphi 0, %s80
    %s95 = sphi 0, %s81
    %s103 = sphi 0, %s105
    %s106 = sphi 0, %s103
    %s107 = sphi 0, %s106
    %s123 = sphi 0, %s107
  $region4: #{a_call__.8} parent=0 // loop_header_branch
    %12 = sbr.rel (%p10) target = $region8
  $region5: #{a_call__.8} parent=0 // loop_body
    %s14 = ssub.s32 %s9, 1
    %s15 = ssub.s32 %s9, 2
    %s22 = sadd.s32 1, %s17
    %p23 = scmp.ge.s32.totalorder %s22, 1
    %s24 = scalar_select %p23, 0, %s22
    %s25 = sadd.s32 1, %s16
    %s26 = scalar_select %p23, %s25, %s16
    %p27 = scmp.ge.s32.totalorder %s26, 4
    %s28 = scalar_select %p27, 0, %s26
    %s29 = sadd.s32 %s16, %s17
    %s30 = sadd.s32 %s28, %s24
    %s31 = ssub.s32 %s29, %s30
    %p32 = scmp.eq.s32.totalorder %s31, 0
    %s34 = sadd.s32 %s33, 1
    %s35 = scalar_select %p32, %s33, %s34
    %p38 = pneg %p32
    %p39 = scmp.eq.s32.totalorder %s9, 3
    %p40 = por %p38, %p39
    %p41 = scmp.ne.s32.totalorder %s33, %s36
    %p42 = scmp.eq.s32.totalorder %s9, 0
    %p43 = por %p41, %p42
    %p44 = scmp.ne.s32.totalorder %s33, %s36
    %p45 = scmp.eq.s32.totalorder %s14, 3
    %p46 = por %p44, %p45
    %p47 = scmp.ne.s32.totalorder %s36, %s37
    %p48 = scmp.eq.s32.totalorder %s14, 0
    %p49 = por %p47, %p48
    %p50 = scmp.ne.s32.totalorder %s36, %s37
    %p51 = scmp.eq.s32.totalorder %s15, 3
    %p52 = por %p50, %p51
    %p54 = scmp.ne.s32.totalorder %s37, %s53
    %p55 = scmp.eq.s32.totalorder %s15, 0
    %p56 = por %p54, %p55
    %s58 = sadd.s32 %s57, 1
    %p61 = scmp.eq.s32.totalorder %s9, 3
    %p62 = scmp.ne.s32.totalorder %s57, %s59
    %p63 = scmp.eq.s32.totalorder %s9, 0
    %p64 = por %p62, %p63
    %p65 = scmp.ne.s32.totalorder %s57, %s59
    %p66 = scmp.eq.s32.totalorder %s14, 3
    %p67 = por %p65, %p66
    %p68 = scmp.ne.s32.totalorder %s59, %s60
    %p69 = scmp.eq.s32.totalorder %s14, 0
    %p70 = por %p68, %p69
    %p71 = scmp.ne.s32.totalorder %s59, %s60
    %p72 = scmp.eq.s32.totalorder %s15, 3
    %p73 = por %p71, %p72
    %p75 = scmp.ne.s32.totalorder %s60, %s74
    %p76 = scmp.eq.s32.totalorder %s15, 0
    %p77 = por %p75, %p76
    %s79 = sadd.s32 %s78, 1
    %p82 = scmp.eq.s32.totalorder %s9, 3
    %p83 = scmp.ne.s32.totalorder %s78, %s80
    %p84 = scmp.eq.s32.totalorder %s9, 0
    %p85 = por %p83, %p84
    %p86 = scmp.ne.s32.totalorder %s78, %s80
    %p87 = scmp.eq.s32.totalorder %s14, 3
    %p88 = por %p86, %p87
    %p89 = scmp.ne.s32.totalorder %s80, %s81
    %p90 = scmp.eq.s32.totalorder %s14, 0
    %p91 = por %p89, %p90
    %p92 = scmp.ne.s32.totalorder %s80, %s81
    %p93 = scmp.eq.s32.totalorder %s15, 3
    %p94 = por %p92, %p93
    %p96 = scmp.ne.s32.totalorder %s81, %s95
    %p97 = scmp.eq.s32.totalorder %s15, 0
    %p98 = por %p96, %p97
    %s99 = ssub.s32 %s16, %s28
    %s100 = ssub.s32 %s17, %s24
    %s101 = sor.u32 %s99, %s100
    %p102 = scmp.eq.s32.totalorder %s101, 0
    %s104 = sadd.s32 %s103, 1
    %s105 = scalar_select %p102, %s103, %s104
    %p108 = pneg %p102
    %p109 = scmp.eq.s32.totalorder %s9, 3
    %p110 = por %p108, %p109
    %p111 = scmp.ne.s32.totalorder %s103, %s106
    %p112 = scmp.eq.s32.totalorder %s9, 0
    %p113 = por %p111, %p112
    %p114 = scmp.ne.s32.totalorder %s103, %s106
    %p115 = scmp.eq.s32.totalorder %s14, 3
    %p116 = por %p114, %p115
    %p117 = scmp.ne.s32.totalorder %s106, %s107
    %p118 = scmp.eq.s32.totalorder %s14, 0
    %p119 = por %p117, %p118
    %p120 = scmp.ne.s32.totalorder %s106, %s107
    %p121 = scmp.eq.s32.totalorder %s15, 3
    %p122 = por %p120, %p121
    %p124 = scmp.ne.s32.totalorder %s107, %s123
    %p125 = scmp.eq.s32.totalorder %s15, 0
    %p126 = por %p124, %p125
    %p127 = scmp.le.s32.totalorder 1, %s9
    %p128 = scmp.lt.s32.totalorder %s9, 5
    %p129 = pnand %p127, %p128
    %p130 = pneg %p129
    // Predicated region
    $region9: #{a_call__.8} parent=5 // pred_check
      _
    $region10: #{a_call__.8} parent=5 // pred_check_branch
      %132 = sbr.rel (%p129) target = $region12
    $region11: #{a_call__.8} parent=5 // pred_region
      %s133 = ssub.s32 %s9, 1
      // Predicated region
      $region13: #{a_call__.8} parent=11 // pred_check
        %p134 = pneg %p70
      $region14: #{a_call__.8} parent=11 // pred_check_branch
        %136 = sbr.rel (%p134) target = $region16
      $region15: #{a_call__.8} parent=11 // pred_region
        _
      $region16: #{a_call__.8} parent=11 // pred_fallthru
        _
      // Predicated region
      $region17: #{a_call__.8} parent=11 // pred_check
        %p137 = pneg %p91
      $region18: #{a_call__.8} parent=11 // pred_check_branch
        %139 = sbr.rel (%p137) target = $region20
      $region19: #{a_call__.8} parent=11 // pred_region
        _
      $region20: #{a_call__.8} parent=11 // pred_fallthru
        _
    $region12: #{a_call__.8} parent=5 // pred_fallthru
      _
    %p140 = scmp.lt.s32.totalorder %s9, 4
    // Predicated region
    $region21: #{a_call__.8} parent=5 // pred_check
      %p141 = pneg %p140
    $region22: #{a_call__.8} parent=5 // pred_check_branch
      %143 = sbr.rel (%p141) target = $region24
    $region23: #{a_call__.8} parent=5 // pred_region
      // Predicated region
      $region25: #{a_call__.8} parent=23 // pred_check
        %p144 = pneg %p43
      $region26: #{a_call__.8} parent=23 // pred_check_branch
        %146 = sbr.rel (%p144) target = $region28
      $region27: #{a_call__.8} parent=23 // pred_region
        %s147 = sadd.s32 %s16, %s17
        %p148 = scmp.lt.s32.totalorder %s147, 3
        %s149 = scalar_select %p148, %s147, 3
        %s150 = smul.addr %s149, 20
        %s151 = smul.addr %s150, 4
        %s152 = scalar_lea.vmem %s0, %s151
        %s153 = sadd.s32 %s16, %s17
      $region28: #{a_call__.8} parent=23 // pred_fallthru
        _
    $region24: #{a_call__.8} parent=5 // pred_fallthru
      _
    %p154 = scmp.le.s32.totalorder 1, %s9
    %p155 = scmp.lt.s32.totalorder %s9, 5
    %p156 = pnand %p154, %p155
    %p157 = pneg %p156
    // Predicated region
    $region29: #{a_call__.8} parent=5 // pred_check
      _
    $region30: #{a_call__.8} parent=5 // pred_check_branch
      %159 = sbr.rel (%p156) target = $region32
    $region31: #{a_call__.8} parent=5 // pred_region
      %s160 = ssub.s32 %s9, 1
      %s161 = sadd.s32 %s18, %s19
      %p162 = scmp.lt.s32.totalorder %s161, 3
      %s163 = scalar_select %p162, %s161, 3
      %s164 = smul.addr %s163, 20
      %s165 = smul.addr %s164, 4
      %s166 = scalar_lea.vmem %s0, %s165
      %p167 = pneg %p49
      %p168 = pneg %p46
      %p169 = pneg %p70
      %p170 = pneg %p67
      %p171 = pneg %p91
      %p172 = pneg %p88
      %p173 = pneg %p119
      %p174 = pneg %p116
      %s175 = smul.u32 8, %s19
      %p176 = scmp.lt.s32.totalorder %s18, 3
      %s177 = scalar_select %p176, %s18, 3
      %p178 = scmp.lt.s32.totalorder %s175, 7
      %s179 = scalar_select %p178, %s175, 7
      %s180 = smul.addr %s177, 8
      %s181 = sadd.s32 %s179, %s180
      %s182 = smul.addr %s181, 4
      %s183 = scalar_lea.vmem %s3, %s182
      %s184 = sadd.s32 %s18, %s19
      %p185 = scmp.lt.s32.totalorder %s184, 3
      %s186 = scalar_select %p185, %s184, 3
      %s187 = smul.addr %s186, 20
      %s188 = smul.addr %s187, 4
      %s189 = scalar_lea.vmem %s0, %s188
      %s190 = sadd.s32 %s18, %s19
      %s191 = smul.u32 8, %s19
      %p192 = scmp.lt.s32.totalorder %s18, 3
      %s193 = scalar_select %p192, %s18, 3
      %p194 = scmp.lt.s32.totalorder %s191, 7
      %s195 = scalar_select %p194, %s191, 7
      %s196 = smul.addr %s193, 8
      %s197 = sadd.s32 %s195, %s196
      %s198 = smul.addr %s197, 4
      %s199 = scalar_lea.vmem %s3, %s198
      %s200 = smul.u32 8, %s19
      %v202 = vld [vmem:[%s189] sm:$0xf]
      %v203 = vld [vmem:[%s189 + $0x4] sm:$0x1]
      %v204 = vld [vmem:[%s189 + $0x8] sm:$0xf]
      %v205 = vld [vmem:[%s189 + $0xc] sm:$0x1]
      %v206 = vld [vmem:[%s189 + $0x10] sm:$0xf]
      %v207 = vld [vmem:[%s189 + $0x14] sm:$0x1]
      %v208 = vld [vmem:[%s189 + $0x18] sm:$0xf]
      %v209 = vld [vmem:[%s189 + $0x1c] sm:$0x1]
      %v210 = vld [vmem:[%s189 + $0x20] sm:$0xf]
      %v211 = vld [vmem:[%s189 + $0x24] sm:$0x1]
      %v212 = vld [vmem:[%s189 + $0x28] sm:$0xf]
      %v213 = vld [vmem:[%s189 + $0x2c] sm:$0x1]
      %v214 = vld [vmem:[%s189 + $0x30] sm:$0xf]
      %v215 = vld [vmem:[%s189 + $0x34] sm:$0x1]
      %v216 = vld [vmem:[%s189 + $0x38] sm:$0xf]
      %v217 = vld [vmem:[%s189 + $0x3c] sm:$0x1]
      %v218 = vld [vmem:[%s189 + $0x40] sm:$0xf]
      %v219 = vld [vmem:[%s189 + $0x44] sm:$0x1]
      %v220 = vld [vmem:[%s189 + $0x48] sm:$0xf]
      %v221 = vld [vmem:[%s189 + $0x4c] sm:$0x1]
      %v222 = vld [vmem:[%s1] sm:$0xf]
      %v223 = vld [vmem:[%s1 + $0x4] sm:$0xf]
      %v224 = vld [vmem:[%s1 + $0x8] sm:$0xf]
      %v225 = vld [vmem:[%s1 + $0xc] sm:$0xf]
      %v226 = vld [vmem:[%s1 + $0x10] sm:$0xf]
      %v227 = vld [vmem:[%s1 + $0x14] sm:$0xf]
      %v228 = vld [vmem:[%s1 + $0x18] sm:$0xf]
      %v229 = vld [vmem:[%s1 + $0x1c] sm:$0xf]
      %vm230 = vsmask.f32 3328
      %vm231 = vsmask.f32 7440
      %vm232 = vmor %vm230, %vm231
      %v234 = vshrl.u32 %v202, 16
      %v236 = vrot.slane %v234, 4
      %v237 = vshll.u32 %v202, 16
      %v239 = vrot.slane %v237, 5
      %v240 = vor.u32 %v236, %v239
      %v241 = vrot.slane %v240, 4
      %v243 = vshll.u32 %v203, 16
      %v245 = vrot.slane %v243, 5
      %v246 = vsel %vm232, %v241, %v245
      %v248 = vshrl.u32 %v204, 16
      %v250 = vrot.slane %v248, 4
      %v251 = vshll.u32 %v204, 16
      %v253 = vrot.slane %v251, 5
      %v254 = vor.u32 %v250, %v253
      %v255 = vrot.slane %v254, 4
      %v257 = vshll.u32 %v205, 16
      %v259 = vrot.slane %v257, 5
      %v260 = vsel %vm232, %v255, %v259
      %v262 = vshrl.u32 %v206, 16
      %v264 = vrot.slane %v262, 4
      %v265 = vshll.u32 %v206, 16
      %v267 = vrot.slane %v265, 5
      %v268 = vor.u32 %v264, %v267
      %v269 = vrot.slane %v268, 4
      %v271 = vshll.u32 %v207, 16
      %v273 = vrot.slane %v271, 5
      %v274 = vsel %vm232, %v269, %v273
      %v276 = vshrl.u32 %v208, 16
      %v278 = vrot.slane %v276, 4
      %v279 = vshll.u32 %v208, 16
      %v281 = vrot.slane %v279, 5
      %v282 = vor.u32 %v278, %v281
      %v283 = vrot.slane %v282, 4
      %v285 = vshll.u32 %v209, 16
      %v287 = vrot.slane %v285, 5
      %v288 = vsel %vm232, %v283, %v287
      %v290 = vshrl.u32 %v210, 16
      %v292 = vrot.slane %v290, 4
      %v293 = vshll.u32 %v210, 16
      %v295 = vrot.slane %v293, 5
      %v296 = vor.u32 %v292, %v295
      %v297 = vrot.slane %v296, 4
      %v299 = vshll.u32 %v211, 16
      %v301 = vrot.slane %v299, 5
      %v302 = vsel %vm232, %v297, %v301
      %v304 = vshrl.u32 %v212, 16
      %v306 = vrot.slane %v304, 4
      %v307 = vshll.u32 %v212, 16
      %v309 = vrot.slane %v307, 5
      %v310 = vor.u32 %v306, %v309
      %v311 = vrot.slane %v310, 4
      %v313 = vshll.u32 %v213, 16
      %v315 = vrot.slane %v313, 5
      %v316 = vsel %vm232, %v311, %v315
      %v318 = vshrl.u32 %v214, 16
      %v320 = vrot.slane %v318, 4
      %v321 = vshll.u32 %v214, 16
      %v323 = vrot.slane %v321, 5
      %v324 = vor.u32 %v320, %v323
      %v325 = vrot.slane %v324, 4
      %v327 = vshll.u32 %v215, 16
      %v329 = vrot.slane %v327, 5
      %v330 = vsel %vm232, %v325, %v329
      %v332 = vshrl.u32 %v216, 16
      %v334 = vrot.slane %v332, 4
      %v335 = vshll.u32 %v216, 16
      %v337 = vrot.slane %v335, 5
      %v338 = vor.u32 %v334, %v337
      %v339 = vrot.slane %v338, 4
      %v341 = vshll.u32 %v217, 16
      %v343 = vrot.slane %v341, 5
      %v344 = vsel %vm232, %v339, %v343
      %s345 = scalar_lea.vmem %s1, 32
      %v346 = vld [vmem:[%s345] sm:$0xf]
      %v347 = vld [vmem:[%s345 + $0x4] sm:$0xf]
      %v348 = vld [vmem:[%s345 + $0x8] sm:$0xf]
      %v349 = vld [vmem:[%s345 + $0xc] sm:$0xf]
      %v350 = vld [vmem:[%s345 + $0x10] sm:$0xf]
      %v351 = vld [vmem:[%s345 + $0x14] sm:$0xf]
      %v352 = vld [vmem:[%s345 + $0x18] sm:$0xf]
      %v353 = vld [vmem:[%s345 + $0x1c] sm:$0xf]
      %v354 = vunpack.c.l.b16 %v246
      %v355 = vunpack.c.l.b16 %v260
      %v356 = vunpack.c.l.b16 %v274
      %v357 = vunpack.c.l.b16 %v288
      %v358 = vunpack.c.l.b16 %v302
      %v359 = vunpack.c.l.b16 %v316
      %v360 = vunpack.c.l.b16 %v330
      %v361 = vunpack.c.l.b16 %v344
      %v362 = vpack.c.b16 %v355, %v354
      %v363 = vpack.c.b16 %v357, %v356
      %v364 = vpack.c.b16 %v359, %v358
      %v365 = vpack.c.b16 %v361, %v360
      %v374 = vunpack.c.l.b16 %v346
      %v375 = vunpack.c.l.b16 %v347
      %v376 = vunpack.c.l.b16 %v348
      %v377 = vunpack.c.l.b16 %v349
      %v378 = vunpack.c.l.b16 %v350
      %v379 = vunpack.c.l.b16 %v351
      %v380 = vunpack.c.l.b16 %v352
      %v381 = vunpack.c.l.b16 %v353
      %v382 = vpack.c.b16 %v375, %v374
      %v383 = vpack.c.b16 %v377, %v376
      %v384 = vpack.c.b16 %v379, %v378
      %v385 = vpack.c.b16 %v381, %v380
      %vm390 = vcmask 523264
      %v392 = vsel %vm390, %v362, 0
      %v395 = vsel %vm390, %v363, 0
      %v398 = vsel %vm390, %v364, 0
      %v401 = vsel %vm390, %v365, 0
      %403 = vmatprep.subr.bf16.mxu0 0
      %404 = vmatpush1.bf16.msra.mxu0 0
      %405 = vmatprep.subr.bf16.mxu0 0
      %406 = vmatpush1.bf16.msra.mxu0 0
      %407 = vmatprep.subr.bf16.mxu0 0
      %408 = vmatpush1.bf16.msra.mxu0 0
      %409 = vmatprep.subr.bf16.mxu0 0
      %410 = vmatpush1.bf16.msra.mxu0 0
      %411 = vmatprep.subr.bf16.mxu0 0
      %412 = vmatpush1.bf16.msra.mxu0 %v385
      %413 = vmatprep.subr.bf16.mxu0 0
      %414 = vmatpush1.bf16.msra.mxu0 %v384
      %415 = vmatprep.subr.bf16.mxu0 0
      %416 = vmatpush1.bf16.msra.mxu0 %v383
      %417 = vmatprep.subr.bf16.mxu0 0
      %418 = vmatpush1.bf16.msra.mxu0 %v382
      %419 = vmatprep.subr.bf16.mxu0 0
      %420 = vmatpush2.bf16.msra.mxu0 0
      %421 = vmatprep.subr.bf16.mxu0 0
      %422 = vmatpush2.bf16.msra.mxu0 0
      %423 = vmatprep.subr.bf16.mxu0 0
      %424 = vmatpush2.bf16.msra.mxu0 0
      %425 = vmatprep.subr.bf16.mxu0 0
      %426 = vmatpush2.bf16.msra.mxu0 0
      %427 = vmatprep.subr.bf16.mxu0 0
      %428 = vmatpush2.bf16.msra.mxu0 0
      %429 = vmatprep.subr.bf16.mxu0 0
      %430 = vmatpush2.bf16.msra.mxu0 0
      %431 = vmatprep.subr.bf16.mxu0 0
      %432 = vmatpush2.bf16.msra.mxu0 0
      %433 = vmatprep.subr.bf16.mxu0 0
      %434 = vmatpush2.bf16.msra.mxu0 0
      %435 = vmatprep.mubr.bf16.mxu0 0
      %436 = vmatmul.mubr.bf16.gmra.mxu0 %v392
      %v437 = vpop.f32.mrf.mxu0
      %v438 = vadd.f32 0.0, %v437
      %v439 = vpop.f32.mrf.mxu0
      %v440 = vpop.f32.mrf.mxu0
      %v441 = vadd.f32 0.0, %v440
      %v442 = vpop.f32.mrf.mxu0
      %443 = vmatprep.mubr.bf16.mxu0 0
      %444 = vmatmul.mubr.bf16.gmra.mxu0 %v395
      %v445 = vpop.f32.mrf.mxu0
      %v446 = vadd.f32 0.0, %v445
      %v447 = vpop.f32.mrf.mxu0
      %v448 = vpop.f32.mrf.mxu0
      %v449 = vadd.f32 0.0, %v448
      %v450 = vpop.f32.mrf.mxu0
      %451 = vmatprep.mubr.bf16.mxu0 0
      %452 = vmatmul.mubr.bf16.gmra.mxu0 %v398
      %v453 = vpop.f32.mrf.mxu0
      %v454 = vadd.f32 0.0, %v453
      %v455 = vpop.f32.mrf.mxu0
      %v456 = vpop.f32.mrf.mxu0
      %v457 = vadd.f32 0.0, %v456
      %v458 = vpop.f32.mrf.mxu0
      %459 = vmatprep.mubr.bf16.mxu0 0
      %460 = vmatmul.mubr.bf16.gmra.mxu0 %v401
      %v461 = vpop.f32.mrf.mxu0
      %v462 = vadd.f32 0.0, %v461
      %v463 = vpop.f32.mrf.mxu0
      %v464 = vpop.f32.mrf.mxu0
      %v465 = vadd.f32 0.0, %v464
      %v466 = vpop.f32.mrf.mxu0
      %467 = vdwg.mxu0
      %v476 = vunpack.c.l.b16 %v202
      %v477 = vunpack.c.l.b16 %v204
      %v478 = vunpack.c.l.b16 %v206
      %v479 = vunpack.c.l.b16 %v208
      %v480 = vunpack.c.l.b16 %v210
      %v481 = vunpack.c.l.b16 %v212
      %v482 = vunpack.c.l.b16 %v214
      %v483 = vunpack.c.l.b16 %v216
      %v484 = vpack.c.b16 %v477, %v476
      %v485 = vpack.c.b16 %v479, %v478
      %v486 = vpack.c.b16 %v481, %v480
      %v487 = vpack.c.b16 %v483, %v482
      %v496 = vunpack.c.l.b16 %v222
      %v497 = vunpack.c.l.b16 %v223
      %v498 = vunpack.c.l.b16 %v224
      %v499 = vunpack.c.l.b16 %v225
      %v500 = vunpack.c.l.b16 %v226
      %v501 = vunpack.c.l.b16 %v227
      %v502 = vunpack.c.l.b16 %v228
      %v503 = vunpack.c.l.b16 %v229
      %v504 = vpack.c.b16 %v497, %v496
      %v505 = vpack.c.b16 %v499, %v498
      %v506 = vpack.c.b16 %v501, %v500
      %v507 = vpack.c.b16 %v503, %v502
      %v513 = vsel %vm390, %v484, 0
      %v516 = vsel %vm390, %v485, 0
      %v519 = vsel %vm390, %v486, 0
      %v522 = vsel %vm390, %v487, 0
      %524 = vmatprep.subr.bf16.mxu0 0
      %525 = vmatpush1.bf16.msra.mxu0 0
      %526 = vmatprep.subr.bf16.mxu0 0
      %527 = vmatpush1.bf16.msra.mxu0 0
      %528 = vmatprep.subr.bf16.mxu0 0
      %529 = vmatpush1.bf16.msra.mxu0 0
      %530 = vmatprep.subr.bf16.mxu0 0
      %531 = vmatpush1.bf16.msra.mxu0 0
      %532 = vmatprep.subr.bf16.mxu0 0
      %533 = vmatpush1.bf16.msra.mxu0 %v507
      %534 = vmatprep.subr.bf16.mxu0 0
      %535 = vmatpush1.bf16.msra.mxu0 %v506
      %536 = vmatprep.subr.bf16.mxu0 0
      %537 = vmatpush1.bf16.msra.mxu0 %v505
      %538 = vmatprep.subr.bf16.mxu0 0
      %539 = vmatpush1.bf16.msra.mxu0 %v504
      %540 = vmatprep.subr.bf16.mxu0 0
      %541 = vmatpush2.bf16.msra.mxu0 0
      %542 = vmatprep.subr.bf16.mxu0 0
      %543 = vmatpush2.bf16.msra.mxu0 0
      %544 = vmatprep.subr.bf16.mxu0 0
      %545 = vmatpush2.bf16.msra.mxu0 0
      %546 = vmatprep.subr.bf16.mxu0 0
      %547 = vmatpush2.bf16.msra.mxu0 0
      %548 = vmatprep.subr.bf16.mxu0 0
      %549 = vmatpush2.bf16.msra.mxu0 0
      %550 = vmatprep.subr.bf16.mxu0 0
      %551 = vmatpush2.bf16.msra.mxu0 0
      %552 = vmatprep.subr.bf16.mxu0 0
      %553 = vmatpush2.bf16.msra.mxu0 0
      %554 = vmatprep.subr.bf16.mxu0 0
      %555 = vmatpush2.bf16.msra.mxu0 0
      %556 = vmatprep.mubr.bf16.mxu0 0
      %557 = vmatmul.mubr.bf16.gmra.mxu0 %v513
      %v558 = vpop.f32.mrf.mxu0
      %v559 = vadd.f32 %v438, %v558
      %v560 = vpop.f32.mrf.mxu0
      %v561 = vpop.f32.mrf.mxu0
      %v562 = vadd.f32 %v441, %v561
      %v563 = vpop.f32.mrf.mxu0
      %564 = vmatprep.mubr.bf16.mxu0 0
      %565 = vmatmul.mubr.bf16.gmra.mxu0 %v516
      %v566 = vpop.f32.mrf.mxu0
      %v567 = vadd.f32 %v446, %v566
      %v568 = vpop.f32.mrf.mxu0
      %v569 = vpop.f32.mrf.mxu0
      %v570 = vadd.f32 %v449, %v569
      %v571 = vpop.f32.mrf.mxu0
      %572 = vmatprep.mubr.bf16.mxu0 0
      %573 = vmatmul.mubr.bf16.gmra.mxu0 %v519
      %v574 = vpop.f32.mrf.mxu0
      %v575 = vadd.f32 %v454, %v574
      %v576 = vpop.f32.mrf.mxu0
      %v577 = vpop.f32.mrf.mxu0
      %v578 = vadd.f32 %v457, %v577
      %v579 = vpop.f32.mrf.mxu0
      %580 = vmatprep.mubr.bf16.mxu0 0
      %581 = vmatmul.mubr.bf16.gmra.mxu0 %v522
      %v582 = vpop.f32.mrf.mxu0
      %v583 = vadd.f32 %v462, %v582
      %v584 = vpop.f32.mrf.mxu0
      %v585 = vpop.f32.mrf.mxu0
      %v586 = vadd.f32 %v465, %v585
      %v587 = vpop.f32.mrf.mxu0
      %588 = vdwg.mxu0
      %vm597 = vcmask 1042432
      %vm598 = vcmask 1046532
      %vm599 = vmor %vm597, %vm598
      %v600 = vrot.slane %v202, 5
      %v601 = vrot.slane %v600, 4
      %v602 = vrot.slane %v203, 5
      %v603 = vsel %vm599, %v601, %v602
      %v604 = vrot.slane %v204, 5
      %v605 = vrot.slane %v604, 4
      %v606 = vrot.slane %v205, 5
      %v607 = vsel %vm599, %v605, %v606
      %v608 = vrot.slane %v206, 5
      %v609 = vrot.slane %v608, 4
      %v610 = vrot.slane %v207, 5
      %v611 = vsel %vm599, %v609, %v610
      %v612 = vrot.slane %v208, 5
      %v613 = vrot.slane %v612, 4
      %v614 = vrot.slane %v209, 5
      %v615 = vsel %vm599, %v613, %v614
      %v616 = vrot.slane %v210, 5
      %v617 = vrot.slane %v616, 4
      %v618 = vrot.slane %v211, 5
      %v619 = vsel %vm599, %v617, %v618
      %v620 = vrot.slane %v212, 5
      %v621 = vrot.slane %v620, 4
      %v622 = vrot.slane %v213, 5
      %v623 = vsel %vm599, %v621, %v622
      %v624 = vrot.slane %v214, 5
      %v625 = vrot.slane %v624, 4
      %v626 = vrot.slane %v215, 5
      %v627 = vsel %vm599, %v625, %v626
      %v628 = vrot.slane %v216, 5
      %v629 = vrot.slane %v628, 4
      %v630 = vrot.slane %v217, 5
      %v631 = vsel %vm599, %v629, %v630
      %s632 = scalar_lea.vmem %s1, 64
      %v633 = vld [vmem:[%s632] sm:$0xf]
      %v634 = vld [vmem:[%s632 + $0x4] sm:$0xf]
      %v635 = vld [vmem:[%s632 + $0x8] sm:$0xf]
      %v636 = vld [vmem:[%s632 + $0xc] sm:$0xf]
      %v637 = vld [vmem:[%s632 + $0x10] sm:$0xf]
      %v638 = vld [vmem:[%s632 + $0x14] sm:$0xf]
      %v639 = vld [vmem:[%s632 + $0x18] sm:$0xf]
      %v640 = vld [vmem:[%s632 + $0x1c] sm:$0xf]
      %v641 = vunpack.c.l.b16 %v603
      %v642 = vunpack.c.l.b16 %v607
      %v643 = vunpack.c.l.b16 %v611
      %v644 = vunpack.c.l.b16 %v615
      %v645 = vunpack.c.l.b16 %v619
      %v646 = vunpack.c.l.b16 %v623
      %v647 = vunpack.c.l.b16 %v627
      %v648 = vunpack.c.l.b16 %v631
      %v649 = vpack.c.b16 %v642, %v641
      %v650 = vpack.c.b16 %v644, %v643
      %v651 = vpack.c.b16 %v646, %v645
      %v652 = vpack.c.b16 %v648, %v647
      %v661 = vunpack.c.l.b16 %v633
      %v662 = vunpack.c.l.b16 %v634
      %v663 = vunpack.c.l.b16 %v635
      %v664 = vunpack.c.l.b16 %v636
      %v665 = vunpack.c.l.b16 %v637
      %v666 = vunpack.c.l.b16 %v638
      %v667 = vunpack.c.l.b16 %v639
      %v668 = vunpack.c.l.b16 %v640
      %v669 = vpack.c.b16 %v662, %v661
      %v670 = vpack.c.b16 %v664, %v663
      %v671 = vpack.c.b16 %v666, %v665
      %v672 = vpack.c.b16 %v668, %v667
      %v678 = vsel %vm390, %v649, 0
      %v681 = vsel %vm390, %v650, 0
      %v684 = vsel %vm390, %v651, 0
      %v687 = vsel %vm390, %v652, 0
      %689 = vmatprep.subr.bf16.mxu0 0
      %690 = vmatpush1.bf16.msra.mxu0 0
      %691 = vmatprep.subr.bf16.mxu0 0
      %692 = vmatpush1.bf16.msra.mxu0 0
      %693 = vmatprep.subr.bf16.mxu0 0
      %694 = vmatpush1.bf16.msra.mxu0 0
      %695 = vmatprep.subr.bf16.mxu0 0
      %696 = vmatpush1.bf16.msra.mxu0 0
      %697 = vmatprep.subr.bf16.mxu0 0
      %698 = vmatpush1.bf16.msra.mxu0 %v672
      %699 = vmatprep.subr.bf16.mxu0 0
      %700 = vmatpush1.bf16.msra.mxu0 %v671
      %701 = vmatprep.subr.bf16.mxu0 0
      %702 = vmatpush1.bf16.msra.mxu0 %v670
      %703 = vmatprep.subr.bf16.mxu0 0
      %704 = vmatpush1.bf16.msra.mxu0 %v669
      %705 = vmatprep.subr.bf16.mxu0 0
      %706 = vmatpush2.bf16.msra.mxu0 0
      %707 = vmatprep.subr.bf16.mxu0 0
      %708 = vmatpush2.bf16.msra.mxu0 0
      %709 = vmatprep.subr.bf16.mxu0 0
      %710 = vmatpush2.bf16.msra.mxu0 0
      %711 = vmatprep.subr.bf16.mxu0 0
      %712 = vmatpush2.bf16.msra.mxu0 0
      %713 = vmatprep.subr.bf16.mxu0 0
      %714 = vmatpush2.bf16.msra.mxu0 0
      %715 = vmatprep.subr.bf16.mxu0 0
      %716 = vmatpush2.bf16.msra.mxu0 0
      %717 = vmatprep.subr.bf16.mxu0 0
      %718 = vmatpush2.bf16.msra.mxu0 0
      %719 = vmatprep.subr.bf16.mxu0 0
      %720 = vmatpush2.bf16.msra.mxu0 0
      %721 = vmatprep.mubr.bf16.mxu0 0
      %722 = vmatmul.mubr.bf16.gmra.mxu0 %v678
      %v723 = vpop.f32.mrf.mxu0
      %v724 = vadd.f32 0.0, %v723
      %v725 = vpop.f32.mrf.mxu0
      %v726 = vpop.f32.mrf.mxu0
      %v727 = vadd.f32 0.0, %v726
      %v728 = vpop.f32.mrf.mxu0
      %729 = vmatprep.mubr.bf16.mxu0 0
      %730 = vmatmul.mubr.bf16.gmra.mxu0 %v681
      %v731 = vpop.f32.mrf.mxu0
      %v732 = vadd.f32 0.0, %v731
      %v733 = vpop.f32.mrf.mxu0
      %v734 = vpop.f32.mrf.mxu0
      %v735 = vadd.f32 0.0, %v734
      %v736 = vpop.f32.mrf.mxu0
      %737 = vmatprep.mubr.bf16.mxu0 0
      %738 = vmatmul.mubr.bf16.gmra.mxu0 %v684
      %v739 = vpop.f32.mrf.mxu0
      %v740 = vadd.f32 0.0, %v739
      %v741 = vpop.f32.mrf.mxu0
      %v742 = vpop.f32.mrf.mxu0
      %v743 = vadd.f32 0.0, %v742
      %v744 = vpop.f32.mrf.mxu0
      %745 = vmatprep.mubr.bf16.mxu0 0
      %746 = vmatmul.mubr.bf16.gmra.mxu0 %v687
      %v747 = vpop.f32.mrf.mxu0
      %v748 = vadd.f32 0.0, %v747
      %v749 = vpop.f32.mrf.mxu0
      %v750 = vpop.f32.mrf.mxu0
      %v751 = vadd.f32 0.0, %v750
      %v752 = vpop.f32.mrf.mxu0
      %753 = vdwg.mxu0
      %v754 = vadd.f32 %v559, %v724
      %v755 = vadd.f32 %v562, %v727
      %v756 = vadd.f32 %v567, %v732
      %v757 = vadd.f32 %v570, %v735
      %v758 = vadd.f32 %v575, %v740
      %v759 = vadd.f32 %v578, %v743
      %v760 = vadd.f32 %v583, %v748
      %v761 = vadd.f32 %v586, %v751
      %s762 = scalar_lea.vmem %s1, 96
      %v763 = vld [vmem:[%s762] sm:$0xf]
      %v764 = vld [vmem:[%s762 + $0x4] sm:$0xf]
      %v765 = vld [vmem:[%s762 + $0x8] sm:$0xf]
      %v766 = vld [vmem:[%s762 + $0xc] sm:$0xf]
      %v767 = vld [vmem:[%s762 + $0x10] sm:$0xf]
      %v768 = vld [vmem:[%s762 + $0x14] sm:$0xf]
      %v769 = vld [vmem:[%s762 + $0x18] sm:$0xf]
      %v770 = vld [vmem:[%s762 + $0x1c] sm:$0xf]
      %v772 = vunpack.c.l.b16 %v218
      %v773 = vpack.c.b16 %v478, %v477
      %v774 = vpack.c.b16 %v480, %v479
      %v775 = vpack.c.b16 %v482, %v481
      %v776 = vpack.c.b16 %v772, %v483
      %v785 = vunpack.c.l.b16 %v763
      %v786 = vunpack.c.l.b16 %v764
      %v787 = vunpack.c.l.b16 %v765
      %v788 = vunpack.c.l.b16 %v766
      %v789 = vunpack.c.l.b16 %v767
      %v790 = vunpack.c.l.b16 %v768
      %v791 = vunpack.c.l.b16 %v769
      %v792 = vunpack.c.l.b16 %v770
      %v793 = vpack.c.b16 %v786, %v785
      %v794 = vpack.c.b16 %v788, %v787
      %v795 = vpack.c.b16 %v790, %v789
      %v796 = vpack.c.b16 %v792, %v791
      %v802 = vsel %vm390, %v773, 0
      %v805 = vsel %vm390, %v774, 0
      %v808 = vsel %vm390, %v775, 0
      %v811 = vsel %vm390, %v776, 0
      %813 = vmatprep.subr.bf16.mxu0 0
      %814 = vmatpush1.bf16.msra.mxu0 0
      %815 = vmatprep.subr.bf16.mxu0 0
      %816 = vmatpush1.bf16.msra.mxu0 0
      %817 = vmatprep.subr.bf16.mxu0 0
      %818 = vmatpush1.bf16.msra.mxu0 0
      %819 = vmatprep.subr.bf16.mxu0 0
      %820 = vmatpush1.bf16.msra.mxu0 0
      %821 = vmatprep.subr.bf16.mxu0 0
      %822 = vmatpush1.bf16.msra.mxu0 %v796
      %823 = vmatprep.subr.bf16.mxu0 0
      %824 = vmatpush1.bf16.msra.mxu0 %v795
      %825 = vmatprep.subr.bf16.mxu0 0
      %826 = vmatpush1.bf16.msra.mxu0 %v794
      %827 = vmatprep.subr.bf16.mxu0 0
      %828 = vmatpush1.bf16.msra.mxu0 %v793
      %829 = vmatprep.subr.bf16.mxu0 0
      %830 = vmatpush2.bf16.msra.mxu0 0
      %831 = vmatprep.subr.bf16.mxu0 0
      %832 = vmatpush2.bf16.msra.mxu0 0
      %833 = vmatprep.subr.bf16.mxu0 0
      %834 = vmatpush2.bf16.msra.mxu0 0
      %835 = vmatprep.subr.bf16.mxu0 0
      %836 = vmatpush2.bf16.msra.mxu0 0
      %837 = vmatprep.subr.bf16.mxu0 0
      %838 = vmatpush2.bf16.msra.mxu0 0
      %839 = vmatprep.subr.bf16.mxu0 0
      %840 = vmatpush2.bf16.msra.mxu0 0
      %841 = vmatprep.subr.bf16.mxu0 0
      %842 = vmatpush2.bf16.msra.mxu0 0
      %843 = vmatprep.subr.bf16.mxu0 0
      %844 = vmatpush2.bf16.msra.mxu0 0
      %845 = vmatprep.mubr.bf16.mxu0 0
      %846 = vmatmul.mubr.bf16.gmra.mxu0 %v802
      %v847 = vpop.f32.mrf.mxu0
      %v848 = vadd.f32 0.0, %v847
      %v849 = vpop.f32.mrf.mxu0
      %v850 = vpop.f32.mrf.mxu0
      %v851 = vadd.f32 0.0, %v850
      %v852 = vpop.f32.mrf.mxu0
      %853 = vmatprep.mubr.bf16.mxu0 0
      %854 = vmatmul.mubr.bf16.gmra.mxu0 %v805
      %v855 = vpop.f32.mrf.mxu0
      %v856 = vadd.f32 0.0, %v855
      %v857 = vpop.f32.mrf.mxu0
      %v858 = vpop.f32.mrf.mxu0
      %v859 = vadd.f32 0.0, %v858
      %v860 = vpop.f32.mrf.mxu0
      %861 = vmatprep.mubr.bf16.mxu0 0
      %862 = vmatmul.mubr.bf16.gmra.mxu0 %v808
      %v863 = vpop.f32.mrf.mxu0
      %v864 = vadd.f32 0.0, %v863
      %v865 = vpop.f32.mrf.mxu0
      %v866 = vpop.f32.mrf.mxu0
      %v867 = vadd.f32 0.0, %v866
      %v868 = vpop.f32.mrf.mxu0
      %869 = vmatprep.mubr.bf16.mxu0 0
      %870 = vmatmul.mubr.bf16.gmra.mxu0 %v811
      %v871 = vpop.f32.mrf.mxu0
      %v872 = vadd.f32 0.0, %v871
      %v873 = vpop.f32.mrf.mxu0
      %v874 = vpop.f32.mrf.mxu0
      %v875 = vadd.f32 0.0, %v874
      %v876 = vpop.f32.mrf.mxu0
      %877 = vdwg.mxu0
      %v878 = vadd.f32 %v754, %v848
      %v879 = vadd.f32 %v755, %v851
      %v880 = vadd.f32 %v756, %v856
      %v881 = vadd.f32 %v757, %v859
      %v882 = vadd.f32 %v758, %v864
      %v883 = vadd.f32 %v759, %v867
      %v884 = vadd.f32 %v760, %v872
      %v885 = vadd.f32 %v761, %v875
      %v887 = vshrl.u32 %v218, 16
      %v889 = vrot.slane %v887, 4
      %v890 = vshll.u32 %v218, 16
      %v892 = vrot.slane %v890, 5
      %v893 = vor.u32 %v889, %v892
      %v894 = vrot.slane %v893, 4
      %v896 = vshll.u32 %v219, 16
      %v898 = vrot.slane %v896, 5
      %v899 = vsel %vm232, %v894, %v898
      %s900 = scalar_lea.vmem %s1, 128
      %v901 = vld [vmem:[%s900] sm:$0xf]
      %v902 = vld [vmem:[%s900 + $0x4] sm:$0xf]
      %v903 = vld [vmem:[%s900 + $0x8] sm:$0xf]
      %v904 = vld [vmem:[%s900 + $0xc] sm:$0xf]
      %v905 = vld [vmem:[%s900 + $0x10] sm:$0xf]
      %v906 = vld [vmem:[%s900 + $0x14] sm:$0xf]
      %v907 = vld [vmem:[%s900 + $0x18] sm:$0xf]
      %v908 = vld [vmem:[%s900 + $0x1c] sm:$0xf]
      %v909 = vunpack.c.l.b16 %v899
      %v910 = vpack.c.b16 %v356, %v355
      %v911 = vpack.c.b16 %v358, %v357
      %v912 = vpack.c.b16 %v360, %v359
      %v913 = vpack.c.b16 %v909, %v361
      %v922 = vunpack.c.l.b16 %v901
      %v923 = vunpack.c.l.b16 %v902
      %v924 = vunpack.c.l.b16 %v903
      %v925 = vunpack.c.l.b16 %v904
      %v926 = vunpack.c.l.b16 %v905
      %v927 = vunpack.c.l.b16 %v906
      %v928 = vunpack.c.l.b16 %v907
      %v929 = vunpack.c.l.b16 %v908
      %v930 = vpack.c.b16 %v923, %v922
      %v931 = vpack.c.b16 %v925, %v924
      %v932 = vpack.c.b16 %v927, %v926
      %v933 = vpack.c.b16 %v929, %v928
      %v939 = vsel %vm390, %v910, 0
      %v942 = vsel %vm390, %v911, 0
      %v945 = vsel %vm390, %v912, 0
      %v948 = vsel %vm390, %v913, 0
      %950 = vmatprep.subr.bf16.mxu0 0
      %951 = vmatpush1.bf16.msra.mxu0 0
      %952 = vmatprep.subr.bf16.mxu0 0
      %953 = vmatpush1.bf16.msra.mxu0 0
      %954 = vmatprep.subr.bf16.mxu0 0
      %955 = vmatpush1.bf16.msra.mxu0 0
      %956 = vmatprep.subr.bf16.mxu0 0
      %957 = vmatpush1.bf16.msra.mxu0 0
      %958 = vmatprep.subr.bf16.mxu0 0
      %959 = vmatpush1.bf16.msra.mxu0 %v933
      %960 = vmatprep.subr.bf16.mxu0 0
      %961 = vmatpush1.bf16.msra.mxu0 %v932
      %962 = vmatprep.subr.bf16.mxu0 0
      %963 = vmatpush1.bf16.msra.mxu0 %v931
      %964 = vmatprep.subr.bf16.mxu0 0
      %965 = vmatpush1.bf16.msra.mxu0 %v930
      %966 = vmatprep.subr.bf16.mxu0 0
      %967 = vmatpush2.bf16.msra.mxu0 0
      %968 = vmatprep.subr.bf16.mxu0 0
      %969 = vmatpush2.bf16.msra.mxu0 0
      %970 = vmatprep.subr.bf16.mxu0 0
      %971 = vmatpush2.bf16.msra.mxu0 0
      %972 = vmatprep.subr.bf16.mxu0 0
      %973 = vmatpush2.bf16.msra.mxu0 0
      %974 = vmatprep.subr.bf16.mxu0 0
      %975 = vmatpush2.bf16.msra.mxu0 0
      %976 = vmatprep.subr.bf16.mxu0 0
      %977 = vmatpush2.bf16.msra.mxu0 0
      %978 = vmatprep.subr.bf16.mxu0 0
      %979 = vmatpush2.bf16.msra.mxu0 0
      %980 = vmatprep.subr.bf16.mxu0 0
      %981 = vmatpush2.bf16.msra.mxu0 0
      %982 = vmatprep.mubr.bf16.mxu0 0
      %983 = vmatmul.mubr.bf16.gmra.mxu0 %v939
      %v984 = vpop.f32.mrf.mxu0
      %v985 = vadd.f32 0.0, %v984
      %v986 = vpop.f32.mrf.mxu0
      %v987 = vpop.f32.mrf.mxu0
      %v988 = vadd.f32 0.0, %v987
      %v989 = vpop.f32.mrf.mxu0
      %990 = vmatprep.mubr.bf16.mxu0 0
      %991 = vmatmul.mubr.bf16.gmra.mxu0 %v942
      %v992 = vpop.f32.mrf.mxu0
      %v993 = vadd.f32 0.0, %v992
      %v994 = vpop.f32.mrf.mxu0
      %v995 = vpop.f32.mrf.mxu0
      %v996 = vadd.f32 0.0, %v995
      %v997 = vpop.f32.mrf.mxu0
      %998 = vmatprep.mubr.bf16.mxu0 0
      %999 = vmatmul.mubr.bf16.gmra.mxu0 %v945
      %v1000 = vpop.f32.mrf.mxu0
      %v1001 = vadd.f32 0.0, %v1000
      %v1002 = vpop.f32.mrf.mxu0
      %v1003 = vpop.f32.mrf.mxu0
      %v1004 = vadd.f32 0.0, %v1003
      %v1005 = vpop.f32.mrf.mxu0
      %1006 = vmatprep.mubr.bf16.mxu0 0
      %1007 = vmatmul.mubr.bf16.gmra.mxu0 %v948
      %v1008 = vpop.f32.mrf.mxu0
      %v1009 = vadd.f32 0.0, %v1008
      %v1010 = vpop.f32.mrf.mxu0
      %v1011 = vpop.f32.mrf.mxu0
      %v1012 = vadd.f32 0.0, %v1011
      %v1013 = vpop.f32.mrf.mxu0
      %1014 = vdwg.mxu0
      %v1015 = vadd.f32 %v878, %v985
      %v1016 = vadd.f32 %v879, %v988
      %v1017 = vadd.f32 %v880, %v993
      %v1018 = vadd.f32 %v881, %v996
      %v1019 = vadd.f32 %v882, %v1001
      %v1020 = vadd.f32 %v883, %v1004
      %v1021 = vadd.f32 %v884, %v1009
      %v1022 = vadd.f32 %v885, %v1012
      %v1024 = vrot.slane %v218, 5
      %v1025 = vrot.slane %v1024, 4
      %v1026 = vrot.slane %v219, 5
      %v1027 = vsel %vm599, %v1025, %v1026
      %s1028 = scalar_lea.vmem %s1, 160
      %v1029 = vld [vmem:[%s1028] sm:$0xf]
      %v1030 = vld [vmem:[%s1028 + $0x4] sm:$0xf]
      %v1031 = vld [vmem:[%s1028 + $0x8] sm:$0xf]
      %v1032 = vld [vmem:[%s1028 + $0xc] sm:$0xf]
      %v1033 = vld [vmem:[%s1028 + $0x10] sm:$0xf]
      %v1034 = vld [vmem:[%s1028 + $0x14] sm:$0xf]
      %v1035 = vld [vmem:[%s1028 + $0x18] sm:$0xf]
      %v1036 = vld [vmem:[%s1028 + $0x1c] sm:$0xf]
      %v1037 = vunpack.c.l.b16 %v1027
      %v1038 = vpack.c.b16 %v643, %v642
      %v1039 = vpack.c.b16 %v645, %v644
      %v1040 = vpack.c.b16 %v647, %v646
      %v1041 = vpack.c.b16 %v1037, %v648
      %v1050 = vunpack.c.l.b16 %v1029
      %v1051 = vunpack.c.l.b16 %v1030
      %v1052 = vunpack.c.l.b16 %v1031
      %v1053 = vunpack.c.l.b16 %v1032
      %v1054 = vunpack.c.l.b16 %v1033
      %v1055 = vunpack.c.l.b16 %v1034
      %v1056 = vunpack.c.l.b16 %v1035
      %v1057 = vunpack.c.l.b16 %v1036
      %v1058 = vpack.c.b16 %v1051, %v1050
      %v1059 = vpack.c.b16 %v1053, %v1052
      %v1060 = vpack.c.b16 %v1055, %v1054
      %v1061 = vpack.c.b16 %v1057, %v1056
      %v1067 = vsel %vm390, %v1038, 0
      %v1070 = vsel %vm390, %v1039, 0
      %v1073 = vsel %vm390, %v1040, 0
      %v1076 = vsel %vm390, %v1041, 0
      %1078 = vmatprep.subr.bf16.mxu0 0
      %1079 = vmatpush1.bf16.msra.mxu0 0
      %1080 = vmatprep.subr.bf16.mxu0 0
      %1081 = vmatpush1.bf16.msra.mxu0 0
      %1082 = vmatprep.subr.bf16.mxu0 0
      %1083 = vmatpush1.bf16.msra.mxu0 0
      %1084 = vmatprep.subr.bf16.mxu0 0
      %1085 = vmatpush1.bf16.msra.mxu0 0
      %1086 = vmatprep.subr.bf16.mxu0 0
      %1087 = vmatpush1.bf16.msra.mxu0 %v1061
      %1088 = vmatprep.subr.bf16.mxu0 0
      %1089 = vmatpush1.bf16.msra.mxu0 %v1060
      %1090 = vmatprep.subr.bf16.mxu0 0
      %1091 = vmatpush1.bf16.msra.mxu0 %v1059
      %1092 = vmatprep.subr.bf16.mxu0 0
      %1093 = vmatpush1.bf16.msra.mxu0 %v1058
      %1094 = vmatprep.subr.bf16.mxu0 0
      %1095 = vmatpush2.bf16.msra.mxu0 0
      %1096 = vmatprep.subr.bf16.mxu0 0
      %1097 = vmatpush2.bf16.msra.mxu0 0
      %1098 = vmatprep.subr.bf16.mxu0 0
      %1099 = vmatpush2.bf16.msra.mxu0 0
      %1100 = vmatprep.subr.bf16.mxu0 0
      %1101 = vmatpush2.bf16.msra.mxu0 0
      %1102 = vmatprep.subr.bf16.mxu0 0
      %1103 = vmatpush2.bf16.msra.mxu0 0
      %1104 = vmatprep.subr.bf16.mxu0 0
      %1105 = vmatpush2.bf16.msra.mxu0 0
      %1106 = vmatprep.subr.bf16.mxu0 0
      %1107 = vmatpush2.bf16.msra.mxu0 0
      %1108 = vmatprep.subr.bf16.mxu0 0
      %1109 = vmatpush2.bf16.msra.mxu0 0
      %1110 = vmatprep.mubr.bf16.mxu0 0
      %1111 = vmatmul.mubr.bf16.gmra.mxu0 %v1067
      %v1112 = vpop.f32.mrf.mxu0
      %v1113 = vadd.f32 0.0, %v1112
      %v1114 = vpop.f32.mrf.mxu0
      %v1115 = vpop.f32.mrf.mxu0
      %v1116 = vadd.f32 0.0, %v1115
      %v1117 = vpop.f32.mrf.mxu0
      %1118 = vmatprep.mubr.bf16.mxu0 0
      %1119 = vmatmul.mubr.bf16.gmra.mxu0 %v1070
      %v1120 = vpop.f32.mrf.mxu0
      %v1121 = vadd.f32 0.0, %v1120
      %v1122 = vpop.f32.mrf.mxu0
      %v1123 = vpop.f32.mrf.mxu0
      %v1124 = vadd.f32 0.0, %v1123
      %v1125 = vpop.f32.mrf.mxu0
      %1126 = vmatprep.mubr.bf16.mxu0 0
      %1127 = vmatmul.mubr.bf16.gmra.mxu0 %v1073
      %v1128 = vpop.f32.mrf.mxu0
      %v1129 = vadd.f32 0.0, %v1128
      %v1130 = vpop.f32.mrf.mxu0
      %v1131 = vpop.f32.mrf.mxu0
      %v1132 = vadd.f32 0.0, %v1131
      %v1133 = vpop.f32.mrf.mxu0
      %1134 = vmatprep.mubr.bf16.mxu0 0
      %1135 = vmatmul.mubr.bf16.gmra.mxu0 %v1076
      %v1136 = vpop.f32.mrf.mxu0
      %v1137 = vadd.f32 0.0, %v1136
      %v1138 = vpop.f32.mrf.mxu0
      %v1139 = vpop.f32.mrf.mxu0
      %v1140 = vadd.f32 0.0, %v1139
      %v1141 = vpop.f32.mrf.mxu0
      %1142 = vdwg.mxu0
      %v1143 = vadd.f32 %v1015, %v1113
      %v1144 = vadd.f32 %v1016, %v1116
      %v1145 = vadd.f32 %v1017, %v1121
      %v1146 = vadd.f32 %v1018, %v1124
      %v1147 = vadd.f32 %v1019, %v1129
      %v1148 = vadd.f32 %v1020, %v1132
      %v1149 = vadd.f32 %v1021, %v1137
      %v1150 = vadd.f32 %v1022, %v1140
      %s1151 = scalar_lea.vmem %s1, 192
      %v1152 = vld [vmem:[%s1151] sm:$0xf]
      %v1153 = vld [vmem:[%s1151 + $0x4] sm:$0xf]
      %v1154 = vld [vmem:[%s1151 + $0x8] sm:$0xf]
      %v1155 = vld [vmem:[%s1151 + $0xc] sm:$0xf]
      %v1156 = vld [vmem:[%s1151 + $0x10] sm:$0xf]
      %v1157 = vld [vmem:[%s1151 + $0x14] sm:$0xf]
      %v1158 = vld [vmem:[%s1151 + $0x18] sm:$0xf]
      %v1159 = vld [vmem:[%s1151 + $0x1c] sm:$0xf]
      %v1161 = vunpack.c.l.b16 %v220
      %v1162 = vpack.c.b16 %v1161, %v772
      %v1171 = vunpack.c.l.b16 %v1152
      %v1172 = vunpack.c.l.b16 %v1153
      %v1173 = vunpack.c.l.b16 %v1154
      %v1174 = vunpack.c.l.b16 %v1155
      %v1175 = vunpack.c.l.b16 %v1156
      %v1176 = vunpack.c.l.b16 %v1157
      %v1177 = vunpack.c.l.b16 %v1158
      %v1178 = vunpack.c.l.b16 %v1159
      %v1179 = vpack.c.b16 %v1172, %v1171
      %v1180 = vpack.c.b16 %v1174, %v1173
      %v1181 = vpack.c.b16 %v1176, %v1175
      %v1182 = vpack.c.b16 %v1178, %v1177
      %v1188 = vsel %vm390, %v1162, 0
      %1190 = vmatprep.subr.bf16.mxu0 0
      %1191 = vmatpush1.bf16.msra.mxu0 0
      %1192 = vmatprep.subr.bf16.mxu0 0
      %1193 = vmatpush1.bf16.msra.mxu0 0
      %1194 = vmatprep.subr.bf16.mxu0 0
      %1195 = vmatpush1.bf16.msra.mxu0 0
      %1196 = vmatprep.subr.bf16.mxu0 0
      %1197 = vmatpush1.bf16.msra.mxu0 0
      %1198 = vmatprep.subr.bf16.mxu0 0
      %1199 = vmatpush1.bf16.msra.mxu0 %v1182
      %1200 = vmatprep.subr.bf16.mxu0 0
      %1201 = vmatpush1.bf16.msra.mxu0 %v1181
      %1202 = vmatprep.subr.bf16.mxu0 0
      %1203 = vmatpush1.bf16.msra.mxu0 %v1180
      %1204 = vmatprep.subr.bf16.mxu0 0
      %1205 = vmatpush1.bf16.msra.mxu0 %v1179
      %1206 = vmatprep.subr.bf16.mxu0 0
      %1207 = vmatpush2.bf16.msra.mxu0 0
      %1208 = vmatprep.subr.bf16.mxu0 0
      %1209 = vmatpush2.bf16.msra.mxu0 0
      %1210 = vmatprep.subr.bf16.mxu0 0
      %1211 = vmatpush2.bf16.msra.mxu0 0
      %1212 = vmatprep.subr.bf16.mxu0 0
      %1213 = vmatpush2.bf16.msra.mxu0 0
      %1214 = vmatprep.subr.bf16.mxu0 0
      %1215 = vmatpush2.bf16.msra.mxu0 0
      %1216 = vmatprep.subr.bf16.mxu0 0
      %1217 = vmatpush2.bf16.msra.mxu0 0
      %1218 = vmatprep.subr.bf16.mxu0 0
      %1219 = vmatpush2.bf16.msra.mxu0 0
      %1220 = vmatprep.subr.bf16.mxu0 0
      %1221 = vmatpush2.bf16.msra.mxu0 0
      %1222 = vmatprep.mubr.bf16.mxu0 0
      %1223 = vmatmul.mubr.bf16.gmra.mxu0 %v516
      %v1224 = vpop.f32.mrf.mxu0
      %v1225 = vadd.f32 0.0, %v1224
      %v1226 = vpop.f32.mrf.mxu0
      %v1227 = vpop.f32.mrf.mxu0
      %v1228 = vadd.f32 0.0, %v1227
      %v1229 = vpop.f32.mrf.mxu0
      %1230 = vmatprep.mubr.bf16.mxu0 0
      %1231 = vmatmul.mubr.bf16.gmra.mxu0 %v519
      %v1232 = vpop.f32.mrf.mxu0
      %v1233 = vadd.f32 0.0, %v1232
      %v1234 = vpop.f32.mrf.mxu0
      %v1235 = vpop.f32.mrf.mxu0
      %v1236 = vadd.f32 0.0, %v1235
      %v1237 = vpop.f32.mrf.mxu0
      %1238 = vmatprep.mubr.bf16.mxu0 0
      %1239 = vmatmul.mubr.bf16.gmra.mxu0 %v522
      %v1240 = vpop.f32.mrf.mxu0
      %v1241 = vadd.f32 0.0, %v1240
      %v1242 = vpop.f32.mrf.mxu0
      %v1243 = vpop.f32.mrf.mxu0
      %v1244 = vadd.f32 0.0, %v1243
      %v1245 = vpop.f32.mrf.mxu0
      %1246 = vmatprep.mubr.bf16.mxu0 0
      %1247 = vmatmul.mubr.bf16.gmra.mxu0 %v1188
      %v1248 = vpop.f32.mrf.mxu0
      %v1249 = vadd.f32 0.0, %v1248
      %v1250 = vpop.f32.mrf.mxu0
      %v1251 = vpop.f32.mrf.mxu0
      %v1252 = vadd.f32 0.0, %v1251
      %v1253 = vpop.f32.mrf.mxu0
      %1254 = vdwg.mxu0
      %v1255 = vadd.f32 %v1143, %v1225
      %v1256 = vadd.f32 %v1144, %v1228
      %v1257 = vadd.f32 %v1145, %v1233
      %v1258 = vadd.f32 %v1146, %v1236
      %v1259 = vadd.f32 %v1147, %v1241
      %v1260 = vadd.f32 %v1148, %v1244
      %v1261 = vadd.f32 %v1149, %v1249
      %v1262 = vadd.f32 %v1150, %v1252
      %v1264 = vshrl.u32 %v220, 16
      %v1266 = vrot.slane %v1264, 4
      %v1267 = vshll.u32 %v220, 16
      %v1269 = vrot.slane %v1267, 5
      %v1270 = vor.u32 %v1266, %v1269
      %v1271 = vrot.slane %v1270, 4
      %v1273 = vshll.u32 %v221, 16
      %v1275 = vrot.slane %v1273, 5
      %v1276 = vsel %vm232, %v1271, %v1275
      %s1277 = scalar_lea.vmem %s1, 224
      %v1278 = vld [vmem:[%s1277] sm:$0xf]
      %v1279 = vld [vmem:[%s1277 + $0x4] sm:$0xf]
      %v1280 = vld [vmem:[%s1277 + $0x8] sm:$0xf]
      %v1281 = vld [vmem:[%s1277 + $0xc] sm:$0xf]
      %v1282 = vld [vmem:[%s1277 + $0x10] sm:$0xf]
      %v1283 = vld [vmem:[%s1277 + $0x14] sm:$0xf]
      %v1284 = vld [vmem:[%s1277 + $0x18] sm:$0xf]
      %v1285 = vld [vmem:[%s1277 + $0x1c] sm:$0xf]
      %v1286 = vunpack.c.l.b16 %v1276
      %v1287 = vpack.c.b16 %v1286, %v909
      %v1296 = vunpack.c.l.b16 %v1278
      %v1297 = vunpack.c.l.b16 %v1279
      %v1298 = vunpack.c.l.b16 %v1280
      %v1299 = vunpack.c.l.b16 %v1281
      %v1300 = vunpack.c.l.b16 %v1282
      %v1301 = vunpack.c.l.b16 %v1283
      %v1302 = vunpack.c.l.b16 %v1284
      %v1303 = vunpack.c.l.b16 %v1285
      %v1304 = vpack.c.b16 %v1297, %v1296
      %v1305 = vpack.c.b16 %v1299, %v1298
      %v1306 = vpack.c.b16 %v1301, %v1300
      %v1307 = vpack.c.b16 %v1303, %v1302
      %v1313 = vsel %vm390, %v1287, 0
      %1315 = vmatprep.subr.bf16.mxu0 0
      %1316 = vmatpush1.bf16.msra.mxu0 0
      %1317 = vmatprep.subr.bf16.mxu0 0
      %1318 = vmatpush1.bf16.msra.mxu0 0
      %1319 = vmatprep.subr.bf16.mxu0 0
      %1320 = vmatpush1.bf16.msra.mxu0 0
      %1321 = vmatprep.subr.bf16.mxu0 0
      %1322 = vmatpush1.bf16.msra.mxu0 0
      %1323 = vmatprep.subr.bf16.mxu0 0
      %1324 = vmatpush1.bf16.msra.mxu0 %v1307
      %1325 = vmatprep.subr.bf16.mxu0 0
      %1326 = vmatpush1.bf16.msra.mxu0 %v1306
      %1327 = vmatprep.subr.bf16.mxu0 0
      %1328 = vmatpush1.bf16.msra.mxu0 %v1305
      %1329 = vmatprep.subr.bf16.mxu0 0
      %1330 = vmatpush1.bf16.msra.mxu0 %v1304
      %1331 = vmatprep.subr.bf16.mxu0 0
      %1332 = vmatpush2.bf16.msra.mxu0 0
      %1333 = vmatprep.subr.bf16.mxu0 0
      %1334 = vmatpush2.bf16.msra.mxu0 0
      %1335 = vmatprep.subr.bf16.mxu0 0
      %1336 = vmatpush2.bf16.msra.mxu0 0
      %1337 = vmatprep.subr.bf16.mxu0 0
      %1338 = vmatpush2.bf16.msra.mxu0 0
      %1339 = vmatprep.subr.bf16.mxu0 0
      %1340 = vmatpush2.bf16.msra.mxu0 0
      %1341 = vmatprep.subr.bf16.mxu0 0
      %1342 = vmatpush2.bf16.msra.mxu0 0
      %1343 = vmatprep.subr.bf16.mxu0 0
      %1344 = vmatpush2.bf16.msra.mxu0 0
      %1345 = vmatprep.subr.bf16.mxu0 0
      %1346 = vmatpush2.bf16.msra.mxu0 0
      %1347 = vmatprep.mubr.bf16.mxu0 0
      %1348 = vmatmul.mubr.bf16.gmra.mxu0 %v395
      %v1349 = vpop.f32.mrf.mxu0
      %v1350 = vadd.f32 0.0, %v1349
      %v1351 = vpop.f32.mrf.mxu0
      %v1352 = vpop.f32.mrf.mxu0
      %v1353 = vadd.f32 0.0, %v1352
      %v1354 = vpop.f32.mrf.mxu0
      %1355 = vmatprep.mubr.bf16.mxu0 0
      %1356 = vmatmul.mubr.bf16.gmra.mxu0 %v398
      %v1357 = vpop.f32.mrf.mxu0
      %v1358 = vadd.f32 0.0, %v1357
      %v1359 = vpop.f32.mrf.mxu0
      %v1360 = vpop.f32.mrf.mxu0
      %v1361 = vadd.f32 0.0, %v1360
      %v1362 = vpop.f32.mrf.mxu0
      %1363 = vmatprep.mubr.bf16.mxu0 0
      %1364 = vmatmul.mubr.bf16.gmra.mxu0 %v401
      %v1365 = vpop.f32.mrf.mxu0
      %v1366 = vadd.f32 0.0, %v1365
      %v1367 = vpop.f32.mrf.mxu0
      %v1368 = vpop.f32.mrf.mxu0
      %v1369 = vadd.f32 0.0, %v1368
      %v1370 = vpop.f32.mrf.mxu0
      %1371 = vmatprep.mubr.bf16.mxu0 0
      %1372 = vmatmul.mubr.bf16.gmra.mxu0 %v1313
      %v1373 = vpop.f32.mrf.mxu0
      %v1374 = vadd.f32 0.0, %v1373
      %v1375 = vpop.f32.mrf.mxu0
      %v1376 = vpop.f32.mrf.mxu0
      %v1377 = vadd.f32 0.0, %v1376
      %v1378 = vpop.f32.mrf.mxu0
      %1379 = vdwg.mxu0
      %v1380 = vadd.f32 %v1255, %v1350
      %v1381 = vadd.f32 %v1256, %v1353
      %v1382 = vadd.f32 %v1257, %v1358
      %v1383 = vadd.f32 %v1258, %v1361
      %v1384 = vadd.f32 %v1259, %v1366
      %v1385 = vadd.f32 %v1260, %v1369
      %v1386 = vadd.f32 %v1261, %v1374
      %v1387 = vadd.f32 %v1262, %v1377
      %v1389 = vrot.slane %v220, 5
      %v1390 = vrot.slane %v1389, 4
      %v1391 = vrot.slane %v221, 5
      %v1392 = vsel %vm599, %v1390, %v1391
      %s1393 = scalar_lea.vmem %s1, 256
      %v1394 = vld [vmem:[%s1393] sm:$0xf]
      %v1395 = vld [vmem:[%s1393 + $0x4] sm:$0xf]
      %v1396 = vld [vmem:[%s1393 + $0x8] sm:$0xf]
      %v1397 = vld [vmem:[%s1393 + $0xc] sm:$0xf]
      %v1398 = vld [vmem:[%s1393 + $0x10] sm:$0xf]
      %v1399 = vld [vmem:[%s1393 + $0x14] sm:$0xf]
      %v1400 = vld [vmem:[%s1393 + $0x18] sm:$0xf]
      %v1401 = vld [vmem:[%s1393 + $0x1c] sm:$0xf]
      %v1402 = vunpack.c.l.b16 %v1392
      %v1403 = vpack.c.b16 %v1402, %v1037
      %v1412 = vunpack.c.l.b16 %v1394
      %v1413 = vunpack.c.l.b16 %v1395
      %v1414 = vunpack.c.l.b16 %v1396
      %v1415 = vunpack.c.l.b16 %v1397
      %v1416 = vunpack.c.l.b16 %v1398
      %v1417 = vunpack.c.l.b16 %v1399
      %v1418 = vunpack.c.l.b16 %v1400
      %v1419 = vunpack.c.l.b16 %v1401
      %v1420 = vpack.c.b16 %v1413, %v1412
      %v1421 = vpack.c.b16 %v1415, %v1414
      %v1422 = vpack.c.b16 %v1417, %v1416
      %v1423 = vpack.c.b16 %v1419, %v1418
      %v1429 = vsel %vm390, %v1403, 0
      %1431 = vmatprep.subr.bf16.mxu0 0
      %1432 = vmatpush1.bf16.msra.mxu0 0
      %1433 = vmatprep.subr.bf16.mxu0 0
      %1434 = vmatpush1.bf16.msra.mxu0 0
      %1435 = vmatprep.subr.bf16.mxu0 0
      %1436 = vmatpush1.bf16.msra.mxu0 0
      %1437 = vmatprep.subr.bf16.mxu0 0
      %1438 = vmatpush1.bf16.msra.mxu0 0
      %1439 = vmatprep.subr.bf16.mxu0 0
      %1440 = vmatpush1.bf16.msra.mxu0 %v1423
      %1441 = vmatprep.subr.bf16.mxu0 0
      %1442 = vmatpush1.bf16.msra.mxu0 %v1422
      %1443 = vmatprep.subr.bf16.mxu0 0
      %1444 = vmatpush1.bf16.msra.mxu0 %v1421
      %1445 = vmatprep.subr.bf16.mxu0 0
      %1446 = vmatpush1.bf16.msra.mxu0 %v1420
      %1447 = vmatprep.subr.bf16.mxu0 0
      %1448 = vmatpush2.bf16.msra.mxu0 0
      %1449 = vmatprep.subr.bf16.mxu0 0
      %1450 = vmatpush2.bf16.msra.mxu0 0
      %1451 = vmatprep.subr.bf16.mxu0 0
      %1452 = vmatpush2.bf16.msra.mxu0 0
      %1453 = vmatprep.subr.bf16.mxu0 0
      %1454 = vmatpush2.bf16.msra.mxu0 0
      %1455 = vmatprep.subr.bf16.mxu0 0
      %1456 = vmatpush2.bf16.msra.mxu0 0
      %1457 = vmatprep.subr.bf16.mxu0 0
      %1458 = vmatpush2.bf16.msra.mxu0 0
      %1459 = vmatprep.subr.bf16.mxu0 0
      %1460 = vmatpush2.bf16.msra.mxu0 0
      %1461 = vmatprep.subr.bf16.mxu0 0
      %1462 = vmatpush2.bf16.msra.mxu0 0
      %1463 = vmatprep.mubr.bf16.mxu0 0
      %1464 = vmatmul.mubr.bf16.gmra.mxu0 %v681
      %v1465 = vpop.f32.mrf.mxu0
      %v1466 = vadd.f32 0.0, %v1465
      %v1467 = vpop.f32.mrf.mxu0
      %v1468 = vpop.f32.mrf.mxu0
      %v1469 = vadd.f32 0.0, %v1468
      %v1470 = vpop.f32.mrf.mxu0
      %1471 = vmatprep.mubr.bf16.mxu0 0
      %1472 = vmatmul.mubr.bf16.gmra.mxu0 %v684
      %v1473 = vpop.f32.mrf.mxu0
      %v1474 = vadd.f32 0.0, %v1473
      %v1475 = vpop.f32.mrf.mxu0
      %v1476 = vpop.f32.mrf.mxu0
      %v1477 = vadd.f32 0.0, %v1476
      %v1478 = vpop.f32.mrf.mxu0
      %1479 = vmatprep.mubr.bf16.mxu0 0
      %1480 = vmatmul.mubr.bf16.gmra.mxu0 %v687
      %v1481 = vpop.f32.mrf.mxu0
      %v1482 = vadd.f32 0.0, %v1481
      %v1483 = vpop.f32.mrf.mxu0
      %v1484 = vpop.f32.mrf.mxu0
      %v1485 = vadd.f32 0.0, %v1484
      %v1486 = vpop.f32.mrf.mxu0
      %1487 = vmatprep.mubr.bf16.mxu0 0
      %1488 = vmatmul.mubr.bf16.gmra.mxu0 %v1429
      %v1489 = vpop.f32.mrf.mxu0
      %v1490 = vadd.f32 0.0, %v1489
      %v1491 = vpop.f32.mrf.mxu0
      %v1492 = vpop.f32.mrf.mxu0
      %v1493 = vadd.f32 0.0, %v1492
      %v1494 = vpop.f32.mrf.mxu0
      %1495 = vdwg.mxu0
      %v1496 = vadd.f32 %v1380, %v1466
      %v1497 = vadd.f32 %v1381, %v1469
      %v1498 = vadd.f32 %v1382, %v1474
      %v1499 = vadd.f32 %v1383, %v1477
      %v1500 = vadd.f32 %v1384, %v1482
      %v1501 = vadd.f32 %v1385, %v1485
      %v1502 = vadd.f32 %v1386, %v1490
      %v1503 = vadd.f32 %v1387, %v1493
      %v1504 = vld [vmem:[%s2] sm:$0x1]
      %v1506 = vlaneseq
      %v1507 = vshrl.u32 %v1506, 7
      %v1508 = vsub.s32 0, %v1507
      %v1509 = vrot.slane %v1504, %v1508
      %v1511 = vadd.f32 %v1496, %v1509
      %v1512 = vadd.f32 %v1497, %v1509
      %v1513 = vadd.f32 %v1498, %v1509
      %v1514 = vadd.f32 %v1499, %v1509
      %v1515 = vadd.f32 %v1500, %v1509
      %v1516 = vadd.f32 %v1501, %v1509
      %v1517 = vadd.f32 %v1502, %v1509
      %v1518 = vadd.f32 %v1503, %v1509
      %v1519 = vmax.f32 %v1511, 0.0
      %v1520 = vmax.f32 %v1512, 0.0
      %v1521 = vmax.f32 %v1513, 0.0
      %v1522 = vmax.f32 %v1514, 0.0
      %v1523 = vmax.f32 %v1515, 0.0
      %v1524 = vmax.f32 %v1516, 0.0
      %v1525 = vmax.f32 %v1517, 0.0
      %v1526 = vmax.f32 %v1518, 0.0
      %v1527 = vpack.c.bf16 %v1519, %v1519
      %v1528 = vpack.c.bf16 %v1520, %v1520
      %v1529 = vpack.c.bf16 %v1521, %v1521
      %v1530 = vpack.c.bf16 %v1522, %v1522
      %v1531 = vpack.c.bf16 %v1523, %v1523
      %v1532 = vpack.c.bf16 %v1524, %v1524
      %v1533 = vpack.c.bf16 %v1525, %v1525
      %v1534 = vpack.c.bf16 %v1526, %v1526
      %1535 = vst [vmem:[%s199] sm:$0xf] %v1527
      %1536 = vst [vmem:[%s199 + $0x4] sm:$0xf] %v1528
      %1537 = vst [vmem:[%s199 + $0x8] sm:$0xf] %v1529
      %1538 = vst [vmem:[%s199 + $0xc] sm:$0xf] %v1530
      %1539 = vst [vmem:[%s199 + $0x10] sm:$0xf] %v1531
      %1540 = vst [vmem:[%s199 + $0x14] sm:$0xf] %v1532
      %1541 = vst [vmem:[%s199 + $0x18] sm:$0xf] %v1533
      %1542 = vst [vmem:[%s199 + $0x1c] sm:$0xf] %v1534
      %s1543 = smul.u32 8, %s19
      %p1544 = scmp.lt.s32.totalorder %s18, 3
      %s1545 = scalar_select %p1544, %s18, 3
      %p1546 = scmp.lt.s32.totalorder %s1543, 7
      %s1547 = scalar_select %p1546, %s1543, 7
      %s1548 = smul.addr %s1545, 8
      %s1549 = sadd.s32 %s1547, %s1548
      %s1550 = smul.addr %s1549, 4
      %s1551 = scalar_lea.vmem %s3, %s1550
      // Predicated region
      $region33: #{a_call__.8} parent=31 // pred_check
        %p1552 = pneg %p116
      $region34: #{a_call__.8} parent=31 // pred_check_branch
        %1554 = sbr.rel (%p1552) target = $region36
      $region35: #{a_call__.8} parent=31 // pred_region
        %s1555 = smul.u32 8, %s19
      $region36: #{a_call__.8} parent=31 // pred_fallthru
        _
    $region32: #{a_call__.8} parent=5 // pred_fallthru
      _
    %p1556 = scmp.le.s32.totalorder 2, %s9
    // Predicated region
    $region37: #{a_call__.8} parent=5 // pred_check
      %p1557 = pneg %p1556
    $region38: #{a_call__.8} parent=5 // pred_check_branch
      %1559 = sbr.rel (%p1557) target = $region40
    $region39: #{a_call__.8} parent=5 // pred_region
      %s1560 = ssub.s32 %s9, 2
      // Predicated region
      $region41: #{a_call__.8} parent=39 // pred_check
        %p1561 = pneg %p122
      $region42: #{a_call__.8} parent=39 // pred_check_branch
        %1563 = sbr.rel (%p1561) target = $region44
      $region43: #{a_call__.8} parent=39 // pred_region
        %s1564 = smul.u32 8, %s21
        %p1565 = scmp.lt.s32.totalorder %s20, 3
        %s1566 = scalar_select %p1565, %s20, 3
        %p1567 = scmp.lt.s32.totalorder %s1564, 7
        %s1568 = scalar_select %p1567, %s1564, 7
        %s1569 = smul.addr %s1566, 8
        %s1570 = sadd.s32 %s1568, %s1569
        %s1571 = smul.addr %s1570, 4
        %s1572 = scalar_lea.vmem %s3, %s1571
      $region44: #{a_call__.8} parent=39 // pred_fallthru
        _
    $region40: #{a_call__.8} parent=5 // pred_fallthru
      _
  $region6: #{a_call__.8} parent=0 // loop_footer
    %s13 = sadd.s32 1, %s9
  $region7: #{a_call__.8} parent=0 // loop_footer_branch
    %8 = sbr.rel target = $region3
  $region8: #{a_call__.8} parent=0 // loop_exit
    _

// kernel: a_call__.7
$region0: #{a_call__.7}
  #allocation0 [shape = 'u32[]', space=smem, size = 0x4, offset = 0x4, fixed_abs, tag = 'smem constant byte address 0x4 - core index']
  #allocation1 [shape = 'u32[144,128]{1,0:T(1,128)}', space=vmem, size = 0x12000, scoped, tag = 'internal scratch']
  %s0 = inlined_call_operand.vmem [shape: bf16[4,18,18,64], index: 0, kind: input, shape index: {}]
  %s1 = inlined_call_operand.vmem [shape: bf16[9,64,64], index: 1, kind: input, shape index: {}]
  %s2 = inlined_call_operand.vmem [shape: f32[1,64], index: 2, kind: input, shape index: {}]
  %s3 = inlined_call_operand.vmem [shape: bf16[4,16,16,64], index: 3, kind: output, shape index: {0}]
  %s4 = inlined_call_operand.vmem [shape: bf16[4,8,8,64], index: 4, kind: output, shape index: {1}]
  %5 = xla_tuple %s3, %s4
  %s6 = sld [smem:[#allocation0]]
  $region53: #{a_call__.7} parent=0
    _
  %s8 = ssub.s32 1, %s6
  %s9 = scalar_select 0, %s8, %s6
  loop: start=0, step=1, limit=6
  $region2: #{a_call__.7} parent=0 // loop_pre_header
    _
  $region3: #{a_call__.7} parent=0 // loop_header
    %s11 = sphi 0, %s15
    %p12 = scmp.ge.s32.totalorder %s11, 6
    %s18 = sphi 0, %s30
    %s19 = sphi 0, %s26
    %s20 = sphi 0, %s18
    %s21 = sphi 0, %s19
    %s22 = sphi 0, %s20
    %s23 = sphi 0, %s21
    %s35 = sphi 0, %s37
    %s38 = sphi 0, %s35
    %s39 = sphi 0, %s38
    %s55 = sphi 0, %s39
    %s59 = sphi 0, %s59
    %s61 = sphi 0, %s59
    %s62 = sphi 0, %s61
    %s76 = sphi 0, %s62
    %s80 = sphi 0, %s80
    %s82 = sphi 0, %s80
    %s83 = sphi 0, %s82
    %s97 = sphi 0, %s83
    %s105 = sphi 0, %s107
    %s108 = sphi 0, %s105
    %s109 = sphi 0, %s108
    %s125 = sphi 0, %s109
    %s133 = sphi 0, %s135
    %s136 = sphi 0, %s133
    %s137 = sphi 0, %s136
    %s153 = sphi 0, %s137
  $region4: #{a_call__.7} parent=0 // loop_header_branch
    %14 = sbr.rel (%p12) target = $region8
  $region5: #{a_call__.7} parent=0 // loop_body
    %s16 = ssub.s32 %s11, 1
    %s17 = ssub.s32 %s11, 2
    %s24 = sadd.s32 1, %s19
    %p25 = scmp.ge.s32.totalorder %s24, 1
    %s26 = scalar_select %p25, 0, %s24
    %s27 = sadd.s32 1, %s18
    %s28 = scalar_select %p25, %s27, %s18
    %p29 = scmp.ge.s32.totalorder %s28, 4
    %s30 = scalar_select %p29, 0, %s28
    %s31 = sadd.s32 %s18, %s19
    %s32 = sadd.s32 %s30, %s26
    %s33 = ssub.s32 %s31, %s32
    %p34 = scmp.eq.s32.totalorder %s33, 0
    %s36 = sadd.s32 %s35, 1
    %s37 = scalar_select %p34, %s35, %s36
    %p40 = pneg %p34
    %p41 = scmp.eq.s32.totalorder %s11, 3
    %p42 = por %p40, %p41
    %p43 = scmp.ne.s32.totalorder %s35, %s38
    %p44 = scmp.eq.s32.totalorder %s11, 0
    %p45 = por %p43, %p44
    %p46 = scmp.ne.s32.totalorder %s35, %s38
    %p47 = scmp.eq.s32.totalorder %s16, 3
    %p48 = por %p46, %p47
    %p49 = scmp.ne.s32.totalorder %s38, %s39
    %p50 = scmp.eq.s32.totalorder %s16, 0
    %p51 = por %p49, %p50
    %p52 = scmp.ne.s32.totalorder %s38, %s39
    %p53 = scmp.eq.s32.totalorder %s17, 3
    %p54 = por %p52, %p53
    %p56 = scmp.ne.s32.totalorder %s39, %s55
    %p57 = scmp.eq.s32.totalorder %s17, 0
    %p58 = por %p56, %p57
    %s60 = sadd.s32 %s59, 1
    %p63 = scmp.eq.s32.totalorder %s11, 3
    %p64 = scmp.ne.s32.totalorder %s59, %s61
    %p65 = scmp.eq.s32.totalorder %s11, 0
    %p66 = por %p64, %p65
    %p67 = scmp.ne.s32.totalorder %s59, %s61
    %p68 = scmp.eq.s32.totalorder %s16, 3
    %p69 = por %p67, %p68
    %p70 = scmp.ne.s32.totalorder %s61, %s62
    %p71 = scmp.eq.s32.totalorder %s16, 0
    %p72 = por %p70, %p71
    %p73 = scmp.ne.s32.totalorder %s61, %s62
    %p74 = scmp.eq.s32.totalorder %s17, 3
    %p75 = por %p73, %p74
    %p77 = scmp.ne.s32.totalorder %s62, %s76
    %p78 = scmp.eq.s32.totalorder %s17, 0
    %p79 = por %p77, %p78
    %s81 = sadd.s32 %s80, 1
    %p84 = scmp.eq.s32.totalorder %s11, 3
    %p85 = scmp.ne.s32.totalorder %s80, %s82
    %p86 = scmp.eq.s32.totalorder %s11, 0
    %p87 = por %p85, %p86
    %p88 = scmp.ne.s32.totalorder %s80, %s82
    %p89 = scmp.eq.s32.totalorder %s16, 3
    %p90 = por %p88, %p89
    %p91 = scmp.ne.s32.totalorder %s82, %s83
    %p92 = scmp.eq.s32.totalorder %s16, 0
    %p93 = por %p91, %p92
    %p94 = scmp.ne.s32.totalorder %s82, %s83
    %p95 = scmp.eq.s32.totalorder %s17, 3
    %p96 = por %p94, %p95
    %p98 = scmp.ne.s32.totalorder %s83, %s97
    %p99 = scmp.eq.s32.totalorder %s17, 0
    %p100 = por %p98, %p99
    %s101 = ssub.s32 %s18, %s30
    %s102 = ssub.s32 %s19, %s26
    %s103 = sor.u32 %s101, %s102
    %p104 = scmp.eq.s32.totalorder %s103, 0
    %s106 = sadd.s32 %s105, 1
    %s107 = scalar_select %p104, %s105, %s106
    %p110 = pneg %p104
    %p111 = scmp.eq.s32.totalorder %s11, 3
    %p112 = por %p110, %p111
    %p113 = scmp.ne.s32.totalorder %s105, %s108
    %p114 = scmp.eq.s32.totalorder %s11, 0
    %p115 = por %p113, %p114
    %p116 = scmp.ne.s32.totalorder %s105, %s108
    %p117 = scmp.eq.s32.totalorder %s16, 3
    %p118 = por %p116, %p117
    %p119 = scmp.ne.s32.totalorder %s108, %s109
    %p120 = scmp.eq.s32.totalorder %s16, 0
    %p121 = por %p119, %p120
    %p122 = scmp.ne.s32.totalorder %s108, %s109
    %p123 = scmp.eq.s32.totalorder %s17, 3
    %p124 = por %p122, %p123
    %p126 = scmp.ne.s32.totalorder %s109, %s125
    %p127 = scmp.eq.s32.totalorder %s17, 0
    %p128 = por %p126, %p127
    %s129 = ssub.s32 %s18, %s30
    %s130 = ssub.s32 %s19, %s26
    %s131 = sor.u32 %s129, %s130
    %p132 = scmp.eq.s32.totalorder %s131, 0
    %s134 = sadd.s32 %s133, 1
    %s135 = scalar_select %p132, %s133, %s134
    %p138 = pneg %p132
    %p139 = scmp.eq.s32.totalorder %s11, 3
    %p140 = por %p138, %p139
    %p141 = scmp.ne.s32.totalorder %s133, %s136
    %p142 = scmp.eq.s32.totalorder %s11, 0
    %p143 = por %p141, %p142
    %p144 = scmp.ne.s32.totalorder %s133, %s136
    %p145 = scmp.eq.s32.totalorder %s16, 3
    %p146 = por %p144, %p145
    %p147 = scmp.ne.s32.totalorder %s136, %s137
    %p148 = scmp.eq.s32.totalorder %s16, 0
    %p149 = por %p147, %p148
    %p150 = scmp.ne.s32.totalorder %s136, %s137
    %p151 = scmp.eq.s32.totalorder %s17, 3
    %p152 = por %p150, %p151
    %p154 = scmp.ne.s32.totalorder %s137, %s153
    %p155 = scmp.eq.s32.totalorder %s17, 0
    %p156 = por %p154, %p155
    %p157 = scmp.le.s32.totalorder 1, %s11
    %p158 = scmp.lt.s32.totalorder %s11, 5
    %p159 = pnand %p157, %p158
    %p160 = pneg %p159
    // Predicated region
    $region9: #{a_call__.7} parent=5 // pred_check
      _
    $region10: #{a_call__.7} parent=5 // pred_check_branch
      %162 = sbr.rel (%p159) target = $region12
    $region11: #{a_call__.7} parent=5 // pred_region
      %s163 = ssub.s32 %s11, 1
      // Predicated region
      $region13: #{a_call__.7} parent=11 // pred_check
        %p164 = pneg %p72
      $region14: #{a_call__.7} parent=11 // pred_check_branch
        %166 = sbr.rel (%p164) target = $region16
      $region15: #{a_call__.7} parent=11 // pred_region
        _
      $region16: #{a_call__.7} parent=11 // pred_fallthru
        _
      // Predicated region
      $region17: #{a_call__.7} parent=11 // pred_check
        %p167 = pneg %p93
      $region18: #{a_call__.7} parent=11 // pred_check_branch
        %169 = sbr.rel (%p167) target = $region20
      $region19: #{a_call__.7} parent=11 // pred_region
        _
      $region20: #{a_call__.7} parent=11 // pred_fallthru
        _
    $region12: #{a_call__.7} parent=5 // pred_fallthru
      _
    %p170 = scmp.lt.s32.totalorder %s11, 4
    // Predicated region
    $region21: #{a_call__.7} parent=5 // pred_check
      %p171 = pneg %p170
    $region22: #{a_call__.7} parent=5 // pred_check_branch
      %173 = sbr.rel (%p171) target = $region24
    $region23: #{a_call__.7} parent=5 // pred_region
      // Predicated region
      $region25: #{a_call__.7} parent=23 // pred_check
        %p174 = pneg %p45
      $region26: #{a_call__.7} parent=23 // pred_check_branch
        %176 = sbr.rel (%p174) target = $region28
      $region27: #{a_call__.7} parent=23 // pred_region
        %s177 = sadd.s32 %s18, %s19
        %p178 = scmp.lt.s32.totalorder %s177, 3
        %s179 = scalar_select %p178, %s177, 3
        %s180 = smul.addr %s179, 54
        %s181 = smul.addr %s180, 4
        %s182 = scalar_lea.vmem %s0, %s181
        %s183 = sadd.s32 %s18, %s19
      $region28: #{a_call__.7} parent=23 // pred_fallthru
        _
    $region24: #{a_call__.7} parent=5 // pred_fallthru
      _
    %p184 = scmp.le.s32.totalorder 1, %s11
    %p185 = scmp.lt.s32.totalorder %s11, 5
    %p186 = pnand %p184, %p185
    %p187 = pneg %p186
    // Predicated region
    $region29: #{a_call__.7} parent=5 // pred_check
      _
    $region30: #{a_call__.7} parent=5 // pred_check_branch
      %189 = sbr.rel (%p186) target = $region32
    $region31: #{a_call__.7} parent=5 // pred_region
      %s190 = ssub.s32 %s11, 1
      %s191 = sadd.s32 %s20, %s21
      %p192 = scmp.lt.s32.totalorder %s191, 3
      %s193 = scalar_select %p192, %s191, 3
      %s194 = smul.addr %s193, 54
      %s195 = smul.addr %s194, 4
      %s196 = scalar_lea.vmem %s0, %s195
      %p197 = pneg %p51
      %p198 = pneg %p48
      %p199 = pneg %p72
      %p200 = pneg %p69
      %p201 = pneg %p93
      %p202 = pneg %p90
      %p203 = pneg %p121
      %p204 = pneg %p118
      %s205 = smul.u32 16, %s21
      %p206 = scmp.lt.s32.totalorder %s20, 3
      %s207 = scalar_select %p206, %s20, 3
      %p208 = scmp.lt.s32.totalorder %s205, 15
      %s209 = scalar_select %p208, %s205, 15
      %s210 = smul.addr %s209, 2
      %s211 = smul.addr %s207, 32
      %s212 = sadd.s32 %s210, %s211
      %s213 = smul.addr %s212, 4
      %s214 = scalar_lea.vmem %s3, %s213
      %p215 = pneg %p149
      %p216 = pneg %p146
      %s217 = smul.u32 8, %s21
      %p218 = scmp.lt.s32.totalorder %s20, 3
      %s219 = scalar_select %p218, %s20, 3
      %p220 = scmp.lt.s32.totalorder %s217, 7
      %s221 = scalar_select %p220, %s217, 7
      %s222 = smul.addr %s219, 8
      %s223 = sadd.s32 %s221, %s222
      %s224 = smul.addr %s223, 4
      %s225 = scalar_lea.vmem %s4, %s224
      %s226 = sadd.s32 %s20, %s21
      %p227 = scmp.lt.s32.totalorder %s226, 3
      %s228 = scalar_select %p227, %s226, 3
      %s229 = smul.addr %s228, 54
      %s230 = smul.addr %s229, 4
      %s231 = scalar_lea.vmem %s0, %s230
      %s232 = sadd.s32 %s20, %s21
      %s233 = smul.u32 16, %s21
      %p234 = scmp.lt.s32.totalorder %s20, 3
      %s235 = scalar_select %p234, %s20, 3
      %p236 = scmp.lt.s32.totalorder %s233, 15
      %s237 = scalar_select %p236, %s233, 15
      %s238 = smul.addr %s237, 2
      %s239 = smul.addr %s235, 32
      %s240 = sadd.s32 %s238, %s239
      %s241 = smul.addr %s240, 4
      %s242 = scalar_lea.vmem %s3, %s241
      %s243 = smul.u32 16, %s21
      %s244 = smul.u32 8, %s21
      %p245 = scmp.lt.s32.totalorder %s20, 3
      %s246 = scalar_select %p245, %s20, 3
      %p247 = scmp.lt.s32.totalorder %s244, 7
      %s248 = scalar_select %p247, %s244, 7
      %s249 = smul.addr %s246, 8
      %s250 = sadd.s32 %s248, %s249
      %s251 = smul.addr %s250, 4
      %s252 = scalar_lea.vmem %s4, %s251
      %s253 = smul.u32 8, %s21
      %v255 = vld [vmem:[%s231] sm:$0xf]
      %v256 = vld [vmem:[%s231 + $0x4] sm:$0xf]
      %v257 = vld [vmem:[%s231 + $0x8] sm:$0x1]
      %v258 = vld [vmem:[%s231 + $0xc] sm:$0xf]
      %v259 = vld [vmem:[%s231 + $0x10] sm:$0xf]
      %v260 = vld [vmem:[%s231 + $0x14] sm:$0x1]
      %v261 = vld [vmem:[%s231 + $0x18] sm:$0xf]
      %v262 = vld [vmem:[%s231 + $0x1c] sm:$0xf]
      %v263 = vld [vmem:[%s231 + $0x20] sm:$0x1]
      %v264 = vld [vmem:[%s231 + $0x24] sm:$0xf]
      %v265 = vld [vmem:[%s231 + $0x28] sm:$0xf]
      %v266 = vld [vmem:[%s231 + $0x2c] sm:$0x1]
      %v267 = vld [vmem:[%s231 + $0x30] sm:$0xf]
      %v268 = vld [vmem:[%s231 + $0x34] sm:$0xf]
      %v269 = vld [vmem:[%s231 + $0x38] sm:$0x1]
      %v270 = vld [vmem:[%s231 + $0x3c] sm:$0xf]
      %v271 = vld [vmem:[%s231 + $0x40] sm:$0xf]
      %v272 = vld [vmem:[%s231 + $0x44] sm:$0x1]
      %v273 = vld [vmem:[%s231 + $0x48] sm:$0xf]
      %v274 = vld [vmem:[%s231 + $0x4c] sm:$0xf]
      %v275 = vld [vmem:[%s231 + $0x50] sm:$0x1]
      %v276 = vld [vmem:[%s231 + $0x54] sm:$0xf]
      %v277 = vld [vmem:[%s231 + $0x58] sm:$0xf]
      %v278 = vld [vmem:[%s231 + $0x5c] sm:$0x1]
      %v279 = vld [vmem:[%s231 + $0x60] sm:$0xf]
      %v280 = vld [vmem:[%s231 + $0x64] sm:$0xf]
      %v281 = vld [vmem:[%s231 + $0x68] sm:$0x1]
      %v282 = vld [vmem:[%s231 + $0x6c] sm:$0xf]
      %v283 = vld [vmem:[%s231 + $0x70] sm:$0xf]
      %v284 = vld [vmem:[%s231 + $0x74] sm:$0x1]
      %v285 = vld [vmem:[%s231 + $0x78] sm:$0xf]
      %v286 = vld [vmem:[%s231 + $0x7c] sm:$0xf]
      %v287 = vld [vmem:[%s231 + $0x80] sm:$0x1]
      %v288 = vld [vmem:[%s231 + $0x84] sm:$0xf]
      %v289 = vld [vmem:[%s231 + $0x88] sm:$0xf]
      %v290 = vld [vmem:[%s231 + $0x8c] sm:$0x1]
      %v291 = vld [vmem:[%s231 + $0x90] sm:$0xf]
      %v292 = vld [vmem:[%s231 + $0x94] sm:$0xf]
      %v293 = vld [vmem:[%s231 + $0x98] sm:$0x1]
      %v294 = vld [vmem:[%s231 + $0x9c] sm:$0xf]
      %v295 = vld [vmem:[%s231 + $0xa0] sm:$0xf]
      %v296 = vld [vmem:[%s231 + $0xa4] sm:$0x1]
      %v297 = vld [vmem:[%s231 + $0xa8] sm:$0xf]
      %v298 = vld [vmem:[%s231 + $0xac] sm:$0xf]
      %v299 = vld [vmem:[%s231 + $0xb0] sm:$0x1]
      %v300 = vld [vmem:[%s231 + $0xb4] sm:$0xf]
      %v301 = vld [vmem:[%s231 + $0xb8] sm:$0xf]
      %v302 = vld [vmem:[%s231 + $0xbc] sm:$0x1]
      %v303 = vld [vmem:[%s231 + $0xc0] sm:$0xf]
      %v304 = vld [vmem:[%s231 + $0xc4] sm:$0xf]
      %v305 = vld [vmem:[%s231 + $0xc8] sm:$0x1]
      %v306 = vld [vmem:[%s231 + $0xcc] sm:$0xf]
      %v307 = vld [vmem:[%s231 + $0xd0] sm:$0xf]
      %v308 = vld [vmem:[%s231 + $0xd4] sm:$0x1]
      %v309 = vld [vmem:[%s1] sm:$0xf]
      %v310 = vld [vmem:[%s1 + $0x4] sm:$0xf]
      %v311 = vld [vmem:[%s1 + $0x8] sm:$0xf]
      %v312 = vld [vmem:[%s1 + $0xc] sm:$0xf]
      %v313 = vld [vmem:[%s1 + $0x10] sm:$0xf]
      %v314 = vld [vmem:[%s1 + $0x14] sm:$0xf]
      %v315 = vld [vmem:[%s1 + $0x18] sm:$0xf]
      %v316 = vld [vmem:[%s1 + $0x1c] sm:$0xf]
      %vm317 = vsmask.f32 3328
      %vm318 = vsmask.f32 7440
      %vm319 = vmor %vm317, %vm318
      %v321 = vshrl.u32 %v255, 16
      %v323 = vrot.slane %v321, 4
      %v324 = vshll.u32 %v255, 16
      %v326 = vrot.slane %v324, 5
      %v327 = vor.u32 %v323, %v326
      %v328 = vrot.slane %v327, 4
      %v330 = vshll.u32 %v256, 16
      %v332 = vrot.slane %v330, 5
      %v333 = vsel %vm319, %v328, %v332
      %v334 = vshrl.u32 %v256, 16
      %v336 = vrot.slane %v334, 4
      %v337 = vor.u32 %v336, %v332
      %v338 = vrot.slane %v337, 4
      %v340 = vshll.u32 %v257, 16
      %v342 = vrot.slane %v340, 5
      %v343 = vsel %vm319, %v338, %v342
      %v345 = vshrl.u32 %v258, 16
      %v347 = vrot.slane %v345, 4
      %v348 = vshll.u32 %v258, 16
      %v350 = vrot.slane %v348, 5
      %v351 = vor.u32 %v347, %v350
      %v352 = vrot.slane %v351, 4
      %v354 = vshll.u32 %v259, 16
      %v356 = vrot.slane %v354, 5
      %v357 = vsel %vm319, %v352, %v356
      %v358 = vshrl.u32 %v259, 16
      %v360 = vrot.slane %v358, 4
      %v361 = vor.u32 %v360, %v356
      %v362 = vrot.slane %v361, 4
      %v364 = vshll.u32 %v260, 16
      %v366 = vrot.slane %v364, 5
      %v367 = vsel %vm319, %v362, %v366
      %v369 = vshrl.u32 %v261, 16
      %v371 = vrot.slane %v369, 4
      %v372 = vshll.u32 %v261, 16
      %v374 = vrot.slane %v372, 5
      %v375 = vor.u32 %v371, %v374
      %v376 = vrot.slane %v375, 4
      %v378 = vshll.u32 %v262, 16
      %v380 = vrot.slane %v378, 5
      %v381 = vsel %vm319, %v376, %v380
      %v382 = vshrl.u32 %v262, 16
      %v384 = vrot.slane %v382, 4
      %v385 = vor.u32 %v384, %v380
      %v386 = vrot.slane %v385, 4
      %v388 = vshll.u32 %v263, 16
      %v390 = vrot.slane %v388, 5
      %v391 = vsel %vm319, %v386, %v390
      %v393 = vshrl.u32 %v264, 16
      %v395 = vrot.slane %v393, 4
      %v396 = vshll.u32 %v264, 16
      %v398 = vrot.slane %v396, 5
      %v399 = vor.u32 %v395, %v398
      %v400 = vrot.slane %v399, 4
      %v402 = vshll.u32 %v265, 16
      %v404 = vrot.slane %v402, 5
      %v405 = vsel %vm319, %v400, %v404
      %v406 = vshrl.u32 %v265, 16
      %v408 = vrot.slane %v406, 4
      %v409 = vor.u32 %v408, %v404
      %v410 = vrot.slane %v409, 4
      %v412 = vshll.u32 %v266, 16
      %v414 = vrot.slane %v412, 5
      %v415 = vsel %vm319, %v410, %v414
      %v417 = vshrl.u32 %v267, 16
      %v419 = vrot.slane %v417, 4
      %v420 = vshll.u32 %v267, 16
      %v422 = vrot.slane %v420, 5
      %v423 = vor.u32 %v419, %v422
      %v424 = vrot.slane %v423, 4
      %v426 = vshll.u32 %v268, 16
      %v428 = vrot.slane %v426, 5
      %v429 = vsel %vm319, %v424, %v428
      %v430 = vshrl.u32 %v268, 16
      %v432 = vrot.slane %v430, 4
      %v433 = vor.u32 %v432, %v428
      %v434 = vrot.slane %v433, 4
      %v436 = vshll.u32 %v269, 16
      %v438 = vrot.slane %v436, 5
      %v439 = vsel %vm319, %v434, %v438
      %v441 = vshrl.u32 %v270, 16
      %v443 = vrot.slane %v441, 4
      %v444 = vshll.u32 %v270, 16
      %v446 = vrot.slane %v444, 5
      %v447 = vor.u32 %v443, %v446
      %v448 = vrot.slane %v447, 4
      %v450 = vshll.u32 %v271, 16
      %v452 = vrot.slane %v450, 5
      %v453 = vsel %vm319, %v448, %v452
      %v454 = vshrl.u32 %v271, 16
      %v456 = vrot.slane %v454, 4
      %v457 = vor.u32 %v456, %v452
      %v458 = vrot.slane %v457, 4
      %v460 = vshll.u32 %v272, 16
      %v462 = vrot.slane %v460, 5
      %v463 = vsel %vm319, %v458, %v462
      %v465 = vshrl.u32 %v273, 16
      %v467 = vrot.slane %v465, 4
      %v468 = vshll.u32 %v273, 16
      %v470 = vrot.slane %v468, 5
      %v471 = vor.u32 %v467, %v470
      %v472 = vrot.slane %v471, 4
      %v474 = vshll.u32 %v274, 16
      %v476 = vrot.slane %v474, 5
      %v477 = vsel %vm319, %v472, %v476
      %v478 = vshrl.u32 %v274, 16
      %v480 = vrot.slane %v478, 4
      %v481 = vor.u32 %v480, %v476
      %v482 = vrot.slane %v481, 4
      %v484 = vshll.u32 %v275, 16
      %v486 = vrot.slane %v484, 5
      %v487 = vsel %vm319, %v482, %v486
      %v489 = vshrl.u32 %v276, 16
      %v491 = vrot.slane %v489, 4
      %v492 = vshll.u32 %v276, 16
      %v494 = vrot.slane %v492, 5
      %v495 = vor.u32 %v491, %v494
      %v496 = vrot.slane %v495, 4
      %v498 = vshll.u32 %v277, 16
      %v500 = vrot.slane %v498, 5
      %v501 = vsel %vm319, %v496, %v500
      %v502 = vshrl.u32 %v277, 16
      %v504 = vrot.slane %v502, 4
      %v505 = vor.u32 %v504, %v500
      %v506 = vrot.slane %v505, 4
      %v508 = vshll.u32 %v278, 16
      %v510 = vrot.slane %v508, 5
      %v511 = vsel %vm319, %v506, %v510
      %v513 = vshrl.u32 %v279, 16
      %v515 = vrot.slane %v513, 4
      %v516 = vshll.u32 %v279, 16
      %v518 = vrot.slane %v516, 5
      %v519 = vor.u32 %v515, %v518
      %v520 = vrot.slane %v519, 4
      %v522 = vshll.u32 %v280, 16
      %v524 = vrot.slane %v522, 5
      %v525 = vsel %vm319, %v520, %v524
      %v526 = vshrl.u32 %v280, 16
      %v528 = vrot.slane %v526, 4
      %v529 = vor.u32 %v528, %v524
      %v530 = vrot.slane %v529, 4
      %v532 = vshll.u32 %v281, 16
      %v534 = vrot.slane %v532, 5
      %v535 = vsel %vm319, %v530, %v534
      %v537 = vshrl.u32 %v282, 16
      %v539 = vrot.slane %v537, 4
      %v540 = vshll.u32 %v282, 16
      %v542 = vrot.slane %v540, 5
      %v543 = vor.u32 %v539, %v542
      %v544 = vrot.slane %v543, 4
      %v546 = vshll.u32 %v283, 16
      %v548 = vrot.slane %v546, 5
      %v549 = vsel %vm319, %v544, %v548
      %v550 = vshrl.u32 %v283, 16
      %v552 = vrot.slane %v550, 4
      %v553 = vor.u32 %v552, %v548
      %v554 = vrot.slane %v553, 4
      %v556 = vshll.u32 %v284, 16
      %v558 = vrot.slane %v556, 5
      %v559 = vsel %vm319, %v554, %v558
      %v561 = vshrl.u32 %v285, 16
      %v563 = vrot.slane %v561, 4
      %v564 = vshll.u32 %v285, 16
      %v566 = vrot.slane %v564, 5
      %v567 = vor.u32 %v563, %v566
      %v568 = vrot.slane %v567, 4
      %v570 = vshll.u32 %v286, 16
      %v572 = vrot.slane %v570, 5
      %v573 = vsel %vm319, %v568, %v572
      %v574 = vshrl.u32 %v286, 16
      %v576 = vrot.slane %v574, 4
      %v577 = vor.u32 %v576, %v572
      %v578 = vrot.slane %v577, 4
      %v580 = vshll.u32 %v287, 16
      %v582 = vrot.slane %v580, 5
      %v583 = vsel %vm319, %v578, %v582
      %v585 = vshrl.u32 %v288, 16
      %v587 = vrot.slane %v585, 4
      %v588 = vshll.u32 %v288, 16
      %v590 = vrot.slane %v588, 5
      %v591 = vor.u32 %v587, %v590
      %v592 = vrot.slane %v591, 4
      %v594 = vshll.u32 %v289, 16
      %v596 = vrot.slane %v594, 5
      %v597 = vsel %vm319, %v592, %v596
      %v598 = vshrl.u32 %v289, 16
      %v600 = vrot.slane %v598, 4
      %v601 = vor.u32 %v600, %v596
      %v602 = vrot.slane %v601, 4
      %v604 = vshll.u32 %v290, 16
      %v606 = vrot.slane %v604, 5
      %v607 = vsel %vm319, %v602, %v606
      %v609 = vshrl.u32 %v291, 16
      %v611 = vrot.slane %v609, 4
      %v612 = vshll.u32 %v291, 16
      %v614 = vrot.slane %v612, 5
      %v615 = vor.u32 %v611, %v614
      %v616 = vrot.slane %v615, 4
      %v618 = vshll.u32 %v292, 16
      %v620 = vrot.slane %v618, 5
      %v621 = vsel %vm319, %v616, %v620
      %v622 = vshrl.u32 %v292, 16
      %v624 = vrot.slane %v622, 4
      %v625 = vor.u32 %v624, %v620
      %v626 = vrot.slane %v625, 4
      %v628 = vshll.u32 %v293, 16
      %v630 = vrot.slane %v628, 5
      %v631 = vsel %vm319, %v626, %v630
      %v633 = vshrl.u32 %v294, 16
      %v635 = vrot.slane %v633, 4
      %v636 = vshll.u32 %v294, 16
      %v638 = vrot.slane %v636, 5
      %v639 = vor.u32 %v635, %v638
      %v640 = vrot.slane %v639, 4
      %v642 = vshll.u32 %v295, 16
      %v644 = vrot.slane %v642, 5
      %v645 = vsel %vm319, %v640, %v644
      %v646 = vshrl.u32 %v295, 16
      %v648 = vrot.slane %v646, 4
      %v649 = vor.u32 %v648, %v644
      %v650 = vrot.slane %v649, 4
      %v652 = vshll.u32 %v296, 16
      %v654 = vrot.slane %v652, 5
      %v655 = vsel %vm319, %v650, %v654
      %v657 = vshrl.u32 %v297, 16
      %v659 = vrot.slane %v657, 4
      %v660 = vshll.u32 %v297, 16
      %v662 = vrot.slane %v660, 5
      %v663 = vor.u32 %v659, %v662
      %v664 = vrot.slane %v663, 4
      %v666 = vshll.u32 %v298, 16
      %v668 = vrot.slane %v666, 5
      %v669 = vsel %vm319, %v664, %v668
      %v670 = vshrl.u32 %v298, 16
      %v672 = vrot.slane %v670, 4
      %v673 = vor.u32 %v672, %v668
      %v674 = vrot.slane %v673, 4
      %v676 = vshll.u32 %v299, 16
      %v678 = vrot.slane %v676, 5
      %v679 = vsel %vm319, %v674, %v678
      %v681 = vshrl.u32 %v300, 16
      %v683 = vrot.slane %v681, 4
      %v684 = vshll.u32 %v300, 16
      %v686 = vrot.slane %v684, 5
      %v687 = vor.u32 %v683, %v686
      %v688 = vrot.slane %v687, 4
      %v690 = vshll.u32 %v301, 16
      %v692 = vrot.slane %v690, 5
      %v693 = vsel %vm319, %v688, %v692
      %v694 = vshrl.u32 %v301, 16
      %v696 = vrot.slane %v694, 4
      %v697 = vor.u32 %v696, %v692
      %v698 = vrot.slane %v697, 4
      %v700 = vshll.u32 %v302, 16
      %v702 = vrot.slane %v700, 5
      %v703 = vsel %vm319, %v698, %v702
      %s704 = scalar_lea.vmem %s1, 32
      %v705 = vld [vmem:[%s704] sm:$0xf]
      %v706 = vld [vmem:[%s704 + $0x4] sm:$0xf]
      %v707 = vld [vmem:[%s704 + $0x8] sm:$0xf]
      %v708 = vld [vmem:[%s704 + $0xc] sm:$0xf]
      %v709 = vld [vmem:[%s704 + $0x10] sm:$0xf]
      %v710 = vld [vmem:[%s704 + $0x14] sm:$0xf]
      %v711 = vld [vmem:[%s704 + $0x18] sm:$0xf]
      %v712 = vld [vmem:[%s704 + $0x1c] sm:$0xf]
      %v713 = vunpack.c.l.b16 %v333
      %v714 = vunpack.c.l.b16 %v343
      %v715 = vunpack.c.l.b16 %v357
      %v716 = vunpack.c.l.b16 %v367
      %v717 = vunpack.c.l.b16 %v381
      %v718 = vunpack.c.l.b16 %v391
      %v719 = vunpack.c.l.b16 %v405
      %v720 = vunpack.c.l.b16 %v415
      %v721 = vunpack.c.l.b16 %v429
      %v722 = vunpack.c.l.b16 %v439
      %v723 = vunpack.c.l.b16 %v453
      %v724 = vunpack.c.l.b16 %v463
      %v725 = vunpack.c.l.b16 %v477
      %v726 = vunpack.c.l.b16 %v487
      %v727 = vunpack.c.l.b16 %v501
      %v728 = vunpack.c.l.b16 %v511
      %v729 = vunpack.c.l.b16 %v525
      %v730 = vunpack.c.l.b16 %v535
      %v731 = vunpack.c.l.b16 %v549
      %v732 = vunpack.c.l.b16 %v559
      %v733 = vunpack.c.l.b16 %v573
      %v734 = vunpack.c.l.b16 %v583
      %v735 = vunpack.c.l.b16 %v597
      %v736 = vunpack.c.l.b16 %v607
      %v737 = vunpack.c.l.b16 %v621
      %v738 = vunpack.c.l.b16 %v631
      %v739 = vunpack.c.l.b16 %v645
      %v740 = vunpack.c.l.b16 %v655
      %v741 = vunpack.c.l.b16 %v669
      %v742 = vunpack.c.l.b16 %v679
      %v743 = vunpack.c.l.b16 %v693
      %v744 = vunpack.c.l.b16 %v703
      %v745 = vpack.c.b16 %v714, %v713
      %v746 = vpack.c.b16 %v716, %v715
      %v747 = vpack.c.b16 %v718, %v717
      %v748 = vpack.c.b16 %v720, %v719
      %v749 = vpack.c.b16 %v722, %v721
      %v750 = vpack.c.b16 %v724, %v723
      %v751 = vpack.c.b16 %v726, %v725
      %v752 = vpack.c.b16 %v728, %v727
      %v753 = vpack.c.b16 %v730, %v729
      %v754 = vpack.c.b16 %v732, %v731
      %v755 = vpack.c.b16 %v734, %v733
      %v756 = vpack.c.b16 %v736, %v735
      %v757 = vpack.c.b16 %v738, %v737
      %v758 = vpack.c.b16 %v740, %v739
      %v759 = vpack.c.b16 %v742, %v741
      %v760 = vpack.c.b16 %v744, %v743
      %v769 = vunpack.c.l.b16 %v705
      %v770 = vunpack.c.l.b16 %v706
      %v771 = vunpack.c.l.b16 %v707
      %v772 = vunpack.c.l.b16 %v708
      %v773 = vunpack.c.l.b16 %v709
      %v774 = vunpack.c.l.b16 %v710
      %v775 = vunpack.c.l.b16 %v711
      %v776 = vunpack.c.l.b16 %v712
      %v777 = vpack.c.b16 %v770, %v769
      %v778 = vpack.c.b16 %v772, %v771
      %v779 = vpack.c.b16 %v774, %v773
      %v780 = vpack.c.b16 %v776, %v775
      %vm785 = vcmask 523264
      %v787 = vsel %vm785, %v745, 0
      %v790 = vsel %vm785, %v746, 0
      %v793 = vsel %vm785, %v747, 0
      %v796 = vsel %vm785, %v748, 0
      %v799 = vsel %vm785, %v749, 0
      %v802 = vsel %vm785, %v750, 0
      %v805 = vsel %vm785, %v751, 0
      %v808 = vsel %vm785, %v752, 0
      %v811 = vsel %vm785, %v753, 0
      %v814 = vsel %vm785, %v754, 0
      %v817 = vsel %vm785, %v755, 0
      %v820 = vsel %vm785, %v756, 0
      %v823 = vsel %vm785, %v757, 0
      %v826 = vsel %vm785, %v758, 0
      %v829 = vsel %vm785, %v759, 0
      %v832 = vsel %vm785, %v760, 0
      %834 = vmatprep.subr.bf16.mxu0 0
      %835 = vmatpush1.bf16.msra.mxu0 0
      %836 = vmatprep.subr.bf16.mxu0 0
      %837 = vmatpush1.bf16.msra.mxu0 0
      %838 = vmatprep.subr.bf16.mxu0 0
      %839 = vmatpush1.bf16.msra.mxu0 0
      %840 = vmatprep.subr.bf16.mxu0 0
      %841 = vmatpush1.bf16.msra.mxu0 0
      %842 = vmatprep.subr.bf16.mxu0 0
      %843 = vmatpush1.bf16.msra.mxu0 %v780
      %844 = vmatprep.subr.bf16.mxu0 0
      %845 = vmatpush1.bf16.msra.mxu0 %v779
      %846 = vmatprep.subr.bf16.mxu0 0
      %847 = vmatpush1.bf16.msra.mxu0 %v778
      %848 = vmatprep.subr.bf16.mxu0 0
      %849 = vmatpush1.bf16.msra.mxu0 %v777
      %850 = vmatprep.subr.bf16.mxu0 0
      %851 = vmatpush2.bf16.msra.mxu0 0
      %852 = vmatprep.subr.bf16.mxu0 0
      %853 = vmatpush2.bf16.msra.mxu0 0
      %854 = vmatprep.subr.bf16.mxu0 0
      %855 = vmatpush2.bf16.msra.mxu0 0
      %856 = vmatprep.subr.bf16.mxu0 0
      %857 = vmatpush2.bf16.msra.mxu0 0
      %858 = vmatprep.subr.bf16.mxu0 0
      %859 = vmatpush2.bf16.msra.mxu0 0
      %860 = vmatprep.subr.bf16.mxu0 0
      %861 = vmatpush2.bf16.msra.mxu0 0
      %862 = vmatprep.subr.bf16.mxu0 0
      %863 = vmatpush2.bf16.msra.mxu0 0
      %864 = vmatprep.subr.bf16.mxu0 0
      %865 = vmatpush2.bf16.msra.mxu0 0
      %866 = vmatprep.mubr.bf16.mxu0 0
      %867 = vmatmul.mubr.bf16.gmra.mxu0 %v787
      %v868 = vpop.f32.mrf.mxu0
      %v869 = vadd.f32 0.0, %v868
      %v870 = vpop.f32.mrf.mxu0
      %v871 = vpop.f32.mrf.mxu0
      %v872 = vadd.f32 0.0, %v871
      %v873 = vpop.f32.mrf.mxu0
      %874 = vmatprep.mubr.bf16.mxu0 0
      %875 = vmatmul.mubr.bf16.gmra.mxu0 %v790
      %v876 = vpop.f32.mrf.mxu0
      %v877 = vadd.f32 0.0, %v876
      %v878 = vpop.f32.mrf.mxu0
      %v879 = vpop.f32.mrf.mxu0
      %v880 = vadd.f32 0.0, %v879
      %v881 = vpop.f32.mrf.mxu0
      %882 = vmatprep.mubr.bf16.mxu0 0
      %883 = vmatmul.mubr.bf16.gmra.mxu0 %v793
      %v884 = vpop.f32.mrf.mxu0
      %v885 = vadd.f32 0.0, %v884
      %v886 = vpop.f32.mrf.mxu0
      %v887 = vpop.f32.mrf.mxu0
      %v888 = vadd.f32 0.0, %v887
      %v889 = vpop.f32.mrf.mxu0
      %890 = vmatprep.mubr.bf16.mxu0 0
      %891 = vmatmul.mubr.bf16.gmra.mxu0 %v796
      %v892 = vpop.f32.mrf.mxu0
      %v893 = vadd.f32 0.0, %v892
      %v894 = vpop.f32.mrf.mxu0
      %v895 = vpop.f32.mrf.mxu0
      %v896 = vadd.f32 0.0, %v895
      %v897 = vpop.f32.mrf.mxu0
      %898 = vmatprep.mubr.bf16.mxu0 0
      %899 = vmatmul.mubr.bf16.gmra.mxu0 %v799
      %v900 = vpop.f32.mrf.mxu0
      %v901 = vadd.f32 0.0, %v900
      %v902 = vpop.f32.mrf.mxu0
      %v903 = vpop.f32.mrf.mxu0
      %v904 = vadd.f32 0.0, %v903
      %v905 = vpop.f32.mrf.mxu0
      %906 = vmatprep.mubr.bf16.mxu0 0
      %907 = vmatmul.mubr.bf16.gmra.mxu0 %v802
      %v908 = vpop.f32.mrf.mxu0
      %v909 = vadd.f32 0.0, %v908
      %v910 = vpop.f32.mrf.mxu0
      %v911 = vpop.f32.mrf.mxu0
      %v912 = vadd.f32 0.0, %v911
      %v913 = vpop.f32.mrf.mxu0
      %914 = vmatprep.mubr.bf16.mxu0 0
      %915 = vmatmul.mubr.bf16.gmra.mxu0 %v805
      %v916 = vpop.f32.mrf.mxu0
      %v917 = vadd.f32 0.0, %v916
      %v918 = vpop.f32.mrf.mxu0
      %v919 = vpop.f32.mrf.mxu0
      %v920 = vadd.f32 0.0, %v919
      %v921 = vpop.f32.mrf.mxu0
      %922 = vmatprep.mubr.bf16.mxu0 0
      %923 = vmatmul.mubr.bf16.gmra.mxu0 %v808
      %v924 = vpop.f32.mrf.mxu0
      %v925 = vadd.f32 0.0, %v924
      %v926 = vpop.f32.mrf.mxu0
      %v927 = vpop.f32.mrf.mxu0
      %v928 = vadd.f32 0.0, %v927
      %v929 = vpop.f32.mrf.mxu0
      %930 = vmatprep.mubr.bf16.mxu0 0
      %931 = vmatmul.mubr.bf16.gmra.mxu0 %v811
      %v932 = vpop.f32.mrf.mxu0
      %v933 = vadd.f32 0.0, %v932
      %v934 = vpop.f32.mrf.mxu0
      %v935 = vpop.f32.mrf.mxu0
      %v936 = vadd.f32 0.0, %v935
      %v937 = vpop.f32.mrf.mxu0
      %938 = vmatprep.mubr.bf16.mxu0 0
      %939 = vmatmul.mubr.bf16.gmra.mxu0 %v814
      %v940 = vpop.f32.mrf.mxu0
      %v941 = vadd.f32 0.0, %v940
      %v942 = vpop.f32.mrf.mxu0
      %v943 = vpop.f32.mrf.mxu0
      %v944 = vadd.f32 0.0, %v943
      %v945 = vpop.f32.mrf.mxu0
      %946 = vmatprep.mubr.bf16.mxu0 0
      %947 = vmatmul.mubr.bf16.gmra.mxu0 %v817
      %v948 = vpop.f32.mrf.mxu0
      %v949 = vadd.f32 0.0, %v948
      %v950 = vpop.f32.mrf.mxu0
      %v951 = vpop.f32.mrf.mxu0
      %v952 = vadd.f32 0.0, %v951
      %v953 = vpop.f32.mrf.mxu0
      %954 = vmatprep.mubr.bf16.mxu0 0
      %955 = vmatmul.mubr.bf16.gmra.mxu0 %v820
      %v956 = vpop.f32.mrf.mxu0
      %v957 = vadd.f32 0.0, %v956
      %v958 = vpop.f32.mrf.mxu0
      %v959 = vpop.f32.mrf.mxu0
      %v960 = vadd.f32 0.0, %v959
      %v961 = vpop.f32.mrf.mxu0
      %962 = vmatprep.mubr.bf16.mxu0 0
      %963 = vmatmul.mubr.bf16.gmra.mxu0 %v823
      %v964 = vpop.f32.mrf.mxu0
      %v965 = vadd.f32 0.0, %v964
      %v966 = vpop.f32.mrf.mxu0
      %v967 = vpop.f32.mrf.mxu0
      %v968 = vadd.f32 0.0, %v967
      %v969 = vpop.f32.mrf.mxu0
      %970 = vmatprep.mubr.bf16.mxu0 0
      %971 = vmatmul.mubr.bf16.gmra.mxu0 %v826
      %v972 = vpop.f32.mrf.mxu0
      %v973 = vadd.f32 0.0, %v972
      %v974 = vpop.f32.mrf.mxu0
      %v975 = vpop.f32.mrf.mxu0
      %v976 = vadd.f32 0.0, %v975
      %v977 = vpop.f32.mrf.mxu0
      %978 = vmatprep.mubr.bf16.mxu0 0
      %979 = vmatmul.mubr.bf16.gmra.mxu0 %v829
      %v980 = vpop.f32.mrf.mxu0
      %v981 = vadd.f32 0.0, %v980
      %v982 = vpop.f32.mrf.mxu0
      %v983 = vpop.f32.mrf.mxu0
      %v984 = vadd.f32 0.0, %v983
      %v985 = vpop.f32.mrf.mxu0
      %986 = vmatprep.mubr.bf16.mxu0 0
      %987 = vmatmul.mubr.bf16.gmra.mxu0 %v832
      %v988 = vpop.f32.mrf.mxu0
      %v989 = vadd.f32 0.0, %v988
      %v990 = vpop.f32.mrf.mxu0
      %v991 = vpop.f32.mrf.mxu0
      %v992 = vadd.f32 0.0, %v991
      %v993 = vpop.f32.mrf.mxu0
      %994 = vdwg.mxu0
      %v1027 = vunpack.c.l.b16 %v255
      %v1028 = vunpack.c.l.b16 %v256
      %v1029 = vunpack.c.l.b16 %v258
      %v1030 = vunpack.c.l.b16 %v259
      %v1031 = vunpack.c.l.b16 %v261
      %v1032 = vunpack.c.l.b16 %v262
      %v1033 = vunpack.c.l.b16 %v264
      %v1034 = vunpack.c.l.b16 %v265
      %v1035 = vunpack.c.l.b16 %v267
      %v1036 = vunpack.c.l.b16 %v268
      %v1037 = vunpack.c.l.b16 %v270
      %v1038 = vunpack.c.l.b16 %v271
      %v1039 = vunpack.c.l.b16 %v273
      %v1040 = vunpack.c.l.b16 %v274
      %v1041 = vunpack.c.l.b16 %v276
      %v1042 = vunpack.c.l.b16 %v277
      %v1043 = vunpack.c.l.b16 %v279
      %v1044 = vunpack.c.l.b16 %v280
      %v1045 = vunpack.c.l.b16 %v282
      %v1046 = vunpack.c.l.b16 %v283
      %v1047 = vunpack.c.l.b16 %v285
      %v1048 = vunpack.c.l.b16 %v286
      %v1049 = vunpack.c.l.b16 %v288
      %v1050 = vunpack.c.l.b16 %v289
      %v1051 = vunpack.c.l.b16 %v291
      %v1052 = vunpack.c.l.b16 %v292
      %v1053 = vunpack.c.l.b16 %v294
      %v1054 = vunpack.c.l.b16 %v295
      %v1055 = vunpack.c.l.b16 %v297
      %v1056 = vunpack.c.l.b16 %v298
      %v1057 = vunpack.c.l.b16 %v300
      %v1058 = vunpack.c.l.b16 %v301
      %v1059 = vpack.c.b16 %v1028, %v1027
      %v1060 = vpack.c.b16 %v1030, %v1029
      %v1061 = vpack.c.b16 %v1032, %v1031
      %v1062 = vpack.c.b16 %v1034, %v1033
      %v1063 = vpack.c.b16 %v1036, %v1035
      %v1064 = vpack.c.b16 %v1038, %v1037
      %v1065 = vpack.c.b16 %v1040, %v1039
      %v1066 = vpack.c.b16 %v1042, %v1041
      %v1067 = vpack.c.b16 %v1044, %v1043
      %v1068 = vpack.c.b16 %v1046, %v1045
      %v1069 = vpack.c.b16 %v1048, %v1047
      %v1070 = vpack.c.b16 %v1050, %v1049
      %v1071 = vpack.c.b16 %v1052, %v1051
      %v1072 = vpack.c.b16 %v1054, %v1053
      %v1073 = vpack.c.b16 %v1056, %v1055
      %v1074 = vpack.c.b16 %v1058, %v1057
      %v1083 = vunpack.c.l.b16 %v309
      %v1084 = vunpack.c.l.b16 %v310
      %v1085 = vunpack.c.l.b16 %v311
      %v1086 = vunpack.c.l.b16 %v312
      %v1087 = vunpack.c.l.b16 %v313
      %v1088 = vunpack.c.l.b16 %v314
      %v1089 = vunpack.c.l.b16 %v315
      %v1090 = vunpack.c.l.b16 %v316
      %v1091 = vpack.c.b16 %v1084, %v1083
      %v1092 = vpack.c.b16 %v1086, %v1085
      %v1093 = vpack.c.b16 %v1088, %v1087
      %v1094 = vpack.c.b16 %v1090, %v1089
      %v1100 = vsel %vm785, %v1059, 0
      %v1103 = vsel %vm785, %v1060, 0
      %v1106 = vsel %vm785, %v1061, 0
      %v1109 = vsel %vm785, %v1062, 0
      %v1112 = vsel %vm785, %v1063, 0
      %v1115 = vsel %vm785, %v1064, 0
      %v1118 = vsel %vm785, %v1065, 0
      %v1121 = vsel %vm785, %v1066, 0
      %v1124 = vsel %vm785, %v1067, 0
      %v1127 = vsel %vm785, %v1068, 0
      %v1130 = vsel %vm785, %v1069, 0
      %v1133 = vsel %vm785, %v1070, 0
      %v1136 = vsel %vm785, %v1071, 0
      %v1139 = vsel %vm785, %v1072, 0
      %v1142 = vsel %vm785, %v1073, 0
      %v1145 = vsel %vm785, %v1074, 0
      %1147 = vmatprep.subr.bf16.mxu0 0
      %1148 = vmatpush1.bf16.msra.mxu0 0
      %1149 = vmatprep.subr.bf16.mxu0 0
      %1150 = vmatpush1.bf16.msra.mxu0 0
      %1151 = vmatprep.subr.bf16.mxu0 0
      %1152 = vmatpush1.bf16.msra.mxu0 0
      %1153 = vmatprep.subr.bf16.mxu0 0
      %1154 = vmatpush1.bf16.msra.mxu0 0
      %1155 = vmatprep.subr.bf16.mxu0 0
      %1156 = vmatpush1.bf16.msra.mxu0 %v1094
      %1157 = vmatprep.subr.bf16.mxu0 0
      %1158 = vmatpush1.bf16.msra.mxu0 %v1093
      %1159 = vmatprep.subr.bf16.mxu0 0
      %1160 = vmatpush1.bf16.msra.mxu0 %v1092
      %1161 = vmatprep.subr.bf16.mxu0 0
      %1162 = vmatpush1.bf16.msra.mxu0 %v1091
      %1163 = vmatprep.subr.bf16.mxu0 0
      %1164 = vmatpush2.bf16.msra.mxu0 0
      %1165 = vmatprep.subr.bf16.mxu0 0
      %1166 = vmatpush2.bf16.msra.mxu0 0
      %1167 = vmatprep.subr.bf16.mxu0 0
      %1168 = vmatpush2.bf16.msra.mxu0 0
      %1169 = vmatprep.subr.bf16.mxu0 0
      %1170 = vmatpush2.bf16.msra.mxu0 0
      %1171 = vmatprep.subr.bf16.mxu0 0
      %1172 = vmatpush2.bf16.msra.mxu0 0
      %1173 = vmatprep.subr.bf16.mxu0 0
      %1174 = vmatpush2.bf16.msra.mxu0 0
      %1175 = vmatprep.subr.bf16.mxu0 0
      %1176 = vmatpush2.bf16.msra.mxu0 0
      %1177 = vmatprep.subr.bf16.mxu0 0
      %1178 = vmatpush2.bf16.msra.mxu0 0
      %1179 = vmatprep.mubr.bf16.mxu0 0
      %1180 = vmatmul.mubr.bf16.gmra.mxu0 %v1100
      %v1181 = vpop.f32.mrf.mxu0
      %v1182 = vadd.f32 %v869, %v1181
      %v1183 = vpop.f32.mrf.mxu0
      %v1184 = vpop.f32.mrf.mxu0
      %v1185 = vadd.f32 %v872, %v1184
      %v1186 = vpop.f32.mrf.mxu0
      %1187 = vmatprep.mubr.bf16.mxu0 0
      %1188 = vmatmul.mubr.bf16.gmra.mxu0 %v1103
      %v1189 = vpop.f32.mrf.mxu0
      %v1190 = vadd.f32 %v877, %v1189
      %v1191 = vpop.f32.mrf.mxu0
      %v1192 = vpop.f32.mrf.mxu0
      %v1193 = vadd.f32 %v880, %v1192
      %v1194 = vpop.f32.mrf.mxu0
      %1195 = vmatprep.mubr.bf16.mxu0 0
      %1196 = vmatmul.mubr.bf16.gmra.mxu0 %v1106
      %v1197 = vpop.f32.mrf.mxu0
      %v1198 = vadd.f32 %v885, %v1197
      %v1199 = vpop.f32.mrf.mxu0
      %v1200 = vpop.f32.mrf.mxu0
      %v1201 = vadd.f32 %v888, %v1200
      %v1202 = vpop.f32.mrf.mxu0
      %1203 = vmatprep.mubr.bf16.mxu0 0
      %1204 = vmatmul.mubr.bf16.gmra.mxu0 %v1109
      %v1205 = vpop.f32.mrf.mxu0
      %v1206 = vadd.f32 %v893, %v1205
      %v1207 = vpop.f32.mrf.mxu0
      %v1208 = vpop.f32.mrf.mxu0
      %v1209 = vadd.f32 %v896, %v1208
      %v1210 = vpop.f32.mrf.mxu0
      %1211 = vmatprep.mubr.bf16.mxu0 0
      %1212 = vmatmul.mubr.bf16.gmra.mxu0 %v1112
      %v1213 = vpop.f32.mrf.mxu0
      %v1214 = vadd.f32 %v901, %v1213
      %v1215 = vpop.f32.mrf.mxu0
      %v1216 = vpop.f32.mrf.mxu0
      %v1217 = vadd.f32 %v904, %v1216
      %v1218 = vpop.f32.mrf.mxu0
      %1219 = vmatprep.mubr.bf16.mxu0 0
      %1220 = vmatmul.mubr.bf16.gmra.mxu0 %v1115
      %v1221 = vpop.f32.mrf.mxu0
      %v1222 = vadd.f32 %v909, %v1221
      %v1223 = vpop.f32.mrf.mxu0
      %v1224 = vpop.f32.mrf.mxu0
      %v1225 = vadd.f32 %v912, %v1224
      %v1226 = vpop.f32.mrf.mxu0
      %1227 = vmatprep.mubr.bf16.mxu0 0
      %1228 = vmatmul.mubr.bf16.gmra.mxu0 %v1118
      %v1229 = vpop.f32.mrf.mxu0
      %v1230 = vadd.f32 %v917, %v1229
      %v1231 = vpop.f32.mrf.mxu0
      %v1232 = vpop.f32.mrf.mxu0
      %v1233 = vadd.f32 %v920, %v1232
      %v1234 = vpop.f32.mrf.mxu0
      %1235 = vmatprep.mubr.bf16.mxu0 0
      %1236 = vmatmul.mubr.bf16.gmra.mxu0 %v1121
      %v1237 = vpop.f32.mrf.mxu0
      %v1238 = vadd.f32 %v925, %v1237
      %v1239 = vpop.f32.mrf.mxu0
      %v1240 = vpop.f32.mrf.mxu0
      %v1241 = vadd.f32 %v928, %v1240
      %v1242 = vpop.f32.mrf.mxu0
      %1243 = vmatprep.mubr.bf16.mxu0 0
      %1244 = vmatmul.mubr.bf16.gmra.mxu0 %v1124
      %v1245 = vpop.f32.mrf.mxu0
      %v1246 = vadd.f32 %v933, %v1245
      %v1247 = vpop.f32.mrf.mxu0
      %v1248 = vpop.f32.mrf.mxu0
      %v1249 = vadd.f32 %v936, %v1248
      %v1250 = vpop.f32.mrf.mxu0
      %1251 = vmatprep.mubr.bf16.mxu0 0
      %1252 = vmatmul.mubr.bf16.gmra.mxu0 %v1127
      %v1253 = vpop.f32.mrf.mxu0
      %v1254 = vadd.f32 %v941, %v1253
      %v1255 = vpop.f32.mrf.mxu0
      %v1256 = vpop.f32.mrf.mxu0
      %v1257 = vadd.f32 %v944, %v1256
      %v1258 = vpop.f32.mrf.mxu0
      %1259 = vmatprep.mubr.bf16.mxu0 0
      %1260 = vmatmul.mubr.bf16.gmra.mxu0 %v1130
      %v1261 = vpop.f32.mrf.mxu0
      %v1262 = vadd.f32 %v949, %v1261
      %v1263 = vpop.f32.mrf.mxu0
      %v1264 = vpop.f32.mrf.mxu0
      %v1265 = vadd.f32 %v952, %v1264
      %v1266 = vpop.f32.mrf.mxu0
      %1267 = vmatprep.mubr.bf16.mxu0 0
      %1268 = vmatmul.mubr.bf16.gmra.mxu0 %v1133
      %v1269 = vpop.f32.mrf.mxu0
      %v1270 = vadd.f32 %v957, %v1269
      %v1271 = vpop.f32.mrf.mxu0
      %v1272 = vpop.f32.mrf.mxu0
      %v1273 = vadd.f32 %v960, %v1272
      %v1274 = vpop.f32.mrf.mxu0
      %1275 = vmatprep.mubr.bf16.mxu0 0
      %1276 = vmatmul.mubr.bf16.gmra.mxu0 %v1136
      %v1277 = vpop.f32.mrf.mxu0
      %v1278 = vadd.f32 %v965, %v1277
      %v1279 = vpop.f32.mrf.mxu0
      %v1280 = vpop.f32.mrf.mxu0
      %v1281 = vadd.f32 %v968, %v1280
      %v1282 = vpop.f32.mrf.mxu0
      %1283 = vmatprep.mubr.bf16.mxu0 0
      %1284 = vmatmul.mubr.bf16.gmra.mxu0 %v1139
      %v1285 = vpop.f32.mrf.mxu0
      %v1286 = vadd.f32 %v973, %v1285
      %v1287 = vpop.f32.mrf.mxu0
      %v1288 = vpop.f32.mrf.mxu0
      %v1289 = vadd.f32 %v976, %v1288
      %v1290 = vpop.f32.mrf.mxu0
      %1291 = vmatprep.mubr.bf16.mxu0 0
      %1292 = vmatmul.mubr.bf16.gmra.mxu0 %v1142
      %v1293 = vpop.f32.mrf.mxu0
      %v1294 = vadd.f32 %v981, %v1293
      %v1295 = vpop.f32.mrf.mxu0
      %v1296 = vpop.f32.mrf.mxu0
      %v1297 = vadd.f32 %v984, %v1296
      %v1298 = vpop.f32.mrf.mxu0
      %1299 = vmatprep.mubr.bf16.mxu0 0
      %1300 = vmatmul.mubr.bf16.gmra.mxu0 %v1145
      %v1301 = vpop.f32.mrf.mxu0
      %v1302 = vadd.f32 %v989, %v1301
      %v1303 = vpop.f32.mrf.mxu0
      %v1304 = vpop.f32.mrf.mxu0
      %v1305 = vadd.f32 %v992, %v1304
      %v1306 = vpop.f32.mrf.mxu0
      %1307 = vdwg.mxu0
      %vm1324 = vcmask 1042432
      %vm1325 = vcmask 1046532
      %vm1326 = vmor %vm1324, %vm1325
      %v1327 = vrot.slane %v255, 5
      %v1328 = vrot.slane %v1327, 4
      %v1329 = vrot.slane %v256, 5
      %v1330 = vsel %vm1326, %v1328, %v1329
      %v1331 = vrot.slane %v1329, 4
      %v1332 = vrot.slane %v257, 5
      %v1333 = vsel %vm1326, %v1331, %v1332
      %v1334 = vrot.slane %v258, 5
      %v1335 = vrot.slane %v1334, 4
      %v1336 = vrot.slane %v259, 5
      %v1337 = vsel %vm1326, %v1335, %v1336
      %v1338 = vrot.slane %v1336, 4
      %v1339 = vrot.slane %v260, 5
      %v1340 = vsel %vm1326, %v1338, %v1339
      %v1341 = vrot.slane %v261, 5
      %v1342 = vrot.slane %v1341, 4
      %v1343 = vrot.slane %v262, 5
      %v1344 = vsel %vm1326, %v1342, %v1343
      %v1345 = vrot.slane %v1343, 4
      %v1346 = vrot.slane %v263, 5
      %v1347 = vsel %vm1326, %v1345, %v1346
      %v1348 = vrot.slane %v264, 5
      %v1349 = vrot.slane %v1348, 4
      %v1350 = vrot.slane %v265, 5
      %v1351 = vsel %vm1326, %v1349, %v1350
      %v1352 = vrot.slane %v1350, 4
      %v1353 = vrot.slane %v266, 5
      %v1354 = vsel %vm1326, %v1352, %v1353
      %v1355 = vrot.slane %v267, 5
      %v1356 = vrot.slane %v1355, 4
      %v1357 = vrot.slane %v268, 5
      %v1358 = vsel %vm1326, %v1356, %v1357
      %v1359 = vrot.slane %v1357, 4
      %v1360 = vrot.slane %v269, 5
      %v1361 = vsel %vm1326, %v1359, %v1360
      %v1362 = vrot.slane %v270, 5
      %v1363 = vrot.slane %v1362, 4
      %v1364 = vrot.slane %v271, 5
      %v1365 = vsel %vm1326, %v1363, %v1364
      %v1366 = vrot.slane %v1364, 4
      %v1367 = vrot.slane %v272, 5
      %v1368 = vsel %vm1326, %v1366, %v1367
      %v1369 = vrot.slane %v273, 5
      %v1370 = vrot.slane %v1369, 4
      %v1371 = vrot.slane %v274, 5
      %v1372 = vsel %vm1326, %v1370, %v1371
      %v1373 = vrot.slane %v1371, 4
      %v1374 = vrot.slane %v275, 5
      %v1375 = vsel %vm1326, %v1373, %v1374
      %v1376 = vrot.slane %v276, 5
      %v1377 = vrot.slane %v1376, 4
      %v1378 = vrot.slane %v277, 5
      %v1379 = vsel %vm1326, %v1377, %v1378
      %v1380 = vrot.slane %v1378, 4
      %v1381 = vrot.slane %v278, 5
      %v1382 = vsel %vm1326, %v1380, %v1381
      %v1383 = vrot.slane %v279, 5
      %v1384 = vrot.slane %v1383, 4
      %v1385 = vrot.slane %v280, 5
      %v1386 = vsel %vm1326, %v1384, %v1385
      %v1387 = vrot.slane %v1385, 4
      %v1388 = vrot.slane %v281, 5
      %v1389 = vsel %vm1326, %v1387, %v1388
      %v1390 = vrot.slane %v282, 5
      %v1391 = vrot.slane %v1390, 4
      %v1392 = vrot.slane %v283, 5
      %v1393 = vsel %vm1326, %v1391, %v1392
      %v1394 = vrot.slane %v1392, 4
      %v1395 = vrot.slane %v284, 5
      %v1396 = vsel %vm1326, %v1394, %v1395
      %v1397 = vrot.slane %v285, 5
      %v1398 = vrot.slane %v1397, 4
      %v1399 = vrot.slane %v286, 5
      %v1400 = vsel %vm1326, %v1398, %v1399
      %v1401 = vrot.slane %v1399, 4
      %v1402 = vrot.slane %v287, 5
      %v1403 = vsel %vm1326, %v1401, %v1402
      %v1404 = vrot.slane %v288, 5
      %v1405 = vrot.slane %v1404, 4
      %v1406 = vrot.slane %v289, 5
      %v1407 = vsel %vm1326, %v1405, %v1406
      %v1408 = vrot.slane %v1406, 4
      %v1409 = vrot.slane %v290, 5
      %v1410 = vsel %vm1326, %v1408, %v1409
      %v1411 = vrot.slane %v291, 5
      %v1412 = vrot.slane %v1411, 4
      %v1413 = vrot.slane %v292, 5
      %v1414 = vsel %vm1326, %v1412, %v1413
      %v1415 = vrot.slane %v1413, 4
      %v1416 = vrot.slane %v293, 5
      %v1417 = vsel %vm1326, %v1415, %v1416
      %v1418 = vrot.slane %v294, 5
      %v1419 = vrot.slane %v1418, 4
      %v1420 = vrot.slane %v295, 5
      %v1421 = vsel %vm1326, %v1419, %v1420
      %v1422 = vrot.slane %v1420, 4
      %v1423 = vrot.slane %v296, 5
      %v1424 = vsel %vm1326, %v1422, %v1423
      %v1425 = vrot.slane %v297, 5
      %v1426 = vrot.slane %v1425, 4
      %v1427 = vrot.slane %v298, 5
      %v1428 = vsel %vm1326, %v1426, %v1427
      %v1429 = vrot.slane %v1427, 4
      %v1430 = vrot.slane %v299, 5
      %v1431 = vsel %vm1326, %v1429, %v1430
      %v1432 = vrot.slane %v300, 5
      %v1433 = vrot.slane %v1432, 4
      %v1434 = vrot.slane %v301, 5
      %v1435 = vsel %vm1326, %v1433, %v1434
      %v1436 = vrot.slane %v1434, 4
      %v1437 = vrot.slane %v302, 5
      %v1438 = vsel %vm1326, %v1436, %v1437
      %s1439 = scalar_lea.vmem %s1, 64
      %v1440 = vld [vmem:[%s1439] sm:$0xf]
      %v1441 = vld [vmem:[%s1439 + $0x4] sm:$0xf]
      %v1442 = vld [vmem:[%s1439 + $0x8] sm:$0xf]
      %v1443 = vld [vmem:[%s1439 + $0xc] sm:$0xf]
      %v1444 = vld [vmem:[%s1439 + $0x10] sm:$0xf]
      %v1445 = vld [vmem:[%s1439 + $0x14] sm:$0xf]
      %v1446 = vld [vmem:[%s1439 + $0x18] sm:$0xf]
      %v1447 = vld [vmem:[%s1439 + $0x1c] sm:$0xf]
      %v1448 = vunpack.c.l.b16 %v1330
      %v1449 = vunpack.c.l.b16 %v1333
      %v1450 = vunpack.c.l.b16 %v1337
      %v1451 = vunpack.c.l.b16 %v1340
      %v1452 = vunpack.c.l.b16 %v1344
      %v1453 = vunpack.c.l.b16 %v1347
      %v1454 = vunpack.c.l.b16 %v1351
      %v1455 = vunpack.c.l.b16 %v1354
      %v1456 = vunpack.c.l.b16 %v1358
      %v1457 = vunpack.c.l.b16 %v1361
      %v1458 = vunpack.c.l.b16 %v1365
      %v1459 = vunpack.c.l.b16 %v1368
      %v1460 = vunpack.c.l.b16 %v1372
      %v1461 = vunpack.c.l.b16 %v1375
      %v1462 = vunpack.c.l.b16 %v1379
      %v1463 = vunpack.c.l.b16 %v1382
      %v1464 = vunpack.c.l.b16 %v1386
      %v1465 = vunpack.c.l.b16 %v1389
      %v1466 = vunpack.c.l.b16 %v1393
      %v1467 = vunpack.c.l.b16 %v1396
      %v1468 = vunpack.c.l.b16 %v1400
      %v1469 = vunpack.c.l.b16 %v1403
      %v1470 = vunpack.c.l.b16 %v1407
      %v1471 = vunpack.c.l.b16 %v1410
      %v1472 = vunpack.c.l.b16 %v1414
      %v1473 = vunpack.c.l.b16 %v1417
      %v1474 = vunpack.c.l.b16 %v1421
      %v1475 = vunpack.c.l.b16 %v1424
      %v1476 = vunpack.c.l.b16 %v1428
      %v1477 = vunpack.c.l.b16 %v1431
      %v1478 = vunpack.c.l.b16 %v1435
      %v1479 = vunpack.c.l.b16 %v1438
      %v1480 = vpack.c.b16 %v1449, %v1448
      %v1481 = vpack.c.b16 %v1451, %v1450
      %v1482 = vpack.c.b16 %v1453, %v1452
      %v1483 = vpack.c.b16 %v1455, %v1454
      %v1484 = vpack.c.b16 %v1457, %v1456
      %v1485 = vpack.c.b16 %v1459, %v1458
      %v1486 = vpack.c.b16 %v1461, %v1460
      %v1487 = vpack.c.b16 %v1463, %v1462
      %v1488 = vpack.c.b16 %v1465, %v1464
      %v1489 = vpack.c.b16 %v1467, %v1466
      %v1490 = vpack.c.b16 %v1469, %v1468
      %v1491 = vpack.c.b16 %v1471, %v1470
      %v1492 = vpack.c.b16 %v1473, %v1472
      %v1493 = vpack.c.b16 %v1475, %v1474
      %v1494 = vpack.c.b16 %v1477, %v1476
      %v1495 = vpack.c.b16 %v1479, %v1478
      %v1504 = vunpack.c.l.b16 %v1440
      %v1505 = vunpack.c.l.b16 %v1441
      %v1506 = vunpack.c.l.b16 %v1442
      %v1507 = vunpack.c.l.b16 %v1443
      %v1508 = vunpack.c.l.b16 %v1444
      %v1509 = vunpack.c.l.b16 %v1445
      %v1510 = vunpack.c.l.b16 %v1446
      %v1511 = vunpack.c.l.b16 %v1447
      %v1512 = vpack.c.b16 %v1505, %v1504
      %v1513 = vpack.c.b16 %v1507, %v1506
      %v1514 = vpack.c.b16 %v1509, %v1508
      %v1515 = vpack.c.b16 %v1511, %v1510
      %v1521 = vsel %vm785, %v1480, 0
      %v1524 = vsel %vm785, %v1481, 0
      %v1527 = vsel %vm785, %v1482, 0
      %v1530 = vsel %vm785, %v1483, 0
      %v1533 = vsel %vm785, %v1484, 0
      %v1536 = vsel %vm785, %v1485, 0
      %v1539 = vsel %vm785, %v1486, 0
      %v1542 = vsel %vm785, %v1487, 0
      %v1545 = vsel %vm785, %v1488, 0
      %v1548 = vsel %vm785, %v1489, 0
      %v1551 = vsel %vm785, %v1490, 0
      %v1554 = vsel %vm785, %v1491, 0
      %v1557 = vsel %vm785, %v1492, 0
      %v1560 = vsel %vm785, %v1493, 0
      %v1563 = vsel %vm785, %v1494, 0
      %v1566 = vsel %vm785, %v1495, 0
      %1568 = vmatprep.subr.bf16.mxu0 0
      %1569 = vmatpush1.bf16.msra.mxu0 0
      %1570 = vmatprep.subr.bf16.mxu0 0
      %1571 = vmatpush1.bf16.msra.mxu0 0
      %1572 = vmatprep.subr.bf16.mxu0 0
      %1573 = vmatpush1.bf16.msra.mxu0 0
      %1574 = vmatprep.subr.bf16.mxu0 0
      %1575 = vmatpush1.bf16.msra.mxu0 0
      %1576 = vmatprep.subr.bf16.mxu0 0
      %1577 = vmatpush1.bf16.msra.mxu0 %v1515
      %1578 = vmatprep.subr.bf16.mxu0 0
      %1579 = vmatpush1.bf16.msra.mxu0 %v1514
      %1580 = vmatprep.subr.bf16.mxu0 0
      %1581 = vmatpush1.bf16.msra.mxu0 %v1513
      %1582 = vmatprep.subr.bf16.mxu0 0
      %1583 = vmatpush1.bf16.msra.mxu0 %v1512
      %1584 = vmatprep.subr.bf16.mxu0 0
      %1585 = vmatpush2.bf16.msra.mxu0 0
      %1586 = vmatprep.subr.bf16.mxu0 0
      %1587 = vmatpush2.bf16.msra.mxu0 0
      %1588 = vmatprep.subr.bf16.mxu0 0
      %1589 = vmatpush2.bf16.msra.mxu0 0
      %1590 = vmatprep.subr.bf16.mxu0 0
      %1591 = vmatpush2.bf16.msra.mxu0 0
      %1592 = vmatprep.subr.bf16.mxu0 0
      %1593 = vmatpush2.bf16.msra.mxu0 0
      %1594 = vmatprep.subr.bf16.mxu0 0
      %1595 = vmatpush2.bf16.msra.mxu0 0
      %1596 = vmatprep.subr.bf16.mxu0 0
      %1597 = vmatpush2.bf16.msra.mxu0 0
      %1598 = vmatprep.subr.bf16.mxu0 0
      %1599 = vmatpush2.bf16.msra.mxu0 0
      %1600 = vmatprep.mubr.bf16.mxu0 0
      %1601 = vmatmul.mubr.bf16.gmra.mxu0 %v1521
      %v1602 = vpop.f32.mrf.mxu0
      %v1603 = vadd.f32 0.0, %v1602
      %v1604 = vpop.f32.mrf.mxu0
      %v1605 = vpop.f32.mrf.mxu0
      %v1606 = vadd.f32 0.0, %v1605
      %v1607 = vpop.f32.mrf.mxu0
      %1608 = vmatprep.mubr.bf16.mxu0 0
      %1609 = vmatmul.mubr.bf16.gmra.mxu0 %v1524
      %v1610 = vpop.f32.mrf.mxu0
      %v1611 = vadd.f32 0.0, %v1610
      %v1612 = vpop.f32.mrf.mxu0
      %v1613 = vpop.f32.mrf.mxu0
      %v1614 = vadd.f32 0.0, %v1613
      %v1615 = vpop.f32.mrf.mxu0
      %1616 = vmatprep.mubr.bf16.mxu0 0
      %1617 = vmatmul.mubr.bf16.gmra.mxu0 %v1527
      %v1618 = vpop.f32.mrf.mxu0
      %v1619 = vadd.f32 0.0, %v1618
      %v1620 = vpop.f32.mrf.mxu0
      %v1621 = vpop.f32.mrf.mxu0
      %v1622 = vadd.f32 0.0, %v1621
      %v1623 = vpop.f32.mrf.mxu0
      %1624 = vmatprep.mubr.bf16.mxu0 0
      %1625 = vmatmul.mubr.bf16.gmra.mxu0 %v1530
      %v1626 = vpop.f32.mrf.mxu0
      %v1627 = vadd.f32 0.0, %v1626
      %v1628 = vpop.f32.mrf.mxu0
      %v1629 = vpop.f32.mrf.mxu0
      %v1630 = vadd.f32 0.0, %v1629
      %v1631 = vpop.f32.mrf.mxu0
      %1632 = vmatprep.mubr.bf16.mxu0 0
      %1633 = vmatmul.mubr.bf16.gmra.mxu0 %v1533
      %v1634 = vpop.f32.mrf.mxu0
      %v1635 = vadd.f32 0.0, %v1634
      %v1636 = vpop.f32.mrf.mxu0
      %v1637 = vpop.f32.mrf.mxu0
      %v1638 = vadd.f32 0.0, %v1637
      %v1639 = vpop.f32.mrf.mxu0
      %1640 = vmatprep.mubr.bf16.mxu0 0
      %1641 = vmatmul.mubr.bf16.gmra.mxu0 %v1536
      %v1642 = vpop.f32.mrf.mxu0
      %v1643 = vadd.f32 0.0, %v1642
      %v1644 = vpop.f32.mrf.mxu0
      %v1645 = vpop.f32.mrf.mxu0
      %v1646 = vadd.f32 0.0, %v1645
      %v1647 = vpop.f32.mrf.mxu0
      %1648 = vmatprep.mubr.bf16.mxu0 0
      %1649 = vmatmul.mubr.bf16.gmra.mxu0 %v1539
      %v1650 = vpop.f32.mrf.mxu0
      %v1651 = vadd.f32 0.0, %v1650
      %v1652 = vpop.f32.mrf.mxu0
      %v1653 = vpop.f32.mrf.mxu0
      %v1654 = vadd.f32 0.0, %v1653
      %v1655 = vpop.f32.mrf.mxu0
      %1656 = vmatprep.mubr.bf16.mxu0 0
      %1657 = vmatmul.mubr.bf16.gmra.mxu0 %v1542
      %v1658 = vpop.f32.mrf.mxu0
      %v1659 = vadd.f32 0.0, %v1658
      %v1660 = vpop.f32.mrf.mxu0
      %v1661 = vpop.f32.mrf.mxu0
      %v1662 = vadd.f32 0.0, %v1661
      %v1663 = vpop.f32.mrf.mxu0
      %1664 = vmatprep.mubr.bf16.mxu0 0
      %1665 = vmatmul.mubr.bf16.gmra.mxu0 %v1545
      %v1666 = vpop.f32.mrf.mxu0
      %v1667 = vadd.f32 0.0, %v1666
      %v1668 = vpop.f32.mrf.mxu0
      %v1669 = vpop.f32.mrf.mxu0
      %v1670 = vadd.f32 0.0, %v1669
      %v1671 = vpop.f32.mrf.mxu0
      %1672 = vmatprep.mubr.bf16.mxu0 0
      %1673 = vmatmul.mubr.bf16.gmra.mxu0 %v1548
      %v1674 = vpop.f32.mrf.mxu0
      %v1675 = vadd.f32 0.0, %v1674
      %v1676 = vpop.f32.mrf.mxu0
      %v1677 = vpop.f32.mrf.mxu0
      %v1678 = vadd.f32 0.0, %v1677
      %v1679 = vpop.f32.mrf.mxu0
      %1680 = vmatprep.mubr.bf16.mxu0 0
      %1681 = vmatmul.mubr.bf16.gmra.mxu0 %v1551
      %v1682 = vpop.f32.mrf.mxu0
      %v1683 = vadd.f32 0.0, %v1682
      %v1684 = vpop.f32.mrf.mxu0
      %v1685 = vpop.f32.mrf.mxu0
      %v1686 = vadd.f32 0.0, %v1685
      %v1687 = vpop.f32.mrf.mxu0
      %1688 = vmatprep.mubr.bf16.mxu0 0
      %1689 = vmatmul.mubr.bf16.gmra.mxu0 %v1554
      %v1690 = vpop.f32.mrf.mxu0
      %v1691 = vadd.f32 0.0, %v1690
      %v1692 = vpop.f32.mrf.mxu0
      %v1693 = vpop.f32.mrf.mxu0
      %v1694 = vadd.f32 0.0, %v1693
      %v1695 = vpop.f32.mrf.mxu0
      %1696 = vmatprep.mubr.bf16.mxu0 0
      %1697 = vmatmul.mubr.bf16.gmra.mxu0 %v1557
      %v1698 = vpop.f32.mrf.mxu0
      %v1699 = vadd.f32 0.0, %v1698
      %v1700 = vpop.f32.mrf.mxu0
      %v1701 = vpop.f32.mrf.mxu0
      %v1702 = vadd.f32 0.0, %v1701
      %v1703 = vpop.f32.mrf.mxu0
      %1704 = vmatprep.mubr.bf16.mxu0 0
      %1705 = vmatmul.mubr.bf16.gmra.mxu0 %v1560
      %v1706 = vpop.f32.mrf.mxu0
      %v1707 = vadd.f32 0.0, %v1706
      %v1708 = vpop.f32.mrf.mxu0
      %v1709 = vpop.f32.mrf.mxu0
      %v1710 = vadd.f32 0.0, %v1709
      %v1711 = vpop.f32.mrf.mxu0
      %1712 = vmatprep.mubr.bf16.mxu0 0
      %1713 = vmatmul.mubr.bf16.gmra.mxu0 %v1563
      %v1714 = vpop.f32.mrf.mxu0
      %v1715 = vadd.f32 0.0, %v1714
      %v1716 = vpop.f32.mrf.mxu0
      %v1717 = vpop.f32.mrf.mxu0
      %v1718 = vadd.f32 0.0, %v1717
      %v1719 = vpop.f32.mrf.mxu0
      %1720 = vmatprep.mubr.bf16.mxu0 0
      %1721 = vmatmul.mubr.bf16.gmra.mxu0 %v1566
      %v1722 = vpop.f32.mrf.mxu0
      %v1723 = vadd.f32 0.0, %v1722
      %v1724 = vpop.f32.mrf.mxu0
      %v1725 = vpop.f32.mrf.mxu0
      %v1726 = vadd.f32 0.0, %v1725
      %v1727 = vpop.f32.mrf.mxu0
      %1728 = vdwg.mxu0
      %v1729 = vadd.f32 %v1182, %v1603
      %v1730 = vadd.f32 %v1185, %v1606
      %v1731 = vadd.f32 %v1190, %v1611
      %v1732 = vadd.f32 %v1193, %v1614
      %v1733 = vadd.f32 %v1198, %v1619
      %v1734 = vadd.f32 %v1201, %v1622
      %v1735 = vadd.f32 %v1206, %v1627
      %v1736 = vadd.f32 %v1209, %v1630
      %v1737 = vadd.f32 %v1214, %v1635
      %v1738 = vadd.f32 %v1217, %v1638
      %v1739 = vadd.f32 %v1222, %v1643
      %v1740 = vadd.f32 %v1225, %v1646
      %v1741 = vadd.f32 %v1230, %v1651
      %v1742 = vadd.f32 %v1233, %v1654
      %v1743 = vadd.f32 %v1238, %v1659
      %v1744 = vadd.f32 %v1241, %v1662
      %v1745 = vadd.f32 %v1246, %v1667
      %v1746 = vadd.f32 %v1249, %v1670
      %v1747 = vadd.f32 %v1254, %v1675
      %v1748 = vadd.f32 %v1257, %v1678
      %v1749 = vadd.f32 %v1262, %v1683
      %v1750 = vadd.f32 %v1265, %v1686
      %v1751 = vadd.f32 %v1270, %v1691
      %v1752 = vadd.f32 %v1273, %v1694
      %v1753 = vadd.f32 %v1278, %v1699
      %v1754 = vadd.f32 %v1281, %v1702
      %v1755 = vadd.f32 %v1286, %v1707
      %v1756 = vadd.f32 %v1289, %v1710
      %v1757 = vadd.f32 %v1294, %v1715
      %v1758 = vadd.f32 %v1297, %v1718
      %v1759 = vadd.f32 %v1302, %v1723
      %v1760 = vadd.f32 %v1305, %v1726
      %s1761 = scalar_lea.vmem %s1, 96
      %v1762 = vld [vmem:[%s1761] sm:$0xf]
      %v1763 = vld [vmem:[%s1761 + $0x4] sm:$0xf]
      %v1764 = vld [vmem:[%s1761 + $0x8] sm:$0xf]
      %v1765 = vld [vmem:[%s1761 + $0xc] sm:$0xf]
      %v1766 = vld [vmem:[%s1761 + $0x10] sm:$0xf]
      %v1767 = vld [vmem:[%s1761 + $0x14] sm:$0xf]
      %v1768 = vld [vmem:[%s1761 + $0x18] sm:$0xf]
      %v1769 = vld [vmem:[%s1761 + $0x1c] sm:$0xf]
      %v1772 = vunpack.c.l.b16 %v303
      %v1773 = vunpack.c.l.b16 %v304
      %v1774 = vpack.c.b16 %v1773, %v1772
      %v1783 = vunpack.c.l.b16 %v1762
      %v1784 = vunpack.c.l.b16 %v1763
      %v1785 = vunpack.c.l.b16 %v1764
      %v1786 = vunpack.c.l.b16 %v1765
      %v1787 = vunpack.c.l.b16 %v1766
      %v1788 = vunpack.c.l.b16 %v1767
      %v1789 = vunpack.c.l.b16 %v1768
      %v1790 = vunpack.c.l.b16 %v1769
      %v1791 = vpack.c.b16 %v1784, %v1783
      %v1792 = vpack.c.b16 %v1786, %v1785
      %v1793 = vpack.c.b16 %v1788, %v1787
      %v1794 = vpack.c.b16 %v1790, %v1789
      %v1800 = vsel %vm785, %v1774, 0
      %1802 = vmatprep.subr.bf16.mxu0 0
      %1803 = vmatpush1.bf16.msra.mxu0 0
      %1804 = vmatprep.subr.bf16.mxu0 0
      %1805 = vmatpush1.bf16.msra.mxu0 0
      %1806 = vmatprep.subr.bf16.mxu0 0
      %1807 = vmatpush1.bf16.msra.mxu0 0
      %1808 = vmatprep.subr.bf16.mxu0 0
      %1809 = vmatpush1.bf16.msra.mxu0 0
      %1810 = vmatprep.subr.bf16.mxu0 0
      %1811 = vmatpush1.bf16.msra.mxu0 %v1794
      %1812 = vmatprep.subr.bf16.mxu0 0
      %1813 = vmatpush1.bf16.msra.mxu0 %v1793
      %1814 = vmatprep.subr.bf16.mxu0 0
      %1815 = vmatpush1.bf16.msra.mxu0 %v1792
      %1816 = vmatprep.subr.bf16.mxu0 0
      %1817 = vmatpush1.bf16.msra.mxu0 %v1791
      %1818 = vmatprep.subr.bf16.mxu0 0
      %1819 = vmatpush2.bf16.msra.mxu0 0
      %1820 = vmatprep.subr.bf16.mxu0 0
      %1821 = vmatpush2.bf16.msra.mxu0 0
      %1822 = vmatprep.subr.bf16.mxu0 0
      %1823 = vmatpush2.bf16.msra.mxu0 0
      %1824 = vmatprep.subr.bf16.mxu0 0
      %1825 = vmatpush2.bf16.msra.mxu0 0
      %1826 = vmatprep.subr.bf16.mxu0 0
      %1827 = vmatpush2.bf16.msra.mxu0 0
      %1828 = vmatprep.subr.bf16.mxu0 0
      %1829 = vmatpush2.bf16.msra.mxu0 0
      %1830 = vmatprep.subr.bf16.mxu0 0
      %1831 = vmatpush2.bf16.msra.mxu0 0
      %1832 = vmatprep.subr.bf16.mxu0 0
      %1833 = vmatpush2.bf16.msra.mxu0 0
      %1834 = vmatprep.mubr.bf16.mxu0 0
      %1835 = vmatmul.mubr.bf16.gmra.mxu0 %v1103
      %v1836 = vpop.f32.mrf.mxu0
      %v1837 = vadd.f32 0.0, %v1836
      %v1838 = vpop.f32.mrf.mxu0
      %v1839 = vpop.f32.mrf.mxu0
      %v1840 = vadd.f32 0.0, %v1839
      %v1841 = vpop.f32.mrf.mxu0
      %1842 = vmatprep.mubr.bf16.mxu0 0
      %1843 = vmatmul.mubr.bf16.gmra.mxu0 %v1106
      %v1844 = vpop.f32.mrf.mxu0
      %v1845 = vadd.f32 0.0, %v1844
      %v1846 = vpop.f32.mrf.mxu0
      %v1847 = vpop.f32.mrf.mxu0
      %v1848 = vadd.f32 0.0, %v1847
      %v1849 = vpop.f32.mrf.mxu0
      %1850 = vmatprep.mubr.bf16.mxu0 0
      %1851 = vmatmul.mubr.bf16.gmra.mxu0 %v1109
      %v1852 = vpop.f32.mrf.mxu0
      %v1853 = vadd.f32 0.0, %v1852
      %v1854 = vpop.f32.mrf.mxu0
      %v1855 = vpop.f32.mrf.mxu0
      %v1856 = vadd.f32 0.0, %v1855
      %v1857 = vpop.f32.mrf.mxu0
      %1858 = vmatprep.mubr.bf16.mxu0 0
      %1859 = vmatmul.mubr.bf16.gmra.mxu0 %v1112
      %v1860 = vpop.f32.mrf.mxu0
      %v1861 = vadd.f32 0.0, %v1860
      %v1862 = vpop.f32.mrf.mxu0
      %v1863 = vpop.f32.mrf.mxu0
      %v1864 = vadd.f32 0.0, %v1863
      %v1865 = vpop.f32.mrf.mxu0
      %1866 = vmatprep.mubr.bf16.mxu0 0
      %1867 = vmatmul.mubr.bf16.gmra.mxu0 %v1115
      %v1868 = vpop.f32.mrf.mxu0
      %v1869 = vadd.f32 0.0, %v1868
      %v1870 = vpop.f32.mrf.mxu0
      %v1871 = vpop.f32.mrf.mxu0
      %v1872 = vadd.f32 0.0, %v1871
      %v1873 = vpop.f32.mrf.mxu0
      %1874 = vmatprep.mubr.bf16.mxu0 0
      %1875 = vmatmul.mubr.bf16.gmra.mxu0 %v1118
      %v1876 = vpop.f32.mrf.mxu0
      %v1877 = vadd.f32 0.0, %v1876
      %v1878 = vpop.f32.mrf.mxu0
      %v1879 = vpop.f32.mrf.mxu0
      %v1880 = vadd.f32 0.0, %v1879
      %v1881 = vpop.f32.mrf.mxu0
      %1882 = vmatprep.mubr.bf16.mxu0 0
      %1883 = vmatmul.mubr.bf16.gmra.mxu0 %v1121
      %v1884 = vpop.f32.mrf.mxu0
      %v1885 = vadd.f32 0.0, %v1884
      %v1886 = vpop.f32.mrf.mxu0
      %v1887 = vpop.f32.mrf.mxu0
      %v1888 = vadd.f32 0.0, %v1887
      %v1889 = vpop.f32.mrf.mxu0
      %1890 = vmatprep.mubr.bf16.mxu0 0
      %1891 = vmatmul.mubr.bf16.gmra.mxu0 %v1124
      %v1892 = vpop.f32.mrf.mxu0
      %v1893 = vadd.f32 0.0, %v1892
      %v1894 = vpop.f32.mrf.mxu0
      %v1895 = vpop.f32.mrf.mxu0
      %v1896 = vadd.f32 0.0, %v1895
      %v1897 = vpop.f32.mrf.mxu0
      %1898 = vmatprep.mubr.bf16.mxu0 0
      %1899 = vmatmul.mubr.bf16.gmra.mxu0 %v1127
      %v1900 = vpop.f32.mrf.mxu0
      %v1901 = vadd.f32 0.0, %v1900
      %v1902 = vpop.f32.mrf.mxu0
      %v1903 = vpop.f32.mrf.mxu0
      %v1904 = vadd.f32 0.0, %v1903
      %v1905 = vpop.f32.mrf.mxu0
      %1906 = vmatprep.mubr.bf16.mxu0 0
      %1907 = vmatmul.mubr.bf16.gmra.mxu0 %v1130
      %v1908 = vpop.f32.mrf.mxu0
      %v1909 = vadd.f32 0.0, %v1908
      %v1910 = vpop.f32.mrf.mxu0
      %v1911 = vpop.f32.mrf.mxu0
      %v1912 = vadd.f32 0.0, %v1911
      %v1913 = vpop.f32.mrf.mxu0
      %1914 = vmatprep.mubr.bf16.mxu0 0
      %1915 = vmatmul.mubr.bf16.gmra.mxu0 %v1133
      %v1916 = vpop.f32.mrf.mxu0
      %v1917 = vadd.f32 0.0, %v1916
      %v1918 = vpop.f32.mrf.mxu0
      %v1919 = vpop.f32.mrf.mxu0
      %v1920 = vadd.f32 0.0, %v1919
      %v1921 = vpop.f32.mrf.mxu0
      %1922 = vmatprep.mubr.bf16.mxu0 0
      %1923 = vmatmul.mubr.bf16.gmra.mxu0 %v1136
      %v1924 = vpop.f32.mrf.mxu0
      %v1925 = vadd.f32 0.0, %v1924
      %v1926 = vpop.f32.mrf.mxu0
      %v1927 = vpop.f32.mrf.mxu0
      %v1928 = vadd.f32 0.0, %v1927
      %v1929 = vpop.f32.mrf.mxu0
      %1930 = vmatprep.mubr.bf16.mxu0 0
      %1931 = vmatmul.mubr.bf16.gmra.mxu0 %v1139
      %v1932 = vpop.f32.mrf.mxu0
      %v1933 = vadd.f32 0.0, %v1932
      %v1934 = vpop.f32.mrf.mxu0
      %v1935 = vpop.f32.mrf.mxu0
      %v1936 = vadd.f32 0.0, %v1935
      %v1937 = vpop.f32.mrf.mxu0
      %1938 = vmatprep.mubr.bf16.mxu0 0
      %1939 = vmatmul.mubr.bf16.gmra.mxu0 %v1142
      %v1940 = vpop.f32.mrf.mxu0
      %v1941 = vadd.f32 0.0, %v1940
      %v1942 = vpop.f32.mrf.mxu0
      %v1943 = vpop.f32.mrf.mxu0
      %v1944 = vadd.f32 0.0, %v1943
      %v1945 = vpop.f32.mrf.mxu0
      %1946 = vmatprep.mubr.bf16.mxu0 0
      %1947 = vmatmul.mubr.bf16.gmra.mxu0 %v1145
      %v1948 = vpop.f32.mrf.mxu0
      %v1949 = vadd.f32 0.0, %v1948
      %v1950 = vpop.f32.mrf.mxu0
      %v1951 = vpop.f32.mrf.mxu0
      %v1952 = vadd.f32 0.0, %v1951
      %v1953 = vpop.f32.mrf.mxu0
      %1954 = vmatprep.mubr.bf16.mxu0 0
      %1955 = vmatmul.mubr.bf16.gmra.mxu0 %v1800
      %v1956 = vpop.f32.mrf.mxu0
      %v1957 = vadd.f32 0.0, %v1956
      %v1958 = vpop.f32.mrf.mxu0
      %v1959 = vpop.f32.mrf.mxu0
      %v1960 = vadd.f32 0.0, %v1959
      %v1961 = vpop.f32.mrf.mxu0
      %1962 = vdwg.mxu0
      %v1963 = vadd.f32 %v1729, %v1837
      %v1964 = vadd.f32 %v1730, %v1840
      %v1965 = vadd.f32 %v1731, %v1845
      %v1966 = vadd.f32 %v1732, %v1848
      %v1967 = vadd.f32 %v1733, %v1853
      %v1968 = vadd.f32 %v1734, %v1856
      %v1969 = vadd.f32 %v1735, %v1861
      %v1970 = vadd.f32 %v1736, %v1864
      %v1971 = vadd.f32 %v1737, %v1869
      %v1972 = vadd.f32 %v1738, %v1872
      %v1973 = vadd.f32 %v1739, %v1877
      %v1974 = vadd.f32 %v1740, %v1880
      %v1975 = vadd.f32 %v1741, %v1885
      %v1976 = vadd.f32 %v1742, %v1888
      %v1977 = vadd.f32 %v1743, %v1893
      %v1978 = vadd.f32 %v1744, %v1896
      %v1979 = vadd.f32 %v1745, %v1901
      %v1980 = vadd.f32 %v1746, %v1904
      %v1981 = vadd.f32 %v1747, %v1909
      %v1982 = vadd.f32 %v1748, %v1912
      %v1983 = vadd.f32 %v1749, %v1917
      %v1984 = vadd.f32 %v1750, %v1920
      %v1985 = vadd.f32 %v1751, %v1925
      %v1986 = vadd.f32 %v1752, %v1928
      %v1987 = vadd.f32 %v1753, %v1933
      %v1988 = vadd.f32 %v1754, %v1936
      %v1989 = vadd.f32 %v1755, %v1941
      %v1990 = vadd.f32 %v1756, %v1944
      %v1991 = vadd.f32 %v1757, %v1949
      %v1992 = vadd.f32 %v1758, %v1952
      %v1993 = vadd.f32 %v1759, %v1957
      %v1994 = vadd.f32 %v1760, %v1960
      %v1996 = vshrl.u32 %v303, 16
      %v1998 = vrot.slane %v1996, 4
      %v1999 = vshll.u32 %v303, 16
      %v2001 = vrot.slane %v1999, 5
      %v2002 = vor.u32 %v1998, %v2001
      %v2003 = vrot.slane %v2002, 4
      %v2005 = vshll.u32 %v304, 16
      %v2007 = vrot.slane %v2005, 5
      %v2008 = vsel %vm319, %v2003, %v2007
      %v2009 = vshrl.u32 %v304, 16
      %v2011 = vrot.slane %v2009, 4
      %v2012 = vor.u32 %v2011, %v2007
      %v2013 = vrot.slane %v2012, 4
      %v2015 = vshll.u32 %v305, 16
      %v2017 = vrot.slane %v2015, 5
      %v2018 = vsel %vm319, %v2013, %v2017
      %s2019 = scalar_lea.vmem %s1, 128
      %v2020 = vld [vmem:[%s2019] sm:$0xf]
      %v2021 = vld [vmem:[%s2019 + $0x4] sm:$0xf]
      %v2022 = vld [vmem:[%s2019 + $0x8] sm:$0xf]
      %v2023 = vld [vmem:[%s2019 + $0xc] sm:$0xf]
      %v2024 = vld [vmem:[%s2019 + $0x10] sm:$0xf]
      %v2025 = vld [vmem:[%s2019 + $0x14] sm:$0xf]
      %v2026 = vld [vmem:[%s2019 + $0x18] sm:$0xf]
      %v2027 = vld [vmem:[%s2019 + $0x1c] sm:$0xf]
      %v2028 = vunpack.c.l.b16 %v2008
      %v2029 = vunpack.c.l.b16 %v2018
      %v2030 = vpack.c.b16 %v2029, %v2028
      %v2039 = vunpack.c.l.b16 %v2020
      %v2040 = vunpack.c.l.b16 %v2021
      %v2041 = vunpack.c.l.b16 %v2022
      %v2042 = vunpack.c.l.b16 %v2023
      %v2043 = vunpack.c.l.b16 %v2024
      %v2044 = vunpack.c.l.b16 %v2025
      %v2045 = vunpack.c.l.b16 %v2026
      %v2046 = vunpack.c.l.b16 %v2027
      %v2047 = vpack.c.b16 %v2040, %v2039
      %v2048 = vpack.c.b16 %v2042, %v2041
      %v2049 = vpack.c.b16 %v2044, %v2043
      %v2050 = vpack.c.b16 %v2046, %v2045
      %v2056 = vsel %vm785, %v2030, 0
      %2058 = vmatprep.subr.bf16.mxu0 0
      %2059 = vmatpush1.bf16.msra.mxu0 0
      %2060 = vmatprep.subr.bf16.mxu0 0
      %2061 = vmatpush1.bf16.msra.mxu0 0
      %2062 = vmatprep.subr.bf16.mxu0 0
      %2063 = vmatpush1.bf16.msra.mxu0 0
      %2064 = vmatprep.subr.bf16.mxu0 0
      %2065 = vmatpush1.bf16.msra.mxu0 0
      %2066 = vmatprep.subr.bf16.mxu0 0
      %2067 = vmatpush1.bf16.msra.mxu0 %v2050
      %2068 = vmatprep.subr.bf16.mxu0 0
      %2069 = vmatpush1.bf16.msra.mxu0 %v2049
      %2070 = vmatprep.subr.bf16.mxu0 0
      %2071 = vmatpush1.bf16.msra.mxu0 %v2048
      %2072 = vmatprep.subr.bf16.mxu0 0
      %2073 = vmatpush1.bf16.msra.mxu0 %v2047
      %2074 = vmatprep.subr.bf16.mxu0 0
      %2075 = vmatpush2.bf16.msra.mxu0 0
      %2076 = vmatprep.subr.bf16.mxu0 0
      %2077 = vmatpush2.bf16.msra.mxu0 0
      %2078 = vmatprep.subr.bf16.mxu0 0
      %2079 = vmatpush2.bf16.msra.mxu0 0
      %2080 = vmatprep.subr.bf16.mxu0 0
      %2081 = vmatpush2.bf16.msra.mxu0 0
      %2082 = vmatprep.subr.bf16.mxu0 0
      %2083 = vmatpush2.bf16.msra.mxu0 0
      %2084 = vmatprep.subr.bf16.mxu0 0
      %2085 = vmatpush2.bf16.msra.mxu0 0
      %2086 = vmatprep.subr.bf16.mxu0 0
      %2087 = vmatpush2.bf16.msra.mxu0 0
      %2088 = vmatprep.subr.bf16.mxu0 0
      %2089 = vmatpush2.bf16.msra.mxu0 0
      %2090 = vmatprep.mubr.bf16.mxu0 0
      %2091 = vmatmul.mubr.bf16.gmra.mxu0 %v790
      %v2092 = vpop.f32.mrf.mxu0
      %v2093 = vadd.f32 0.0, %v2092
      %v2094 = vpop.f32.mrf.mxu0
      %v2095 = vpop.f32.mrf.mxu0
      %v2096 = vadd.f32 0.0, %v2095
      %v2097 = vpop.f32.mrf.mxu0
      %2098 = vmatprep.mubr.bf16.mxu0 0
      %2099 = vmatmul.mubr.bf16.gmra.mxu0 %v793
      %v2100 = vpop.f32.mrf.mxu0
      %v2101 = vadd.f32 0.0, %v2100
      %v2102 = vpop.f32.mrf.mxu0
      %v2103 = vpop.f32.mrf.mxu0
      %v2104 = vadd.f32 0.0, %v2103
      %v2105 = vpop.f32.mrf.mxu0
      %2106 = vmatprep.mubr.bf16.mxu0 0
      %2107 = vmatmul.mubr.bf16.gmra.mxu0 %v796
      %v2108 = vpop.f32.mrf.mxu0
      %v2109 = vadd.f32 0.0, %v2108
      %v2110 = vpop.f32.mrf.mxu0
      %v2111 = vpop.f32.mrf.mxu0
      %v2112 = vadd.f32 0.0, %v2111
      %v2113 = vpop.f32.mrf.mxu0
      %2114 = vmatprep.mubr.bf16.mxu0 0
      %2115 = vmatmul.mubr.bf16.gmra.mxu0 %v799
      %v2116 = vpop.f32.mrf.mxu0
      %v2117 = vadd.f32 0.0, %v2116
      %v2118 = vpop.f32.mrf.mxu0
      %v2119 = vpop.f32.mrf.mxu0
      %v2120 = vadd.f32 0.0, %v2119
      %v2121 = vpop.f32.mrf.mxu0
      %2122 = vmatprep.mubr.bf16.mxu0 0
      %2123 = vmatmul.mubr.bf16.gmra.mxu0 %v802
      %v2124 = vpop.f32.mrf.mxu0
      %v2125 = vadd.f32 0.0, %v2124
      %v2126 = vpop.f32.mrf.mxu0
      %v2127 = vpop.f32.mrf.mxu0
      %v2128 = vadd.f32 0.0, %v2127
      %v2129 = vpop.f32.mrf.mxu0
      %2130 = vmatprep.mubr.bf16.mxu0 0
      %2131 = vmatmul.mubr.bf16.gmra.mxu0 %v805
      %v2132 = vpop.f32.mrf.mxu0
      %v2133 = vadd.f32 0.0, %v2132
      %v2134 = vpop.f32.mrf.mxu0
      %v2135 = vpop.f32.mrf.mxu0
      %v2136 = vadd.f32 0.0, %v2135
      %v2137 = vpop.f32.mrf.mxu0
      %2138 = vmatprep.mubr.bf16.mxu0 0
      %2139 = vmatmul.mubr.bf16.gmra.mxu0 %v808
      %v2140 = vpop.f32.mrf.mxu0
      %v2141 = vadd.f32 0.0, %v2140
      %v2142 = vpop.f32.mrf.mxu0
      %v2143 = vpop.f32.mrf.mxu0
      %v2144 = vadd.f32 0.0, %v2143
      %v2145 = vpop.f32.mrf.mxu0
      %2146 = vmatprep.mubr.bf16.mxu0 0
      %2147 = vmatmul.mubr.bf16.gmra.mxu0 %v811
      %v2148 = vpop.f32.mrf.mxu0
      %v2149 = vadd.f32 0.0, %v2148
      %v2150 = vpop.f32.mrf.mxu0
      %v2151 = vpop.f32.mrf.mxu0
      %v2152 = vadd.f32 0.0, %v2151
      %v2153 = vpop.f32.mrf.mxu0
      %2154 = vmatprep.mubr.bf16.mxu0 0
      %2155 = vmatmul.mubr.bf16.gmra.mxu0 %v814
      %v2156 = vpop.f32.mrf.mxu0
      %v2157 = vadd.f32 0.0, %v2156
      %v2158 = vpop.f32.mrf.mxu0
      %v2159 = vpop.f32.mrf.mxu0
      %v2160 = vadd.f32 0.0, %v2159
      %v2161 = vpop.f32.mrf.mxu0
      %2162 = vmatprep.mubr.bf16.mxu0 0
      %2163 = vmatmul.mubr.bf16.gmra.mxu0 %v817
      %v2164 = vpop.f32.mrf.mxu0
      %v2165 = vadd.f32 0.0, %v2164
      %v2166 = vpop.f32.mrf.mxu0
      %v2167 = vpop.f32.mrf.mxu0
      %v2168 = vadd.f32 0.0, %v2167
      %v2169 = vpop.f32.mrf.mxu0
      %2170 = vmatprep.mubr.bf16.mxu0 0
      %2171 = vmatmul.mubr.bf16.gmra.mxu0 %v820
      %v2172 = vpop.f32.mrf.mxu0
      %v2173 = vadd.f32 0.0, %v2172
      %v2174 = vpop.f32.mrf.mxu0
      %v2175 = vpop.f32.mrf.mxu0
      %v2176 = vadd.f32 0.0, %v2175
      %v2177 = vpop.f32.mrf.mxu0
      %2178 = vmatprep.mubr.bf16.mxu0 0
      %2179 = vmatmul.mubr.bf16.gmra.mxu0 %v823
      %v2180 = vpop.f32.mrf.mxu0
      %v2181 = vadd.f32 0.0, %v2180
      %v2182 = vpop.f32.mrf.mxu0
      %v2183 = vpop.f32.mrf.mxu0
      %v2184 = vadd.f32 0.0, %v2183
      %v2185 = vpop.f32.mrf.mxu0
      %2186 = vmatprep.mubr.bf16.mxu0 0
      %2187 = vmatmul.mubr.bf16.gmra.mxu0 %v826
      %v2188 = vpop.f32.mrf.mxu0
      %v2189 = vadd.f32 0.0, %v2188
      %v2190 = vpop.f32.mrf.mxu0
      %v2191 = vpop.f32.mrf.mxu0
      %v2192 = vadd.f32 0.0, %v2191
      %v2193 = vpop.f32.mrf.mxu0
      %2194 = vmatprep.mubr.bf16.mxu0 0
      %2195 = vmatmul.mubr.bf16.gmra.mxu0 %v829
      %v2196 = vpop.f32.mrf.mxu0
      %v2197 = vadd.f32 0.0, %v2196
      %v2198 = vpop.f32.mrf.mxu0
      %v2199 = vpop.f32.mrf.mxu0
      %v2200 = vadd.f32 0.0, %v2199
      %v2201 = vpop.f32.mrf.mxu0
      %2202 = vmatprep.mubr.bf16.mxu0 0
      %2203 = vmatmul.mubr.bf16.gmra.mxu0 %v832
      %v2204 = vpop.f32.mrf.mxu0
      %v2205 = vadd.f32 0.0, %v2204
      %v2206 = vpop.f32.mrf.mxu0
      %v2207 = vpop.f32.mrf.mxu0
      %v2208 = vadd.f32 0.0, %v2207
      %v2209 = vpop.f32.mrf.mxu0
      %2210 = vmatprep.mubr.bf16.mxu0 0
      %2211 = vmatmul.mubr.bf16.gmra.mxu0 %v2056
      %v2212 = vpop.f32.mrf.mxu0
      %v2213 = vadd.f32 0.0, %v2212
      %v2214 = vpop.f32.mrf.mxu0
      %v2215 = vpop.f32.mrf.mxu0
      %v2216 = vadd.f32 0.0, %v2215
      %v2217 = vpop.f32.mrf.mxu0
      %2218 = vdwg.mxu0
      %v2219 = vadd.f32 %v1963, %v2093
      %v2220 = vadd.f32 %v1964, %v2096
      %v2221 = vadd.f32 %v1965, %v2101
      %v2222 = vadd.f32 %v1966, %v2104
      %v2223 = vadd.f32 %v1967, %v2109
      %v2224 = vadd.f32 %v1968, %v2112
      %v2225 = vadd.f32 %v1969, %v2117
      %v2226 = vadd.f32 %v1970, %v2120
      %v2227 = vadd.f32 %v1971, %v2125
      %v2228 = vadd.f32 %v1972, %v2128
      %v2229 = vadd.f32 %v1973, %v2133
      %v2230 = vadd.f32 %v1974, %v2136
      %v2231 = vadd.f32 %v1975, %v2141
      %v2232 = vadd.f32 %v1976, %v2144
      %v2233 = vadd.f32 %v1977, %v2149
      %v2234 = vadd.f32 %v1978, %v2152
      %v2235 = vadd.f32 %v1979, %v2157
      %v2236 = vadd.f32 %v1980, %v2160
      %v2237 = vadd.f32 %v1981, %v2165
      %v2238 = vadd.f32 %v1982, %v2168
      %v2239 = vadd.f32 %v1983, %v2173
      %v2240 = vadd.f32 %v1984, %v2176
      %v2241 = vadd.f32 %v1985, %v2181
      %v2242 = vadd.f32 %v1986, %v2184
      %v2243 = vadd.f32 %v1987, %v2189
      %v2244 = vadd.f32 %v1988, %v2192
      %v2245 = vadd.f32 %v1989, %v2197
      %v2246 = vadd.f32 %v1990, %v2200
      %v2247 = vadd.f32 %v1991, %v2205
      %v2248 = vadd.f32 %v1992, %v2208
      %v2249 = vadd.f32 %v1993, %v2213
      %v2250 = vadd.f32 %v1994, %v2216
      %v2252 = vrot.slane %v303, 5
      %v2253 = vrot.slane %v2252, 4
      %v2254 = vrot.slane %v304, 5
      %v2255 = vsel %vm1326, %v2253, %v2254
      %v2256 = vrot.slane %v2254, 4
      %v2257 = vrot.slane %v305, 5
      %v2258 = vsel %vm1326, %v2256, %v2257
      %s2259 = scalar_lea.vmem %s1, 160
      %v2260 = vld [vmem:[%s2259] sm:$0xf]
      %v2261 = vld [vmem:[%s2259 + $0x4] sm:$0xf]
      %v2262 = vld [vmem:[%s2259 + $0x8] sm:$0xf]
      %v2263 = vld [vmem:[%s2259 + $0xc] sm:$0xf]
      %v2264 = vld [vmem:[%s2259 + $0x10] sm:$0xf]
      %v2265 = vld [vmem:[%s2259 + $0x14] sm:$0xf]
      %v2266 = vld [vmem:[%s2259 + $0x18] sm:$0xf]
      %v2267 = vld [vmem:[%s2259 + $0x1c] sm:$0xf]
      %v2268 = vunpack.c.l.b16 %v2255
      %v2269 = vunpack.c.l.b16 %v2258
      %v2270 = vpack.c.b16 %v2269, %v2268
      %v2279 = vunpack.c.l.b16 %v2260
      %v2280 = vunpack.c.l.b16 %v2261
      %v2281 = vunpack.c.l.b16 %v2262
      %v2282 = vunpack.c.l.b16 %v2263
      %v2283 = vunpack.c.l.b16 %v2264
      %v2284 = vunpack.c.l.b16 %v2265
      %v2285 = vunpack.c.l.b16 %v2266
      %v2286 = vunpack.c.l.b16 %v2267
      %v2287 = vpack.c.b16 %v2280, %v2279
      %v2288 = vpack.c.b16 %v2282, %v2281
      %v2289 = vpack.c.b16 %v2284, %v2283
      %v2290 = vpack.c.b16 %v2286, %v2285
      %v2296 = vsel %vm785, %v2270, 0
      %2298 = vmatprep.subr.bf16.mxu0 0
      %2299 = vmatpush1.bf16.msra.mxu0 0
      %2300 = vmatprep.subr.bf16.mxu0 0
      %2301 = vmatpush1.bf16.msra.mxu0 0
      %2302 = vmatprep.subr.bf16.mxu0 0
      %2303 = vmatpush1.bf16.msra.mxu0 0
      %2304 = vmatprep.subr.bf16.mxu0 0
      %2305 = vmatpush1.bf16.msra.mxu0 0
      %2306 = vmatprep.subr.bf16.mxu0 0
      %2307 = vmatpush1.bf16.msra.mxu0 %v2290
      %2308 = vmatprep.subr.bf16.mxu0 0
      %2309 = vmatpush1.bf16.msra.mxu0 %v2289
      %2310 = vmatprep.subr.bf16.mxu0 0
      %2311 = vmatpush1.bf16.msra.mxu0 %v2288
      %2312 = vmatprep.subr.bf16.mxu0 0
      %2313 = vmatpush1.bf16.msra.mxu0 %v2287
      %2314 = vmatprep.subr.bf16.mxu0 0
      %2315 = vmatpush2.bf16.msra.mxu0 0
      %2316 = vmatprep.subr.bf16.mxu0 0
      %2317 = vmatpush2.bf16.msra.mxu0 0
      %2318 = vmatprep.subr.bf16.mxu0 0
      %2319 = vmatpush2.bf16.msra.mxu0 0
      %2320 = vmatprep.subr.bf16.mxu0 0
      %2321 = vmatpush2.bf16.msra.mxu0 0
      %2322 = vmatprep.subr.bf16.mxu0 0
      %2323 = vmatpush2.bf16.msra.mxu0 0
      %2324 = vmatprep.subr.bf16.mxu0 0
      %2325 = vmatpush2.bf16.msra.mxu0 0
      %2326 = vmatprep.subr.bf16.mxu0 0
      %2327 = vmatpush2.bf16.msra.mxu0 0
      %2328 = vmatprep.subr.bf16.mxu0 0
      %2329 = vmatpush2.bf16.msra.mxu0 0
      %2330 = vmatprep.mubr.bf16.mxu0 0
      %2331 = vmatmul.mubr.bf16.gmra.mxu0 %v1524
      %v2332 = vpop.f32.mrf.mxu0
      %v2333 = vadd.f32 0.0, %v2332
      %v2334 = vpop.f32.mrf.mxu0
      %v2335 = vpop.f32.mrf.mxu0
      %v2336 = vadd.f32 0.0, %v2335
      %v2337 = vpop.f32.mrf.mxu0
      %2338 = vmatprep.mubr.bf16.mxu0 0
      %2339 = vmatmul.mubr.bf16.gmra.mxu0 %v1527
      %v2340 = vpop.f32.mrf.mxu0
      %v2341 = vadd.f32 0.0, %v2340
      %v2342 = vpop.f32.mrf.mxu0
      %v2343 = vpop.f32.mrf.mxu0
      %v2344 = vadd.f32 0.0, %v2343
      %v2345 = vpop.f32.mrf.mxu0
      %2346 = vmatprep.mubr.bf16.mxu0 0
      %2347 = vmatmul.mubr.bf16.gmra.mxu0 %v1530
      %v2348 = vpop.f32.mrf.mxu0
      %v2349 = vadd.f32 0.0, %v2348
      %v2350 = vpop.f32.mrf.mxu0
      %v2351 = vpop.f32.mrf.mxu0
      %v2352 = vadd.f32 0.0, %v2351
      %v2353 = vpop.f32.mrf.mxu0
      %2354 = vmatprep.mubr.bf16.mxu0 0
      %2355 = vmatmul.mubr.bf16.gmra.mxu0 %v1533
      %v2356 = vpop.f32.mrf.mxu0
      %v2357 = vadd.f32 0.0, %v2356
      %v2358 = vpop.f32.mrf.mxu0
      %v2359 = vpop.f32.mrf.mxu0
      %v2360 = vadd.f32 0.0, %v2359
      %v2361 = vpop.f32.mrf.mxu0
      %2362 = vmatprep.mubr.bf16.mxu0 0
      %2363 = vmatmul.mubr.bf16.gmra.mxu0 %v1536
      %v2364 = vpop.f32.mrf.mxu0
      %v2365 = vadd.f32 0.0, %v2364
      %v2366 = vpop.f32.mrf.mxu0
      %v2367 = vpop.f32.mrf.mxu0
      %v2368 = vadd.f32 0.0, %v2367
      %v2369 = vpop.f32.mrf.mxu0
      %2370 = vmatprep.mubr.bf16.mxu0 0
      %2371 = vmatmul.mubr.bf16.gmra.mxu0 %v1539
      %v2372 = vpop.f32.mrf.mxu0
      %v2373 = vadd.f32 0.0, %v2372
      %v2374 = vpop.f32.mrf.mxu0
      %v2375 = vpop.f32.mrf.mxu0
      %v2376 = vadd.f32 0.0, %v2375
      %v2377 = vpop.f32.mrf.mxu0
      %2378 = vmatprep.mubr.bf16.mxu0 0
      %2379 = vmatmul.mubr.bf16.gmra.mxu0 %v1542
      %v2380 = vpop.f32.mrf.mxu0
      %v2381 = vadd.f32 0.0, %v2380
      %v2382 = vpop.f32.mrf.mxu0
      %v2383 = vpop.f32.mrf.mxu0
      %v2384 = vadd.f32 0.0, %v2383
      %v2385 = vpop.f32.mrf.mxu0
      %2386 = vmatprep.mubr.bf16.mxu0 0
      %2387 = vmatmul.mubr.bf16.gmra.mxu0 %v1545
      %v2388 = vpop.f32.mrf.mxu0
      %v2389 = vadd.f32 0.0, %v2388
      %v2390 = vpop.f32.mrf.mxu0
      %v2391 = vpop.f32.mrf.mxu0
      %v2392 = vadd.f32 0.0, %v2391
      %v2393 = vpop.f32.mrf.mxu0
      %2394 = vmatprep.mubr.bf16.mxu0 0
      %2395 = vmatmul.mubr.bf16.gmra.mxu0 %v1548
      %v2396 = vpop.f32.mrf.mxu0
      %v2397 = vadd.f32 0.0, %v2396
      %v2398 = vpop.f32.mrf.mxu0
      %v2399 = vpop.f32.mrf.mxu0
      %v2400 = vadd.f32 0.0, %v2399
      %v2401 = vpop.f32.mrf.mxu0
      %2402 = vmatprep.mubr.bf16.mxu0 0
      %2403 = vmatmul.mubr.bf16.gmra.mxu0 %v1551
      %v2404 = vpop.f32.mrf.mxu0
      %v2405 = vadd.f32 0.0, %v2404
      %v2406 = vpop.f32.mrf.mxu0
      %v2407 = vpop.f32.mrf.mxu0
      %v2408 = vadd.f32 0.0, %v2407
      %v2409 = vpop.f32.mrf.mxu0
      %2410 = vmatprep.mubr.bf16.mxu0 0
      %2411 = vmatmul.mubr.bf16.gmra.mxu0 %v1554
      %v2412 = vpop.f32.mrf.mxu0
      %v2413 = vadd.f32 0.0, %v2412
      %v2414 = vpop.f32.mrf.mxu0
      %v2415 = vpop.f32.mrf.mxu0
      %v2416 = vadd.f32 0.0, %v2415
      %v2417 = vpop.f32.mrf.mxu0
      %2418 = vmatprep.mubr.bf16.mxu0 0
      %2419 = vmatmul.mubr.bf16.gmra.mxu0 %v1557
      %v2420 = vpop.f32.mrf.mxu0
      %v2421 = vadd.f32 0.0, %v2420
      %v2422 = vpop.f32.mrf.mxu0
      %v2423 = vpop.f32.mrf.mxu0
      %v2424 = vadd.f32 0.0, %v2423
      %v2425 = vpop.f32.mrf.mxu0
      %2426 = vmatprep.mubr.bf16.mxu0 0
      %2427 = vmatmul.mubr.bf16.gmra.mxu0 %v1560
      %v2428 = vpop.f32.mrf.mxu0
      %v2429 = vadd.f32 0.0, %v2428
      %v2430 = vpop.f32.mrf.mxu0
      %v2431 = vpop.f32.mrf.mxu0
      %v2432 = vadd.f32 0.0, %v2431
      %v2433 = vpop.f32.mrf.mxu0
      %2434 = vmatprep.mubr.bf16.mxu0 0
      %2435 = vmatmul.mubr.bf16.gmra.mxu0 %v1563
      %v2436 = vpop.f32.mrf.mxu0
      %v2437 = vadd.f32 0.0, %v2436
      %v2438 = vpop.f32.mrf.mxu0
      %v2439 = vpop.f32.mrf.mxu0
      %v2440 = vadd.f32 0.0, %v2439
      %v2441 = vpop.f32.mrf.mxu0
      %2442 = vmatprep.mubr.bf16.mxu0 0
      %2443 = vmatmul.mubr.bf16.gmra.mxu0 %v1566
      %v2444 = vpop.f32.mrf.mxu0
      %v2445 = vadd.f32 0.0, %v2444
      %v2446 = vpop.f32.mrf.mxu0
      %v2447 = vpop.f32.mrf.mxu0
      %v2448 = vadd.f32 0.0, %v2447
      %v2449 = vpop.f32.mrf.mxu0
      %2450 = vmatprep.mubr.bf16.mxu0 0
      %2451 = vmatmul.mubr.bf16.gmra.mxu0 %v2296
      %v2452 = vpop.f32.mrf.mxu0
      %v2453 = vadd.f32 0.0, %v2452
      %v2454 = vpop.f32.mrf.mxu0
      %v2455 = vpop.f32.mrf.mxu0
      %v2456 = vadd.f32 0.0, %v2455
      %v2457 = vpop.f32.mrf.mxu0
      %2458 = vdwg.mxu0
      %v2459 = vadd.f32 %v2219, %v2333
      %v2460 = vadd.f32 %v2220, %v2336
      %v2461 = vadd.f32 %v2221, %v2341
      %v2462 = vadd.f32 %v2222, %v2344
      %v2463 = vadd.f32 %v2223, %v2349
      %v2464 = vadd.f32 %v2224, %v2352
      %v2465 = vadd.f32 %v2225, %v2357
      %v2466 = vadd.f32 %v2226, %v2360
      %v2467 = vadd.f32 %v2227, %v2365
      %v2468 = vadd.f32 %v2228, %v2368
      %v2469 = vadd.f32 %v2229, %v2373
      %v2470 = vadd.f32 %v2230, %v2376
      %v2471 = vadd.f32 %v2231, %v2381
      %v2472 = vadd.f32 %v2232, %v2384
      %v2473 = vadd.f32 %v2233, %v2389
      %v2474 = vadd.f32 %v2234, %v2392
      %v2475 = vadd.f32 %v2235, %v2397
      %v2476 = vadd.f32 %v2236, %v2400
      %v2477 = vadd.f32 %v2237, %v2405
      %v2478 = vadd.f32 %v2238, %v2408
      %v2479 = vadd.f32 %v2239, %v2413
      %v2480 = vadd.f32 %v2240, %v2416
      %v2481 = vadd.f32 %v2241, %v2421
      %v2482 = vadd.f32 %v2242, %v2424
      %v2483 = vadd.f32 %v2243, %v2429
      %v2484 = vadd.f32 %v2244, %v2432
      %v2485 = vadd.f32 %v2245, %v2437
      %v2486 = vadd.f32 %v2246, %v2440
      %v2487 = vadd.f32 %v2247, %v2445
      %v2488 = vadd.f32 %v2248, %v2448
      %v2489 = vadd.f32 %v2249, %v2453
      %v2490 = vadd.f32 %v2250, %v2456
      %s2491 = scalar_lea.vmem %s1, 192
      %v2492 = vld [vmem:[%s2491] sm:$0xf]
      %v2493 = vld [vmem:[%s2491 + $0x4] sm:$0xf]
      %v2494 = vld [vmem:[%s2491 + $0x8] sm:$0xf]
      %v2495 = vld [vmem:[%s2491 + $0xc] sm:$0xf]
      %v2496 = vld [vmem:[%s2491 + $0x10] sm:$0xf]
      %v2497 = vld [vmem:[%s2491 + $0x14] sm:$0xf]
      %v2498 = vld [vmem:[%s2491 + $0x18] sm:$0xf]
      %v2499 = vld [vmem:[%s2491 + $0x1c] sm:$0xf]
      %v2502 = vunpack.c.l.b16 %v306
      %v2503 = vunpack.c.l.b16 %v307
      %v2504 = vpack.c.b16 %v2503, %v2502
      %v2513 = vunpack.c.l.b16 %v2492
      %v2514 = vunpack.c.l.b16 %v2493
      %v2515 = vunpack.c.l.b16 %v2494
      %v2516 = vunpack.c.l.b16 %v2495
      %v2517 = vunpack.c.l.b16 %v2496
      %v2518 = vunpack.c.l.b16 %v2497
      %v2519 = vunpack.c.l.b16 %v2498
      %v2520 = vunpack.c.l.b16 %v2499
      %v2521 = vpack.c.b16 %v2514, %v2513
      %v2522 = vpack.c.b16 %v2516, %v2515
      %v2523 = vpack.c.b16 %v2518, %v2517
      %v2524 = vpack.c.b16 %v2520, %v2519
      %v2530 = vsel %vm785, %v2504, 0
      %2532 = vmatprep.subr.bf16.mxu0 0
      %2533 = vmatpush1.bf16.msra.mxu0 0
      %2534 = vmatprep.subr.bf16.mxu0 0
      %2535 = vmatpush1.bf16.msra.mxu0 0
      %2536 = vmatprep.subr.bf16.mxu0 0
      %2537 = vmatpush1.bf16.msra.mxu0 0
      %2538 = vmatprep.subr.bf16.mxu0 0
      %2539 = vmatpush1.bf16.msra.mxu0 0
      %2540 = vmatprep.subr.bf16.mxu0 0
      %2541 = vmatpush1.bf16.msra.mxu0 %v2524
      %2542 = vmatprep.subr.bf16.mxu0 0
      %2543 = vmatpush1.bf16.msra.mxu0 %v2523
      %2544 = vmatprep.subr.bf16.mxu0 0
      %2545 = vmatpush1.bf16.msra.mxu0 %v2522
      %2546 = vmatprep.subr.bf16.mxu0 0
      %2547 = vmatpush1.bf16.msra.mxu0 %v2521
      %2548 = vmatprep.subr.bf16.mxu0 0
      %2549 = vmatpush2.bf16.msra.mxu0 0
      %2550 = vmatprep.subr.bf16.mxu0 0
      %2551 = vmatpush2.bf16.msra.mxu0 0
      %2552 = vmatprep.subr.bf16.mxu0 0
      %2553 = vmatpush2.bf16.msra.mxu0 0
      %2554 = vmatprep.subr.bf16.mxu0 0
      %2555 = vmatpush2.bf16.msra.mxu0 0
      %2556 = vmatprep.subr.bf16.mxu0 0
      %2557 = vmatpush2.bf16.msra.mxu0 0
      %2558 = vmatprep.subr.bf16.mxu0 0
      %2559 = vmatpush2.bf16.msra.mxu0 0
      %2560 = vmatprep.subr.bf16.mxu0 0
      %2561 = vmatpush2.bf16.msra.mxu0 0
      %2562 = vmatprep.subr.bf16.mxu0 0
      %2563 = vmatpush2.bf16.msra.mxu0 0
      %2564 = vmatprep.mubr.bf16.mxu0 0
      %2565 = vmatmul.mubr.bf16.gmra.mxu0 %v1106
      %v2566 = vpop.f32.mrf.mxu0
      %v2567 = vadd.f32 0.0, %v2566
      %v2568 = vpop.f32.mrf.mxu0
      %v2569 = vpop.f32.mrf.mxu0
      %v2570 = vadd.f32 0.0, %v2569
      %v2571 = vpop.f32.mrf.mxu0
      %2572 = vmatprep.mubr.bf16.mxu0 0
      %2573 = vmatmul.mubr.bf16.gmra.mxu0 %v1109
      %v2574 = vpop.f32.mrf.mxu0
      %v2575 = vadd.f32 0.0, %v2574
      %v2576 = vpop.f32.mrf.mxu0
      %v2577 = vpop.f32.mrf.mxu0
      %v2578 = vadd.f32 0.0, %v2577
      %v2579 = vpop.f32.mrf.mxu0
      %2580 = vmatprep.mubr.bf16.mxu0 0
      %2581 = vmatmul.mubr.bf16.gmra.mxu0 %v1112
      %v2582 = vpop.f32.mrf.mxu0
      %v2583 = vadd.f32 0.0, %v2582
      %v2584 = vpop.f32.mrf.mxu0
      %v2585 = vpop.f32.mrf.mxu0
      %v2586 = vadd.f32 0.0, %v2585
      %v2587 = vpop.f32.mrf.mxu0
      %2588 = vmatprep.mubr.bf16.mxu0 0
      %2589 = vmatmul.mubr.bf16.gmra.mxu0 %v1115
      %v2590 = vpop.f32.mrf.mxu0
      %v2591 = vadd.f32 0.0, %v2590
      %v2592 = vpop.f32.mrf.mxu0
      %v2593 = vpop.f32.mrf.mxu0
      %v2594 = vadd.f32 0.0, %v2593
      %v2595 = vpop.f32.mrf.mxu0
      %2596 = vmatprep.mubr.bf16.mxu0 0
      %2597 = vmatmul.mubr.bf16.gmra.mxu0 %v1118
      %v2598 = vpop.f32.mrf.mxu0
      %v2599 = vadd.f32 0.0, %v2598
      %v2600 = vpop.f32.mrf.mxu0
      %v2601 = vpop.f32.mrf.mxu0
      %v2602 = vadd.f32 0.0, %v2601
      %v2603 = vpop.f32.mrf.mxu0
      %2604 = vmatprep.mubr.bf16.mxu0 0
      %2605 = vmatmul.mubr.bf16.gmra.mxu0 %v1121
      %v2606 = vpop.f32.mrf.mxu0
      %v2607 = vadd.f32 0.0, %v2606
      %v2608 = vpop.f32.mrf.mxu0
      %v2609 = vpop.f32.mrf.mxu0
      %v2610 = vadd.f32 0.0, %v2609
      %v2611 = vpop.f32.mrf.mxu0
      %2612 = vmatprep.mubr.bf16.mxu0 0
      %2613 = vmatmul.mubr.bf16.gmra.mxu0 %v1124
      %v2614 = vpop.f32.mrf.mxu0
      %v2615 = vadd.f32 0.0, %v2614
      %v2616 = vpop.f32.mrf.mxu0
      %v2617 = vpop.f32.mrf.mxu0
      %v2618 = vadd.f32 0.0, %v2617
      %v2619 = vpop.f32.mrf.mxu0
      %2620 = vmatprep.mubr.bf16.mxu0 0
      %2621 = vmatmul.mubr.bf16.gmra.mxu0 %v1127
      %v2622 = vpop.f32.mrf.mxu0
      %v2623 = vadd.f32 0.0, %v2622
      %v2624 = vpop.f32.mrf.mxu0
      %v2625 = vpop.f32.mrf.mxu0
      %v2626 = vadd.f32 0.0, %v2625
      %v2627 = vpop.f32.mrf.mxu0
      %2628 = vmatprep.mubr.bf16.mxu0 0
      %2629 = vmatmul.mubr.bf16.gmra.mxu0 %v1130
      %v2630 = vpop.f32.mrf.mxu0
      %v2631 = vadd.f32 0.0, %v2630
      %v2632 = vpop.f32.mrf.mxu0
      %v2633 = vpop.f32.mrf.mxu0
      %v2634 = vadd.f32 0.0, %v2633
      %v2635 = vpop.f32.mrf.mxu0
      %2636 = vmatprep.mubr.bf16.mxu0 0
      %2637 = vmatmul.mubr.bf16.gmra.mxu0 %v1133
      %v2638 = vpop.f32.mrf.mxu0
      %v2639 = vadd.f32 0.0, %v2638
      %v2640 = vpop.f32.mrf.mxu0
      %v2641 = vpop.f32.mrf.mxu0
      %v2642 = vadd.f32 0.0, %v2641
      %v2643 = vpop.f32.mrf.mxu0
      %2644 = vmatprep.mubr.bf16.mxu0 0
      %2645 = vmatmul.mubr.bf16.gmra.mxu0 %v1136
      %v2646 = vpop.f32.mrf.mxu0
      %v2647 = vadd.f32 0.0, %v2646
      %v2648 = vpop.f32.mrf.mxu0
      %v2649 = vpop.f32.mrf.mxu0
      %v2650 = vadd.f32 0.0, %v2649
      %v2651 = vpop.f32.mrf.mxu0
      %2652 = vmatprep.mubr.bf16.mxu0 0
      %2653 = vmatmul.mubr.bf16.gmra.mxu0 %v1139
      %v2654 = vpop.f32.mrf.mxu0
      %v2655 = vadd.f32 0.0, %v2654
      %v2656 = vpop.f32.mrf.mxu0
      %v2657 = vpop.f32.mrf.mxu0
      %v2658 = vadd.f32 0.0, %v2657
      %v2659 = vpop.f32.mrf.mxu0
      %2660 = vmatprep.mubr.bf16.mxu0 0
      %2661 = vmatmul.mubr.bf16.gmra.mxu0 %v1142
      %v2662 = vpop.f32.mrf.mxu0
      %v2663 = vadd.f32 0.0, %v2662
      %v2664 = vpop.f32.mrf.mxu0
      %v2665 = vpop.f32.mrf.mxu0
      %v2666 = vadd.f32 0.0, %v2665
      %v2667 = vpop.f32.mrf.mxu0
      %2668 = vmatprep.mubr.bf16.mxu0 0
      %2669 = vmatmul.mubr.bf16.gmra.mxu0 %v1145
      %v2670 = vpop.f32.mrf.mxu0
      %v2671 = vadd.f32 0.0, %v2670
      %v2672 = vpop.f32.mrf.mxu0
      %v2673 = vpop.f32.mrf.mxu0
      %v2674 = vadd.f32 0.0, %v2673
      %v2675 = vpop.f32.mrf.mxu0
      %2676 = vmatprep.mubr.bf16.mxu0 0
      %2677 = vmatmul.mubr.bf16.gmra.mxu0 %v1800
      %v2678 = vpop.f32.mrf.mxu0
      %v2679 = vadd.f32 0.0, %v2678
      %v2680 = vpop.f32.mrf.mxu0
      %v2681 = vpop.f32.mrf.mxu0
      %v2682 = vadd.f32 0.0, %v2681
      %v2683 = vpop.f32.mrf.mxu0
      %2684 = vmatprep.mubr.bf16.mxu0 0
      %2685 = vmatmul.mubr.bf16.gmra.mxu0 %v2530
      %v2686 = vpop.f32.mrf.mxu0
      %v2687 = vadd.f32 0.0, %v2686
      %v2688 = vpop.f32.mrf.mxu0
      %v2689 = vpop.f32.mrf.mxu0
      %v2690 = vadd.f32 0.0, %v2689
      %v2691 = vpop.f32.mrf.mxu0
      %2692 = vdwg.mxu0
      %v2693 = vadd.f32 %v2459, %v2567
      %v2694 = vadd.f32 %v2460, %v2570
      %v2695 = vadd.f32 %v2461, %v2575
      %v2696 = vadd.f32 %v2462, %v2578
      %v2697 = vadd.f32 %v2463, %v2583
      %v2698 = vadd.f32 %v2464, %v2586
      %v2699 = vadd.f32 %v2465, %v2591
      %v2700 = vadd.f32 %v2466, %v2594
      %v2701 = vadd.f32 %v2467, %v2599
      %v2702 = vadd.f32 %v2468, %v2602
      %v2703 = vadd.f32 %v2469, %v2607
      %v2704 = vadd.f32 %v2470, %v2610
      %v2705 = vadd.f32 %v2471, %v2615
      %v2706 = vadd.f32 %v2472, %v2618
      %v2707 = vadd.f32 %v2473, %v2623
      %v2708 = vadd.f32 %v2474, %v2626
      %v2709 = vadd.f32 %v2475, %v2631
      %v2710 = vadd.f32 %v2476, %v2634
      %v2711 = vadd.f32 %v2477, %v2639
      %v2712 = vadd.f32 %v2478, %v2642
      %v2713 = vadd.f32 %v2479, %v2647
      %v2714 = vadd.f32 %v2480, %v2650
      %v2715 = vadd.f32 %v2481, %v2655
      %v2716 = vadd.f32 %v2482, %v2658
      %v2717 = vadd.f32 %v2483, %v2663
      %v2718 = vadd.f32 %v2484, %v2666
      %v2719 = vadd.f32 %v2485, %v2671
      %v2720 = vadd.f32 %v2486, %v2674
      %v2721 = vadd.f32 %v2487, %v2679
      %v2722 = vadd.f32 %v2488, %v2682
      %v2723 = vadd.f32 %v2489, %v2687
      %v2724 = vadd.f32 %v2490, %v2690
      %v2726 = vshrl.u32 %v306, 16
      %v2728 = vrot.slane %v2726, 4
      %v2729 = vshll.u32 %v306, 16
      %v2731 = vrot.slane %v2729, 5
      %v2732 = vor.u32 %v2728, %v2731
      %v2733 = vrot.slane %v2732, 4
      %v2735 = vshll.u32 %v307, 16
      %v2737 = vrot.slane %v2735, 5
      %v2738 = vsel %vm319, %v2733, %v2737
      %v2739 = vshrl.u32 %v307, 16
      %v2741 = vrot.slane %v2739, 4
      %v2742 = vor.u32 %v2741, %v2737
      %v2743 = vrot.slane %v2742, 4
      %v2745 = vshll.u32 %v308, 16
      %v2747 = vrot.slane %v2745, 5
      %v2748 = vsel %vm319, %v2743, %v2747
      %s2749 = scalar_lea.vmem %s1, 224
      %v2750 = vld [vmem:[%s2749] sm:$0xf]
      %v2751 = vld [vmem:[%s2749 + $0x4] sm:$0xf]
      %v2752 = vld [vmem:[%s2749 + $0x8] sm:$0xf]
      %v2753 = vld [vmem:[%s2749 + $0xc] sm:$0xf]
      %v2754 = vld [vmem:[%s2749 + $0x10] sm:$0xf]
      %v2755 = vld [vmem:[%s2749 + $0x14] sm:$0xf]
      %v2756 = vld [vmem:[%s2749 + $0x18] sm:$0xf]
      %v2757 = vld [vmem:[%s2749 + $0x1c] sm:$0xf]
      %v2758 = vunpack.c.l.b16 %v2738
      %v2759 = vunpack.c.l.b16 %v2748
      %v2760 = vpack.c.b16 %v2759, %v2758
      %v2769 = vunpack.c.l.b16 %v2750
      %v2770 = vunpack.c.l.b16 %v2751
      %v2771 = vunpack.c.l.b16 %v2752
      %v2772 = vunpack.c.l.b16 %v2753
      %v2773 = vunpack.c.l.b16 %v2754
      %v2774 = vunpack.c.l.b16 %v2755
      %v2775 = vunpack.c.l.b16 %v2756
      %v2776 = vunpack.c.l.b16 %v2757
      %v2777 = vpack.c.b16 %v2770, %v2769
      %v2778 = vpack.c.b16 %v2772, %v2771
      %v2779 = vpack.c.b16 %v2774, %v2773
      %v2780 = vpack.c.b16 %v2776, %v2775
      %v2786 = vsel %vm785, %v2760, 0
      %2788 = vmatprep.subr.bf16.mxu0 0
      %2789 = vmatpush1.bf16.msra.mxu0 0
      %2790 = vmatprep.subr.bf16.mxu0 0
      %2791 = vmatpush1.bf16.msra.mxu0 0
      %2792 = vmatprep.subr.bf16.mxu0 0
      %2793 = vmatpush1.bf16.msra.mxu0 0
      %2794 = vmatprep.subr.bf16.mxu0 0
      %2795 = vmatpush1.bf16.msra.mxu0 0
      %2796 = vmatprep.subr.bf16.mxu0 0
      %2797 = vmatpush1.bf16.msra.mxu0 %v2780
      %2798 = vmatprep.subr.bf16.mxu0 0
      %2799 = vmatpush1.bf16.msra.mxu0 %v2779
      %2800 = vmatprep.subr.bf16.mxu0 0
      %2801 = vmatpush1.bf16.msra.mxu0 %v2778
      %2802 = vmatprep.subr.bf16.mxu0 0
      %2803 = vmatpush1.bf16.msra.mxu0 %v2777
      %2804 = vmatprep.subr.bf16.mxu0 0
      %2805 = vmatpush2.bf16.msra.mxu0 0
      %2806 = vmatprep.subr.bf16.mxu0 0
      %2807 = vmatpush2.bf16.msra.mxu0 0
      %2808 = vmatprep.subr.bf16.mxu0 0
      %2809 = vmatpush2.bf16.msra.mxu0 0
      %2810 = vmatprep.subr.bf16.mxu0 0
      %2811 = vmatpush2.bf16.msra.mxu0 0
      %2812 = vmatprep.subr.bf16.mxu0 0
      %2813 = vmatpush2.bf16.msra.mxu0 0
      %2814 = vmatprep.subr.bf16.mxu0 0
      %2815 = vmatpush2.bf16.msra.mxu0 0
      %2816 = vmatprep.subr.bf16.mxu0 0
      %2817 = vmatpush2.bf16.msra.mxu0 0
      %2818 = vmatprep.subr.bf16.mxu0 0
      %2819 = vmatpush2.bf16.msra.mxu0 0
      %2820 = vmatprep.mubr.bf16.mxu0 0
      %2821 = vmatmul.mubr.bf16.gmra.mxu0 %v793
      %v2822 = vpop.f32.mrf.mxu0
      %v2823 = vadd.f32 0.0, %v2822
      %v2824 = vpop.f32.mrf.mxu0
      %v2825 = vpop.f32.mrf.mxu0
      %v2826 = vadd.f32 0.0, %v2825
      %v2827 = vpop.f32.mrf.mxu0
      %2828 = vmatprep.mubr.bf16.mxu0 0
      %2829 = vmatmul.mubr.bf16.gmra.mxu0 %v796
      %v2830 = vpop.f32.mrf.mxu0
      %v2831 = vadd.f32 0.0, %v2830
      %v2832 = vpop.f32.mrf.mxu0
      %v2833 = vpop.f32.mrf.mxu0
      %v2834 = vadd.f32 0.0, %v2833
      %v2835 = vpop.f32.mrf.mxu0
      %2836 = vmatprep.mubr.bf16.mxu0 0
      %2837 = vmatmul.mubr.bf16.gmra.mxu0 %v799
      %v2838 = vpop.f32.mrf.mxu0
      %v2839 = vadd.f32 0.0, %v2838
      %v2840 = vpop.f32.mrf.mxu0
      %v2841 = vpop.f32.mrf.mxu0
      %v2842 = vadd.f32 0.0, %v2841
      %v2843 = vpop.f32.mrf.mxu0
      %2844 = vmatprep.mubr.bf16.mxu0 0
      %2845 = vmatmul.mubr.bf16.gmra.mxu0 %v802
      %v2846 = vpop.f32.mrf.mxu0
      %v2847 = vadd.f32 0.0, %v2846
      %v2848 = vpop.f32.mrf.mxu0
      %v2849 = vpop.f32.mrf.mxu0
      %v2850 = vadd.f32 0.0, %v2849
      %v2851 = vpop.f32.mrf.mxu0
      %2852 = vmatprep.mubr.bf16.mxu0 0
      %2853 = vmatmul.mubr.bf16.gmra.mxu0 %v805
      %v2854 = vpop.f32.mrf.mxu0
      %v2855 = vadd.f32 0.0, %v2854
      %v2856 = vpop.f32.mrf.mxu0
      %v2857 = vpop.f32.mrf.mxu0
      %v2858 = vadd.f32 0.0, %v2857
      %v2859 = vpop.f32.mrf.mxu0
      %2860 = vmatprep.mubr.bf16.mxu0 0
      %2861 = vmatmul.mubr.bf16.gmra.mxu0 %v808
      %v2862 = vpop.f32.mrf.mxu0
      %v2863 = vadd.f32 0.0, %v2862
      %v2864 = vpop.f32.mrf.mxu0
      %v2865 = vpop.f32.mrf.mxu0
      %v2866 = vadd.f32 0.0, %v2865
      %v2867 = vpop.f32.mrf.mxu0
      %2868 = vmatprep.mubr.bf16.mxu0 0
      %2869 = vmatmul.mubr.bf16.gmra.mxu0 %v811
      %v2870 = vpop.f32.mrf.mxu0
      %v2871 = vadd.f32 0.0, %v2870
      %v2872 = vpop.f32.mrf.mxu0
      %v2873 = vpop.f32.mrf.mxu0
      %v2874 = vadd.f32 0.0, %v2873
      %v2875 = vpop.f32.mrf.mxu0
      %2876 = vmatprep.mubr.bf16.mxu0 0
      %2877 = vmatmul.mubr.bf16.gmra.mxu0 %v814
      %v2878 = vpop.f32.mrf.mxu0
      %v2879 = vadd.f32 0.0, %v2878
      %v2880 = vpop.f32.mrf.mxu0
      %v2881 = vpop.f32.mrf.mxu0
      %v2882 = vadd.f32 0.0, %v2881
      %v2883 = vpop.f32.mrf.mxu0
      %2884 = vmatprep.mubr.bf16.mxu0 0
      %2885 = vmatmul.mubr.bf16.gmra.mxu0 %v817
      %v2886 = vpop.f32.mrf.mxu0
      %v2887 = vadd.f32 0.0, %v2886
      %v2888 = vpop.f32.mrf.mxu0
      %v2889 = vpop.f32.mrf.mxu0
      %v2890 = vadd.f32 0.0, %v2889
      %v2891 = vpop.f32.mrf.mxu0
      %2892 = vmatprep.mubr.bf16.mxu0 0
      %2893 = vmatmul.mubr.bf16.gmra.mxu0 %v820
      %v2894 = vpop.f32.mrf.mxu0
      %v2895 = vadd.f32 0.0, %v2894
      %v2896 = vpop.f32.mrf.mxu0
      %v2897 = vpop.f32.mrf.mxu0
      %v2898 = vadd.f32 0.0, %v2897
      %v2899 = vpop.f32.mrf.mxu0
      %2900 = vmatprep.mubr.bf16.mxu0 0
      %2901 = vmatmul.mubr.bf16.gmra.mxu0 %v823
      %v2902 = vpop.f32.mrf.mxu0
      %v2903 = vadd.f32 0.0, %v2902
      %v2904 = vpop.f32.mrf.mxu0
      %v2905 = vpop.f32.mrf.mxu0
      %v2906 = vadd.f32 0.0, %v2905
      %v2907 = vpop.f32.mrf.mxu0
      %2908 = vmatprep.mubr.bf16.mxu0 0
      %2909 = vmatmul.mubr.bf16.gmra.mxu0 %v826
      %v2910 = vpop.f32.mrf.mxu0
      %v2911 = vadd.f32 0.0, %v2910
      %v2912 = vpop.f32.mrf.mxu0
      %v2913 = vpop.f32.mrf.mxu0
      %v2914 = vadd.f32 0.0, %v2913
      %v2915 = vpop.f32.mrf.mxu0
      %2916 = vmatprep.mubr.bf16.mxu0 0
      %2917 = vmatmul.mubr.bf16.gmra.mxu0 %v829
      %v2918 = vpop.f32.mrf.mxu0
      %v2919 = vadd.f32 0.0, %v2918
      %v2920 = vpop.f32.mrf.mxu0
      %v2921 = vpop.f32.mrf.mxu0
      %v2922 = vadd.f32 0.0, %v2921
      %v2923 = vpop.f32.mrf.mxu0
      %2924 = vmatprep.mubr.bf16.mxu0 0
      %2925 = vmatmul.mubr.bf16.gmra.mxu0 %v832
      %v2926 = vpop.f32.mrf.mxu0
      %v2927 = vadd.f32 0.0, %v2926
      %v2928 = vpop.f32.mrf.mxu0
      %v2929 = vpop.f32.mrf.mxu0
      %v2930 = vadd.f32 0.0, %v2929
      %v2931 = vpop.f32.mrf.mxu0
      %2932 = vmatprep.mubr.bf16.mxu0 0
      %2933 = vmatmul.mubr.bf16.gmra.mxu0 %v2056
      %v2934 = vpop.f32.mrf.mxu0
      %v2935 = vadd.f32 0.0, %v2934
      %v2936 = vpop.f32.mrf.mxu0
      %v2937 = vpop.f32.mrf.mxu0
      %v2938 = vadd.f32 0.0, %v2937
      %v2939 = vpop.f32.mrf.mxu0
      %2940 = vmatprep.mubr.bf16.mxu0 0
      %2941 = vmatmul.mubr.bf16.gmra.mxu0 %v2786
      %v2942 = vpop.f32.mrf.mxu0
      %v2943 = vadd.f32 0.0, %v2942
      %v2944 = vpop.f32.mrf.mxu0
      %v2945 = vpop.f32.mrf.mxu0
      %v2946 = vadd.f32 0.0, %v2945
      %v2947 = vpop.f32.mrf.mxu0
      %2948 = vdwg.mxu0
      %v2949 = vadd.f32 %v2693, %v2823
      %v2950 = vadd.f32 %v2694, %v2826
      %v2951 = vadd.f32 %v2695, %v2831
      %v2952 = vadd.f32 %v2696, %v2834
      %v2953 = vadd.f32 %v2697, %v2839
      %v2954 = vadd.f32 %v2698, %v2842
      %v2955 = vadd.f32 %v2699, %v2847
      %v2956 = vadd.f32 %v2700, %v2850
      %v2957 = vadd.f32 %v2701, %v2855
      %v2958 = vadd.f32 %v2702, %v2858
      %v2959 = vadd.f32 %v2703, %v2863
      %v2960 = vadd.f32 %v2704, %v2866
      %v2961 = vadd.f32 %v2705, %v2871
      %v2962 = vadd.f32 %v2706, %v2874
      %v2963 = vadd.f32 %v2707, %v2879
      %v2964 = vadd.f32 %v2708, %v2882
      %v2965 = vadd.f32 %v2709, %v2887
      %v2966 = vadd.f32 %v2710, %v2890
      %v2967 = vadd.f32 %v2711, %v2895
      %v2968 = vadd.f32 %v2712, %v2898
      %v2969 = vadd.f32 %v2713, %v2903
      %v2970 = vadd.f32 %v2714, %v2906
      %v2971 = vadd.f32 %v2715, %v2911
      %v2972 = vadd.f32 %v2716, %v2914
      %v2973 = vadd.f32 %v2717, %v2919
      %v2974 = vadd.f32 %v2718, %v2922
      %v2975 = vadd.f32 %v2719, %v2927
      %v2976 = vadd.f32 %v2720, %v2930
      %v2977 = vadd.f32 %v2721, %v2935
      %v2978 = vadd.f32 %v2722, %v2938
      %v2979 = vadd.f32 %v2723, %v2943
      %v2980 = vadd.f32 %v2724, %v2946
      %v2982 = vrot.slane %v306, 5
      %v2983 = vrot.slane %v2982, 4
      %v2984 = vrot.slane %v307, 5
      %v2985 = vsel %vm1326, %v2983, %v2984
      %v2986 = vrot.slane %v2984, 4
      %v2987 = vrot.slane %v308, 5
      %v2988 = vsel %vm1326, %v2986, %v2987
      %s2989 = scalar_lea.vmem %s1, 256
      %v2990 = vld [vmem:[%s2989] sm:$0xf]
      %v2991 = vld [vmem:[%s2989 + $0x4] sm:$0xf]
      %v2992 = vld [vmem:[%s2989 + $0x8] sm:$0xf]
      %v2993 = vld [vmem:[%s2989 + $0xc] sm:$0xf]
      %v2994 = vld [vmem:[%s2989 + $0x10] sm:$0xf]
      %v2995 = vld [vmem:[%s2989 + $0x14] sm:$0xf]
      %v2996 = vld [vmem:[%s2989 + $0x18] sm:$0xf]
      %v2997 = vld [vmem:[%s2989 + $0x1c] sm:$0xf]
      %v2998 = vunpack.c.l.b16 %v2985
      %v2999 = vunpack.c.l.b16 %v2988
      %v3000 = vpack.c.b16 %v2999, %v2998
      %v3009 = vunpack.c.l.b16 %v2990
      %v3010 = vunpack.c.l.b16 %v2991
      %v3011 = vunpack.c.l.b16 %v2992
      %v3012 = vunpack.c.l.b16 %v2993
      %v3013 = vunpack.c.l.b16 %v2994
      %v3014 = vunpack.c.l.b16 %v2995
      %v3015 = vunpack.c.l.b16 %v2996
      %v3016 = vunpack.c.l.b16 %v2997
      %v3017 = vpack.c.b16 %v3010, %v3009
      %v3018 = vpack.c.b16 %v3012, %v3011
      %v3019 = vpack.c.b16 %v3014, %v3013
      %v3020 = vpack.c.b16 %v3016, %v3015
      %v3026 = vsel %vm785, %v3000, 0
      %3028 = vmatprep.subr.bf16.mxu0 0
      %3029 = vmatpush1.bf16.msra.mxu0 0
      %3030 = vmatprep.subr.bf16.mxu0 0
      %3031 = vmatpush1.bf16.msra.mxu0 0
      %3032 = vmatprep.subr.bf16.mxu0 0
      %3033 = vmatpush1.bf16.msra.mxu0 0
      %3034 = vmatprep.subr.bf16.mxu0 0
      %3035 = vmatpush1.bf16.msra.mxu0 0
      %3036 = vmatprep.subr.bf16.mxu0 0
      %3037 = vmatpush1.bf16.msra.mxu0 %v3020
      %3038 = vmatprep.subr.bf16.mxu0 0
      %3039 = vmatpush1.bf16.msra.mxu0 %v3019
      %3040 = vmatprep.subr.bf16.mxu0 0
      %3041 = vmatpush1.bf16.msra.mxu0 %v3018
      %3042 = vmatprep.subr.bf16.mxu0 0
      %3043 = vmatpush1.bf16.msra.mxu0 %v3017
      %3044 = vmatprep.subr.bf16.mxu0 0
      %3045 = vmatpush2.bf16.msra.mxu0 0
      %3046 = vmatprep.subr.bf16.mxu0 0
      %3047 = vmatpush2.bf16.msra.mxu0 0
      %3048 = vmatprep.subr.bf16.mxu0 0
      %3049 = vmatpush2.bf16.msra.mxu0 0
      %3050 = vmatprep.subr.bf16.mxu0 0
      %3051 = vmatpush2.bf16.msra.mxu0 0
      %3052 = vmatprep.subr.bf16.mxu0 0
      %3053 = vmatpush2.bf16.msra.mxu0 0
      %3054 = vmatprep.subr.bf16.mxu0 0
      %3055 = vmatpush2.bf16.msra.mxu0 0
      %3056 = vmatprep.subr.bf16.mxu0 0
      %3057 = vmatpush2.bf16.msra.mxu0 0
      %3058 = vmatprep.subr.bf16.mxu0 0
      %3059 = vmatpush2.bf16.msra.mxu0 0
      %3060 = vmatprep.mubr.bf16.mxu0 0
      %3061 = vmatmul.mubr.bf16.gmra.mxu0 %v1527
      %v3062 = vpop.f32.mrf.mxu0
      %v3063 = vadd.f32 0.0, %v3062
      %v3064 = vpop.f32.mrf.mxu0
      %v3065 = vpop.f32.mrf.mxu0
      %v3066 = vadd.f32 0.0, %v3065
      %v3067 = vpop.f32.mrf.mxu0
      %3068 = vmatprep.mubr.bf16.mxu0 0
      %3069 = vmatmul.mubr.bf16.gmra.mxu0 %v1530
      %v3070 = vpop.f32.mrf.mxu0
      %v3071 = vadd.f32 0.0, %v3070
      %v3072 = vpop.f32.mrf.mxu0
      %v3073 = vpop.f32.mrf.mxu0
      %v3074 = vadd.f32 0.0, %v3073
      %v3075 = vpop.f32.mrf.mxu0
      %3076 = vmatprep.mubr.bf16.mxu0 0
      %3077 = vmatmul.mubr.bf16.gmra.mxu0 %v1533
      %v3078 = vpop.f32.mrf.mxu0
      %v3079 = vadd.f32 0.0, %v3078
      %v3080 = vpop.f32.mrf.mxu0
      %v3081 = vpop.f32.mrf.mxu0
      %v3082 = vadd.f32 0.0, %v3081
      %v3083 = vpop.f32.mrf.mxu0
      %3084 = vmatprep.mubr.bf16.mxu0 0
      %3085 = vmatmul.mubr.bf16.gmra.mxu0 %v1536
      %v3086 = vpop.f32.mrf.mxu0
      %v3087 = vadd.f32 0.0, %v3086
      %v3088 = vpop.f32.mrf.mxu0
      %v3089 = vpop.f32.mrf.mxu0
      %v3090 = vadd.f32 0.0, %v3089
      %v3091 = vpop.f32.mrf.mxu0
      %3092 = vmatprep.mubr.bf16.mxu0 0
      %3093 = vmatmul.mubr.bf16.gmra.mxu0 %v1539
      %v3094 = vpop.f32.mrf.mxu0
      %v3095 = vadd.f32 0.0, %v3094
      %v3096 = vpop.f32.mrf.mxu0
      %v3097 = vpop.f32.mrf.mxu0
      %v3098 = vadd.f32 0.0, %v3097
      %v3099 = vpop.f32.mrf.mxu0
      %3100 = vmatprep.mubr.bf16.mxu0 0
      %3101 = vmatmul.mubr.bf16.gmra.mxu0 %v1542
      %v3102 = vpop.f32.mrf.mxu0
      %v3103 = vadd.f32 0.0, %v3102
      %v3104 = vpop.f32.mrf.mxu0
      %v3105 = vpop.f32.mrf.mxu0
      %v3106 = vadd.f32 0.0, %v3105
      %v3107 = vpop.f32.mrf.mxu0
      %3108 = vmatprep.mubr.bf16.mxu0 0
      %3109 = vmatmul.mubr.bf16.gmra.mxu0 %v1545
      %v3110 = vpop.f32.mrf.mxu0
      %v3111 = vadd.f32 0.0, %v3110
      %v3112 = vpop.f32.mrf.mxu0
      %v3113 = vpop.f32.mrf.mxu0
      %v3114 = vadd.f32 0.0, %v3113
      %v3115 = vpop.f32.mrf.mxu0
      %3116 = vmatprep.mubr.bf16.mxu0 0
      %3117 = vmatmul.mubr.bf16.gmra.mxu0 %v1548
      %v3118 = vpop.f32.mrf.mxu0
      %v3119 = vadd.f32 0.0, %v3118
      %v3120 = vpop.f32.mrf.mxu0
      %v3121 = vpop.f32.mrf.mxu0
      %v3122 = vadd.f32 0.0, %v3121
      %v3123 = vpop.f32.mrf.mxu0
      %3124 = vmatprep.mubr.bf16.mxu0 0
      %3125 = vmatmul.mubr.bf16.gmra.mxu0 %v1551
      %v3126 = vpop.f32.mrf.mxu0
      %v3127 = vadd.f32 0.0, %v3126
      %v3128 = vpop.f32.mrf.mxu0
      %v3129 = vpop.f32.mrf.mxu0
      %v3130 = vadd.f32 0.0, %v3129
      %v3131 = vpop.f32.mrf.mxu0
      %3132 = vmatprep.mubr.bf16.mxu0 0
      %3133 = vmatmul.mubr.bf16.gmra.mxu0 %v1554
      %v3134 = vpop.f32.mrf.mxu0
      %v3135 = vadd.f32 0.0, %v3134
      %v3136 = vpop.f32.mrf.mxu0
      %v3137 = vpop.f32.mrf.mxu0
      %v3138 = vadd.f32 0.0, %v3137
      %v3139 = vpop.f32.mrf.mxu0
      %3140 = vmatprep.mubr.bf16.mxu0 0
      %3141 = vmatmul.mubr.bf16.gmra.mxu0 %v1557
      %v3142 = vpop.f32.mrf.mxu0
      %v3143 = vadd.f32 0.0, %v3142
      %v3144 = vpop.f32.mrf.mxu0
      %v3145 = vpop.f32.mrf.mxu0
      %v3146 = vadd.f32 0.0, %v3145
      %v3147 = vpop.f32.mrf.mxu0
      %3148 = vmatprep.mubr.bf16.mxu0 0
      %3149 = vmatmul.mubr.bf16.gmra.mxu0 %v1560
      %v3150 = vpop.f32.mrf.mxu0
      %v3151 = vadd.f32 0.0, %v3150
      %v3152 = vpop.f32.mrf.mxu0
      %v3153 = vpop.f32.mrf.mxu0
      %v3154 = vadd.f32 0.0, %v3153
      %v3155 = vpop.f32.mrf.mxu0
      %3156 = vmatprep.mubr.bf16.mxu0 0
      %3157 = vmatmul.mubr.bf16.gmra.mxu0 %v1563
      %v3158 = vpop.f32.mrf.mxu0
      %v3159 = vadd.f32 0.0, %v3158
      %v3160 = vpop.f32.mrf.mxu0
      %v3161 = vpop.f32.mrf.mxu0
      %v3162 = vadd.f32 0.0, %v3161
      %v3163 = vpop.f32.mrf.mxu0
      %3164 = vmatprep.mubr.bf16.mxu0 0
      %3165 = vmatmul.mubr.bf16.gmra.mxu0 %v1566
      %v3166 = vpop.f32.mrf.mxu0
      %v3167 = vadd.f32 0.0, %v3166
      %v3168 = vpop.f32.mrf.mxu0
      %v3169 = vpop.f32.mrf.mxu0
      %v3170 = vadd.f32 0.0, %v3169
      %v3171 = vpop.f32.mrf.mxu0
      %3172 = vmatprep.mubr.bf16.mxu0 0
      %3173 = vmatmul.mubr.bf16.gmra.mxu0 %v2296
      %v3174 = vpop.f32.mrf.mxu0
      %v3175 = vadd.f32 0.0, %v3174
      %v3176 = vpop.f32.mrf.mxu0
      %v3177 = vpop.f32.mrf.mxu0
      %v3178 = vadd.f32 0.0, %v3177
      %v3179 = vpop.f32.mrf.mxu0
      %3180 = vmatprep.mubr.bf16.mxu0 0
      %3181 = vmatmul.mubr.bf16.gmra.mxu0 %v3026
      %v3182 = vpop.f32.mrf.mxu0
      %v3183 = vadd.f32 0.0, %v3182
      %v3184 = vpop.f32.mrf.mxu0
      %v3185 = vpop.f32.mrf.mxu0
      %v3186 = vadd.f32 0.0, %v3185
      %v3187 = vpop.f32.mrf.mxu0
      %3188 = vdwg.mxu0
      %v3189 = vadd.f32 %v2949, %v3063
      %v3190 = vadd.f32 %v2950, %v3066
      %v3191 = vadd.f32 %v2951, %v3071
      %v3192 = vadd.f32 %v2952, %v3074
      %v3193 = vadd.f32 %v2953, %v3079
      %v3194 = vadd.f32 %v2954, %v3082
      %v3195 = vadd.f32 %v2955, %v3087
      %v3196 = vadd.f32 %v2956, %v3090
      %v3197 = vadd.f32 %v2957, %v3095
      %v3198 = vadd.f32 %v2958, %v3098
      %v3199 = vadd.f32 %v2959, %v3103
      %v3200 = vadd.f32 %v2960, %v3106
      %v3201 = vadd.f32 %v2961, %v3111
      %v3202 = vadd.f32 %v2962, %v3114
      %v3203 = vadd.f32 %v2963, %v3119
      %v3204 = vadd.f32 %v2964, %v3122
      %v3205 = vadd.f32 %v2965, %v3127
      %v3206 = vadd.f32 %v2966, %v3130
      %v3207 = vadd.f32 %v2967, %v3135
      %v3208 = vadd.f32 %v2968, %v3138
      %v3209 = vadd.f32 %v2969, %v3143
      %v3210 = vadd.f32 %v2970, %v3146
      %v3211 = vadd.f32 %v2971, %v3151
      %v3212 = vadd.f32 %v2972, %v3154
      %v3213 = vadd.f32 %v2973, %v3159
      %v3214 = vadd.f32 %v2974, %v3162
      %v3215 = vadd.f32 %v2975, %v3167
      %v3216 = vadd.f32 %v2976, %v3170
      %v3217 = vadd.f32 %v2977, %v3175
      %v3218 = vadd.f32 %v2978, %v3178
      %v3219 = vadd.f32 %v2979, %v3183
      %v3220 = vadd.f32 %v2980, %v3186
      %v3221 = vld [vmem:[%s2] sm:$0x1]
      %v3223 = vlaneseq
      %v3224 = vshrl.u32 %v3223, 7
      %v3225 = vsub.s32 0, %v3224
      %v3226 = vrot.slane %v3221, %v3225
      %v3228 = vadd.f32 %v3189, %v3226
      %v3229 = vadd.f32 %v3190, %v3226
      %v3230 = vadd.f32 %v3191, %v3226
      %v3231 = vadd.f32 %v3192, %v3226
      %v3232 = vadd.f32 %v3193, %v3226
      %v3233 = vadd.f32 %v3194, %v3226
      %v3234 = vadd.f32 %v3195, %v3226
      %v3235 = vadd.f32 %v3196, %v3226
      %v3236 = vadd.f32 %v3197, %v3226
      %v3237 = vadd.f32 %v3198, %v3226
      %v3238 = vadd.f32 %v3199, %v3226
      %v3239 = vadd.f32 %v3200, %v3226
      %v3240 = vadd.f32 %v3201, %v3226
      %v3241 = vadd.f32 %v3202, %v3226
      %v3242 = vadd.f32 %v3203, %v3226
      %v3243 = vadd.f32 %v3204, %v3226
      %v3244 = vadd.f32 %v3205, %v3226
      %v3245 = vadd.f32 %v3206, %v3226
      %v3246 = vadd.f32 %v3207, %v3226
      %v3247 = vadd.f32 %v3208, %v3226
      %v3248 = vadd.f32 %v3209, %v3226
      %v3249 = vadd.f32 %v3210, %v3226
      %v3250 = vadd.f32 %v3211, %v3226
      %v3251 = vadd.f32 %v3212, %v3226
      %v3252 = vadd.f32 %v3213, %v3226
      %v3253 = vadd.f32 %v3214, %v3226
      %v3254 = vadd.f32 %v3215, %v3226
      %v3255 = vadd.f32 %v3216, %v3226
      %v3256 = vadd.f32 %v3217, %v3226
      %v3257 = vadd.f32 %v3218, %v3226
      %v3258 = vadd.f32 %v3219, %v3226
      %v3259 = vadd.f32 %v3220, %v3226
      %v3260 = vmax.f32 %v3228, 0.0
      %v3261 = vmax.f32 %v3229, 0.0
      %v3262 = vmax.f32 %v3230, 0.0
      %v3263 = vmax.f32 %v3231, 0.0
      %v3264 = vmax.f32 %v3232, 0.0
      %v3265 = vmax.f32 %v3233, 0.0
      %v3266 = vmax.f32 %v3234, 0.0
      %v3267 = vmax.f32 %v3235, 0.0
      %v3268 = vmax.f32 %v3236, 0.0
      %v3269 = vmax.f32 %v3237, 0.0
      %v3270 = vmax.f32 %v3238, 0.0
      %v3271 = vmax.f32 %v3239, 0.0
      %v3272 = vmax.f32 %v3240, 0.0
      %v3273 = vmax.f32 %v3241, 0.0
      %v3274 = vmax.f32 %v3242, 0.0
      %v3275 = vmax.f32 %v3243, 0.0
      %v3276 = vmax.f32 %v3244, 0.0
      %v3277 = vmax.f32 %v3245, 0.0
      %v3278 = vmax.f32 %v3246, 0.0
      %v3279 = vmax.f32 %v3247, 0.0
      %v3280 = vmax.f32 %v3248, 0.0
      %v3281 = vmax.f32 %v3249, 0.0
      %v3282 = vmax.f32 %v3250, 0.0
      %v3283 = vmax.f32 %v3251, 0.0
      %v3284 = vmax.f32 %v3252, 0.0
      %v3285 = vmax.f32 %v3253, 0.0
      %v3286 = vmax.f32 %v3254, 0.0
      %v3287 = vmax.f32 %v3255, 0.0
      %v3288 = vmax.f32 %v3256, 0.0
      %v3289 = vmax.f32 %v3257, 0.0
      %v3290 = vmax.f32 %v3258, 0.0
      %v3291 = vmax.f32 %v3259, 0.0
      %v3292 = vpack.c.bf16 %v3229, %v3228
      %v3293 = vpack.c.bf16 %v3231, %v3230
      %v3294 = vpack.c.bf16 %v3233, %v3232
      %v3295 = vpack.c.bf16 %v3235, %v3234
      %v3296 = vpack.c.bf16 %v3237, %v3236
      %v3297 = vpack.c.bf16 %v3239, %v3238
      %v3298 = vpack.c.bf16 %v3241, %v3240
      %v3299 = vpack.c.bf16 %v3243, %v3242
      %v3300 = vpack.c.bf16 %v3245, %v3244
      %v3301 = vpack.c.bf16 %v3247, %v3246
      %v3302 = vpack.c.bf16 %v3249, %v3248
      %v3303 = vpack.c.bf16 %v3251, %v3250
      %v3304 = vpack.c.bf16 %v3253, %v3252
      %v3305 = vpack.c.bf16 %v3255, %v3254
      %v3306 = vpack.c.bf16 %v3257, %v3256
      %v3307 = vpack.c.bf16 %v3259, %v3258
      %v3324 = vunpack.c.l.b16 %v3292
      %v3325 = vunpack.c.h.b16 %v3292
      %v3326 = vunpack.c.l.b16 %v3293
      %v3327 = vunpack.c.h.b16 %v3293
      %v3328 = vunpack.c.l.b16 %v3294
      %v3329 = vunpack.c.h.b16 %v3294
      %v3330 = vunpack.c.l.b16 %v3295
      %v3331 = vunpack.c.h.b16 %v3295
      %v3332 = vunpack.c.l.b16 %v3296
      %v3333 = vunpack.c.h.b16 %v3296
      %v3334 = vunpack.c.l.b16 %v3297
      %v3335 = vunpack.c.h.b16 %v3297
      %v3336 = vunpack.c.l.b16 %v3298
      %v3337 = vunpack.c.h.b16 %v3298
      %v3338 = vunpack.c.l.b16 %v3299
      %v3339 = vunpack.c.h.b16 %v3299
      %v3340 = vunpack.c.l.b16 %v3300
      %v3341 = vunpack.c.h.b16 %v3300
      %v3342 = vunpack.c.l.b16 %v3301
      %v3343 = vunpack.c.h.b16 %v3301
      %v3344 = vunpack.c.l.b16 %v3302
      %v3345 = vunpack.c.h.b16 %v3302
      %v3346 = vunpack.c.l.b16 %v3303
      %v3347 = vunpack.c.h.b16 %v3303
      %v3348 = vunpack.c.l.b16 %v3304
      %v3349 = vunpack.c.h.b16 %v3304
      %v3350 = vunpack.c.l.b16 %v3305
      %v3351 = vunpack.c.h.b16 %v3305
      %v3352 = vunpack.c.l.b16 %v3306
      %v3353 = vunpack.c.h.b16 %v3306
      %v3354 = vunpack.c.l.b16 %v3307
      %v3355 = vunpack.c.h.b16 %v3307
      %v3356 = vpack.c.b16 %v3324, %v3324
      %v3357 = vpack.c.b16 %v3325, %v3325
      %v3358 = vpack.c.b16 %v3326, %v3326
      %v3359 = vpack.c.b16 %v3327, %v3327
      %v3360 = vpack.c.b16 %v3328, %v3328
      %v3361 = vpack.c.b16 %v3329, %v3329
      %v3362 = vpack.c.b16 %v3330, %v3330
      %v3363 = vpack.c.b16 %v3331, %v3331
      %v3364 = vpack.c.b16 %v3332, %v3332
      %v3365 = vpack.c.b16 %v3333, %v3333
      %v3366 = vpack.c.b16 %v3334, %v3334
      %v3367 = vpack.c.b16 %v3335, %v3335
      %v3368 = vpack.c.b16 %v3336, %v3336
      %v3369 = vpack.c.b16 %v3337, %v3337
      %v3370 = vpack.c.b16 %v3338, %v3338
      %v3371 = vpack.c.b16 %v3339, %v3339
      %v3372 = vpack.c.b16 %v3340, %v3340
      %v3373 = vpack.c.b16 %v3341, %v3341
      %v3374 = vpack.c.b16 %v3342, %v3342
      %v3375 = vpack.c.b16 %v3343, %v3343
      %v3376 = vpack.c.b16 %v3344, %v3344
      %v3377 = vpack.c.b16 %v3345, %v3345
      %v3378 = vpack.c.b16 %v3346, %v3346
      %v3379 = vpack.c.b16 %v3347, %v3347
      %v3380 = vpack.c.b16 %v3348, %v3348
      %v3381 = vpack.c.b16 %v3349, %v3349
      %v3382 = vpack.c.b16 %v3350, %v3350
      %v3383 = vpack.c.b16 %v3351, %v3351
      %v3384 = vpack.c.b16 %v3352, %v3352
      %v3385 = vpack.c.b16 %v3353, %v3353
      %v3386 = vpack.c.b16 %v3354, %v3354
      %v3387 = vpack.c.b16 %v3355, %v3355
      %vm3420 = vcmask 519168
      %3421 = vst.msk [vmem:[%s242] sm:$0xf] %vm3420, %v3356
      %3422 = vst.msk [vmem:[%s242 + $0x4] sm:$0xf] %vm3420, %v3357
      %3423 = vst.msk [vmem:[%s242 + $0x8] sm:$0xf] %vm3420, %v3358
      %3424 = vst.msk [vmem:[%s242 + $0xc] sm:$0xf] %vm3420, %v3359
      %3425 = vst.msk [vmem:[%s242 + $0x10] sm:$0xf] %vm3420, %v3360
      %3426 = vst.msk [vmem:[%s242 + $0x14] sm:$0xf] %vm3420, %v3361
      %3427 = vst.msk [vmem:[%s242 + $0x18] sm:$0xf] %vm3420, %v3362
      %3428 = vst.msk [vmem:[%s242 + $0x1c] sm:$0xf] %vm3420, %v3363
      %3429 = vst.msk [vmem:[%s242 + $0x20] sm:$0xf] %vm3420, %v3364
      %3430 = vst.msk [vmem:[%s242 + $0x24] sm:$0xf] %vm3420, %v3365
      %3431 = vst.msk [vmem:[%s242 + $0x28] sm:$0xf] %vm3420, %v3366
      %3432 = vst.msk [vmem:[%s242 + $0x2c] sm:$0xf] %vm3420, %v3367
      %3433 = vst.msk [vmem:[%s242 + $0x30] sm:$0xf] %vm3420, %v3368
      %3434 = vst.msk [vmem:[%s242 + $0x34] sm:$0xf] %vm3420, %v3369
      %3435 = vst.msk [vmem:[%s242 + $0x38] sm:$0xf] %vm3420, %v3370
      %3436 = vst.msk [vmem:[%s242 + $0x3c] sm:$0xf] %vm3420, %v3371
      %3437 = vst.msk [vmem:[%s242 + $0x40] sm:$0xf] %vm3420, %v3372
      %3438 = vst.msk [vmem:[%s242 + $0x44] sm:$0xf] %vm3420, %v3373
      %3439 = vst.msk [vmem:[%s242 + $0x48] sm:$0xf] %vm3420, %v3374
      %3440 = vst.msk [vmem:[%s242 + $0x4c] sm:$0xf] %vm3420, %v3375
      %3441 = vst.msk [vmem:[%s242 + $0x50] sm:$0xf] %vm3420, %v3376
      %3442 = vst.msk [vmem:[%s242 + $0x54] sm:$0xf] %vm3420, %v3377
      %3443 = vst.msk [vmem:[%s242 + $0x58] sm:$0xf] %vm3420, %v3378
      %3444 = vst.msk [vmem:[%s242 + $0x5c] sm:$0xf] %vm3420, %v3379
      %3445 = vst.msk [vmem:[%s242 + $0x60] sm:$0xf] %vm3420, %v3380
      %3446 = vst.msk [vmem:[%s242 + $0x64] sm:$0xf] %vm3420, %v3381
      %3447 = vst.msk [vmem:[%s242 + $0x68] sm:$0xf] %vm3420, %v3382
      %3448 = vst.msk [vmem:[%s242 + $0x6c] sm:$0xf] %vm3420, %v3383
      %3449 = vst.msk [vmem:[%s242 + $0x70] sm:$0xf] %vm3420, %v3384
      %3450 = vst.msk [vmem:[%s242 + $0x74] sm:$0xf] %vm3420, %v3385
      %3451 = vst.msk [vmem:[%s242 + $0x78] sm:$0xf] %vm3420, %v3386
      %3452 = vst.msk [vmem:[%s242 + $0x7c] sm:$0xf] %vm3420, %v3387
      %v3453 = vsel %vm785, %v3260, -inf
      %v3454 = vsel %vm785, %v3262, -inf
      %v3455 = vmax.f32 %v3453, %v3454
      %v3456 = vsel %vm785, %v3261, -inf
      %v3457 = vsel %vm785, %v3263, -inf
      %v3458 = vmax.f32 %v3456, %v3457
      %v3459 = vsel %vm785, %v3264, -inf
      %v3460 = vsel %vm785, %v3266, -inf
      %v3461 = vmax.f32 %v3459, %v3460
      %v3462 = vsel %vm785, %v3265, -inf
      %v3463 = vsel %vm785, %v3267, -inf
      %v3464 = vmax.f32 %v3462, %v3463
      %v3465 = vsel %vm785, %v3268, -inf
      %v3466 = vsel %vm785, %v3270, -inf
      %v3467 = vmax.f32 %v3465, %v3466
      %v3468 = vsel %vm785, %v3269, -inf
      %v3469 = vsel %vm785, %v3271, -inf
      %v3470 = vmax.f32 %v3468, %v3469
      %v3471 = vsel %vm785, %v3272, -inf
      %v3472 = vsel %vm785, %v3274, -inf
      %v3473 = vmax.f32 %v3471, %v3472
      %v3474 = vsel %vm785, %v3273, -inf
      %v3475 = vsel %vm785, %v3275, -inf
      %v3476 = vmax.f32 %v3474, %v3475
      %v3477 = vsel %vm785, %v3276, -inf
      %v3478 = vsel %vm785, %v3278, -inf
      %v3479 = vmax.f32 %v3477, %v3478
      %v3480 = vsel %vm785, %v3277, -inf
      %v3481 = vsel %vm785, %v3279, -inf
      %v3482 = vmax.f32 %v3480, %v3481
      %v3483 = vsel %vm785, %v3280, -inf
      %v3484 = vsel %vm785, %v3282, -inf
      %v3485 = vmax.f32 %v3483, %v3484
      %v3486 = vsel %vm785, %v3281, -inf
      %v3487 = vsel %vm785, %v3283, -inf
      %v3488 = vmax.f32 %v3486, %v3487
      %v3489 = vsel %vm785, %v3284, -inf
      %v3490 = vsel %vm785, %v3286, -inf
      %v3491 = vmax.f32 %v3489, %v3490
      %v3492 = vsel %vm785, %v3285, -inf
      %v3493 = vsel %vm785, %v3287, -inf
      %v3494 = vmax.f32 %v3492, %v3493
      %v3495 = vsel %vm785, %v3288, -inf
      %v3496 = vsel %vm785, %v3290, -inf
      %v3497 = vmax.f32 %v3495, %v3496
      %v3498 = vsel %vm785, %v3289, -inf
      %v3499 = vsel %vm785, %v3291, -inf
      %v3500 = vmax.f32 %v3498, %v3499
      %v3517 = vcombine.high %v3455, %v3455
      %v3519 = vunpack.c.l.s4 1983009808
      %v3520 = vunpack.c.0.s8 %v3519
      %v3521 = vlaneseq
      %v3522 = vshrl.u32 %v3521, 7
      %v3523 = vsub.s32 %v3520, %v3522
      %v3524 = vrot.slane %v3455, %v3523
      %v3526 = vunpack.c.l.s4 1983009808
      %v3527 = vunpack.c.0.s8 %v3526
      %v3528 = vlaneseq
      %v3529 = vshrl.u32 %v3528, 7
      %v3530 = vsub.s32 %v3527, %v3529
      %v3531 = vrot.slane %v3517, %v3530
      %v3532 = vcombine.high %v3524, %v3524
      %v3533 = vcombine.high %v3531, %v3531
      %v3534 = vcombine.high %v3458, %v3458
      %v3536 = vunpack.c.l.s4 1983009808
      %v3537 = vunpack.c.0.s8 %v3536
      %v3538 = vlaneseq
      %v3539 = vshrl.u32 %v3538, 7
      %v3540 = vsub.s32 %v3537, %v3539
      %v3541 = vrot.slane %v3458, %v3540
      %v3543 = vunpack.c.l.s4 1983009808
      %v3544 = vunpack.c.0.s8 %v3543
      %v3545 = vlaneseq
      %v3546 = vshrl.u32 %v3545, 7
      %v3547 = vsub.s32 %v3544, %v3546
      %v3548 = vrot.slane %v3534, %v3547
      %v3549 = vcombine.high %v3541, %v3541
      %v3550 = vcombine.high %v3548, %v3548
      %v3551 = vcombine.high %v3461, %v3461
      %v3553 = vunpack.c.l.s4 1983009808
      %v3554 = vunpack.c.0.s8 %v3553
      %v3555 = vlaneseq
      %v3556 = vshrl.u32 %v3555, 7
      %v3557 = vsub.s32 %v3554, %v3556
      %v3558 = vrot.slane %v3461, %v3557
      %v3560 = vunpack.c.l.s4 1983009808
      %v3561 = vunpack.c.0.s8 %v3560
      %v3562 = vlaneseq
      %v3563 = vshrl.u32 %v3562, 7
      %v3564 = vsub.s32 %v3561, %v3563
      %v3565 = vrot.slane %v3551, %v3564
      %v3566 = vcombine.high %v3558, %v3558
      %v3567 = vcombine.high %v3565, %v3565
      %v3568 = vcombine.high %v3464, %v3464
      %v3570 = vunpack.c.l.s4 1983009808
      %v3571 = vunpack.c.0.s8 %v3570
      %v3572 = vlaneseq
      %v3573 = vshrl.u32 %v3572, 7
      %v3574 = vsub.s32 %v3571, %v3573
      %v3575 = vrot.slane %v3464, %v3574
      %v3577 = vunpack.c.l.s4 1983009808
      %v3578 = vunpack.c.0.s8 %v3577
      %v3579 = vlaneseq
      %v3580 = vshrl.u32 %v3579, 7
      %v3581 = vsub.s32 %v3578, %v3580
      %v3582 = vrot.slane %v3568, %v3581
      %v3583 = vcombine.high %v3575, %v3575
      %v3584 = vcombine.high %v3582, %v3582
      %v3585 = vcombine.high %v3467, %v3467
      %v3587 = vunpack.c.l.s4 1983009808
      %v3588 = vunpack.c.0.s8 %v3587
      %v3589 = vlaneseq
      %v3590 = vshrl.u32 %v3589, 7
      %v3591 = vsub.s32 %v3588, %v3590
      %v3592 = vrot.slane %v3467, %v3591
      %v3594 = vunpack.c.l.s4 1983009808
      %v3595 = vunpack.c.0.s8 %v3594
      %v3596 = vlaneseq
      %v3597 = vshrl.u32 %v3596, 7
      %v3598 = vsub.s32 %v3595, %v3597
      %v3599 = vrot.slane %v3585, %v3598
      %v3600 = vcombine.high %v3592, %v3592
      %v3601 = vcombine.high %v3599, %v3599
      %v3602 = vcombine.high %v3470, %v3470
      %v3604 = vunpack.c.l.s4 1983009808
      %v3605 = vunpack.c.0.s8 %v3604
      %v3606 = vlaneseq
      %v3607 = vshrl.u32 %v3606, 7
      %v3608 = vsub.s32 %v3605, %v3607
      %v3609 = vrot.slane %v3470, %v3608
      %v3611 = vunpack.c.l.s4 1983009808
      %v3612 = vunpack.c.0.s8 %v3611
      %v3613 = vlaneseq
      %v3614 = vshrl.u32 %v3613, 7
      %v3615 = vsub.s32 %v3612, %v3614
      %v3616 = vrot.slane %v3602, %v3615
      %v3617 = vcombine.high %v3609, %v3609
      %v3618 = vcombine.high %v3616, %v3616
      %v3619 = vcombine.high %v3473, %v3473
      %v3621 = vunpack.c.l.s4 1983009808
      %v3622 = vunpack.c.0.s8 %v3621
      %v3623 = vlaneseq
      %v3624 = vshrl.u32 %v3623, 7
      %v3625 = vsub.s32 %v3622, %v3624
      %v3626 = vrot.slane %v3473, %v3625
      %v3628 = vunpack.c.l.s4 1983009808
      %v3629 = vunpack.c.0.s8 %v3628
      %v3630 = vlaneseq
      %v3631 = vshrl.u32 %v3630, 7
      %v3632 = vsub.s32 %v3629, %v3631
      %v3633 = vrot.slane %v3619, %v3632
      %v3634 = vcombine.high %v3626, %v3626
      %v3635 = vcombine.high %v3633, %v3633
      %v3636 = vcombine.high %v3476, %v3476
      %v3638 = vunpack.c.l.s4 1983009808
      %v3639 = vunpack.c.0.s8 %v3638
      %v3640 = vlaneseq
      %v3641 = vshrl.u32 %v3640, 7
      %v3642 = vsub.s32 %v3639, %v3641
      %v3643 = vrot.slane %v3476, %v3642
      %v3645 = vunpack.c.l.s4 1983009808
      %v3646 = vunpack.c.0.s8 %v3645
      %v3647 = vlaneseq
      %v3648 = vshrl.u32 %v3647, 7
      %v3649 = vsub.s32 %v3646, %v3648
      %v3650 = vrot.slane %v3636, %v3649
      %v3651 = vcombine.high %v3643, %v3643
      %v3652 = vcombine.high %v3650, %v3650
      %v3653 = vcombine.high %v3479, %v3479
      %v3655 = vunpack.c.l.s4 1983009808
      %v3656 = vunpack.c.0.s8 %v3655
      %v3657 = vlaneseq
      %v3658 = vshrl.u32 %v3657, 7
      %v3659 = vsub.s32 %v3656, %v3658
      %v3660 = vrot.slane %v3479, %v3659
      %v3662 = vunpack.c.l.s4 1983009808
      %v3663 = vunpack.c.0.s8 %v3662
      %v3664 = vlaneseq
      %v3665 = vshrl.u32 %v3664, 7
      %v3666 = vsub.s32 %v3663, %v3665
      %v3667 = vrot.slane %v3653, %v3666
      %v3668 = vcombine.high %v3660, %v3660
      %v3669 = vcombine.high %v3667, %v3667
      %v3670 = vcombine.high %v3482, %v3482
      %v3672 = vunpack.c.l.s4 1983009808
      %v3673 = vunpack.c.0.s8 %v3672
      %v3674 = vlaneseq
      %v3675 = vshrl.u32 %v3674, 7
      %v3676 = vsub.s32 %v3673, %v3675
      %v3677 = vrot.slane %v3482, %v3676
      %v3679 = vunpack.c.l.s4 1983009808
      %v3680 = vunpack.c.0.s8 %v3679
      %v3681 = vlaneseq
      %v3682 = vshrl.u32 %v3681, 7
      %v3683 = vsub.s32 %v3680, %v3682
      %v3684 = vrot.slane %v3670, %v3683
      %v3685 = vcombine.high %v3677, %v3677
      %v3686 = vcombine.high %v3684, %v3684
      %v3687 = vcombine.high %v3485, %v3485
      %v3689 = vunpack.c.l.s4 1983009808
      %v3690 = vunpack.c.0.s8 %v3689
      %v3691 = vlaneseq
      %v3692 = vshrl.u32 %v3691, 7
      %v3693 = vsub.s32 %v3690, %v3692
      %v3694 = vrot.slane %v3485, %v3693
      %v3696 = vunpack.c.l.s4 1983009808
      %v3697 = vunpack.c.0.s8 %v3696
      %v3698 = vlaneseq
      %v3699 = vshrl.u32 %v3698, 7
      %v3700 = vsub.s32 %v3697, %v3699
      %v3701 = vrot.slane %v3687, %v3700
      %v3702 = vcombine.high %v3694, %v3694
      %v3703 = vcombine.high %v3701, %v3701
      %v3704 = vcombine.high %v3488, %v3488
      %v3706 = vunpack.c.l.s4 1983009808
      %v3707 = vunpack.c.0.s8 %v3706
      %v3708 = vlaneseq
      %v3709 = vshrl.u32 %v3708, 7
      %v3710 = vsub.s32 %v3707, %v3709
      %v3711 = vrot.slane %v3488, %v3710
      %v3713 = vunpack.c.l.s4 1983009808
      %v3714 = vunpack.c.0.s8 %v3713
      %v3715 = vlaneseq
      %v3716 = vshrl.u32 %v3715, 7
      %v3717 = vsub.s32 %v3714, %v3716
      %v3718 = vrot.slane %v3704, %v3717
      %v3719 = vcombine.high %v3711, %v3711
      %v3720 = vcombine.high %v3718, %v3718
      %v3721 = vcombine.high %v3491, %v3491
      %v3723 = vunpack.c.l.s4 1983009808
      %v3724 = vunpack.c.0.s8 %v3723
      %v3725 = vlaneseq
      %v3726 = vshrl.u32 %v3725, 7
      %v3727 = vsub.s32 %v3724, %v3726
      %v3728 = vrot.slane %v3491, %v3727
      %v3730 = vunpack.c.l.s4 1983009808
      %v3731 = vunpack.c.0.s8 %v3730
      %v3732 = vlaneseq
      %v3733 = vshrl.u32 %v3732, 7
      %v3734 = vsub.s32 %v3731, %v3733
      %v3735 = vrot.slane %v3721, %v3734
      %v3736 = vcombine.high %v3728, %v3728
      %v3737 = vcombine.high %v3735, %v3735
      %v3738 = vcombine.high %v3494, %v3494
      %v3740 = vunpack.c.l.s4 1983009808
      %v3741 = vunpack.c.0.s8 %v3740
      %v3742 = vlaneseq
      %v3743 = vshrl.u32 %v3742, 7
      %v3744 = vsub.s32 %v3741, %v3743
      %v3745 = vrot.slane %v3494, %v3744
      %v3747 = vunpack.c.l.s4 1983009808
      %v3748 = vunpack.c.0.s8 %v3747
      %v3749 = vlaneseq
      %v3750 = vshrl.u32 %v3749, 7
      %v3751 = vsub.s32 %v3748, %v3750
      %v3752 = vrot.slane %v3738, %v3751
      %v3753 = vcombine.high %v3745, %v3745
      %v3754 = vcombine.high %v3752, %v3752
      %v3755 = vcombine.high %v3497, %v3497
      %v3757 = vunpack.c.l.s4 1983009808
      %v3758 = vunpack.c.0.s8 %v3757
      %v3759 = vlaneseq
      %v3760 = vshrl.u32 %v3759, 7
      %v3761 = vsub.s32 %v3758, %v3760
      %v3762 = vrot.slane %v3497, %v3761
      %v3764 = vunpack.c.l.s4 1983009808
      %v3765 = vunpack.c.0.s8 %v3764
      %v3766 = vlaneseq
      %v3767 = vshrl.u32 %v3766, 7
      %v3768 = vsub.s32 %v3765, %v3767
      %v3769 = vrot.slane %v3755, %v3768
      %v3770 = vcombine.high %v3762, %v3762
      %v3771 = vcombine.high %v3769, %v3769
      %v3772 = vcombine.high %v3500, %v3500
      %v3774 = vunpack.c.l.s4 1983009808
      %v3775 = vunpack.c.0.s8 %v3774
      %v3776 = vlaneseq
      %v3777 = vshrl.u32 %v3776, 7
      %v3778 = vsub.s32 %v3775, %v3777
      %v3779 = vrot.slane %v3500, %v3778
      %v3781 = vunpack.c.l.s4 1983009808
      %v3782 = vunpack.c.0.s8 %v3781
      %v3783 = vlaneseq
      %v3784 = vshrl.u32 %v3783, 7
      %v3785 = vsub.s32 %v3782, %v3784
      %v3786 = vrot.slane %v3772, %v3785
      %v3787 = vcombine.high %v3779, %v3779
      %v3788 = vcombine.high %v3786, %v3786
      %vm3853 = vcmask 517120
      %v3854 = vsel %vm3853, %v3524, -inf
      %v3855 = vrot.slane %v3854, 4
      %v3856 = vmax.f32 %v3854, %v3855
      %v3857 = vrot.slane %v3856, 2
      %v3858 = vmax.f32 %v3856, %v3857
      %v3859 = vrot.slane %v3858, 1
      %v3860 = vmax.f32 %v3858, %v3859
      %v3861 = vsel %vm3853, %v3532, -inf
      %v3862 = vrot.slane %v3861, 4
      %v3863 = vmax.f32 %v3861, %v3862
      %v3864 = vrot.slane %v3863, 2
      %v3865 = vmax.f32 %v3863, %v3864
      %v3866 = vrot.slane %v3865, 1
      %v3867 = vmax.f32 %v3865, %v3866
      %v3868 = vsel %vm3853, %v3531, -inf
      %v3869 = vrot.slane %v3868, 4
      %v3870 = vmax.f32 %v3868, %v3869
      %v3871 = vrot.slane %v3870, 2
      %v3872 = vmax.f32 %v3870, %v3871
      %v3873 = vrot.slane %v3872, 1
      %v3874 = vmax.f32 %v3872, %v3873
      %v3875 = vsel %vm3853, %v3533, -inf
      %v3876 = vrot.slane %v3875, 4
      %v3877 = vmax.f32 %v3875, %v3876
      %v3878 = vrot.slane %v3877, 2
      %v3879 = vmax.f32 %v3877, %v3878
      %v3880 = vrot.slane %v3879, 1
      %v3881 = vmax.f32 %v3879, %v3880
      %v3882 = vsel %vm3853, %v3541, -inf
      %v3883 = vrot.slane %v3882, 4
      %v3884 = vmax.f32 %v3882, %v3883
      %v3885 = vrot.slane %v3884, 2
      %v3886 = vmax.f32 %v3884, %v3885
      %v3887 = vrot.slane %v3886, 1
      %v3888 = vmax.f32 %v3886, %v3887
      %v3889 = vsel %vm3853, %v3549, -inf
      %v3890 = vrot.slane %v3889, 4
      %v3891 = vmax.f32 %v3889, %v3890
      %v3892 = vrot.slane %v3891, 2
      %v3893 = vmax.f32 %v3891, %v3892
      %v3894 = vrot.slane %v3893, 1
      %v3895 = vmax.f32 %v3893, %v3894
      %v3896 = vsel %vm3853, %v3548, -inf
      %v3897 = vrot.slane %v3896, 4
      %v3898 = vmax.f32 %v3896, %v3897
      %v3899 = vrot.slane %v3898, 2
      %v3900 = vmax.f32 %v3898, %v3899
      %v3901 = vrot.slane %v3900, 1
      %v3902 = vmax.f32 %v3900, %v3901
      %v3903 = vsel %vm3853, %v3550, -inf
      %v3904 = vrot.slane %v3903, 4
      %v3905 = vmax.f32 %v3903, %v3904
      %v3906 = vrot.slane %v3905, 2
      %v3907 = vmax.f32 %v3905, %v3906
      %v3908 = vrot.slane %v3907, 1
      %v3909 = vmax.f32 %v3907, %v3908
      %v3910 = vsel %vm3853, %v3558, -inf
      %v3911 = vrot.slane %v3910, 4
      %v3912 = vmax.f32 %v3910, %v3911
      %v3913 = vrot.slane %v3912, 2
      %v3914 = vmax.f32 %v3912, %v3913
      %v3915 = vrot.slane %v3914, 1
      %v3916 = vmax.f32 %v3914, %v3915
      %v3917 = vsel %vm3853, %v3566, -inf
      %v3918 = vrot.slane %v3917, 4
      %v3919 = vmax.f32 %v3917, %v3918
      %v3920 = vrot.slane %v3919, 2
      %v3921 = vmax.f32 %v3919, %v3920
      %v3922 = vrot.slane %v3921, 1
      %v3923 = vmax.f32 %v3921, %v3922
      %v3924 = vsel %vm3853, %v3565, -inf
      %v3925 = vrot.slane %v3924, 4
      %v3926 = vmax.f32 %v3924, %v3925
      %v3927 = vrot.slane %v3926, 2
      %v3928 = vmax.f32 %v3926, %v3927
      %v3929 = vrot.slane %v3928, 1
      %v3930 = vmax.f32 %v3928, %v3929
      %v3931 = vsel %vm3853, %v3567, -inf
      %v3932 = vrot.slane %v3931, 4
      %v3933 = vmax.f32 %v3931, %v3932
      %v3934 = vrot.slane %v3933, 2
      %v3935 = vmax.f32 %v3933, %v3934
      %v3936 = vrot.slane %v3935, 1
      %v3937 = vmax.f32 %v3935, %v3936
      %v3938 = vsel %vm3853, %v3575, -inf
      %v3939 = vrot.slane %v3938, 4
      %v3940 = vmax.f32 %v3938, %v3939
      %v3941 = vrot.slane %v3940, 2
      %v3942 = vmax.f32 %v3940, %v3941
      %v3943 = vrot.slane %v3942, 1
      %v3944 = vmax.f32 %v3942, %v3943
      %v3945 = vsel %vm3853, %v3583, -inf
      %v3946 = vrot.slane %v3945, 4
      %v3947 = vmax.f32 %v3945, %v3946
      %v3948 = vrot.slane %v3947, 2
      %v3949 = vmax.f32 %v3947, %v3948
      %v3950 = vrot.slane %v3949, 1
      %v3951 = vmax.f32 %v3949, %v3950
      %v3952 = vsel %vm3853, %v3582, -inf
      %v3953 = vrot.slane %v3952, 4
      %v3954 = vmax.f32 %v3952, %v3953
      %v3955 = vrot.slane %v3954, 2
      %v3956 = vmax.f32 %v3954, %v3955
      %v3957 = vrot.slane %v3956, 1
      %v3958 = vmax.f32 %v3956, %v3957
      %v3959 = vsel %vm3853, %v3584, -inf
      %v3960 = vrot.slane %v3959, 4
      %v3961 = vmax.f32 %v3959, %v3960
      %v3962 = vrot.slane %v3961, 2
      %v3963 = vmax.f32 %v3961, %v3962
      %v3964 = vrot.slane %v3963, 1
      %v3965 = vmax.f32 %v3963, %v3964
      %v3966 = vsel %vm3853, %v3592, -inf
      %v3967 = vrot.slane %v3966, 4
      %v3968 = vmax.f32 %v3966, %v3967
      %v3969 = vrot.slane %v3968, 2
      %v3970 = vmax.f32 %v3968, %v3969
      %v3971 = vrot.slane %v3970, 1
      %v3972 = vmax.f32 %v3970, %v3971
      %v3973 = vsel %vm3853, %v3600, -inf
      %v3974 = vrot.slane %v3973, 4
      %v3975 = vmax.f32 %v3973, %v3974
      %v3976 = vrot.slane %v3975, 2
      %v3977 = vmax.f32 %v3975, %v3976
      %v3978 = vrot.slane %v3977, 1
      %v3979 = vmax.f32 %v3977, %v3978
      %v3980 = vsel %vm3853, %v3599, -inf
      %v3981 = vrot.slane %v3980, 4
      %v3982 = vmax.f32 %v3980, %v3981
      %v3983 = vrot.slane %v3982, 2
      %v3984 = vmax.f32 %v3982, %v3983
      %v3985 = vrot.slane %v3984, 1
      %v3986 = vmax.f32 %v3984, %v3985
      %v3987 = vsel %vm3853, %v3601, -inf
      %v3988 = vrot.slane %v3987, 4
      %v3989 = vmax.f32 %v3987, %v3988
      %v3990 = vrot.slane %v3989, 2
      %v3991 = vmax.f32 %v3989, %v3990
      %v3992 = vrot.slane %v3991, 1
      %v3993 = vmax.f32 %v3991, %v3992
      %v3994 = vsel %vm3853, %v3609, -inf
      %v3995 = vrot.slane %v3994, 4
      %v3996 = vmax.f32 %v3994, %v3995
      %v3997 = vrot.slane %v3996, 2
      %v3998 = vmax.f32 %v3996, %v3997
      %v3999 = vrot.slane %v3998, 1
      %v4000 = vmax.f32 %v3998, %v3999
      %v4001 = vsel %vm3853, %v3617, -inf
      %v4002 = vrot.slane %v4001, 4
      %v4003 = vmax.f32 %v4001, %v4002
      %v4004 = vrot.slane %v4003, 2
      %v4005 = vmax.f32 %v4003, %v4004
      %v4006 = vrot.slane %v4005, 1
      %v4007 = vmax.f32 %v4005, %v4006
      %v4008 = vsel %vm3853, %v3616, -inf
      %v4009 = vrot.slane %v4008, 4
      %v4010 = vmax.f32 %v4008, %v4009
      %v4011 = vrot.slane %v4010, 2
      %v4012 = vmax.f32 %v4010, %v4011
      %v4013 = vrot.slane %v4012, 1
      %v4014 = vmax.f32 %v4012, %v4013
      %v4015 = vsel %vm3853, %v3618, -inf
      %v4016 = vrot.slane %v4015, 4
      %v4017 = vmax.f32 %v4015, %v4016
      %v4018 = vrot.slane %v4017, 2
      %v4019 = vmax.f32 %v4017, %v4018
      %v4020 = vrot.slane %v4019, 1
      %v4021 = vmax.f32 %v4019, %v4020
      %v4022 = vsel %vm3853, %v3626, -inf
      %v4023 = vrot.slane %v4022, 4
      %v4024 = vmax.f32 %v4022, %v4023
      %v4025 = vrot.slane %v4024, 2
      %v4026 = vmax.f32 %v4024, %v4025
      %v4027 = vrot.slane %v4026, 1
      %v4028 = vmax.f32 %v4026, %v4027
      %v4029 = vsel %vm3853, %v3634, -inf
      %v4030 = vrot.slane %v4029, 4
      %v4031 = vmax.f32 %v4029, %v4030
      %v4032 = vrot.slane %v4031, 2
      %v4033 = vmax.f32 %v4031, %v4032
      %v4034 = vrot.slane %v4033, 1
      %v4035 = vmax.f32 %v4033, %v4034
      %v4036 = vsel %vm3853, %v3633, -inf
      %v4037 = vrot.slane %v4036, 4
      %v4038 = vmax.f32 %v4036, %v4037
      %v4039 = vrot.slane %v4038, 2
      %v4040 = vmax.f32 %v4038, %v4039
      %v4041 = vrot.slane %v4040, 1
      %v4042 = vmax.f32 %v4040, %v4041
      %v4043 = vsel %vm3853, %v3635, -inf
      %v4044 = vrot.slane %v4043, 4
      %v4045 = vmax.f32 %v4043, %v4044
      %v4046 = vrot.slane %v4045, 2
      %v4047 = vmax.f32 %v4045, %v4046
      %v4048 = vrot.slane %v4047, 1
      %v4049 = vmax.f32 %v4047, %v4048
      %v4050 = vsel %vm3853, %v3643, -inf
      %v4051 = vrot.slane %v4050, 4
      %v4052 = vmax.f32 %v4050, %v4051
      %v4053 = vrot.slane %v4052, 2
      %v4054 = vmax.f32 %v4052, %v4053
      %v4055 = vrot.slane %v4054, 1
      %v4056 = vmax.f32 %v4054, %v4055
      %v4057 = vsel %vm3853, %v3651, -inf
      %v4058 = vrot.slane %v4057, 4
      %v4059 = vmax.f32 %v4057, %v4058
      %v4060 = vrot.slane %v4059, 2
      %v4061 = vmax.f32 %v4059, %v4060
      %v4062 = vrot.slane %v4061, 1
      %v4063 = vmax.f32 %v4061, %v4062
      %v4064 = vsel %vm3853, %v3650, -inf
      %v4065 = vrot.slane %v4064, 4
      %v4066 = vmax.f32 %v4064, %v4065
      %v4067 = vrot.slane %v4066, 2
      %v4068 = vmax.f32 %v4066, %v4067
      %v4069 = vrot.slane %v4068, 1
      %v4070 = vmax.f32 %v4068, %v4069
      %v4071 = vsel %vm3853, %v3652, -inf
      %v4072 = vrot.slane %v4071, 4
      %v4073 = vmax.f32 %v4071, %v4072
      %v4074 = vrot.slane %v4073, 2
      %v4075 = vmax.f32 %v4073, %v4074
      %v4076 = vrot.slane %v4075, 1
      %v4077 = vmax.f32 %v4075, %v4076
      %v4078 = vsel %vm3853, %v3660, -inf
      %v4079 = vrot.slane %v4078, 4
      %v4080 = vmax.f32 %v4078, %v4079
      %v4081 = vrot.slane %v4080, 2
      %v4082 = vmax.f32 %v4080, %v4081
      %v4083 = vrot.slane %v4082, 1
      %v4084 = vmax.f32 %v4082, %v4083
      %v4085 = vsel %vm3853, %v3668, -inf
      %v4086 = vrot.slane %v4085, 4
      %v4087 = vmax.f32 %v4085, %v4086
      %v4088 = vrot.slane %v4087, 2
      %v4089 = vmax.f32 %v4087, %v4088
      %v4090 = vrot.slane %v4089, 1
      %v4091 = vmax.f32 %v4089, %v4090
      %v4092 = vsel %vm3853, %v3667, -inf
      %v4093 = vrot.slane %v4092, 4
      %v4094 = vmax.f32 %v4092, %v4093
      %v4095 = vrot.slane %v4094, 2
      %v4096 = vmax.f32 %v4094, %v4095
      %v4097 = vrot.slane %v4096, 1
      %v4098 = vmax.f32 %v4096, %v4097
      %v4099 = vsel %vm3853, %v3669, -inf
      %v4100 = vrot.slane %v4099, 4
      %v4101 = vmax.f32 %v4099, %v4100
      %v4102 = vrot.slane %v4101, 2
      %v4103 = vmax.f32 %v4101, %v4102
      %v4104 = vrot.slane %v4103, 1
      %v4105 = vmax.f32 %v4103, %v4104
      %v4106 = vsel %vm3853, %v3677, -inf
      %v4107 = vrot.slane %v4106, 4
      %v4108 = vmax.f32 %v4106, %v4107
      %v4109 = vrot.slane %v4108, 2
      %v4110 = vmax.f32 %v4108, %v4109
      %v4111 = vrot.slane %v4110, 1
      %v4112 = vmax.f32 %v4110, %v4111
      %v4113 = vsel %vm3853, %v3685, -inf
      %v4114 = vrot.slane %v4113, 4
      %v4115 = vmax.f32 %v4113, %v4114
      %v4116 = vrot.slane %v4115, 2
      %v4117 = vmax.f32 %v4115, %v4116
      %v4118 = vrot.slane %v4117, 1
      %v4119 = vmax.f32 %v4117, %v4118
      %v4120 = vsel %vm3853, %v3684, -inf
      %v4121 = vrot.slane %v4120, 4
      %v4122 = vmax.f32 %v4120, %v4121
      %v4123 = vrot.slane %v4122, 2
      %v4124 = vmax.f32 %v4122, %v4123
      %v4125 = vrot.slane %v4124, 1
      %v4126 = vmax.f32 %v4124, %v4125
      %v4127 = vsel %vm3853, %v3686, -inf
      %v4128 = vrot.slane %v4127, 4
      %v4129 = vmax.f32 %v4127, %v4128
      %v4130 = vrot.slane %v4129, 2
      %v4131 = vmax.f32 %v4129, %v4130
      %v4132 = vrot.slane %v4131, 1
      %v4133 = vmax.f32 %v4131, %v4132
      %v4134 = vsel %vm3853, %v3694, -inf
      %v4135 = vrot.slane %v4134, 4
      %v4136 = vmax.f32 %v4134, %v4135
      %v4137 = vrot.slane %v4136, 2
      %v4138 = vmax.f32 %v4136, %v4137
      %v4139 = vrot.slane %v4138, 1
      %v4140 = vmax.f32 %v4138, %v4139
      %v4141 = vsel %vm3853, %v3702, -inf
      %v4142 = vrot.slane %v4141, 4
      %v4143 = vmax.f32 %v4141, %v4142
      %v4144 = vrot.slane %v4143, 2
      %v4145 = vmax.f32 %v4143, %v4144
      %v4146 = vrot.slane %v4145, 1
      %v4147 = vmax.f32 %v4145, %v4146
      %v4148 = vsel %vm3853, %v3701, -inf
      %v4149 = vrot.slane %v4148, 4
      %v4150 = vmax.f32 %v4148, %v4149
      %v4151 = vrot.slane %v4150, 2
      %v4152 = vmax.f32 %v4150, %v4151
      %v4153 = vrot.slane %v4152, 1
      %v4154 = vmax.f32 %v4152, %v4153
      %v4155 = vsel %vm3853, %v3703, -inf
      %v4156 = vrot.slane %v4155, 4
      %v4157 = vmax.f32 %v4155, %v4156
      %v4158 = vrot.slane %v4157, 2
      %v4159 = vmax.f32 %v4157, %v4158
      %v4160 = vrot.slane %v4159, 1
      %v4161 = vmax.f32 %v4159, %v4160
      %v4162 = vsel %vm3853, %v3711, -inf
      %v4163 = vrot.slane %v4162, 4
      %v4164 = vmax.f32 %v4162, %v4163
      %v4165 = vrot.slane %v4164, 2
      %v4166 = vmax.f32 %v4164, %v4165
      %v4167 = vrot.slane %v4166, 1
      %v4168 = vmax.f32 %v4166, %v4167
      %v4169 = vsel %vm3853, %v3719, -inf
      %v4170 = vrot.slane %v4169, 4
      %v4171 = vmax.f32 %v4169, %v4170
      %v4172 = vrot.slane %v4171, 2
      %v4173 = vmax.f32 %v4171, %v4172
      %v4174 = vrot.slane %v4173, 1
      %v4175 = vmax.f32 %v4173, %v4174
      %v4176 = vsel %vm3853, %v3718, -inf
      %v4177 = vrot.slane %v4176, 4
      %v4178 = vmax.f32 %v4176, %v4177
      %v4179 = vrot.slane %v4178, 2
      %v4180 = vmax.f32 %v4178, %v4179
      %v4181 = vrot.slane %v4180, 1
      %v4182 = vmax.f32 %v4180, %v4181
      %v4183 = vsel %vm3853, %v3720, -inf
      %v4184 = vrot.slane %v4183, 4
      %v4185 = vmax.f32 %v4183, %v4184
      %v4186 = vrot.slane %v4185, 2
      %v4187 = vmax.f32 %v4185, %v4186
      %v4188 = vrot.slane %v4187, 1
      %v4189 = vmax.f32 %v4187, %v4188
      %v4190 = vsel %vm3853, %v3728, -inf
      %v4191 = vrot.slane %v4190, 4
      %v4192 = vmax.f32 %v4190, %v4191
      %v4193 = vrot.slane %v4192, 2
      %v4194 = vmax.f32 %v4192, %v4193
      %v4195 = vrot.slane %v4194, 1
      %v4196 = vmax.f32 %v4194, %v4195
      %v4197 = vsel %vm3853, %v3736, -inf
      %v4198 = vrot.slane %v4197, 4
      %v4199 = vmax.f32 %v4197, %v4198
      %v4200 = vrot.slane %v4199, 2
      %v4201 = vmax.f32 %v4199, %v4200
      %v4202 = vrot.slane %v4201, 1
      %v4203 = vmax.f32 %v4201, %v4202
      %v4204 = vsel %vm3853, %v3735, -inf
      %v4205 = vrot.slane %v4204, 4
      %v4206 = vmax.f32 %v4204, %v4205
      %v4207 = vrot.slane %v4206, 2
      %v4208 = vmax.f32 %v4206, %v4207
      %v4209 = vrot.slane %v4208, 1
      %v4210 = vmax.f32 %v4208, %v4209
      %v4211 = vsel %vm3853, %v3737, -inf
      %v4212 = vrot.slane %v4211, 4
      %v4213 = vmax.f32 %v4211, %v4212
      %v4214 = vrot.slane %v4213, 2
      %v4215 = vmax.f32 %v4213, %v4214
      %v4216 = vrot.slane %v4215, 1
      %v4217 = vmax.f32 %v4215, %v4216
      %v4218 = vsel %vm3853, %v3745, -inf
      %v4219 = vrot.slane %v4218, 4
      %v4220 = vmax.f32 %v4218, %v4219
      %v4221 = vrot.slane %v4220, 2
      %v4222 = vmax.f32 %v4220, %v4221
      %v4223 = vrot.slane %v4222, 1
      %v4224 = vmax.f32 %v4222, %v4223
      %v4225 = vsel %vm3853, %v3753, -inf
      %v4226 = vrot.slane %v4225, 4
      %v4227 = vmax.f32 %v4225, %v4226
      %v4228 = vrot.slane %v4227, 2
      %v4229 = vmax.f32 %v4227, %v4228
      %v4230 = vrot.slane %v4229, 1
      %v4231 = vmax.f32 %v4229, %v4230
      %v4232 = vsel %vm3853, %v3752, -inf
      %v4233 = vrot.slane %v4232, 4
      %v4234 = vmax.f32 %v4232, %v4233
      %v4235 = vrot.slane %v4234, 2
      %v4236 = vmax.f32 %v4234, %v4235
      %v4237 = vrot.slane %v4236, 1
      %v4238 = vmax.f32 %v4236, %v4237
      %v4239 = vsel %vm3853, %v3754, -inf
      %v4240 = vrot.slane %v4239, 4
      %v4241 = vmax.f32 %v4239, %v4240
      %v4242 = vrot.slane %v4241, 2
      %v4243 = vmax.f32 %v4241, %v4242
      %v4244 = vrot.slane %v4243, 1
      %v4245 = vmax.f32 %v4243, %v4244
      %v4246 = vsel %vm3853, %v3762, -inf
      %v4247 = vrot.slane %v4246, 4
      %v4248 = vmax.f32 %v4246, %v4247
      %v4249 = vrot.slane %v4248, 2
      %v4250 = vmax.f32 %v4248, %v4249
      %v4251 = vrot.slane %v4250, 1
      %v4252 = vmax.f32 %v4250, %v4251
      %v4253 = vsel %vm3853, %v3770, -inf
      %v4254 = vrot.slane %v4253, 4
      %v4255 = vmax.f32 %v4253, %v4254
      %v4256 = vrot.slane %v4255, 2
      %v4257 = vmax.f32 %v4255, %v4256
      %v4258 = vrot.slane %v4257, 1
      %v4259 = vmax.f32 %v4257, %v4258
      %v4260 = vsel %vm3853, %v3769, -inf
      %v4261 = vrot.slane %v4260, 4
      %v4262 = vmax.f32 %v4260, %v4261
      %v4263 = vrot.slane %v4262, 2
      %v4264 = vmax.f32 %v4262, %v4263
      %v4265 = vrot.slane %v4264, 1
      %v4266 = vmax.f32 %v4264, %v4265
      %v4267 = vsel %vm3853, %v3771, -inf
      %v4268 = vrot.slane %v4267, 4
      %v4269 = vmax.f32 %v4267, %v4268
      %v4270 = vrot.slane %v4269, 2
      %v4271 = vmax.f32 %v4269, %v4270
      %v4272 = vrot.slane %v4271, 1
      %v4273 = vmax.f32 %v4271, %v4272
      %v4274 = vsel %vm3853, %v3779, -inf
      %v4275 = vrot.slane %v4274, 4
      %v4276 = vmax.f32 %v4274, %v4275
      %v4277 = vrot.slane %v4276, 2
      %v4278 = vmax.f32 %v4276, %v4277
      %v4279 = vrot.slane %v4278, 1
      %v4280 = vmax.f32 %v4278, %v4279
      %v4281 = vsel %vm3853, %v3787, -inf
      %v4282 = vrot.slane %v4281, 4
      %v4283 = vmax.f32 %v4281, %v4282
      %v4284 = vrot.slane %v4283, 2
      %v4285 = vmax.f32 %v4283, %v4284
      %v4286 = vrot.slane %v4285, 1
      %v4287 = vmax.f32 %v4285, %v4286
      %v4288 = vsel %vm3853, %v3786, -inf
      %v4289 = vrot.slane %v4288, 4
      %v4290 = vmax.f32 %v4288, %v4289
      %v4291 = vrot.slane %v4290, 2
      %v4292 = vmax.f32 %v4290, %v4291
      %v4293 = vrot.slane %v4292, 1
      %v4294 = vmax.f32 %v4292, %v4293
      %v4295 = vsel %vm3853, %v3788, -inf
      %v4296 = vrot.slane %v4295, 4
      %v4297 = vmax.f32 %v4295, %v4296
      %v4298 = vrot.slane %v4297, 2
      %v4299 = vmax.f32 %v4297, %v4298
      %v4300 = vrot.slane %v4299, 1
      %v4301 = vmax.f32 %v4299, %v4300
      %v4302 = vpack.c.bf16 %v3860, %v3860
      %v4303 = vpack.c.bf16 %v3867, %v3867
      %v4304 = vpack.c.bf16 %v3874, %v3874
      %v4305 = vpack.c.bf16 %v3881, %v3881
      %v4306 = vpack.c.bf16 %v3888, %v3888
      %v4307 = vpack.c.bf16 %v3895, %v3895
      %v4308 = vpack.c.bf16 %v3902, %v3902
      %v4309 = vpack.c.bf16 %v3909, %v3909
      %v4310 = vpack.c.bf16 %v3916, %v3916
      %v4311 = vpack.c.bf16 %v3923, %v3923
      %v4312 = vpack.c.bf16 %v3930, %v3930
      %v4313 = vpack.c.bf16 %v3937, %v3937
      %v4314 = vpack.c.bf16 %v3944, %v3944
      %v4315 = vpack.c.bf16 %v3951, %v3951
      %v4316 = vpack.c.bf16 %v3958, %v3958
      %v4317 = vpack.c.bf16 %v3965, %v3965
      %v4318 = vpack.c.bf16 %v3972, %v3972
      %v4319 = vpack.c.bf16 %v3979, %v3979
      %v4320 = vpack.c.bf16 %v3986, %v3986
      %v4321 = vpack.c.bf16 %v3993, %v3993
      %v4322 = vpack.c.bf16 %v4000, %v4000
      %v4323 = vpack.c.bf16 %v4007, %v4007
      %v4324 = vpack.c.bf16 %v4014, %v4014
      %v4325 = vpack.c.bf16 %v4021, %v4021
      %v4326 = vpack.c.bf16 %v4028, %v4028
      %v4327 = vpack.c.bf16 %v4035, %v4035
      %v4328 = vpack.c.bf16 %v4042, %v4042
      %v4329 = vpack.c.bf16 %v4049, %v4049
      %v4330 = vpack.c.bf16 %v4056, %v4056
      %v4331 = vpack.c.bf16 %v4063, %v4063
      %v4332 = vpack.c.bf16 %v4070, %v4070
      %v4333 = vpack.c.bf16 %v4077, %v4077
      %v4334 = vpack.c.bf16 %v4084, %v4084
      %v4335 = vpack.c.bf16 %v4091, %v4091
      %v4336 = vpack.c.bf16 %v4098, %v4098
      %v4337 = vpack.c.bf16 %v4105, %v4105
      %v4338 = vpack.c.bf16 %v4112, %v4112
      %v4339 = vpack.c.bf16 %v4119, %v4119
      %v4340 = vpack.c.bf16 %v4126, %v4126
      %v4341 = vpack.c.bf16 %v4133, %v4133
      %v4342 = vpack.c.bf16 %v4140, %v4140
      %v4343 = vpack.c.bf16 %v4147, %v4147
      %v4344 = vpack.c.bf16 %v4154, %v4154
      %v4345 = vpack.c.bf16 %v4161, %v4161
      %v4346 = vpack.c.bf16 %v4168, %v4168
      %v4347 = vpack.c.bf16 %v4175, %v4175
      %v4348 = vpack.c.bf16 %v4182, %v4182
      %v4349 = vpack.c.bf16 %v4189, %v4189
      %v4350 = vpack.c.bf16 %v4196, %v4196
      %v4351 = vpack.c.bf16 %v4203, %v4203
      %v4352 = vpack.c.bf16 %v4210, %v4210
      %v4353 = vpack.c.bf16 %v4217, %v4217
      %v4354 = vpack.c.bf16 %v4224, %v4224
      %v4355 = vpack.c.bf16 %v4231, %v4231
      %v4356 = vpack.c.bf16 %v4238, %v4238
      %v4357 = vpack.c.bf16 %v4245, %v4245
      %v4358 = vpack.c.bf16 %v4252, %v4252
      %v4359 = vpack.c.bf16 %v4259, %v4259
      %v4360 = vpack.c.bf16 %v4266, %v4266
      %v4361 = vpack.c.bf16 %v4273, %v4273
      %v4362 = vpack.c.bf16 %v4280, %v4280
      %v4363 = vpack.c.bf16 %v4287, %v4287
      %v4364 = vpack.c.bf16 %v4294, %v4294
      %v4365 = vpack.c.bf16 %v4301, %v4301
      %v4430 = vunpack.c.l.b16 %v4302
      %v4431 = vunpack.c.l.b16 %v4303
      %v4432 = vunpack.c.l.b16 %v4304
      %v4433 = vunpack.c.l.b16 %v4305
      %v4434 = vunpack.c.l.b16 %v4306
      %v4435 = vunpack.c.l.b16 %v4307
      %v4436 = vunpack.c.l.b16 %v4308
      %v4437 = vunpack.c.l.b16 %v4309
      %v4438 = vunpack.c.l.b16 %v4310
      %v4439 = vunpack.c.l.b16 %v4311
      %v4440 = vunpack.c.l.b16 %v4312
      %v4441 = vunpack.c.l.b16 %v4313
      %v4442 = vunpack.c.l.b16 %v4314
      %v4443 = vunpack.c.l.b16 %v4315
      %v4444 = vunpack.c.l.b16 %v4316
      %v4445 = vunpack.c.l.b16 %v4317
      %v4446 = vunpack.c.l.b16 %v4318
      %v4447 = vunpack.c.l.b16 %v4319
      %v4448 = vunpack.c.l.b16 %v4320
      %v4449 = vunpack.c.l.b16 %v4321
      %v4450 = vunpack.c.l.b16 %v4322
      %v4451 = vunpack.c.l.b16 %v4323
      %v4452 = vunpack.c.l.b16 %v4324
      %v4453 = vunpack.c.l.b16 %v4325
      %v4454 = vunpack.c.l.b16 %v4326
      %v4455 = vunpack.c.l.b16 %v4327
      %v4456 = vunpack.c.l.b16 %v4328
      %v4457 = vunpack.c.l.b16 %v4329
      %v4458 = vunpack.c.l.b16 %v4330
      %v4459 = vunpack.c.l.b16 %v4331
      %v4460 = vunpack.c.l.b16 %v4332
      %v4461 = vunpack.c.l.b16 %v4333
      %v4462 = vunpack.c.l.b16 %v4334
      %v4463 = vunpack.c.l.b16 %v4335
      %v4464 = vunpack.c.l.b16 %v4336
      %v4465 = vunpack.c.l.b16 %v4337
      %v4466 = vunpack.c.l.b16 %v4338
      %v4467 = vunpack.c.l.b16 %v4339
      %v4468 = vunpack.c.l.b16 %v4340
      %v4469 = vunpack.c.l.b16 %v4341
      %v4470 = vunpack.c.l.b16 %v4342
      %v4471 = vunpack.c.l.b16 %v4343
      %v4472 = vunpack.c.l.b16 %v4344
      %v4473 = vunpack.c.l.b16 %v4345
      %v4474 = vunpack.c.l.b16 %v4346
      %v4475 = vunpack.c.l.b16 %v4347
      %v4476 = vunpack.c.l.b16 %v4348
      %v4477 = vunpack.c.l.b16 %v4349
      %v4478 = vunpack.c.l.b16 %v4350
      %v4479 = vunpack.c.l.b16 %v4351
      %v4480 = vunpack.c.l.b16 %v4352
      %v4481 = vunpack.c.l.b16 %v4353
      %v4482 = vunpack.c.l.b16 %v4354
      %v4483 = vunpack.c.l.b16 %v4355
      %v4484 = vunpack.c.l.b16 %v4356
      %v4485 = vunpack.c.l.b16 %v4357
      %v4486 = vunpack.c.l.b16 %v4358
      %v4487 = vunpack.c.l.b16 %v4359
      %v4488 = vunpack.c.l.b16 %v4360
      %v4489 = vunpack.c.l.b16 %v4361
      %v4490 = vunpack.c.l.b16 %v4362
      %v4491 = vunpack.c.l.b16 %v4363
      %v4492 = vunpack.c.l.b16 %v4364
      %v4493 = vunpack.c.l.b16 %v4365
      %v4494 = vpack.c.b16 %v4430, %v4430
      %v4495 = vpack.c.b16 %v4431, %v4431
      %v4496 = vpack.c.b16 %v4432, %v4432
      %v4497 = vpack.c.b16 %v4433, %v4433
      %v4498 = vpack.c.b16 %v4434, %v4434
      %v4499 = vpack.c.b16 %v4435, %v4435
      %v4500 = vpack.c.b16 %v4436, %v4436
      %v4501 = vpack.c.b16 %v4437, %v4437
      %v4502 = vpack.c.b16 %v4438, %v4438
      %v4503 = vpack.c.b16 %v4439, %v4439
      %v4504 = vpack.c.b16 %v4440, %v4440
      %v4505 = vpack.c.b16 %v4441, %v4441
      %v4506 = vpack.c.b16 %v4442, %v4442
      %v4507 = vpack.c.b16 %v4443, %v4443
      %v4508 = vpack.c.b16 %v4444, %v4444
      %v4509 = vpack.c.b16 %v4445, %v4445
      %v4510 = vpack.c.b16 %v4446, %v4446
      %v4511 = vpack.c.b16 %v4447, %v4447
      %v4512 = vpack.c.b16 %v4448, %v4448
      %v4513 = vpack.c.b16 %v4449, %v4449
      %v4514 = vpack.c.b16 %v4450, %v4450
      %v4515 = vpack.c.b16 %v4451, %v4451
      %v4516 = vpack.c.b16 %v4452, %v4452
      %v4517 = vpack.c.b16 %v4453, %v4453
      %v4518 = vpack.c.b16 %v4454, %v4454
      %v4519 = vpack.c.b16 %v4455, %v4455
      %v4520 = vpack.c.b16 %v4456, %v4456
      %v4521 = vpack.c.b16 %v4457, %v4457
      %v4522 = vpack.c.b16 %v4458, %v4458
      %v4523 = vpack.c.b16 %v4459, %v4459
      %v4524 = vpack.c.b16 %v4460, %v4460
      %v4525 = vpack.c.b16 %v4461, %v4461
      %v4526 = vpack.c.b16 %v4462, %v4462
      %v4527 = vpack.c.b16 %v4463, %v4463
      %v4528 = vpack.c.b16 %v4464, %v4464
      %v4529 = vpack.c.b16 %v4465, %v4465
      %v4530 = vpack.c.b16 %v4466, %v4466
      %v4531 = vpack.c.b16 %v4467, %v4467
      %v4532 = vpack.c.b16 %v4468, %v4468
      %v4533 = vpack.c.b16 %v4469, %v4469
      %v4534 = vpack.c.b16 %v4470, %v4470
      %v4535 = vpack.c.b16 %v4471, %v4471
      %v4536 = vpack.c.b16 %v4472, %v4472
      %v4537 = vpack.c.b16 %v4473, %v4473
      %v4538 = vpack.c.b16 %v4474, %v4474
      %v4539 = vpack.c.b16 %v4475, %v4475
      %v4540 = vpack.c.b16 %v4476, %v4476
      %v4541 = vpack.c.b16 %v4477, %v4477
      %v4542 = vpack.c.b16 %v4478, %v4478
      %v4543 = vpack.c.b16 %v4479, %v4479
      %v4544 = vpack.c.b16 %v4480, %v4480
      %v4545 = vpack.c.b16 %v4481, %v4481
      %v4546 = vpack.c.b16 %v4482, %v4482
      %v4547 = vpack.c.b16 %v4483, %v4483
      %v4548 = vpack.c.b16 %v4484, %v4484
      %v4549 = vpack.c.b16 %v4485, %v4485
      %v4550 = vpack.c.b16 %v4486, %v4486
      %v4551 = vpack.c.b16 %v4487, %v4487
      %v4552 = vpack.c.b16 %v4488, %v4488
      %v4553 = vpack.c.b16 %v4489, %v4489
      %v4554 = vpack.c.b16 %v4490, %v4490
      %v4555 = vpack.c.b16 %v4491, %v4491
      %v4556 = vpack.c.b16 %v4492, %v4492
      %v4557 = vpack.c.b16 %v4493, %v4493
      %v4558 = vunpack.c.l.b16 %v4494
      %v4559 = vunpack.c.l.b16 %v4495
      %v4560 = vunpack.c.l.b16 %v4496
      %v4561 = vunpack.c.l.b16 %v4497
      %v4562 = vunpack.c.l.b16 %v4498
      %v4563 = vunpack.c.l.b16 %v4499
      %v4564 = vunpack.c.l.b16 %v4500
      %v4565 = vunpack.c.l.b16 %v4501
      %v4566 = vunpack.c.l.b16 %v4502
      %v4567 = vunpack.c.l.b16 %v4503
      %v4568 = vunpack.c.l.b16 %v4504
      %v4569 = vunpack.c.l.b16 %v4505
      %v4570 = vunpack.c.l.b16 %v4506
      %v4571 = vunpack.c.l.b16 %v4507
      %v4572 = vunpack.c.l.b16 %v4508
      %v4573 = vunpack.c.l.b16 %v4509
      %v4574 = vunpack.c.l.b16 %v4510
      %v4575 = vunpack.c.l.b16 %v4511
      %v4576 = vunpack.c.l.b16 %v4512
      %v4577 = vunpack.c.l.b16 %v4513
      %v4578 = vunpack.c.l.b16 %v4514
      %v4579 = vunpack.c.l.b16 %v4515
      %v4580 = vunpack.c.l.b16 %v4516
      %v4581 = vunpack.c.l.b16 %v4517
      %v4582 = vunpack.c.l.b16 %v4518
      %v4583 = vunpack.c.l.b16 %v4519
      %v4584 = vunpack.c.l.b16 %v4520
      %v4585 = vunpack.c.l.b16 %v4521
      %v4586 = vunpack.c.l.b16 %v4522
      %v4587 = vunpack.c.l.b16 %v4523
      %v4588 = vunpack.c.l.b16 %v4524
      %v4589 = vunpack.c.l.b16 %v4525
      %v4590 = vunpack.c.l.b16 %v4526
      %v4591 = vunpack.c.l.b16 %v4527
      %v4592 = vunpack.c.l.b16 %v4528
      %v4593 = vunpack.c.l.b16 %v4529
      %v4594 = vunpack.c.l.b16 %v4530
      %v4595 = vunpack.c.l.b16 %v4531
      %v4596 = vunpack.c.l.b16 %v4532
      %v4597 = vunpack.c.l.b16 %v4533
      %v4598 = vunpack.c.l.b16 %v4534
      %v4599 = vunpack.c.l.b16 %v4535
      %v4600 = vunpack.c.l.b16 %v4536
      %v4601 = vunpack.c.l.b16 %v4537
      %v4602 = vunpack.c.l.b16 %v4538
      %v4603 = vunpack.c.l.b16 %v4539
      %v4604 = vunpack.c.l.b16 %v4540
      %v4605 = vunpack.c.l.b16 %v4541
      %v4606 = vunpack.c.l.b16 %v4542
      %v4607 = vunpack.c.l.b16 %v4543
      %v4608 = vunpack.c.l.b16 %v4544
      %v4609 = vunpack.c.l.b16 %v4545
      %v4610 = vunpack.c.l.b16 %v4546
      %v4611 = vunpack.c.l.b16 %v4547
      %v4612 = vunpack.c.l.b16 %v4548
      %v4613 = vunpack.c.l.b16 %v4549
      %v4614 = vunpack.c.l.b16 %v4550
      %v4615 = vunpack.c.l.b16 %v4551
      %v4616 = vunpack.c.l.b16 %v4552
      %v4617 = vunpack.c.l.b16 %v4553
      %v4618 = vunpack.c.l.b16 %v4554
      %v4619 = vunpack.c.l.b16 %v4555
      %v4620 = vunpack.c.l.b16 %v4556
      %v4621 = vunpack.c.l.b16 %v4557
      %vm4622 = vcmask 1041409
      %v4623 = vsel %vm4622, %v4559, %v4558
      %vm4624 = vcmask 1042434
      %v4625 = vsel %vm4624, %v4560, %v4623
      %vm4626 = vcmask 1043459
      %v4627 = vsel %vm4626, %v4561, %v4625
      %vm4628 = vcmask 1044484
      %v4629 = vsel %vm4628, %v4562, %v4627
      %vm4630 = vcmask 1045509
      %v4631 = vsel %vm4630, %v4563, %v4629
      %vm4632 = vcmask 1046534
      %v4633 = vsel %vm4632, %v4564, %v4631
      %vm4634 = vcmask 1047559
      %v4635 = vsel %vm4634, %v4565, %v4633
      %v4636 = vsel %vm4622, %v4567, %v4566
      %v4637 = vsel %vm4624, %v4568, %v4636
      %v4638 = vsel %vm4626, %v4569, %v4637
      %v4639 = vsel %vm4628, %v4570, %v4638
      %v4640 = vsel %vm4630, %v4571, %v4639
      %v4641 = vsel %vm4632, %v4572, %v4640
      %v4642 = vsel %vm4634, %v4573, %v4641
      %v4643 = vsel %vm4622, %v4575, %v4574
      %v4644 = vsel %vm4624, %v4576, %v4643
      %v4645 = vsel %vm4626, %v4577, %v4644
      %v4646 = vsel %vm4628, %v4578, %v4645
      %v4647 = vsel %vm4630, %v4579, %v4646
      %v4648 = vsel %vm4632, %v4580, %v4647
      %v4649 = vsel %vm4634, %v4581, %v4648
      %v4650 = vsel %vm4622, %v4583, %v4582
      %v4651 = vsel %vm4624, %v4584, %v4650
      %v4652 = vsel %vm4626, %v4585, %v4651
      %v4653 = vsel %vm4628, %v4586, %v4652
      %v4654 = vsel %vm4630, %v4587, %v4653
      %v4655 = vsel %vm4632, %v4588, %v4654
      %v4656 = vsel %vm4634, %v4589, %v4655
      %v4657 = vsel %vm4622, %v4591, %v4590
      %v4658 = vsel %vm4624, %v4592, %v4657
      %v4659 = vsel %vm4626, %v4593, %v4658
      %v4660 = vsel %vm4628, %v4594, %v4659
      %v4661 = vsel %vm4630, %v4595, %v4660
      %v4662 = vsel %vm4632, %v4596, %v4661
      %v4663 = vsel %vm4634, %v4597, %v4662
      %v4664 = vsel %vm4622, %v4599, %v4598
      %v4665 = vsel %vm4624, %v4600, %v4664
      %v4666 = vsel %vm4626, %v4601, %v4665
      %v4667 = vsel %vm4628, %v4602, %v4666
      %v4668 = vsel %vm4630, %v4603, %v4667
      %v4669 = vsel %vm4632, %v4604, %v4668
      %v4670 = vsel %vm4634, %v4605, %v4669
      %v4671 = vsel %vm4622, %v4607, %v4606
      %v4672 = vsel %vm4624, %v4608, %v4671
      %v4673 = vsel %vm4626, %v4609, %v4672
      %v4674 = vsel %vm4628, %v4610, %v4673
      %v4675 = vsel %vm4630, %v4611, %v4674
      %v4676 = vsel %vm4632, %v4612, %v4675
      %v4677 = vsel %vm4634, %v4613, %v4676
      %v4678 = vsel %vm4622, %v4615, %v4614
      %v4679 = vsel %vm4624, %v4616, %v4678
      %v4680 = vsel %vm4626, %v4617, %v4679
      %v4681 = vsel %vm4628, %v4618, %v4680
      %v4682 = vsel %vm4630, %v4619, %v4681
      %v4683 = vsel %vm4632, %v4620, %v4682
      %v4684 = vsel %vm4634, %v4621, %v4683
      %v4685 = vpack.c.b16 %v4635, %v4635
      %v4686 = vpack.c.b16 %v4642, %v4642
      %v4687 = vpack.c.b16 %v4649, %v4649
      %v4688 = vpack.c.b16 %v4656, %v4656
      %v4689 = vpack.c.b16 %v4663, %v4663
      %v4690 = vpack.c.b16 %v4670, %v4670
      %v4691 = vpack.c.b16 %v4677, %v4677
      %v4692 = vpack.c.b16 %v4684, %v4684
      %4701 = vst.msk [vmem:[%s252] sm:$0xf] %vm3420, %v4685
      %4702 = vst.msk [vmem:[%s252 + $0x4] sm:$0xf] %vm3420, %v4686
      %4703 = vst.msk [vmem:[%s252 + $0x8] sm:$0xf] %vm3420, %v4687
      %4704 = vst.msk [vmem:[%s252 + $0xc] sm:$0xf] %vm3420, %v4688
      %4705 = vst.msk [vmem:[%s252 + $0x10] sm:$0xf] %vm3420, %v4689
      %4706 = vst.msk [vmem:[%s252 + $0x14] sm:$0xf] %vm3420, %v4690
      %4707 = vst.msk [vmem:[%s252 + $0x18] sm:$0xf] %vm3420, %v4691
      %4708 = vst.msk [vmem:[%s252 + $0x1c] sm:$0xf] %vm3420, %v4692
      %s4709 = smul.u32 16, %s21
      %p4710 = scmp.lt.s32.totalorder %s20, 3
      %s4711 = scalar_select %p4710, %s20, 3
      %p4712 = scmp.lt.s32.totalorder %s4709, 15
      %s4713 = scalar_select %p4712, %s4709, 15
      %s4714 = smul.addr %s4713, 2
      %s4715 = smul.addr %s4711, 32
      %s4716 = sadd.s32 %s4714, %s4715
      %s4717 = smul.addr %s4716, 4
      %s4718 = scalar_lea.vmem %s3, %s4717
      %s4719 = smul.u32 8, %s21
      %p4720 = scmp.lt.s32.totalorder %s20, 3
      %s4721 = scalar_select %p4720, %s20, 3
      %p4722 = scmp.lt.s32.totalorder %s4719, 7
      %s4723 = scalar_select %p4722, %s4719, 7
      %s4724 = smul.addr %s4721, 8
      %s4725 = sadd.s32 %s4723, %s4724
      %s4726 = smul.addr %s4725, 4
      %s4727 = scalar_lea.vmem %s4, %s4726
      // Predicated region
      $region33: #{a_call__.7} parent=31 // pred_check
        %p4728 = pneg %p118
      $region34: #{a_call__.7} parent=31 // pred_check_branch
        %4730 = sbr.rel (%p4728) target = $region36
      $region35: #{a_call__.7} parent=31 // pred_region
        %s4731 = smul.u32 16, %s21
      $region36: #{a_call__.7} parent=31 // pred_fallthru
        _
      // Predicated region
      $region37: #{a_call__.7} parent=31 // pred_check
        %p4732 = pneg %p146
      $region38: #{a_call__.7} parent=31 // pred_check_branch
        %4734 = sbr.rel (%p4732) target = $region40
      $region39: #{a_call__.7} parent=31 // pred_region
        %s4735 = smul.u32 8, %s21
      $region40: #{a_call__.7} parent=31 // pred_fallthru
        _
    $region32: #{a_call__.7} parent=5 // pred_fallthru
      _
    %p4736 = scmp.le.s32.totalorder 2, %s11
    // Predicated region
    $region41: #{a_call__.7} parent=5 // pred_check
      %p4737 = pneg %p4736
    $region42: #{a_call__.7} parent=5 // pred_check_branch
      %4739 = sbr.rel (%p4737) target = $region44
    $region43: #{a_call__.7} parent=5 // pred_region
      %s4740 = ssub.s32 %s11, 2
      // Predicated region
      $region45: #{a_call__.7} parent=43 // pred_check
        %p4741 = pneg %p124
      $region46: #{a_call__.7} parent=43 // pred_check_branch
        %4743 = sbr.rel (%p4741) target = $region48
      $region47: #{a_call__.7} parent=43 // pred_region
        %s4744 = smul.u32 16, %s23
        %p4745 = scmp.lt.s32.totalorder %s22, 3
        %s4746 = scalar_select %p4745, %s22, 3
        %p4747 = scmp.lt.s32.totalorder %s4744, 15
        %s4748 = scalar_select %p4747, %s4744, 15
        %s4749 = smul.addr %s4748, 2
        %s4750 = smul.addr %s4746, 32
        %s4751 = sadd.s32 %s4749, %s4750
        %s4752 = smul.addr %s4751, 4
        %s4753 = scalar_lea.vmem %s3, %s4752
      $region48: #{a_call__.7} parent=43 // pred_fallthru
        _
      // Predicated region
      $region49: #{a_call__.7} parent=43 // pred_check
        %p4754 = pneg %p152
      $region50: #{a_call__.7} parent=43 // pred_check_branch
        %4756 = sbr.rel (%p4754) target = $region52
      $region51: #{a_call__.7} parent=43 // pred_region
        %s4757 = smul.u32 8, %s23
        %p4758 = scmp.lt.s32.totalorder %s22, 3
        %s4759 = scalar_select %p4758, %s22, 3
        %p4760 = scmp.lt.s32.totalorder %s4757, 7
        %s4761 = scalar_select %p4760, %s4757, 7
        %s4762 = smul.addr %s4759, 8
        %s4763 = sadd.s32 %s4761, %s4762
        %s4764 = smul.addr %s4763, 4
        %s4765 = scalar_lea.vmem %s4, %s4764
      $region52: #{a_call__.7} parent=43 // pred_fallthru
        _
    $region44: #{a_call__.7} parent=5 // pred_fallthru
      _
  $region6: #{a_call__.7} parent=0 // loop_footer
    %s15 = sadd.s32 1, %s11
  $region7: #{a_call__.7} parent=0 // loop_footer_branch
    %10 = sbr.rel target = $region3
  $region8: #{a_call__.7} parent=0 // loop_exit
    _

// kernel: a_call__.11
$region0: #{a_call__.11}
  #allocation0 [shape = 'u32[]', space=smem, size = 0x4, offset = 0x4, fixed_abs, tag = 'smem constant byte address 0x4 - core index']
  #allocation1 [shape = 'u32[144,128]{1,0:T(1,128)}', space=vmem, size = 0x12000, scoped, tag = 'internal scratch']
  #allocation2 [shape = 'f32[1,128]{1,0:T(1,128)}', space=vmem, size = 0x200, scoped, tag = 'scratch operand']
  #allocation3 [shape = 'f32[128,128]{1,0:T(8,128)}', space=vmem, size = 0x10000, scoped, tag = 'scratch operand']
  #allocation4 [shape = 'f32[128,128]{1,0:T(8,128)}', space=vmem, size = 0x10000, scoped, tag = 'scratch operand']
  %s0 = inlined_call_operand.vmem [shape: bf16[4,64,128], index: 0, kind: input, shape index: {}, may-alias: {0,1}]
  %s1 = inlined_call_operand.vmem [shape: bf16[4,64,128], index: 1, kind: input, shape index: {}, may-alias: {0,1}]
  %s2 = inlined_call_operand.vmem [shape: f32[2,8,128], index: 2, kind: output, shape index: {0}]
  %s3 = inlined_call_operand.vmem [shape: f32[2,8,128], index: 3, kind: output, shape index: {1}]
  %4 = xla_tuple %s2, %s3
  %s5 = sld [smem:[#allocation0]]
  $region61: #{a_call__.11} parent=0
    _
  %s7 = ssub.s32 1, %s5
  %s8 = scalar_select 0, %s7, %s5
  loop: start=0, step=1, limit=4
  $region2: #{a_call__.11} parent=0 // loop_pre_header
    _
  $region3: #{a_call__.11} parent=0 // loop_header
    %s10 = sphi 0, %s14
    %p11 = scmp.ge.s32.totalorder %s10, 4
    %s17 = sphi 0, %s29
    %s18 = sphi 0, %s25
    %s19 = sphi 0, %s17
    %s20 = sphi 0, %s18
    %s21 = sphi 0, %s19
    %s22 = sphi 0, %s20
    %s34 = sphi 0, %s36
    %s37 = sphi 0, %s34
    %s38 = sphi 0, %s37
    %s54 = sphi 0, %s38
    %s64 = sphi 0, %s66
    %s67 = sphi 0, %s64
    %s68 = sphi 0, %s67
    %s84 = sphi 0, %s68
    %s90 = sphi 0, %s92
    %s93 = sphi 0, %s90
    %s94 = sphi 0, %s93
    %s110 = sphi 0, %s94
    %s116 = sphi 0, %s118
    %s119 = sphi 0, %s116
    %s120 = sphi 0, %s119
    %s136 = sphi 0, %s120
  $region4: #{a_call__.11} parent=0 // loop_header_branch
    %13 = sbr.rel (%p11) target = $region8
  $region5: #{a_call__.11} parent=0 // loop_body
    %s15 = ssub.s32 %s10, 1
    %s16 = ssub.s32 %s10, 2
    %s23 = sadd.s32 1, %s18
    %p24 = scmp.ge.s32.totalorder %s23, 1
    %s25 = scalar_select %p24, 0, %s23
    %s26 = sadd.s32 1, %s17
    %s27 = scalar_select %p24, %s26, %s17
    %p28 = scmp.ge.s32.totalorder %s27, 2
    %s29 = scalar_select %p28, 0, %s27
    %s30 = ssub.s32 %s17, %s29
    %s31 = ssub.s32 %s18, %s25
    %s32 = sor.u32 %s30, %s31
    %p33 = scmp.eq.s32.totalorder %s32, 0
    %s35 = sadd.s32 %s34, 1
    %s36 = scalar_select %p33, %s34, %s35
    %p39 = pneg %p33
    %p40 = scmp.eq.s32.totalorder %s10, 1
    %p41 = por %p39, %p40
    %p42 = scmp.ne.s32.totalorder %s34, %s37
    %p43 = scmp.eq.s32.totalorder %s10, 0
    %p44 = por %p42, %p43
    %p45 = scmp.ne.s32.totalorder %s34, %s37
    %p46 = scmp.eq.s32.totalorder %s15, 1
    %p47 = por %p45, %p46
    %p48 = scmp.ne.s32.totalorder %s37, %s38
    %p49 = scmp.eq.s32.totalorder %s15, 0
    %p50 = por %p48, %p49
    %p51 = scmp.ne.s32.totalorder %s37, %s38
    %p52 = scmp.eq.s32.totalorder %s16, 1
    %p53 = por %p51, %p52
    %p55 = scmp.ne.s32.totalorder %s38, %s54
    %p56 = scmp.eq.s32.totalorder %s16, 0
    %p57 = por %p55, %p56
    %s58 = sadd.s32 %s17, 2
    %s59 = sadd.s32 %s29, 2
    %s60 = ssub.s32 %s58, %s59
    %s61 = ssub.s32 %s18, %s25
    %s62 = sor.u32 %s60, %s61
    %p63 = scmp.eq.s32.totalorder %s62, 0
    %s65 = sadd.s32 %s64, 1
    %s66 = scalar_select %p63, %s64, %s65
    %p69 = pneg %p63
    %p70 = scmp.eq.s32.totalorder %s10, 1
    %p71 = por %p69, %p70
    %p72 = scmp.ne.s32.totalorder %s64, %s67
    %p73 = scmp.eq.s32.totalorder %s10, 0
    %p74 = por %p72, %p73
    %p75 = scmp.ne.s32.totalorder %s64, %s67
    %p76 = scmp.eq.s32.totalorder %s15, 1
    %p77 = por %p75, %p76
    %p78 = scmp.ne.s32.totalorder %s67, %s68
    %p79 = scmp.eq.s32.totalorder %s15, 0
    %p80 = por %p78, %p79
    %p81 = scmp.ne.s32.totalorder %s67, %s68
    %p82 = scmp.eq.s32.totalorder %s16, 1
    %p83 = por %p81, %p82
    %p85 = scmp.ne.s32.totalorder %s68, %s84
    %p86 = scmp.eq.s32.totalorder %s16, 0
    %p87 = por %p85, %p86
    %s88 = ssub.s32 %s17, %s29
    %p89 = scmp.eq.s32.totalorder %s88, 0
    %s91 = sadd.s32 %s90, 1
    %s92 = scalar_select %p89, %s90, %s91
    %p95 = pneg %p89
    %p96 = scmp.eq.s32.totalorder %s10, 1
    %p97 = por %p95, %p96
    %p98 = scmp.ne.s32.totalorder %s90, %s93
    %p99 = scmp.eq.s32.totalorder %s10, 0
    %p100 = por %p98, %p99
    %p101 = scmp.ne.s32.totalorder %s90, %s93
    %p102 = scmp.eq.s32.totalorder %s15, 1
    %p103 = por %p101, %p102
    %p104 = scmp.ne.s32.totalorder %s93, %s94
    %p105 = scmp.eq.s32.totalorder %s15, 0
    %p106 = por %p104, %p105
    %p107 = scmp.ne.s32.totalorder %s93, %s94
    %p108 = scmp.eq.s32.totalorder %s16, 1
    %p109 = por %p107, %p108
    %p111 = scmp.ne.s32.totalorder %s94, %s110
    %p112 = scmp.eq.s32.totalorder %s16, 0
    %p113 = por %p111, %p112
    %s114 = ssub.s32 %s17, %s29
    %p115 = scmp.eq.s32.totalorder %s114, 0
    %s117 = sadd.s32 %s116, 1
    %s118 = scalar_select %p115, %s116, %s117
    %p121 = pneg %p115
    %p122 = scmp.eq.s32.totalorder %s10, 1
    %p123 = por %p121, %p122
    %p124 = scmp.ne.s32.totalorder %s116, %s119
    %p125 = scmp.eq.s32.totalorder %s10, 0
    %p126 = por %p124, %p125
    %p127 = scmp.ne.s32.totalorder %s116, %s119
    %p128 = scmp.eq.s32.totalorder %s15, 1
    %p129 = por %p127, %p128
    %p130 = scmp.ne.s32.totalorder %s119, %s120
    %p131 = scmp.eq.s32.totalorder %s15, 0
    %p132 = por %p130, %p131
    %p133 = scmp.ne.s32.totalorder %s119, %s120
    %p134 = scmp.eq.s32.totalorder %s16, 1
    %p135 = por %p133, %p134
    %p137 = scmp.ne.s32.totalorder %s120, %s136
    %p138 = scmp.eq.s32.totalorder %s16, 0
    %p139 = por %p137, %p138
    %p140 = scmp.le.s32.totalorder 1, %s10
    %p141 = scmp.lt.s32.totalorder %s10, 3
    %p142 = pnand %p140, %p141
    %p143 = pneg %p142
    // Predicated region
    $region9: #{a_call__.11} parent=5 // pred_check
      _
    $region10: #{a_call__.11} parent=5 // pred_check_branch
      %145 = sbr.rel (%p142) target = $region12
    $region11: #{a_call__.11} parent=5 // pred_region
      %s146 = ssub.s32 %s10, 1
    $region12: #{a_call__.11} parent=5 // pred_fallthru
      _
    %p147 = scmp.lt.s32.totalorder %s10, 2
    // Predicated region
    $region13: #{a_call__.11} parent=5 // pred_check
      %p148 = pneg %p147
    $region14: #{a_call__.11} parent=5 // pred_check_branch
      %150 = sbr.rel (%p148) target = $region16
    $region15: #{a_call__.11} parent=5 // pred_region
      // Predicated region
      $region17: #{a_call__.11} parent=15 // pred_check
        %p151 = pneg %p44
      $region18: #{a_call__.11} parent=15 // pred_check_branch
        %153 = sbr.rel (%p151) target = $region20
      $region19: #{a_call__.11} parent=15 // pred_region
        %s154 = smul.u32 8, %s18
        %p155 = scmp.lt.s32.totalorder %s17, 3
        %s156 = scalar_select %p155, %s17, 3
        %p157 = scmp.lt.s32.totalorder %s154, 7
        %s158 = scalar_select %p157, %s154, 7
        %s159 = smul.addr %s156, 8
        %s160 = sadd.s32 %s158, %s159
        %s161 = smul.addr %s160, 4
        %s162 = scalar_lea.vmem %s0, %s161
        %s163 = smul.u32 8, %s18
      $region20: #{a_call__.11} parent=15 // pred_fallthru
        _
      // Predicated region
      $region21: #{a_call__.11} parent=15 // pred_check
        %p164 = pneg %p74
      $region22: #{a_call__.11} parent=15 // pred_check_branch
        %166 = sbr.rel (%p164) target = $region24
      $region23: #{a_call__.11} parent=15 // pred_region
        %s167 = sadd.s32 %s17, 2
        %s168 = smul.u32 8, %s18
        %p169 = scmp.lt.s32.totalorder %s167, 3
        %s170 = scalar_select %p169, %s167, 3
        %p171 = scmp.lt.s32.totalorder %s168, 7
        %s172 = scalar_select %p171, %s168, 7
        %s173 = smul.addr %s170, 8
        %s174 = sadd.s32 %s172, %s173
        %s175 = smul.addr %s174, 4
        %s176 = scalar_lea.vmem %s1, %s175
        %s177 = sadd.s32 %s17, 2
        %s178 = smul.u32 8, %s18
      $region24: #{a_call__.11} parent=15 // pred_fallthru
        _
    $region16: #{a_call__.11} parent=5 // pred_fallthru
      _
    %p179 = scmp.le.s32.totalorder 1, %s10
    %p180 = scmp.lt.s32.totalorder %s10, 3
    %p181 = pnand %p179, %p180
    %p182 = pneg %p181
    // Predicated region
    $region25: #{a_call__.11} parent=5 // pred_check
      _
    $region26: #{a_call__.11} parent=5 // pred_check_branch
      %184 = sbr.rel (%p181) target = $region28
    $region27: #{a_call__.11} parent=5 // pred_region
      %s185 = ssub.s32 %s10, 1
      %s186 = smul.u32 8, %s20
      %p187 = scmp.lt.s32.totalorder %s19, 3
      %s188 = scalar_select %p187, %s19, 3
      %p189 = scmp.lt.s32.totalorder %s186, 7
      %s190 = scalar_select %p189, %s186, 7
      %s191 = smul.addr %s188, 8
      %s192 = sadd.s32 %s190, %s191
      %s193 = smul.addr %s192, 4
      %s194 = scalar_lea.vmem %s0, %s193
      %p195 = pneg %p50
      %p196 = pneg %p47
      %s197 = sadd.s32 %s19, 2
      %s198 = smul.u32 8, %s20
      %p199 = scmp.lt.s32.totalorder %s197, 3
      %s200 = scalar_select %p199, %s197, 3
      %p201 = scmp.lt.s32.totalorder %s198, 7
      %s202 = scalar_select %p201, %s198, 7
      %s203 = smul.addr %s200, 8
      %s204 = sadd.s32 %s202, %s203
      %s205 = smul.addr %s204, 4
      %s206 = scalar_lea.vmem %s1, %s205
      %p207 = pneg %p80
      %p208 = pneg %p77
      %p209 = pneg %p106
      %p210 = pneg %p103
      %p211 = scmp.lt.s32.totalorder %s19, 1
      %s212 = scalar_select %p211, %s19, 1
      %s213 = smul.addr %s212, 8
      %s214 = scalar_lea.vmem %s2, %s213
      %p215 = pneg %p132
      %p216 = pneg %p129
      %p217 = scmp.lt.s32.totalorder %s19, 1
      %s218 = scalar_select %p217, %s19, 1
      %s219 = smul.addr %s218, 8
      %s220 = scalar_lea.vmem %s3, %s219
      %s221 = smul.u32 8, %s20
      %p222 = scmp.lt.s32.totalorder %s19, 3
      %s223 = scalar_select %p222, %s19, 3
      %p224 = scmp.lt.s32.totalorder %s221, 7
      %s225 = scalar_select %p224, %s221, 7
      %s226 = smul.addr %s223, 8
      %s227 = sadd.s32 %s225, %s226
      %s228 = smul.addr %s227, 4
      %s229 = scalar_lea.vmem %s0, %s228
      %s230 = smul.u32 8, %s20
      %s231 = sadd.s32 %s19, 2
      %s232 = smul.u32 8, %s20
      %p233 = scmp.lt.s32.totalorder %s231, 3
      %s234 = scalar_select %p233, %s231, 3
      %p235 = scmp.lt.s32.totalorder %s232, 7
      %s236 = scalar_select %p235, %s232, 7
      %s237 = smul.addr %s234, 8
      %s238 = sadd.s32 %s236, %s237
      %s239 = smul.addr %s238, 4
      %s240 = scalar_lea.vmem %s1, %s239
      %s241 = sadd.s32 %s19, 2
      %s242 = smul.u32 8, %s20
      %p243 = scmp.lt.s32.totalorder %s19, 1
      %s244 = scalar_select %p243, %s19, 1
      %s245 = smul.addr %s244, 8
      %s246 = scalar_lea.vmem %s2, %s245
      %p247 = scmp.lt.s32.totalorder %s19, 1
      %s248 = scalar_select %p247, %s19, 1
      %s249 = smul.addr %s248, 8
      %s250 = scalar_lea.vmem %s3, %s249
      %v252 = vld [vmem:[%s229] sm:$0xf]
      %v253 = vld [vmem:[%s229 + $0x4] sm:$0xf]
      %v254 = vld [vmem:[%s229 + $0x8] sm:$0xf]
      %v255 = vld [vmem:[%s229 + $0xc] sm:$0xf]
      %v256 = vld [vmem:[%s229 + $0x10] sm:$0xf]
      %v257 = vld [vmem:[%s229 + $0x14] sm:$0xf]
      %v258 = vld [vmem:[%s229 + $0x18] sm:$0xf]
      %v259 = vld [vmem:[%s229 + $0x1c] sm:$0xf]
      %v260 = vld [vmem:[%s240] sm:$0xf]
      %v261 = vld [vmem:[%s240 + $0x4] sm:$0xf]
      %v262 = vld [vmem:[%s240 + $0x8] sm:$0xf]
      %v263 = vld [vmem:[%s240 + $0xc] sm:$0xf]
      %v264 = vld [vmem:[%s240 + $0x10] sm:$0xf]
      %v265 = vld [vmem:[%s240 + $0x14] sm:$0xf]
      %v266 = vld [vmem:[%s240 + $0x18] sm:$0xf]
      %v267 = vld [vmem:[%s240 + $0x1c] sm:$0xf]
      %p268 = scmp.eq.s32.totalorder %s20, 0
      // Predicated region
      $region29: #{a_call__.11} parent=27 // pred_check
        %p269 = pneg %p268
      $region30: #{a_call__.11} parent=27 // pred_check_branch
        %271 = sbr.rel (%p269) target = $region32
      $region31: #{a_call__.11} parent=27 // pred_region
        %272 = vst [vmem:[#allocation2] sm:$0x1] 0.0
      $region32: #{a_call__.11} parent=27 // pred_fallthru
        _
      %v273 = vunpack.c.l.bf16 %v252
      %v274 = vunpack.c.l.bf16 %v253
      %v275 = vunpack.c.l.bf16 %v254
      %v276 = vunpack.c.l.bf16 %v255
      %v277 = vunpack.c.l.bf16 %v256
      %v278 = vunpack.c.l.bf16 %v257
      %v279 = vunpack.c.l.bf16 %v258
      %v280 = vunpack.c.l.bf16 %v259
      %v281 = vunpack.c.l.bf16 %v260
      %v282 = vunpack.c.l.bf16 %v261
      %v283 = vunpack.c.l.bf16 %v262
      %v284 = vunpack.c.l.bf16 %v263
      %v285 = vunpack.c.l.bf16 %v264
      %v286 = vunpack.c.l.bf16 %v265
      %v287 = vunpack.c.l.bf16 %v266
      %v288 = vunpack.c.l.bf16 %v267
      %v289 = vsub.f32 %v273, %v281
      %v290 = vsub.f32 %v274, %v282
      %v291 = vsub.f32 %v275, %v283
      %v292 = vsub.f32 %v276, %v284
      %v293 = vsub.f32 %v277, %v285
      %v294 = vsub.f32 %v278, %v286
      %v295 = vsub.f32 %v279, %v287
      %v296 = vsub.f32 %v280, %v288
      %v297 = vand.u32 2147483647, %v289
      %v298 = vand.u32 2147483647, %v290
      %v299 = vand.u32 2147483647, %v291
      %v300 = vand.u32 2147483647, %v292
      %v301 = vand.u32 2147483647, %v293
      %v302 = vand.u32 2147483647, %v294
      %v303 = vand.u32 2147483647, %v295
      %v304 = vand.u32 2147483647, %v296
      %v305 = vld [vmem:[#allocation2] sm:$0x1]
      %v306 = vadd.f32 %v297, %v298
      %v307 = vadd.f32 %v306, %v299
      %v308 = vadd.f32 %v307, %v300
      %v309 = vadd.f32 %v308, %v301
      %v310 = vadd.f32 %v309, %v302
      %v311 = vadd.f32 %v310, %v303
      %v312 = vadd.f32 %v311, %v304
      %v313 = vrot.slane %v312, 4
      %v314 = vadd.f32 %v312, %v313
      %v315 = vrot.slane %v314, 2
      %v316 = vadd.f32 %v314, %v315
      %v317 = vrot.slane %v316, 1
      %v318 = vadd.f32 %v316, %v317
      %v319 = vadd.f32 %v305, %v318
      %320 = vst [vmem:[#allocation2] sm:$0x1] %v319
      // Predicated region
      $region33: #{a_call__.11} parent=27 // pred_check
        %p321 = pneg %p268
      $region34: #{a_call__.11} parent=27 // pred_check_branch
        %323 = sbr.rel (%p321) target = $region36
      $region35: #{a_call__.11} parent=27 // pred_region
        %v324 = vld [vmem:[#allocation2] sm:$0x1]
        %vm325 = vcmask 1040384
        %v326 = vsel %vm325, %v324, 0.0
        %327 = vadd.xlane.f32.xlu0 %v326
        %v328 = vpop.xlane.xlu0 %327
        %v329 = vrot.slane %v328, 4
        %v330 = vadd.f32 %v328, %v329
        %v331 = vrot.slane %v330, 2
        %v332 = vadd.f32 %v330, %v331
        %v333 = vrot.slane %v332, 1
        %v334 = vadd.f32 %v332, %v333
        %s335 = vtos %v334
        %v336 = vstv %s335
        %337 = vst [vmem:[%s246] sm:$0xff] %v336
        %338 = vst [vmem:[#allocation3] sm:$0xff] 0.0
        %339 = vst [vmem:[#allocation3 + $0x8] sm:$0xff] 0.0
        %340 = vst [vmem:[#allocation3 + $0x10] sm:$0xff] 0.0
        %341 = vst [vmem:[#allocation3 + $0x18] sm:$0xff] 0.0
        %342 = vst [vmem:[#allocation3 + $0x20] sm:$0xff] 0.0
        %343 = vst [vmem:[#allocation3 + $0x28] sm:$0xff] 0.0
        %344 = vst [vmem:[#allocation3 + $0x30] sm:$0xff] 0.0
        %345 = vst [vmem:[#allocation3 + $0x38] sm:$0xff] 0.0
        %346 = vst [vmem:[#allocation3 + $0x40] sm:$0xff] 0.0
        %347 = vst [vmem:[#allocation3 + $0x48] sm:$0xff] 0.0
        %348 = vst [vmem:[#allocation3 + $0x50] sm:$0xff] 0.0
        %349 = vst [vmem:[#allocation3 + $0x58] sm:$0xff] 0.0
        %350 = vst [vmem:[#allocation3 + $0x60] sm:$0xff] 0.0
        %351 = vst [vmem:[#allocation3 + $0x68] sm:$0xff] 0.0
        %352 = vst [vmem:[#allocation3 + $0x70] sm:$0xff] 0.0
        %353 = vst [vmem:[#allocation3 + $0x78] sm:$0xff] 0.0
        %354 = vst [vmem:[#allocation4] sm:$0xff] 0.0
        %355 = vst [vmem:[#allocation4 + $0x8] sm:$0xff] 0.0
        %356 = vst [vmem:[#allocation4 + $0x10] sm:$0xff] 0.0
        %357 = vst [vmem:[#allocation4 + $0x18] sm:$0xff] 0.0
        %358 = vst [vmem:[#allocation4 + $0x20] sm:$0xff] 0.0
        %359 = vst [vmem:[#allocation4 + $0x28] sm:$0xff] 0.0
        %360 = vst [vmem:[#allocation4 + $0x30] sm:$0xff] 0.0
        %361 = vst [vmem:[#allocation4 + $0x38] sm:$0xff] 0.0
        %362 = vst [vmem:[#allocation4 + $0x40] sm:$0xff] 0.0
        %363 = vst [vmem:[#allocation4 + $0x48] sm:$0xff] 0.0
        %364 = vst [vmem:[#allocation4 + $0x50] sm:$0xff] 0.0
        %365 = vst [vmem:[#allocation4 + $0x58] sm:$0xff] 0.0
        %366 = vst [vmem:[#allocation4 + $0x60] sm:$0xff] 0.0
        %367 = vst [vmem:[#allocation4 + $0x68] sm:$0xff] 0.0
        %368 = vst [vmem:[#allocation4 + $0x70] sm:$0xff] 0.0
        %369 = vst [vmem:[#allocation4 + $0x78] sm:$0xff] 0.0
      $region36: #{a_call__.11} parent=27 // pred_fallthru
        _
      %v370 = vld [vmem:[#allocation3] sm:$0xff]
      %v371 = vld [vmem:[#allocation3 + $0x8] sm:$0xff]
      %v372 = vld [vmem:[#allocation3 + $0x10] sm:$0xff]
      %v373 = vld [vmem:[#allocation3 + $0x18] sm:$0xff]
      %v374 = vld [vmem:[#allocation3 + $0x20] sm:$0xff]
      %v375 = vld [vmem:[#allocation3 + $0x28] sm:$0xff]
      %v376 = vld [vmem:[#allocation3 + $0x30] sm:$0xff]
      %v377 = vld [vmem:[#allocation3 + $0x38] sm:$0xff]
      %v378 = vld [vmem:[#allocation3 + $0x40] sm:$0xff]
      %v379 = vld [vmem:[#allocation3 + $0x48] sm:$0xff]
      %v380 = vld [vmem:[#allocation3 + $0x50] sm:$0xff]
      %v381 = vld [vmem:[#allocation3 + $0x58] sm:$0xff]
      %v382 = vld [vmem:[#allocation3 + $0x60] sm:$0xff]
      %v383 = vld [vmem:[#allocation3 + $0x68] sm:$0xff]
      %v384 = vld [vmem:[#allocation3 + $0x70] sm:$0xff]
      %v385 = vld [vmem:[#allocation3 + $0x78] sm:$0xff]
      %v394 = vunpack.c.l.b16 %v252
      %v395 = vunpack.c.l.b16 %v253
      %v396 = vunpack.c.l.b16 %v254
      %v397 = vunpack.c.l.b16 %v255
      %v398 = vunpack.c.l.b16 %v256
      %v399 = vunpack.c.l.b16 %v257
      %v400 = vunpack.c.l.b16 %v258
      %v401 = vunpack.c.l.b16 %v259
      %v402 = vpack.c.b16 %v395, %v394
      %v403 = vpack.c.b16 %v397, %v396
      %v404 = vpack.c.b16 %v399, %v398
      %v405 = vpack.c.b16 %v401, %v400
      %410 = vxpose.xlu0.c.b16.start [1/8] %v402, 128
      %411 = vxpose.xlu0.c.b16.cont [2/8] %v403, 128
      %412 = vxpose.xlu0.c.b16.cont [3/8] %v404, 128
      %413 = vxpose.xlu0.c.b16.cont [4/8] %v405, 128
      %414 = vxpose.xlu0.c.b16.cont [5/8] 0, 128
      %415 = vxpose.xlu0.c.b16.cont [6/8] 0, 128
      %416 = vxpose.xlu0.c.b16.cont [7/8] 0, 128
      %417 = vxpose.xlu0.c.b16.end [8/8] 0, 128
      %v418 = vpop.trf.xlu0
      %v419 = vpop.trf.xlu0
      %v420 = vpop.trf.xlu0
      %v421 = vpop.trf.xlu0
      %v422 = vpop.trf.xlu0
      %v423 = vpop.trf.xlu0
      %v424 = vpop.trf.xlu0
      %v425 = vpop.trf.xlu0
      %vm426 = vcmask 523264
      %v428 = vsel %vm426, %v418, 0
      %v431 = vsel %vm426, %v419, 0
      %v434 = vsel %vm426, %v420, 0
      %v437 = vsel %vm426, %v421, 0
      %v440 = vsel %vm426, %v422, 0
      %v443 = vsel %vm426, %v423, 0
      %v446 = vsel %vm426, %v424, 0
      %v449 = vsel %vm426, %v425, 0
      %451 = vmatprep.subr.bf16.mxu0 0
      %452 = vmatpush1.bf16.msra.mxu0 0
      %453 = vmatprep.subr.bf16.mxu0 0
      %454 = vmatpush1.bf16.msra.mxu0 0
      %455 = vmatprep.subr.bf16.mxu0 0
      %456 = vmatpush1.bf16.msra.mxu0 0
      %457 = vmatprep.subr.bf16.mxu0 0
      %458 = vmatpush1.bf16.msra.mxu0 0
      %459 = vmatprep.subr.bf16.mxu0 0
      %460 = vmatpush1.bf16.msra.mxu0 %v405
      %461 = vmatprep.subr.bf16.mxu0 0
      %462 = vmatpush1.bf16.msra.mxu0 %v404
      %463 = vmatprep.subr.bf16.mxu0 0
      %464 = vmatpush1.bf16.msra.mxu0 %v403
      %465 = vmatprep.subr.bf16.mxu0 0
      %466 = vmatpush1.bf16.msra.mxu0 %v402
      %467 = vmatprep.subr.bf16.mxu0 0
      %468 = vmatpush2.bf16.msra.mxu0 0
      %469 = vmatprep.subr.bf16.mxu0 0
      %470 = vmatpush2.bf16.msra.mxu0 0
      %471 = vmatprep.subr.bf16.mxu0 0
      %472 = vmatpush2.bf16.msra.mxu0 0
      %473 = vmatprep.subr.bf16.mxu0 0
      %474 = vmatpush2.bf16.msra.mxu0 0
      %475 = vmatprep.subr.bf16.mxu0 0
      %476 = vmatpush2.bf16.msra.mxu0 0
      %477 = vmatprep.subr.bf16.mxu0 0
      %478 = vmatpush2.bf16.msra.mxu0 0
      %479 = vmatprep.subr.bf16.mxu0 0
      %480 = vmatpush2.bf16.msra.mxu0 0
      %481 = vmatprep.subr.bf16.mxu0 0
      %482 = vmatpush2.bf16.msra.mxu0 0
      %483 = vmatprep.mubr.bf16.mxu0 0
      %484 = vmatmul.mubr.bf16.gmra.mxu0 %v428
      %v485 = vpop.f32.mrf.mxu0
      %v486 = vadd.f32 0.0, %v485
      %v487 = vpop.f32.mrf.mxu0
      %v488 = vpop.f32.mrf.mxu0
      %v489 = vadd.f32 0.0, %v488
      %v490 = vpop.f32.mrf.mxu0
      %491 = vmatprep.mubr.bf16.mxu0 0
      %492 = vmatmul.mubr.bf16.gmra.mxu0 %v431
      %v493 = vpop.f32.mrf.mxu0
      %v494 = vadd.f32 0.0, %v493
      %v495 = vpop.f32.mrf.mxu0
      %v496 = vpop.f32.mrf.mxu0
      %v497 = vadd.f32 0.0, %v496
      %v498 = vpop.f32.mrf.mxu0
      %499 = vmatprep.mubr.bf16.mxu0 0
      %500 = vmatmul.mubr.bf16.gmra.mxu0 %v434
      %v501 = vpop.f32.mrf.mxu0
      %v502 = vadd.f32 0.0, %v501
      %v503 = vpop.f32.mrf.mxu0
      %v504 = vpop.f32.mrf.mxu0
      %v505 = vadd.f32 0.0, %v504
      %v506 = vpop.f32.mrf.mxu0
      %507 = vmatprep.mubr.bf16.mxu0 0
      %508 = vmatmul.mubr.bf16.gmra.mxu0 %v437
      %v509 = vpop.f32.mrf.mxu0
      %v510 = vadd.f32 0.0, %v509
      %v511 = vpop.f32.mrf.mxu0
      %v512 = vpop.f32.mrf.mxu0
      %v513 = vadd.f32 0.0, %v512
      %v514 = vpop.f32.mrf.mxu0
      %515 = vmatprep.mubr.bf16.mxu0 0
      %516 = vmatmul.mubr.bf16.gmra.mxu0 %v440
      %v517 = vpop.f32.mrf.mxu0
      %v518 = vadd.f32 0.0, %v517
      %v519 = vpop.f32.mrf.mxu0
      %v520 = vpop.f32.mrf.mxu0
      %v521 = vadd.f32 0.0, %v520
      %v522 = vpop.f32.mrf.mxu0
      %523 = vmatprep.mubr.bf16.mxu0 0
      %524 = vmatmul.mubr.bf16.gmra.mxu0 %v443
      %v525 = vpop.f32.mrf.mxu0
      %v526 = vadd.f32 0.0, %v525
      %v527 = vpop.f32.mrf.mxu0
      %v528 = vpop.f32.mrf.mxu0
      %v529 = vadd.f32 0.0, %v528
      %v530 = vpop.f32.mrf.mxu0
      %531 = vmatprep.mubr.bf16.mxu0 0
      %532 = vmatmul.mubr.bf16.gmra.mxu0 %v446
      %v533 = vpop.f32.mrf.mxu0
      %v534 = vadd.f32 0.0, %v533
      %v535 = vpop.f32.mrf.mxu0
      %v536 = vpop.f32.mrf.mxu0
      %v537 = vadd.f32 0.0, %v536
      %v538 = vpop.f32.mrf.mxu0
      %539 = vmatprep.mubr.bf16.mxu0 0
      %540 = vmatmul.mubr.bf16.gmra.mxu0 %v449
      %v541 = vpop.f32.mrf.mxu0
      %v542 = vadd.f32 0.0, %v541
      %v543 = vpop.f32.mrf.mxu0
      %v544 = vpop.f32.mrf.mxu0
      %v545 = vadd.f32 0.0, %v544
      %v546 = vpop.f32.mrf.mxu0
      %547 = vdwg.mxu0
      %v548 = vadd.f32 %v370, %v486
      %v549 = vadd.f32 %v371, %v489
      %v550 = vadd.f32 %v372, %v494
      %v551 = vadd.f32 %v373, %v497
      %v552 = vadd.f32 %v374, %v502
      %v553 = vadd.f32 %v375, %v505
      %v554 = vadd.f32 %v376, %v510
      %v555 = vadd.f32 %v377, %v513
      %v556 = vadd.f32 %v378, %v518
      %v557 = vadd.f32 %v379, %v521
      %v558 = vadd.f32 %v380, %v526
      %v559 = vadd.f32 %v381, %v529
      %v560 = vadd.f32 %v382, %v534
      %v561 = vadd.f32 %v383, %v537
      %v562 = vadd.f32 %v384, %v542
      %v563 = vadd.f32 %v385, %v545
      %564 = vst [vmem:[#allocation3] sm:$0xff] %v548
      %565 = vst [vmem:[#allocation3 + $0x8] sm:$0xff] %v549
      %566 = vst [vmem:[#allocation3 + $0x10] sm:$0xff] %v550
      %567 = vst [vmem:[#allocation3 + $0x18] sm:$0xff] %v551
      %568 = vst [vmem:[#allocation3 + $0x20] sm:$0xff] %v552
      %569 = vst [vmem:[#allocation3 + $0x28] sm:$0xff] %v553
      %570 = vst [vmem:[#allocation3 + $0x30] sm:$0xff] %v554
      %571 = vst [vmem:[#allocation3 + $0x38] sm:$0xff] %v555
      %572 = vst [vmem:[#allocation3 + $0x40] sm:$0xff] %v556
      %573 = vst [vmem:[#allocation3 + $0x48] sm:$0xff] %v557
      %574 = vst [vmem:[#allocation3 + $0x50] sm:$0xff] %v558
      %575 = vst [vmem:[#allocation3 + $0x58] sm:$0xff] %v559
      %576 = vst [vmem:[#allocation3 + $0x60] sm:$0xff] %v560
      %577 = vst [vmem:[#allocation3 + $0x68] sm:$0xff] %v561
      %578 = vst [vmem:[#allocation3 + $0x70] sm:$0xff] %v562
      %579 = vst [vmem:[#allocation3 + $0x78] sm:$0xff] %v563
      %v580 = vld [vmem:[#allocation4] sm:$0xff]
      %v581 = vld [vmem:[#allocation4 + $0x8] sm:$0xff]
      %v582 = vld [vmem:[#allocation4 + $0x10] sm:$0xff]
      %v583 = vld [vmem:[#allocation4 + $0x18] sm:$0xff]
      %v584 = vld [vmem:[#allocation4 + $0x20] sm:$0xff]
      %v585 = vld [vmem:[#allocation4 + $0x28] sm:$0xff]
      %v586 = vld [vmem:[#allocation4 + $0x30] sm:$0xff]
      %v587 = vld [vmem:[#allocation4 + $0x38] sm:$0xff]
      %v588 = vld [vmem:[#allocation4 + $0x40] sm:$0xff]
      %v589 = vld [vmem:[#allocation4 + $0x48] sm:$0xff]
      %v590 = vld [vmem:[#allocation4 + $0x50] sm:$0xff]
      %v591 = vld [vmem:[#allocation4 + $0x58] sm:$0xff]
      %v592 = vld [vmem:[#allocation4 + $0x60] sm:$0xff]
      %v593 = vld [vmem:[#allocation4 + $0x68] sm:$0xff]
      %v594 = vld [vmem:[#allocation4 + $0x70] sm:$0xff]
      %v595 = vld [vmem:[#allocation4 + $0x78] sm:$0xff]
      %v604 = vunpack.c.l.b16 %v260
      %v605 = vunpack.c.l.b16 %v261
      %v606 = vunpack.c.l.b16 %v262
      %v607 = vunpack.c.l.b16 %v263
      %v608 = vunpack.c.l.b16 %v264
      %v609 = vunpack.c.l.b16 %v265
      %v610 = vunpack.c.l.b16 %v266
      %v611 = vunpack.c.l.b16 %v267
      %v612 = vpack.c.b16 %v605, %v604
      %v613 = vpack.c.b16 %v607, %v606
      %v614 = vpack.c.b16 %v609, %v608
      %v615 = vpack.c.b16 %v611, %v610
      %620 = vxpose.xlu0.c.b16.start [1/8] %v612, 128
      %621 = vxpose.xlu0.c.b16.cont [2/8] %v613, 128
      %622 = vxpose.xlu0.c.b16.cont [3/8] %v614, 128
      %623 = vxpose.xlu0.c.b16.cont [4/8] %v615, 128
      %624 = vxpose.xlu0.c.b16.cont [5/8] 0, 128
      %625 = vxpose.xlu0.c.b16.cont [6/8] 0, 128
      %626 = vxpose.xlu0.c.b16.cont [7/8] 0, 128
      %627 = vxpose.xlu0.c.b16.end [8/8] 0, 128
      %v628 = vpop.trf.xlu0
      %v629 = vpop.trf.xlu0
      %v630 = vpop.trf.xlu0
      %v631 = vpop.trf.xlu0
      %v632 = vpop.trf.xlu0
      %v633 = vpop.trf.xlu0
      %v634 = vpop.trf.xlu0
      %v635 = vpop.trf.xlu0
      %v637 = vsel %vm426, %v628, 0
      %v640 = vsel %vm426, %v629, 0
      %v643 = vsel %vm426, %v630, 0
      %v646 = vsel %vm426, %v631, 0
      %v649 = vsel %vm426, %v632, 0
      %v652 = vsel %vm426, %v633, 0
      %v655 = vsel %vm426, %v634, 0
      %v658 = vsel %vm426, %v635, 0
      %660 = vmatprep.subr.bf16.mxu0 0
      %661 = vmatpush1.bf16.msra.mxu0 0
      %662 = vmatprep.subr.bf16.mxu0 0
      %663 = vmatpush1.bf16.msra.mxu0 0
      %664 = vmatprep.subr.bf16.mxu0 0
      %665 = vmatpush1.bf16.msra.mxu0 0
      %666 = vmatprep.subr.bf16.mxu0 0
      %667 = vmatpush1.bf16.msra.mxu0 0
      %668 = vmatprep.subr.bf16.mxu0 0
      %669 = vmatpush1.bf16.msra.mxu0 %v615
      %670 = vmatprep.subr.bf16.mxu0 0
      %671 = vmatpush1.bf16.msra.mxu0 %v614
      %672 = vmatprep.subr.bf16.mxu0 0
      %673 = vmatpush1.bf16.msra.mxu0 %v613
      %674 = vmatprep.subr.bf16.mxu0 0
      %675 = vmatpush1.bf16.msra.mxu0 %v612
      %676 = vmatprep.subr.bf16.mxu0 0
      %677 = vmatpush2.bf16.msra.mxu0 0
      %678 = vmatprep.subr.bf16.mxu0 0
      %679 = vmatpush2.bf16.msra.mxu0 0
      %680 = vmatprep.subr.bf16.mxu0 0
      %681 = vmatpush2.bf16.msra.mxu0 0
      %682 = vmatprep.subr.bf16.mxu0 0
      %683 = vmatpush2.bf16.msra.mxu0 0
      %684 = vmatprep.subr.bf16.mxu0 0
      %685 = vmatpush2.bf16.msra.mxu0 0
      %686 = vmatprep.subr.bf16.mxu0 0
      %687 = vmatpush2.bf16.msra.mxu0 0
      %688 = vmatprep.subr.bf16.mxu0 0
      %689 = vmatpush2.bf16.msra.mxu0 0
      %690 = vmatprep.subr.bf16.mxu0 0
      %691 = vmatpush2.bf16.msra.mxu0 0
      %692 = vmatprep.mubr.bf16.mxu0 0
      %693 = vmatmul.mubr.bf16.gmra.mxu0 %v637
      %v694 = vpop.f32.mrf.mxu0
      %v695 = vadd.f32 0.0, %v694
      %v696 = vpop.f32.mrf.mxu0
      %v697 = vpop.f32.mrf.mxu0
      %v698 = vadd.f32 0.0, %v697
      %v699 = vpop.f32.mrf.mxu0
      %700 = vmatprep.mubr.bf16.mxu0 0
      %701 = vmatmul.mubr.bf16.gmra.mxu0 %v640
      %v702 = vpop.f32.mrf.mxu0
      %v703 = vadd.f32 0.0, %v702
      %v704 = vpop.f32.mrf.mxu0
      %v705 = vpop.f32.mrf.mxu0
      %v706 = vadd.f32 0.0, %v705
      %v707 = vpop.f32.mrf.mxu0
      %708 = vmatprep.mubr.bf16.mxu0 0
      %709 = vmatmul.mubr.bf16.gmra.mxu0 %v643
      %v710 = vpop.f32.mrf.mxu0
      %v711 = vadd.f32 0.0, %v710
      %v712 = vpop.f32.mrf.mxu0
      %v713 = vpop.f32.mrf.mxu0
      %v714 = vadd.f32 0.0, %v713
      %v715 = vpop.f32.mrf.mxu0
      %716 = vmatprep.mubr.bf16.mxu0 0
      %717 = vmatmul.mubr.bf16.gmra.mxu0 %v646
      %v718 = vpop.f32.mrf.mxu0
      %v719 = vadd.f32 0.0, %v718
      %v720 = vpop.f32.mrf.mxu0
      %v721 = vpop.f32.mrf.mxu0
      %v722 = vadd.f32 0.0, %v721
      %v723 = vpop.f32.mrf.mxu0
      %724 = vmatprep.mubr.bf16.mxu0 0
      %725 = vmatmul.mubr.bf16.gmra.mxu0 %v649
      %v726 = vpop.f32.mrf.mxu0
      %v727 = vadd.f32 0.0, %v726
      %v728 = vpop.f32.mrf.mxu0
      %v729 = vpop.f32.mrf.mxu0
      %v730 = vadd.f32 0.0, %v729
      %v731 = vpop.f32.mrf.mxu0
      %732 = vmatprep.mubr.bf16.mxu0 0
      %733 = vmatmul.mubr.bf16.gmra.mxu0 %v652
      %v734 = vpop.f32.mrf.mxu0
      %v735 = vadd.f32 0.0, %v734
      %v736 = vpop.f32.mrf.mxu0
      %v737 = vpop.f32.mrf.mxu0
      %v738 = vadd.f32 0.0, %v737
      %v739 = vpop.f32.mrf.mxu0
      %740 = vmatprep.mubr.bf16.mxu0 0
      %741 = vmatmul.mubr.bf16.gmra.mxu0 %v655
      %v742 = vpop.f32.mrf.mxu0
      %v743 = vadd.f32 0.0, %v742
      %v744 = vpop.f32.mrf.mxu0
      %v745 = vpop.f32.mrf.mxu0
      %v746 = vadd.f32 0.0, %v745
      %v747 = vpop.f32.mrf.mxu0
      %748 = vmatprep.mubr.bf16.mxu0 0
      %749 = vmatmul.mubr.bf16.gmra.mxu0 %v658
      %v750 = vpop.f32.mrf.mxu0
      %v751 = vadd.f32 0.0, %v750
      %v752 = vpop.f32.mrf.mxu0
      %v753 = vpop.f32.mrf.mxu0
      %v754 = vadd.f32 0.0, %v753
      %v755 = vpop.f32.mrf.mxu0
      %756 = vdwg.mxu0
      %v757 = vadd.f32 %v580, %v695
      %v758 = vadd.f32 %v581, %v698
      %v759 = vadd.f32 %v582, %v703
      %v760 = vadd.f32 %v583, %v706
      %v761 = vadd.f32 %v584, %v711
      %v762 = vadd.f32 %v585, %v714
      %v763 = vadd.f32 %v586, %v719
      %v764 = vadd.f32 %v587, %v722
      %v765 = vadd.f32 %v588, %v727
      %v766 = vadd.f32 %v589, %v730
      %v767 = vadd.f32 %v590, %v735
      %v768 = vadd.f32 %v591, %v738
      %v769 = vadd.f32 %v592, %v743
      %v770 = vadd.f32 %v593, %v746
      %v771 = vadd.f32 %v594, %v751
      %v772 = vadd.f32 %v595, %v754
      %773 = vst [vmem:[#allocation4] sm:$0xff] %v757
      %774 = vst [vmem:[#allocation4 + $0x8] sm:$0xff] %v758
      %775 = vst [vmem:[#allocation4 + $0x10] sm:$0xff] %v759
      %776 = vst [vmem:[#allocation4 + $0x18] sm:$0xff] %v760
      %777 = vst [vmem:[#allocation4 + $0x20] sm:$0xff] %v761
      %778 = vst [vmem:[#allocation4 + $0x28] sm:$0xff] %v762
      %779 = vst [vmem:[#allocation4 + $0x30] sm:$0xff] %v763
      %780 = vst [vmem:[#allocation4 + $0x38] sm:$0xff] %v764
      %781 = vst [vmem:[#allocation4 + $0x40] sm:$0xff] %v765
      %782 = vst [vmem:[#allocation4 + $0x48] sm:$0xff] %v766
      %783 = vst [vmem:[#allocation4 + $0x50] sm:$0xff] %v767
      %784 = vst [vmem:[#allocation4 + $0x58] sm:$0xff] %v768
      %785 = vst [vmem:[#allocation4 + $0x60] sm:$0xff] %v769
      %786 = vst [vmem:[#allocation4 + $0x68] sm:$0xff] %v770
      %787 = vst [vmem:[#allocation4 + $0x70] sm:$0xff] %v771
      %788 = vst [vmem:[#allocation4 + $0x78] sm:$0xff] %v772
      // Predicated region
      $region37: #{a_call__.11} parent=27 // pred_check
        %p789 = pneg %p268
      $region38: #{a_call__.11} parent=27 // pred_check_branch
        %791 = sbr.rel (%p789) target = $region40
      $region39: #{a_call__.11} parent=27 // pred_region
        %v792 = vld [vmem:[#allocation3] sm:$0xff]
        %v793 = vld [vmem:[#allocation3 + $0x8] sm:$0xff]
        %v794 = vld [vmem:[#allocation3 + $0x10] sm:$0xff]
        %v795 = vld [vmem:[#allocation3 + $0x18] sm:$0xff]
        %v796 = vld [vmem:[#allocation3 + $0x20] sm:$0xff]
        %v797 = vld [vmem:[#allocation3 + $0x28] sm:$0xff]
        %v798 = vld [vmem:[#allocation3 + $0x30] sm:$0xff]
        %v799 = vld [vmem:[#allocation3 + $0x38] sm:$0xff]
        %v800 = vld [vmem:[#allocation3 + $0x40] sm:$0xff]
        %v801 = vld [vmem:[#allocation3 + $0x48] sm:$0xff]
        %v802 = vld [vmem:[#allocation3 + $0x50] sm:$0xff]
        %v803 = vld [vmem:[#allocation3 + $0x58] sm:$0xff]
        %v804 = vld [vmem:[#allocation3 + $0x60] sm:$0xff]
        %v805 = vld [vmem:[#allocation3 + $0x68] sm:$0xff]
        %v806 = vld [vmem:[#allocation3 + $0x70] sm:$0xff]
        %v807 = vld [vmem:[#allocation3 + $0x78] sm:$0xff]
        %v808 = vld [vmem:[#allocation4] sm:$0xff]
        %v809 = vld [vmem:[#allocation4 + $0x8] sm:$0xff]
        %v810 = vld [vmem:[#allocation4 + $0x10] sm:$0xff]
        %v811 = vld [vmem:[#allocation4 + $0x18] sm:$0xff]
        %v812 = vld [vmem:[#allocation4 + $0x20] sm:$0xff]
        %v813 = vld [vmem:[#allocation4 + $0x28] sm:$0xff]
        %v814 = vld [vmem:[#allocation4 + $0x30] sm:$0xff]
        %v815 = vld [vmem:[#allocation4 + $0x38] sm:$0xff]
        %v816 = vld [vmem:[#allocation4 + $0x40] sm:$0xff]
        %v817 = vld [vmem:[#allocation4 + $0x48] sm:$0xff]
        %v818 = vld [vmem:[#allocation4 + $0x50] sm:$0xff]
        %v819 = vld [vmem:[#allocation4 + $0x58] sm:$0xff]
        %v820 = vld [vmem:[#allocation4 + $0x60] sm:$0xff]
        %v821 = vld [vmem:[#allocation4 + $0x68] sm:$0xff]
        %v822 = vld [vmem:[#allocation4 + $0x70] sm:$0xff]
        %v823 = vld [vmem:[#allocation4 + $0x78] sm:$0xff]
        %v824 = vsub.f32 %v792, %v808
        %v825 = vsub.f32 %v793, %v809
        %v826 = vsub.f32 %v794, %v810
        %v827 = vsub.f32 %v795, %v811
        %v828 = vsub.f32 %v796, %v812
        %v829 = vsub.f32 %v797, %v813
        %v830 = vsub.f32 %v798, %v814
        %v831 = vsub.f32 %v799, %v815
        %v832 = vsub.f32 %v800, %v816
        %v833 = vsub.f32 %v801, %v817
        %v834 = vsub.f32 %v802, %v818
        %v835 = vsub.f32 %v803, %v819
        %v836 = vsub.f32 %v804, %v820
        %v837 = vsub.f32 %v805, %v821
        %v838 = vsub.f32 %v806, %v822
        %v839 = vsub.f32 %v807, %v823
        %v840 = vmul.f32 %v824, 0.00012207031
        %v841 = vmul.f32 %v825, 0.00012207031
        %v842 = vmul.f32 %v826, 0.00012207031
        %v843 = vmul.f32 %v827, 0.00012207031
        %v844 = vmul.f32 %v828, 0.00012207031
        %v845 = vmul.f32 %v829, 0.00012207031
        %v846 = vmul.f32 %v830, 0.00012207031
        %v847 = vmul.f32 %v831, 0.00012207031
        %v848 = vmul.f32 %v832, 0.00012207031
        %v849 = vmul.f32 %v833, 0.00012207031
        %v850 = vmul.f32 %v834, 0.00012207031
        %v851 = vmul.f32 %v835, 0.00012207031
        %v852 = vmul.f32 %v836, 0.00012207031
        %v853 = vmul.f32 %v837, 0.00012207031
        %v854 = vmul.f32 %v838, 0.00012207031
        %v855 = vmul.f32 %v839, 0.00012207031
        %v856 = vand.u32 2147483647, %v840
        %v857 = vand.u32 2147483647, %v841
        %v858 = vand.u32 2147483647, %v842
        %v859 = vand.u32 2147483647, %v843
        %v860 = vand.u32 2147483647, %v844
        %v861 = vand.u32 2147483647, %v845
        %v862 = vand.u32 2147483647, %v846
        %v863 = vand.u32 2147483647, %v847
        %v864 = vand.u32 2147483647, %v848
        %v865 = vand.u32 2147483647, %v849
        %v866 = vand.u32 2147483647, %v850
        %v867 = vand.u32 2147483647, %v851
        %v868 = vand.u32 2147483647, %v852
        %v869 = vand.u32 2147483647, %v853
        %v870 = vand.u32 2147483647, %v854
        %v871 = vand.u32 2147483647, %v855
        %v872 = vadd.f32 %v856, %v857
        %v873 = vadd.f32 %v872, %v858
        %v874 = vadd.f32 %v873, %v859
        %v875 = vadd.f32 %v874, %v860
        %v876 = vadd.f32 %v875, %v861
        %v877 = vadd.f32 %v876, %v862
        %v878 = vadd.f32 %v877, %v863
        %v879 = vadd.f32 %v878, %v864
        %v880 = vadd.f32 %v879, %v865
        %v881 = vadd.f32 %v880, %v866
        %v882 = vadd.f32 %v881, %v867
        %v883 = vadd.f32 %v882, %v868
        %v884 = vadd.f32 %v883, %v869
        %v885 = vadd.f32 %v884, %v870
        %v886 = vadd.f32 %v885, %v871
        %887 = vadd.xlane.f32.xlu0 %v886
        %v888 = vpop.xlane.xlu0 %887
        %v889 = vrot.slane %v888, 4
        %v890 = vadd.f32 %v888, %v889
        %v891 = vrot.slane %v890, 2
        %v892 = vadd.f32 %v890, %v891
        %v893 = vrot.slane %v892, 1
        %v894 = vadd.f32 %v892, %v893
        %s895 = vtos %v894
        %v896 = vstv %s895
        %897 = vst [vmem:[%s250] sm:$0xff] %v896
      $region40: #{a_call__.11} parent=27 // pred_fallthru
        _
      %p898 = scmp.lt.s32.totalorder %s19, 1
      %s899 = scalar_select %p898, %s19, 1
      %s900 = smul.addr %s899, 8
      %s901 = scalar_lea.vmem %s2, %s900
      %p902 = scmp.lt.s32.totalorder %s19, 1
      %s903 = scalar_select %p902, %s19, 1
      %s904 = smul.addr %s903, 8
      %s905 = scalar_lea.vmem %s3, %s904
      // Predicated region
      $region41: #{a_call__.11} parent=27 // pred_check
        %p906 = pneg %p103
      $region42: #{a_call__.11} parent=27 // pred_check_branch
        %908 = sbr.rel (%p906) target = $region44
      $region43: #{a_call__.11} parent=27 // pred_region
        _
      $region44: #{a_call__.11} parent=27 // pred_fallthru
        _
      // Predicated region
      $region45: #{a_call__.11} parent=27 // pred_check
        %p909 = pneg %p129
      $region46: #{a_call__.11} parent=27 // pred_check_branch
        %911 = sbr.rel (%p909) target = $region48
      $region47: #{a_call__.11} parent=27 // pred_region
        _
      $region48: #{a_call__.11} parent=27 // pred_fallthru
        _
    $region28: #{a_call__.11} parent=5 // pred_fallthru
      _
    %p912 = scmp.le.s32.totalorder 2, %s10
    // Predicated region
    $region49: #{a_call__.11} parent=5 // pred_check
      %p913 = pneg %p912
    $region50: #{a_call__.11} parent=5 // pred_check_branch
      %915 = sbr.rel (%p913) target = $region52
    $region51: #{a_call__.11} parent=5 // pred_region
      %s916 = ssub.s32 %s10, 2
      // Predicated region
      $region53: #{a_call__.11} parent=51 // pred_check
        %p917 = pneg %p109
      $region54: #{a_call__.11} parent=51 // pred_check_branch
        %919 = sbr.rel (%p917) target = $region56
      $region55: #{a_call__.11} parent=51 // pred_region
        %p920 = scmp.lt.s32.totalorder %s21, 1
        %s921 = scalar_select %p920, %s21, 1
        %s922 = smul.addr %s921, 8
        %s923 = scalar_lea.vmem %s2, %s922
      $region56: #{a_call__.11} parent=51 // pred_fallthru
        _
      // Predicated region
      $region57: #{a_call__.11} parent=51 // pred_check
        %p924 = pneg %p135
      $region58: #{a_call__.11} parent=51 // pred_check_branch
        %926 = sbr.rel (%p924) target = $region60
      $region59: #{a_call__.11} parent=51 // pred_region
        %p927 = scmp.lt.s32.totalorder %s21, 1
        %s928 = scalar_select %p927, %s21, 1
        %s929 = smul.addr %s928, 8
        %s930 = scalar_lea.vmem %s3, %s929
      $region60: #{a_call__.11} parent=51 // pred_fallthru
        _
    $region52: #{a_call__.11} parent=5 // pred_fallthru
      _
  $region6: #{a_call__.11} parent=0 // loop_footer
    %s14 = sadd.s32 1, %s10
  $region7: #{a_call__.11} parent=0 // loop_footer_branch
    %9 = sbr.rel target = $region3
  $region8: #{a_call__.11} parent=0 // loop_exit
    _

// kernel: a_call__.9
$region0: #{a_call__.9}
  #allocation0 [shape = 'u32[]', space=smem, size = 0x4, offset = 0x4, fixed_abs, tag = 'smem constant byte address 0x4 - core index']
  #allocation1 [shape = 'u32[144,128]{1,0:T(1,128)}', space=vmem, size = 0x12000, scoped, tag = 'internal scratch']
  %s0 = inlined_call_operand.vmem [shape: bf16[4,10,10,128], index: 0, kind: input, shape index: {}]
  %s1 = inlined_call_operand.vmem [shape: bf16[9,128,128], index: 1, kind: input, shape index: {}]
  %s2 = inlined_call_operand.vmem [shape: f32[1,128], index: 2, kind: input, shape index: {}]
  %s3 = inlined_call_operand.vmem [shape: bf16[4,8,8,128], index: 3, kind: output, shape index: {}]
  %s4 = sld [smem:[#allocation0]]
  $region45: #{a_call__.9} parent=0
    _
  %s6 = ssub.s32 1, %s4
  %s7 = scalar_select 0, %s6, %s4
  loop: start=0, step=1, limit=6
  $region2: #{a_call__.9} parent=0 // loop_pre_header
    _
  $region3: #{a_call__.9} parent=0 // loop_header
    %s9 = sphi 0, %s13
    %p10 = scmp.ge.s32.totalorder %s9, 6
    %s16 = sphi 0, %s28
    %s17 = sphi 0, %s24
    %s18 = sphi 0, %s16
    %s19 = sphi 0, %s17
    %s20 = sphi 0, %s18
    %s21 = sphi 0, %s19
    %s33 = sphi 0, %s35
    %s36 = sphi 0, %s33
    %s37 = sphi 0, %s36
    %s53 = sphi 0, %s37
    %s57 = sphi 0, %s57
    %s59 = sphi 0, %s57
    %s60 = sphi 0, %s59
    %s74 = sphi 0, %s60
    %s78 = sphi 0, %s78
    %s80 = sphi 0, %s78
    %s81 = sphi 0, %s80
    %s95 = sphi 0, %s81
    %s103 = sphi 0, %s105
    %s106 = sphi 0, %s103
    %s107 = sphi 0, %s106
    %s123 = sphi 0, %s107
  $region4: #{a_call__.9} parent=0 // loop_header_branch
    %12 = sbr.rel (%p10) target = $region8
  $region5: #{a_call__.9} parent=0 // loop_body
    %s14 = ssub.s32 %s9, 1
    %s15 = ssub.s32 %s9, 2
    %s22 = sadd.s32 1, %s17
    %p23 = scmp.ge.s32.totalorder %s22, 1
    %s24 = scalar_select %p23, 0, %s22
    %s25 = sadd.s32 1, %s16
    %s26 = scalar_select %p23, %s25, %s16
    %p27 = scmp.ge.s32.totalorder %s26, 4
    %s28 = scalar_select %p27, 0, %s26
    %s29 = sadd.s32 %s16, %s17
    %s30 = sadd.s32 %s28, %s24
    %s31 = ssub.s32 %s29, %s30
    %p32 = scmp.eq.s32.totalorder %s31, 0
    %s34 = sadd.s32 %s33, 1
    %s35 = scalar_select %p32, %s33, %s34
    %p38 = pneg %p32
    %p39 = scmp.eq.s32.totalorder %s9, 3
    %p40 = por %p38, %p39
    %p41 = scmp.ne.s32.totalorder %s33, %s36
    %p42 = scmp.eq.s32.totalorder %s9, 0
    %p43 = por %p41, %p42
    %p44 = scmp.ne.s32.totalorder %s33, %s36
    %p45 = scmp.eq.s32.totalorder %s14, 3
    %p46 = por %p44, %p45
    %p47 = scmp.ne.s32.totalorder %s36, %s37
    %p48 = scmp.eq.s32.totalorder %s14, 0
    %p49 = por %p47, %p48
    %p50 = scmp.ne.s32.totalorder %s36, %s37
    %p51 = scmp.eq.s32.totalorder %s15, 3
    %p52 = por %p50, %p51
    %p54 = scmp.ne.s32.totalorder %s37, %s53
    %p55 = scmp.eq.s32.totalorder %s15, 0
    %p56 = por %p54, %p55
    %s58 = sadd.s32 %s57, 1
    %p61 = scmp.eq.s32.totalorder %s9, 3
    %p62 = scmp.ne.s32.totalorder %s57, %s59
    %p63 = scmp.eq.s32.totalorder %s9, 0
    %p64 = por %p62, %p63
    %p65 = scmp.ne.s32.totalorder %s57, %s59
    %p66 = scmp.eq.s32.totalorder %s14, 3
    %p67 = por %p65, %p66
    %p68 = scmp.ne.s32.totalorder %s59, %s60
    %p69 = scmp.eq.s32.totalorder %s14, 0
    %p70 = por %p68, %p69
    %p71 = scmp.ne.s32.totalorder %s59, %s60
    %p72 = scmp.eq.s32.totalorder %s15, 3
    %p73 = por %p71, %p72
    %p75 = scmp.ne.s32.totalorder %s60, %s74
    %p76 = scmp.eq.s32.totalorder %s15, 0
    %p77 = por %p75, %p76
    %s79 = sadd.s32 %s78, 1
    %p82 = scmp.eq.s32.totalorder %s9, 3
    %p83 = scmp.ne.s32.totalorder %s78, %s80
    %p84 = scmp.eq.s32.totalorder %s9, 0
    %p85 = por %p83, %p84
    %p86 = scmp.ne.s32.totalorder %s78, %s80
    %p87 = scmp.eq.s32.totalorder %s14, 3
    %p88 = por %p86, %p87
    %p89 = scmp.ne.s32.totalorder %s80, %s81
    %p90 = scmp.eq.s32.totalorder %s14, 0
    %p91 = por %p89, %p90
    %p92 = scmp.ne.s32.totalorder %s80, %s81
    %p93 = scmp.eq.s32.totalorder %s15, 3
    %p94 = por %p92, %p93
    %p96 = scmp.ne.s32.totalorder %s81, %s95
    %p97 = scmp.eq.s32.totalorder %s15, 0
    %p98 = por %p96, %p97
    %s99 = ssub.s32 %s16, %s28
    %s100 = ssub.s32 %s17, %s24
    %s101 = sor.u32 %s99, %s100
    %p102 = scmp.eq.s32.totalorder %s101, 0
    %s104 = sadd.s32 %s103, 1
    %s105 = scalar_select %p102, %s103, %s104
    %p108 = pneg %p102
    %p109 = scmp.eq.s32.totalorder %s9, 3
    %p110 = por %p108, %p109
    %p111 = scmp.ne.s32.totalorder %s103, %s106
    %p112 = scmp.eq.s32.totalorder %s9, 0
    %p113 = por %p111, %p112
    %p114 = scmp.ne.s32.totalorder %s103, %s106
    %p115 = scmp.eq.s32.totalorder %s14, 3
    %p116 = por %p114, %p115
    %p117 = scmp.ne.s32.totalorder %s106, %s107
    %p118 = scmp.eq.s32.totalorder %s14, 0
    %p119 = por %p117, %p118
    %p120 = scmp.ne.s32.totalorder %s106, %s107
    %p121 = scmp.eq.s32.totalorder %s15, 3
    %p122 = por %p120, %p121
    %p124 = scmp.ne.s32.totalorder %s107, %s123
    %p125 = scmp.eq.s32.totalorder %s15, 0
    %p126 = por %p124, %p125
    %p127 = scmp.le.s32.totalorder 1, %s9
    %p128 = scmp.lt.s32.totalorder %s9, 5
    %p129 = pnand %p127, %p128
    %p130 = pneg %p129
    // Predicated region
    $region9: #{a_call__.9} parent=5 // pred_check
      _
    $region10: #{a_call__.9} parent=5 // pred_check_branch
      %132 = sbr.rel (%p129) target = $region12
    $region11: #{a_call__.9} parent=5 // pred_region
      %s133 = ssub.s32 %s9, 1
      // Predicated region
      $region13: #{a_call__.9} parent=11 // pred_check
        %p134 = pneg %p70
      $region14: #{a_call__.9} parent=11 // pred_check_branch
        %136 = sbr.rel (%p134) target = $region16
      $region15: #{a_call__.9} parent=11 // pred_region
        _
      $region16: #{a_call__.9} parent=11 // pred_fallthru
        _
      // Predicated region
      $region17: #{a_call__.9} parent=11 // pred_check
        %p137 = pneg %p91
      $region18: #{a_call__.9} parent=11 // pred_check_branch
        %139 = sbr.rel (%p137) target = $region20
      $region19: #{a_call__.9} parent=11 // pred_region
        _
      $region20: #{a_call__.9} parent=11 // pred_fallthru
        _
    $region12: #{a_call__.9} parent=5 // pred_fallthru
      _
    %p140 = scmp.lt.s32.totalorder %s9, 4
    // Predicated region
    $region21: #{a_call__.9} parent=5 // pred_check
      %p141 = pneg %p140
    $region22: #{a_call__.9} parent=5 // pred_check_branch
      %143 = sbr.rel (%p141) target = $region24
    $region23: #{a_call__.9} parent=5 // pred_region
      // Predicated region
      $region25: #{a_call__.9} parent=23 // pred_check
        %p144 = pneg %p43
      $region26: #{a_call__.9} parent=23 // pred_check_branch
        %146 = sbr.rel (%p144) target = $region28
      $region27: #{a_call__.9} parent=23 // pred_region
        %s147 = sadd.s32 %s16, %s17
        %p148 = scmp.lt.s32.totalorder %s147, 3
        %s149 = scalar_select %p148, %s147, 3
        %s150 = smul.addr %s149, 20
        %s151 = smul.addr %s150, 4
        %s152 = scalar_lea.vmem %s0, %s151
        %s153 = sadd.s32 %s16, %s17
      $region28: #{a_call__.9} parent=23 // pred_fallthru
        _
    $region24: #{a_call__.9} parent=5 // pred_fallthru
      _
    %p154 = scmp.le.s32.totalorder 1, %s9
    %p155 = scmp.lt.s32.totalorder %s9, 5
    %p156 = pnand %p154, %p155
    %p157 = pneg %p156
    // Predicated region
    $region29: #{a_call__.9} parent=5 // pred_check
      _
    $region30: #{a_call__.9} parent=5 // pred_check_branch
      %159 = sbr.rel (%p156) target = $region32
    $region31: #{a_call__.9} parent=5 // pred_region
      %s160 = ssub.s32 %s9, 1
      %s161 = sadd.s32 %s18, %s19
      %p162 = scmp.lt.s32.totalorder %s161, 3
      %s163 = scalar_select %p162, %s161, 3
      %s164 = smul.addr %s163, 20
      %s165 = smul.addr %s164, 4
      %s166 = scalar_lea.vmem %s0, %s165
      %p167 = pneg %p49
      %p168 = pneg %p46
      %p169 = pneg %p70
      %p170 = pneg %p67
      %p171 = pneg %p91
      %p172 = pneg %p88
      %p173 = pneg %p119
      %p174 = pneg %p116
      %s175 = smul.u32 8, %s19
      %p176 = scmp.lt.s32.totalorder %s18, 3
      %s177 = scalar_select %p176, %s18, 3
      %p178 = scmp.lt.s32.totalorder %s175, 7
      %s179 = scalar_select %p178, %s175, 7
      %s180 = smul.addr %s177, 8
      %s181 = sadd.s32 %s179, %s180
      %s182 = smul.addr %s181, 4
      %s183 = scalar_lea.vmem %s3, %s182
      %s184 = sadd.s32 %s18, %s19
      %p185 = scmp.lt.s32.totalorder %s184, 3
      %s186 = scalar_select %p185, %s184, 3
      %s187 = smul.addr %s186, 20
      %s188 = smul.addr %s187, 4
      %s189 = scalar_lea.vmem %s0, %s188
      %s190 = sadd.s32 %s18, %s19
      %s191 = smul.u32 8, %s19
      %p192 = scmp.lt.s32.totalorder %s18, 3
      %s193 = scalar_select %p192, %s18, 3
      %p194 = scmp.lt.s32.totalorder %s191, 7
      %s195 = scalar_select %p194, %s191, 7
      %s196 = smul.addr %s193, 8
      %s197 = sadd.s32 %s195, %s196
      %s198 = smul.addr %s197, 4
      %s199 = scalar_lea.vmem %s3, %s198
      %s200 = smul.u32 8, %s19
      %v202 = vld [vmem:[%s189] sm:$0xf]
      %v203 = vld [vmem:[%s189 + $0x4] sm:$0x1]
      %v204 = vld [vmem:[%s189 + $0x8] sm:$0xf]
      %v205 = vld [vmem:[%s189 + $0xc] sm:$0x1]
      %v206 = vld [vmem:[%s189 + $0x10] sm:$0xf]
      %v207 = vld [vmem:[%s189 + $0x14] sm:$0x1]
      %v208 = vld [vmem:[%s189 + $0x18] sm:$0xf]
      %v209 = vld [vmem:[%s189 + $0x1c] sm:$0x1]
      %v210 = vld [vmem:[%s189 + $0x20] sm:$0xf]
      %v211 = vld [vmem:[%s189 + $0x24] sm:$0x1]
      %v212 = vld [vmem:[%s189 + $0x28] sm:$0xf]
      %v213 = vld [vmem:[%s189 + $0x2c] sm:$0x1]
      %v214 = vld [vmem:[%s189 + $0x30] sm:$0xf]
      %v215 = vld [vmem:[%s189 + $0x34] sm:$0x1]
      %v216 = vld [vmem:[%s189 + $0x38] sm:$0xf]
      %v217 = vld [vmem:[%s189 + $0x3c] sm:$0x1]
      %v218 = vld [vmem:[%s189 + $0x40] sm:$0xf]
      %v219 = vld [vmem:[%s189 + $0x44] sm:$0x1]
      %v220 = vld [vmem:[%s189 + $0x48] sm:$0xf]
      %v221 = vld [vmem:[%s189 + $0x4c] sm:$0x1]
      %v222 = vld [vmem:[%s1] sm:$0xf]
      %v223 = vld [vmem:[%s1 + $0x4] sm:$0xf]
      %v224 = vld [vmem:[%s1 + $0x8] sm:$0xf]
      %v225 = vld [vmem:[%s1 + $0xc] sm:$0xf]
      %v226 = vld [vmem:[%s1 + $0x10] sm:$0xf]
      %v227 = vld [vmem:[%s1 + $0x14] sm:$0xf]
      %v228 = vld [vmem:[%s1 + $0x18] sm:$0xf]
      %v229 = vld [vmem:[%s1 + $0x1c] sm:$0xf]
      %v230 = vld [vmem:[%s1 + $0x20] sm:$0xf]
      %v231 = vld [vmem:[%s1 + $0x24] sm:$0xf]
      %v232 = vld [vmem:[%s1 + $0x28] sm:$0xf]
      %v233 = vld [vmem:[%s1 + $0x2c] sm:$0xf]
      %v234 = vld [vmem:[%s1 + $0x30] sm:$0xf]
      %v235 = vld [vmem:[%s1 + $0x34] sm:$0xf]
      %v236 = vld [vmem:[%s1 + $0x38] sm:$0xf]
      %v237 = vld [vmem:[%s1 + $0x3c] sm:$0xf]
      %vm238 = vsmask.f32 3328
      %vm239 = vsmask.f32 7440
      %vm240 = vmor %vm238, %vm239
      %v242 = vshrl.u32 %v202, 16
      %v244 = vrot.slane %v242, 4
      %v245 = vshll.u32 %v202, 16
      %v247 = vrot.slane %v245, 5
      %v248 = vor.u32 %v244, %v247
      %v249 = vrot.slane %v248, 4
      %v251 = vshll.u32 %v203, 16
      %v253 = vrot.slane %v251, 5
      %v254 = vsel %vm240, %v249, %v253
      %v256 = vshrl.u32 %v204, 16
      %v258 = vrot.slane %v256, 4
      %v259 = vshll.u32 %v204, 16
      %v261 = vrot.slane %v259, 5
      %v262 = vor.u32 %v258, %v261
      %v263 = vrot.slane %v262, 4
      %v265 = vshll.u32 %v205, 16
      %v267 = vrot.slane %v265, 5
      %v268 = vsel %vm240, %v263, %v267
      %v270 = vshrl.u32 %v206, 16
      %v272 = vrot.slane %v270, 4
      %v273 = vshll.u32 %v206, 16
      %v275 = vrot.slane %v273, 5
      %v276 = vor.u32 %v272, %v275
      %v277 = vrot.slane %v276, 4
      %v279 = vshll.u32 %v207, 16
      %v281 = vrot.slane %v279, 5
      %v282 = vsel %vm240, %v277, %v281
      %v284 = vshrl.u32 %v208, 16
      %v286 = vrot.slane %v284, 4
      %v287 = vshll.u32 %v208, 16
      %v289 = vrot.slane %v287, 5
      %v290 = vor.u32 %v286, %v289
      %v291 = vrot.slane %v290, 4
      %v293 = vshll.u32 %v209, 16
      %v295 = vrot.slane %v293, 5
      %v296 = vsel %vm240, %v291, %v295
      %v298 = vshrl.u32 %v210, 16
      %v300 = vrot.slane %v298, 4
      %v301 = vshll.u32 %v210, 16
      %v303 = vrot.slane %v301, 5
      %v304 = vor.u32 %v300, %v303
      %v305 = vrot.slane %v304, 4
      %v307 = vshll.u32 %v211, 16
      %v309 = vrot.slane %v307, 5
      %v310 = vsel %vm240, %v305, %v309
      %v312 = vshrl.u32 %v212, 16
      %v314 = vrot.slane %v312, 4
      %v315 = vshll.u32 %v212, 16
      %v317 = vrot.slane %v315, 5
      %v318 = vor.u32 %v314, %v317
      %v319 = vrot.slane %v318, 4
      %v321 = vshll.u32 %v213, 16
      %v323 = vrot.slane %v321, 5
      %v324 = vsel %vm240, %v319, %v323
      %v326 = vshrl.u32 %v214, 16
      %v328 = vrot.slane %v326, 4
      %v329 = vshll.u32 %v214, 16
      %v331 = vrot.slane %v329, 5
      %v332 = vor.u32 %v328, %v331
      %v333 = vrot.slane %v332, 4
      %v335 = vshll.u32 %v215, 16
      %v337 = vrot.slane %v335, 5
      %v338 = vsel %vm240, %v333, %v337
      %v340 = vshrl.u32 %v216, 16
      %v342 = vrot.slane %v340, 4
      %v343 = vshll.u32 %v216, 16
      %v345 = vrot.slane %v343, 5
      %v346 = vor.u32 %v342, %v345
      %v347 = vrot.slane %v346, 4
      %v349 = vshll.u32 %v217, 16
      %v351 = vrot.slane %v349, 5
      %v352 = vsel %vm240, %v347, %v351
      %s353 = scalar_lea.vmem %s1, 64
      %v354 = vld [vmem:[%s353] sm:$0xf]
      %v355 = vld [vmem:[%s353 + $0x4] sm:$0xf]
      %v356 = vld [vmem:[%s353 + $0x8] sm:$0xf]
      %v357 = vld [vmem:[%s353 + $0xc] sm:$0xf]
      %v358 = vld [vmem:[%s353 + $0x10] sm:$0xf]
      %v359 = vld [vmem:[%s353 + $0x14] sm:$0xf]
      %v360 = vld [vmem:[%s353 + $0x18] sm:$0xf]
      %v361 = vld [vmem:[%s353 + $0x1c] sm:$0xf]
      %v362 = vld [vmem:[%s353 + $0x20] sm:$0xf]
      %v363 = vld [vmem:[%s353 + $0x24] sm:$0xf]
      %v364 = vld [vmem:[%s353 + $0x28] sm:$0xf]
      %v365 = vld [vmem:[%s353 + $0x2c] sm:$0xf]
      %v366 = vld [vmem:[%s353 + $0x30] sm:$0xf]
      %v367 = vld [vmem:[%s353 + $0x34] sm:$0xf]
      %v368 = vld [vmem:[%s353 + $0x38] sm:$0xf]
      %v369 = vld [vmem:[%s353 + $0x3c] sm:$0xf]
      %v370 = vunpack.c.l.b16 %v254
      %v371 = vunpack.c.l.b16 %v268
      %v372 = vunpack.c.l.b16 %v282
      %v373 = vunpack.c.l.b16 %v296
      %v374 = vunpack.c.l.b16 %v310
      %v375 = vunpack.c.l.b16 %v324
      %v376 = vunpack.c.l.b16 %v338
      %v377 = vunpack.c.l.b16 %v352
      %v378 = vpack.c.b16 %v371, %v370
      %v379 = vpack.c.b16 %v373, %v372
      %v380 = vpack.c.b16 %v375, %v374
      %v381 = vpack.c.b16 %v377, %v376
      %v402 = vunpack.c.l.b16 %v354
      %v403 = vunpack.c.l.b16 %v355
      %v404 = vunpack.c.l.b16 %v356
      %v405 = vunpack.c.l.b16 %v357
      %v406 = vunpack.c.l.b16 %v358
      %v407 = vunpack.c.l.b16 %v359
      %v408 = vunpack.c.l.b16 %v360
      %v409 = vunpack.c.l.b16 %v361
      %v410 = vunpack.c.l.b16 %v362
      %v411 = vunpack.c.l.b16 %v363
      %v412 = vunpack.c.l.b16 %v364
      %v413 = vunpack.c.l.b16 %v365
      %v414 = vunpack.c.l.b16 %v366
      %v415 = vunpack.c.l.b16 %v367
      %v416 = vunpack.c.l.b16 %v368
      %v417 = vunpack.c.l.b16 %v369
      %v418 = vpack.c.b16 %v403, %v402
      %v419 = vpack.c.b16 %v405, %v404
      %v420 = vpack.c.b16 %v407, %v406
      %v421 = vpack.c.b16 %v409, %v408
      %v422 = vpack.c.b16 %v411, %v410
      %v423 = vpack.c.b16 %v413, %v412
      %v424 = vpack.c.b16 %v415, %v414
      %v425 = vpack.c.b16 %v417, %v416
      %434 = vmatprep.subr.bf16.mxu0 0
      %435 = vmatpush1.bf16.msra.mxu0 %v425
      %436 = vmatprep.subr.bf16.mxu0 0
      %437 = vmatpush1.bf16.msra.mxu0 %v424
      %438 = vmatprep.subr.bf16.mxu0 0
      %439 = vmatpush1.bf16.msra.mxu0 %v423
      %440 = vmatprep.subr.bf16.mxu0 0
      %441 = vmatpush1.bf16.msra.mxu0 %v422
      %442 = vmatprep.subr.bf16.mxu0 0
      %443 = vmatpush1.bf16.msra.mxu0 %v421
      %444 = vmatprep.subr.bf16.mxu0 0
      %445 = vmatpush1.bf16.msra.mxu0 %v420
      %446 = vmatprep.subr.bf16.mxu0 0
      %447 = vmatpush1.bf16.msra.mxu0 %v419
      %448 = vmatprep.subr.bf16.mxu0 0
      %449 = vmatpush1.bf16.msra.mxu0 %v418
      %450 = vmatprep.subr.bf16.mxu0 0
      %451 = vmatpush2.bf16.msra.mxu0 0
      %452 = vmatprep.subr.bf16.mxu0 0
      %453 = vmatpush2.bf16.msra.mxu0 0
      %454 = vmatprep.subr.bf16.mxu0 0
      %455 = vmatpush2.bf16.msra.mxu0 0
      %456 = vmatprep.subr.bf16.mxu0 0
      %457 = vmatpush2.bf16.msra.mxu0 0
      %458 = vmatprep.subr.bf16.mxu0 0
      %459 = vmatpush2.bf16.msra.mxu0 0
      %460 = vmatprep.subr.bf16.mxu0 0
      %461 = vmatpush2.bf16.msra.mxu0 0
      %462 = vmatprep.subr.bf16.mxu0 0
      %463 = vmatpush2.bf16.msra.mxu0 0
      %464 = vmatprep.subr.bf16.mxu0 0
      %465 = vmatpush2.bf16.msra.mxu0 0
      %466 = vmatprep.mubr.bf16.mxu0 0
      %467 = vmatmul.mubr.bf16.gmra.mxu0 %v378
      %v468 = vpop.f32.mrf.mxu0
      %v469 = vadd.f32 0.0, %v468
      %v470 = vpop.f32.mrf.mxu0
      %v471 = vpop.f32.mrf.mxu0
      %v472 = vadd.f32 0.0, %v471
      %v473 = vpop.f32.mrf.mxu0
      %474 = vmatprep.mubr.bf16.mxu0 0
      %475 = vmatmul.mubr.bf16.gmra.mxu0 %v379
      %v476 = vpop.f32.mrf.mxu0
      %v477 = vadd.f32 0.0, %v476
      %v478 = vpop.f32.mrf.mxu0
      %v479 = vpop.f32.mrf.mxu0
      %v480 = vadd.f32 0.0, %v479
      %v481 = vpop.f32.mrf.mxu0
      %482 = vmatprep.mubr.bf16.mxu0 0
      %483 = vmatmul.mubr.bf16.gmra.mxu0 %v380
      %v484 = vpop.f32.mrf.mxu0
      %v485 = vadd.f32 0.0, %v484
      %v486 = vpop.f32.mrf.mxu0
      %v487 = vpop.f32.mrf.mxu0
      %v488 = vadd.f32 0.0, %v487
      %v489 = vpop.f32.mrf.mxu0
      %490 = vmatprep.mubr.bf16.mxu0 0
      %491 = vmatmul.mubr.bf16.gmra.mxu0 %v381
      %v492 = vpop.f32.mrf.mxu0
      %v493 = vadd.f32 0.0, %v492
      %v494 = vpop.f32.mrf.mxu0
      %v495 = vpop.f32.mrf.mxu0
      %v496 = vadd.f32 0.0, %v495
      %v497 = vpop.f32.mrf.mxu0
      %498 = vdwg.mxu0
      %v507 = vunpack.c.l.b16 %v202
      %v508 = vunpack.c.l.b16 %v204
      %v509 = vunpack.c.l.b16 %v206
      %v510 = vunpack.c.l.b16 %v208
      %v511 = vunpack.c.l.b16 %v210
      %v512 = vunpack.c.l.b16 %v212
      %v513 = vunpack.c.l.b16 %v214
      %v514 = vunpack.c.l.b16 %v216
      %v515 = vpack.c.b16 %v508, %v507
      %v516 = vpack.c.b16 %v510, %v509
      %v517 = vpack.c.b16 %v512, %v511
      %v518 = vpack.c.b16 %v514, %v513
      %v539 = vunpack.c.l.b16 %v222
      %v540 = vunpack.c.l.b16 %v223
      %v541 = vunpack.c.l.b16 %v224
      %v542 = vunpack.c.l.b16 %v225
      %v543 = vunpack.c.l.b16 %v226
      %v544 = vunpack.c.l.b16 %v227
      %v545 = vunpack.c.l.b16 %v228
      %v546 = vunpack.c.l.b16 %v229
      %v547 = vunpack.c.l.b16 %v230
      %v548 = vunpack.c.l.b16 %v231
      %v549 = vunpack.c.l.b16 %v232
      %v550 = vunpack.c.l.b16 %v233
      %v551 = vunpack.c.l.b16 %v234
      %v552 = vunpack.c.l.b16 %v235
      %v553 = vunpack.c.l.b16 %v236
      %v554 = vunpack.c.l.b16 %v237
      %v555 = vpack.c.b16 %v540, %v539
      %v556 = vpack.c.b16 %v542, %v541
      %v557 = vpack.c.b16 %v544, %v543
      %v558 = vpack.c.b16 %v546, %v545
      %v559 = vpack.c.b16 %v548, %v547
      %v560 = vpack.c.b16 %v550, %v549
      %v561 = vpack.c.b16 %v552, %v551
      %v562 = vpack.c.b16 %v554, %v553
      %571 = vmatprep.subr.bf16.mxu0 0
      %572 = vmatpush1.bf16.msra.mxu0 %v562
      %573 = vmatprep.subr.bf16.mxu0 0
      %574 = vmatpush1.bf16.msra.mxu0 %v561
      %575 = vmatprep.subr.bf16.mxu0 0
      %576 = vmatpush1.bf16.msra.mxu0 %v560
      %577 = vmatprep.subr.bf16.mxu0 0
      %578 = vmatpush1.bf16.msra.mxu0 %v559
      %579 = vmatprep.subr.bf16.mxu0 0
      %580 = vmatpush1.bf16.msra.mxu0 %v558
      %581 = vmatprep.subr.bf16.mxu0 0
      %582 = vmatpush1.bf16.msra.mxu0 %v557
      %583 = vmatprep.subr.bf16.mxu0 0
      %584 = vmatpush1.bf16.msra.mxu0 %v556
      %585 = vmatprep.subr.bf16.mxu0 0
      %586 = vmatpush1.bf16.msra.mxu0 %v555
      %587 = vmatprep.subr.bf16.mxu0 0
      %588 = vmatpush2.bf16.msra.mxu0 0
      %589 = vmatprep.subr.bf16.mxu0 0
      %590 = vmatpush2.bf16.msra.mxu0 0
      %591 = vmatprep.subr.bf16.mxu0 0
      %592 = vmatpush2.bf16.msra.mxu0 0
      %593 = vmatprep.subr.bf16.mxu0 0
      %594 = vmatpush2.bf16.msra.mxu0 0
      %595 = vmatprep.subr.bf16.mxu0 0
      %596 = vmatpush2.bf16.msra.mxu0 0
      %597 = vmatprep.subr.bf16.mxu0 0
      %598 = vmatpush2.bf16.msra.mxu0 0
      %599 = vmatprep.subr.bf16.mxu0 0
      %600 = vmatpush2.bf16.msra.mxu0 0
      %601 = vmatprep.subr.bf16.mxu0 0
      %602 = vmatpush2.bf16.msra.mxu0 0
      %603 = vmatprep.mubr.bf16.mxu0 0
      %604 = vmatmul.mubr.bf16.gmra.mxu0 %v515
      %v605 = vpop.f32.mrf.mxu0
      %v606 = vadd.f32 %v469, %v605
      %v607 = vpop.f32.mrf.mxu0
      %v608 = vpop.f32.mrf.mxu0
      %v609 = vadd.f32 %v472, %v608
      %v610 = vpop.f32.mrf.mxu0
      %611 = vmatprep.mubr.bf16.mxu0 0
      %612 = vmatmul.mubr.bf16.gmra.mxu0 %v516
      %v613 = vpop.f32.mrf.mxu0
      %v614 = vadd.f32 %v477, %v613
      %v615 = vpop.f32.mrf.mxu0
      %v616 = vpop.f32.mrf.mxu0
      %v617 = vadd.f32 %v480, %v616
      %v618 = vpop.f32.mrf.mxu0
      %619 = vmatprep.mubr.bf16.mxu0 0
      %620 = vmatmul.mubr.bf16.gmra.mxu0 %v517
      %v621 = vpop.f32.mrf.mxu0
      %v622 = vadd.f32 %v485, %v621
      %v623 = vpop.f32.mrf.mxu0
      %v624 = vpop.f32.mrf.mxu0
      %v625 = vadd.f32 %v488, %v624
      %v626 = vpop.f32.mrf.mxu0
      %627 = vmatprep.mubr.bf16.mxu0 0
      %628 = vmatmul.mubr.bf16.gmra.mxu0 %v518
      %v629 = vpop.f32.mrf.mxu0
      %v630 = vadd.f32 %v493, %v629
      %v631 = vpop.f32.mrf.mxu0
      %v632 = vpop.f32.mrf.mxu0
      %v633 = vadd.f32 %v496, %v632
      %v634 = vpop.f32.mrf.mxu0
      %635 = vdwg.mxu0
      %vm644 = vcmask 1042432
      %vm645 = vcmask 1046532
      %vm646 = vmor %vm644, %vm645
      %v647 = vrot.slane %v202, 5
      %v648 = vrot.slane %v647, 4
      %v649 = vrot.slane %v203, 5
      %v650 = vsel %vm646, %v648, %v649
      %v651 = vrot.slane %v204, 5
      %v652 = vrot.slane %v651, 4
      %v653 = vrot.slane %v205, 5
      %v654 = vsel %vm646, %v652, %v653
      %v655 = vrot.slane %v206, 5
      %v656 = vrot.slane %v655, 4
      %v657 = vrot.slane %v207, 5
      %v658 = vsel %vm646, %v656, %v657
      %v659 = vrot.slane %v208, 5
      %v660 = vrot.slane %v659, 4
      %v661 = vrot.slane %v209, 5
      %v662 = vsel %vm646, %v660, %v661
      %v663 = vrot.slane %v210, 5
      %v664 = vrot.slane %v663, 4
      %v665 = vrot.slane %v211, 5
      %v666 = vsel %vm646, %v664, %v665
      %v667 = vrot.slane %v212, 5
      %v668 = vrot.slane %v667, 4
      %v669 = vrot.slane %v213, 5
      %v670 = vsel %vm646, %v668, %v669
      %v671 = vrot.slane %v214, 5
      %v672 = vrot.slane %v671, 4
      %v673 = vrot.slane %v215, 5
      %v674 = vsel %vm646, %v672, %v673
      %v675 = vrot.slane %v216, 5
      %v676 = vrot.slane %v675, 4
      %v677 = vrot.slane %v217, 5
      %v678 = vsel %vm646, %v676, %v677
      %s679 = scalar_lea.vmem %s1, 128
      %v680 = vld [vmem:[%s679] sm:$0xf]
      %v681 = vld [vmem:[%s679 + $0x4] sm:$0xf]
      %v682 = vld [vmem:[%s679 + $0x8] sm:$0xf]
      %v683 = vld [vmem:[%s679 + $0xc] sm:$0xf]
      %v684 = vld [vmem:[%s679 + $0x10] sm:$0xf]
      %v685 = vld [vmem:[%s679 + $0x14] sm:$0xf]
      %v686 = vld [vmem:[%s679 + $0x18] sm:$0xf]
      %v687 = vld [vmem:[%s679 + $0x1c] sm:$0xf]
      %v688 = vld [vmem:[%s679 + $0x20] sm:$0xf]
      %v689 = vld [vmem:[%s679 + $0x24] sm:$0xf]
      %v690 = vld [vmem:[%s679 + $0x28] sm:$0xf]
      %v691 = vld [vmem:[%s679 + $0x2c] sm:$0xf]
      %v692 = vld [vmem:[%s679 + $0x30] sm:$0xf]
      %v693 = vld [vmem:[%s679 + $0x34] sm:$0xf]
      %v694 = vld [vmem:[%s679 + $0x38] sm:$0xf]
      %v695 = vld [vmem:[%s679 + $0x3c] sm:$0xf]
      %v696 = vunpack.c.l.b16 %v650
      %v697 = vunpack.c.l.b16 %v654
      %v698 = vunpack.c.l.b16 %v658
      %v699 = vunpack.c.l.b16 %v662
      %v700 = vunpack.c.l.b16 %v666
      %v701 = vunpack.c.l.b16 %v670
      %v702 = vunpack.c.l.b16 %v674
      %v703 = vunpack.c.l.b16 %v678
      %v704 = vpack.c.b16 %v697, %v696
      %v705 = vpack.c.b16 %v699, %v698
      %v706 = vpack.c.b16 %v701, %v700
      %v707 = vpack.c.b16 %v703, %v702
      %v728 = vunpack.c.l.b16 %v680
      %v729 = vunpack.c.l.b16 %v681
      %v730 = vunpack.c.l.b16 %v682
      %v731 = vunpack.c.l.b16 %v683
      %v732 = vunpack.c.l.b16 %v684
      %v733 = vunpack.c.l.b16 %v685
      %v734 = vunpack.c.l.b16 %v686
      %v735 = vunpack.c.l.b16 %v687
      %v736 = vunpack.c.l.b16 %v688
      %v737 = vunpack.c.l.b16 %v689
      %v738 = vunpack.c.l.b16 %v690
      %v739 = vunpack.c.l.b16 %v691
      %v740 = vunpack.c.l.b16 %v692
      %v741 = vunpack.c.l.b16 %v693
      %v742 = vunpack.c.l.b16 %v694
      %v743 = vunpack.c.l.b16 %v695
      %v744 = vpack.c.b16 %v729, %v728
      %v745 = vpack.c.b16 %v731, %v730
      %v746 = vpack.c.b16 %v733, %v732
      %v747 = vpack.c.b16 %v735, %v734
      %v748 = vpack.c.b16 %v737, %v736
      %v749 = vpack.c.b16 %v739, %v738
      %v750 = vpack.c.b16 %v741, %v740
      %v751 = vpack.c.b16 %v743, %v742
      %760 = vmatprep.subr.bf16.mxu0 0
      %761 = vmatpush1.bf16.msra.mxu0 %v751
      %762 = vmatprep.subr.bf16.mxu0 0
      %763 = vmatpush1.bf16.msra.mxu0 %v750
      %764 = vmatprep.subr.bf16.mxu0 0
      %765 = vmatpush1.bf16.msra.mxu0 %v749
      %766 = vmatprep.subr.bf16.mxu0 0
      %767 = vmatpush1.bf16.msra.mxu0 %v748
      %768 = vmatprep.subr.bf16.mxu0 0
      %769 = vmatpush1.bf16.msra.mxu0 %v747
      %770 = vmatprep.subr.bf16.mxu0 0
      %771 = vmatpush1.bf16.msra.mxu0 %v746
      %772 = vmatprep.subr.bf16.mxu0 0
      %773 = vmatpush1.bf16.msra.mxu0 %v745
      %774 = vmatprep.subr.bf16.mxu0 0
      %775 = vmatpush1.bf16.msra.mxu0 %v744
      %776 = vmatprep.subr.bf16.mxu0 0
      %777 = vmatpush2.bf16.msra.mxu0 0
      %778 = vmatprep.subr.bf16.mxu0 0
      %779 = vmatpush2.bf16.msra.mxu0 0
      %780 = vmatprep.subr.bf16.mxu0 0
      %781 = vmatpush2.bf16.msra.mxu0 0
      %782 = vmatprep.subr.bf16.mxu0 0
      %783 = vmatpush2.bf16.msra.mxu0 0
      %784 = vmatprep.subr.bf16.mxu0 0
      %785 = vmatpush2.bf16.msra.mxu0 0
      %786 = vmatprep.subr.bf16.mxu0 0
      %787 = vmatpush2.bf16.msra.mxu0 0
      %788 = vmatprep.subr.bf16.mxu0 0
      %789 = vmatpush2.bf16.msra.mxu0 0
      %790 = vmatprep.subr.bf16.mxu0 0
      %791 = vmatpush2.bf16.msra.mxu0 0
      %792 = vmatprep.mubr.bf16.mxu0 0
      %793 = vmatmul.mubr.bf16.gmra.mxu0 %v704
      %v794 = vpop.f32.mrf.mxu0
      %v795 = vadd.f32 0.0, %v794
      %v796 = vpop.f32.mrf.mxu0
      %v797 = vpop.f32.mrf.mxu0
      %v798 = vadd.f32 0.0, %v797
      %v799 = vpop.f32.mrf.mxu0
      %800 = vmatprep.mubr.bf16.mxu0 0
      %801 = vmatmul.mubr.bf16.gmra.mxu0 %v705
      %v802 = vpop.f32.mrf.mxu0
      %v803 = vadd.f32 0.0, %v802
      %v804 = vpop.f32.mrf.mxu0
      %v805 = vpop.f32.mrf.mxu0
      %v806 = vadd.f32 0.0, %v805
      %v807 = vpop.f32.mrf.mxu0
      %808 = vmatprep.mubr.bf16.mxu0 0
      %809 = vmatmul.mubr.bf16.gmra.mxu0 %v706
      %v810 = vpop.f32.mrf.mxu0
      %v811 = vadd.f32 0.0, %v810
      %v812 = vpop.f32.mrf.mxu0
      %v813 = vpop.f32.mrf.mxu0
      %v814 = vadd.f32 0.0, %v813
      %v815 = vpop.f32.mrf.mxu0
      %816 = vmatprep.mubr.bf16.mxu0 0
      %817 = vmatmul.mubr.bf16.gmra.mxu0 %v707
      %v818 = vpop.f32.mrf.mxu0
      %v819 = vadd.f32 0.0, %v818
      %v820 = vpop.f32.mrf.mxu0
      %v821 = vpop.f32.mrf.mxu0
      %v822 = vadd.f32 0.0, %v821
      %v823 = vpop.f32.mrf.mxu0
      %824 = vdwg.mxu0
      %v825 = vadd.f32 %v606, %v795
      %v826 = vadd.f32 %v609, %v798
      %v827 = vadd.f32 %v614, %v803
      %v828 = vadd.f32 %v617, %v806
      %v829 = vadd.f32 %v622, %v811
      %v830 = vadd.f32 %v625, %v814
      %v831 = vadd.f32 %v630, %v819
      %v832 = vadd.f32 %v633, %v822
      %s833 = scalar_lea.vmem %s1, 192
      %v834 = vld [vmem:[%s833] sm:$0xf]
      %v835 = vld [vmem:[%s833 + $0x4] sm:$0xf]
      %v836 = vld [vmem:[%s833 + $0x8] sm:$0xf]
      %v837 = vld [vmem:[%s833 + $0xc] sm:$0xf]
      %v838 = vld [vmem:[%s833 + $0x10] sm:$0xf]
      %v839 = vld [vmem:[%s833 + $0x14] sm:$0xf]
      %v840 = vld [vmem:[%s833 + $0x18] sm:$0xf]
      %v841 = vld [vmem:[%s833 + $0x1c] sm:$0xf]
      %v842 = vld [vmem:[%s833 + $0x20] sm:$0xf]
      %v843 = vld [vmem:[%s833 + $0x24] sm:$0xf]
      %v844 = vld [vmem:[%s833 + $0x28] sm:$0xf]
      %v845 = vld [vmem:[%s833 + $0x2c] sm:$0xf]
      %v846 = vld [vmem:[%s833 + $0x30] sm:$0xf]
      %v847 = vld [vmem:[%s833 + $0x34] sm:$0xf]
      %v848 = vld [vmem:[%s833 + $0x38] sm:$0xf]
      %v849 = vld [vmem:[%s833 + $0x3c] sm:$0xf]
      %v851 = vunpack.c.l.b16 %v218
      %v852 = vpack.c.b16 %v509, %v508
      %v853 = vpack.c.b16 %v511, %v510
      %v854 = vpack.c.b16 %v513, %v512
      %v855 = vpack.c.b16 %v851, %v514
      %v876 = vunpack.c.l.b16 %v834
      %v877 = vunpack.c.l.b16 %v835
      %v878 = vunpack.c.l.b16 %v836
      %v879 = vunpack.c.l.b16 %v837
      %v880 = vunpack.c.l.b16 %v838
      %v881 = vunpack.c.l.b16 %v839
      %v882 = vunpack.c.l.b16 %v840
      %v883 = vunpack.c.l.b16 %v841
      %v884 = vunpack.c.l.b16 %v842
      %v885 = vunpack.c.l.b16 %v843
      %v886 = vunpack.c.l.b16 %v844
      %v887 = vunpack.c.l.b16 %v845
      %v888 = vunpack.c.l.b16 %v846
      %v889 = vunpack.c.l.b16 %v847
      %v890 = vunpack.c.l.b16 %v848
      %v891 = vunpack.c.l.b16 %v849
      %v892 = vpack.c.b16 %v877, %v876
      %v893 = vpack.c.b16 %v879, %v878
      %v894 = vpack.c.b16 %v881, %v880
      %v895 = vpack.c.b16 %v883, %v882
      %v896 = vpack.c.b16 %v885, %v884
      %v897 = vpack.c.b16 %v887, %v886
      %v898 = vpack.c.b16 %v889, %v888
      %v899 = vpack.c.b16 %v891, %v890
      %908 = vmatprep.subr.bf16.mxu0 0
      %909 = vmatpush1.bf16.msra.mxu0 %v899
      %910 = vmatprep.subr.bf16.mxu0 0
      %911 = vmatpush1.bf16.msra.mxu0 %v898
      %912 = vmatprep.subr.bf16.mxu0 0
      %913 = vmatpush1.bf16.msra.mxu0 %v897
      %914 = vmatprep.subr.bf16.mxu0 0
      %915 = vmatpush1.bf16.msra.mxu0 %v896
      %916 = vmatprep.subr.bf16.mxu0 0
      %917 = vmatpush1.bf16.msra.mxu0 %v895
      %918 = vmatprep.subr.bf16.mxu0 0
      %919 = vmatpush1.bf16.msra.mxu0 %v894
      %920 = vmatprep.subr.bf16.mxu0 0
      %921 = vmatpush1.bf16.msra.mxu0 %v893
      %922 = vmatprep.subr.bf16.mxu0 0
      %923 = vmatpush1.bf16.msra.mxu0 %v892
      %924 = vmatprep.subr.bf16.mxu0 0
      %925 = vmatpush2.bf16.msra.mxu0 0
      %926 = vmatprep.subr.bf16.mxu0 0
      %927 = vmatpush2.bf16.msra.mxu0 0
      %928 = vmatprep.subr.bf16.mxu0 0
      %929 = vmatpush2.bf16.msra.mxu0 0
      %930 = vmatprep.subr.bf16.mxu0 0
      %931 = vmatpush2.bf16.msra.mxu0 0
      %932 = vmatprep.subr.bf16.mxu0 0
      %933 = vmatpush2.bf16.msra.mxu0 0
      %934 = vmatprep.subr.bf16.mxu0 0
      %935 = vmatpush2.bf16.msra.mxu0 0
      %936 = vmatprep.subr.bf16.mxu0 0
      %937 = vmatpush2.bf16.msra.mxu0 0
      %938 = vmatprep.subr.bf16.mxu0 0
      %939 = vmatpush2.bf16.msra.mxu0 0
      %940 = vmatprep.mubr.bf16.mxu0 0
      %941 = vmatmul.mubr.bf16.gmra.mxu0 %v852
      %v942 = vpop.f32.mrf.mxu0
      %v943 = vadd.f32 0.0, %v942
      %v944 = vpop.f32.mrf.mxu0
      %v945 = vpop.f32.mrf.mxu0
      %v946 = vadd.f32 0.0, %v945
      %v947 = vpop.f32.mrf.mxu0
      %948 = vmatprep.mubr.bf16.mxu0 0
      %949 = vmatmul.mubr.bf16.gmra.mxu0 %v853
      %v950 = vpop.f32.mrf.mxu0
      %v951 = vadd.f32 0.0, %v950
      %v952 = vpop.f32.mrf.mxu0
      %v953 = vpop.f32.mrf.mxu0
      %v954 = vadd.f32 0.0, %v953
      %v955 = vpop.f32.mrf.mxu0
      %956 = vmatprep.mubr.bf16.mxu0 0
      %957 = vmatmul.mubr.bf16.gmra.mxu0 %v854
      %v958 = vpop.f32.mrf.mxu0
      %v959 = vadd.f32 0.0, %v958
      %v960 = vpop.f32.mrf.mxu0
      %v961 = vpop.f32.mrf.mxu0
      %v962 = vadd.f32 0.0, %v961
      %v963 = vpop.f32.mrf.mxu0
      %964 = vmatprep.mubr.bf16.mxu0 0
      %965 = vmatmul.mubr.bf16.gmra.mxu0 %v855
      %v966 = vpop.f32.mrf.mxu0
      %v967 = vadd.f32 0.0, %v966
      %v968 = vpop.f32.mrf.mxu0
      %v969 = vpop.f32.mrf.mxu0
      %v970 = vadd.f32 0.0, %v969
      %v971 = vpop.f32.mrf.mxu0
      %972 = vdwg.mxu0
      %v973 = vadd.f32 %v825, %v943
      %v974 = vadd.f32 %v826, %v946
      %v975 = vadd.f32 %v827, %v951
      %v976 = vadd.f32 %v828, %v954
      %v977 = vadd.f32 %v829, %v959
      %v978 = vadd.f32 %v830, %v962
      %v979 = vadd.f32 %v831, %v967
      %v980 = vadd.f32 %v832, %v970
      %v982 = vshrl.u32 %v218, 16
      %v984 = vrot.slane %v982, 4
      %v985 = vshll.u32 %v218, 16
      %v987 = vrot.slane %v985, 5
      %v988 = vor.u32 %v984, %v987
      %v989 = vrot.slane %v988, 4
      %v991 = vshll.u32 %v219, 16
      %v993 = vrot.slane %v991, 5
      %v994 = vsel %vm240, %v989, %v993
      %s995 = scalar_lea.vmem %s1, 256
      %v996 = vld [vmem:[%s995] sm:$0xf]
      %v997 = vld [vmem:[%s995 + $0x4] sm:$0xf]
      %v998 = vld [vmem:[%s995 + $0x8] sm:$0xf]
      %v999 = vld [vmem:[%s995 + $0xc] sm:$0xf]
      %v1000 = vld [vmem:[%s995 + $0x10] sm:$0xf]
      %v1001 = vld [vmem:[%s995 + $0x14] sm:$0xf]
      %v1002 = vld [vmem:[%s995 + $0x18] sm:$0xf]
      %v1003 = vld [vmem:[%s995 + $0x1c] sm:$0xf]
      %v1004 = vld [vmem:[%s995 + $0x20] sm:$0xf]
      %v1005 = vld [vmem:[%s995 + $0x24] sm:$0xf]
      %v1006 = vld [vmem:[%s995 + $0x28] sm:$0xf]
      %v1007 = vld [vmem:[%s995 + $0x2c] sm:$0xf]
      %v1008 = vld [vmem:[%s995 + $0x30] sm:$0xf]
      %v1009 = vld [vmem:[%s995 + $0x34] sm:$0xf]
      %v1010 = vld [vmem:[%s995 + $0x38] sm:$0xf]
      %v1011 = vld [vmem:[%s995 + $0x3c] sm:$0xf]
      %v1012 = vunpack.c.l.b16 %v994
      %v1013 = vpack.c.b16 %v372, %v371
      %v1014 = vpack.c.b16 %v374, %v373
      %v1015 = vpack.c.b16 %v376, %v375
      %v1016 = vpack.c.b16 %v1012, %v377
      %v1037 = vunpack.c.l.b16 %v996
      %v1038 = vunpack.c.l.b16 %v997
      %v1039 = vunpack.c.l.b16 %v998
      %v1040 = vunpack.c.l.b16 %v999
      %v1041 = vunpack.c.l.b16 %v1000
      %v1042 = vunpack.c.l.b16 %v1001
      %v1043 = vunpack.c.l.b16 %v1002
      %v1044 = vunpack.c.l.b16 %v1003
      %v1045 = vunpack.c.l.b16 %v1004
      %v1046 = vunpack.c.l.b16 %v1005
      %v1047 = vunpack.c.l.b16 %v1006
      %v1048 = vunpack.c.l.b16 %v1007
      %v1049 = vunpack.c.l.b16 %v1008
      %v1050 = vunpack.c.l.b16 %v1009
      %v1051 = vunpack.c.l.b16 %v1010
      %v1052 = vunpack.c.l.b16 %v1011
      %v1053 = vpack.c.b16 %v1038, %v1037
      %v1054 = vpack.c.b16 %v1040, %v1039
      %v1055 = vpack.c.b16 %v1042, %v1041
      %v1056 = vpack.c.b16 %v1044, %v1043
      %v1057 = vpack.c.b16 %v1046, %v1045
      %v1058 = vpack.c.b16 %v1048, %v1047
      %v1059 = vpack.c.b16 %v1050, %v1049
      %v1060 = vpack.c.b16 %v1052, %v1051
      %1069 = vmatprep.subr.bf16.mxu0 0
      %1070 = vmatpush1.bf16.msra.mxu0 %v1060
      %1071 = vmatprep.subr.bf16.mxu0 0
      %1072 = vmatpush1.bf16.msra.mxu0 %v1059
      %1073 = vmatprep.subr.bf16.mxu0 0
      %1074 = vmatpush1.bf16.msra.mxu0 %v1058
      %1075 = vmatprep.subr.bf16.mxu0 0
      %1076 = vmatpush1.bf16.msra.mxu0 %v1057
      %1077 = vmatprep.subr.bf16.mxu0 0
      %1078 = vmatpush1.bf16.msra.mxu0 %v1056
      %1079 = vmatprep.subr.bf16.mxu0 0
      %1080 = vmatpush1.bf16.msra.mxu0 %v1055
      %1081 = vmatprep.subr.bf16.mxu0 0
      %1082 = vmatpush1.bf16.msra.mxu0 %v1054
      %1083 = vmatprep.subr.bf16.mxu0 0
      %1084 = vmatpush1.bf16.msra.mxu0 %v1053
      %1085 = vmatprep.subr.bf16.mxu0 0
      %1086 = vmatpush2.bf16.msra.mxu0 0
      %1087 = vmatprep.subr.bf16.mxu0 0
      %1088 = vmatpush2.bf16.msra.mxu0 0
      %1089 = vmatprep.subr.bf16.mxu0 0
      %1090 = vmatpush2.bf16.msra.mxu0 0
      %1091 = vmatprep.subr.bf16.mxu0 0
      %1092 = vmatpush2.bf16.msra.mxu0 0
      %1093 = vmatprep.subr.bf16.mxu0 0
      %1094 = vmatpush2.bf16.msra.mxu0 0
      %1095 = vmatprep.subr.bf16.mxu0 0
      %1096 = vmatpush2.bf16.msra.mxu0 0
      %1097 = vmatprep.subr.bf16.mxu0 0
      %1098 = vmatpush2.bf16.msra.mxu0 0
      %1099 = vmatprep.subr.bf16.mxu0 0
      %1100 = vmatpush2.bf16.msra.mxu0 0
      %1101 = vmatprep.mubr.bf16.mxu0 0
      %1102 = vmatmul.mubr.bf16.gmra.mxu0 %v1013
      %v1103 = vpop.f32.mrf.mxu0
      %v1104 = vadd.f32 0.0, %v1103
      %v1105 = vpop.f32.mrf.mxu0
      %v1106 = vpop.f32.mrf.mxu0
      %v1107 = vadd.f32 0.0, %v1106
      %v1108 = vpop.f32.mrf.mxu0
      %1109 = vmatprep.mubr.bf16.mxu0 0
      %1110 = vmatmul.mubr.bf16.gmra.mxu0 %v1014
      %v1111 = vpop.f32.mrf.mxu0
      %v1112 = vadd.f32 0.0, %v1111
      %v1113 = vpop.f32.mrf.mxu0
      %v1114 = vpop.f32.mrf.mxu0
      %v1115 = vadd.f32 0.0, %v1114
      %v1116 = vpop.f32.mrf.mxu0
      %1117 = vmatprep.mubr.bf16.mxu0 0
      %1118 = vmatmul.mubr.bf16.gmra.mxu0 %v1015
      %v1119 = vpop.f32.mrf.mxu0
      %v1120 = vadd.f32 0.0, %v1119
      %v1121 = vpop.f32.mrf.mxu0
      %v1122 = vpop.f32.mrf.mxu0
      %v1123 = vadd.f32 0.0, %v1122
      %v1124 = vpop.f32.mrf.mxu0
      %1125 = vmatprep.mubr.bf16.mxu0 0
      %1126 = vmatmul.mubr.bf16.gmra.mxu0 %v1016
      %v1127 = vpop.f32.mrf.mxu0
      %v1128 = vadd.f32 0.0, %v1127
      %v1129 = vpop.f32.mrf.mxu0
      %v1130 = vpop.f32.mrf.mxu0
      %v1131 = vadd.f32 0.0, %v1130
      %v1132 = vpop.f32.mrf.mxu0
      %1133 = vdwg.mxu0
      %v1134 = vadd.f32 %v973, %v1104
      %v1135 = vadd.f32 %v974, %v1107
      %v1136 = vadd.f32 %v975, %v1112
      %v1137 = vadd.f32 %v976, %v1115
      %v1138 = vadd.f32 %v977, %v1120
      %v1139 = vadd.f32 %v978, %v1123
      %v1140 = vadd.f32 %v979, %v1128
      %v1141 = vadd.f32 %v980, %v1131
      %v1143 = vrot.slane %v218, 5
      %v1144 = vrot.slane %v1143, 4
      %v1145 = vrot.slane %v219, 5
      %v1146 = vsel %vm646, %v1144, %v1145
      %s1147 = scalar_lea.vmem %s1, 320
      %v1148 = vld [vmem:[%s1147] sm:$0xf]
      %v1149 = vld [vmem:[%s1147 + $0x4] sm:$0xf]
      %v1150 = vld [vmem:[%s1147 + $0x8] sm:$0xf]
      %v1151 = vld [vmem:[%s1147 + $0xc] sm:$0xf]
      %v1152 = vld [vmem:[%s1147 + $0x10] sm:$0xf]
      %v1153 = vld [vmem:[%s1147 + $0x14] sm:$0xf]
      %v1154 = vld [vmem:[%s1147 + $0x18] sm:$0xf]
      %v1155 = vld [vmem:[%s1147 + $0x1c] sm:$0xf]
      %v1156 = vld [vmem:[%s1147 + $0x20] sm:$0xf]
      %v1157 = vld [vmem:[%s1147 + $0x24] sm:$0xf]
      %v1158 = vld [vmem:[%s1147 + $0x28] sm:$0xf]
      %v1159 = vld [vmem:[%s1147 + $0x2c] sm:$0xf]
      %v1160 = vld [vmem:[%s1147 + $0x30] sm:$0xf]
      %v1161 = vld [vmem:[%s1147 + $0x34] sm:$0xf]
      %v1162 = vld [vmem:[%s1147 + $0x38] sm:$0xf]
      %v1163 = vld [vmem:[%s1147 + $0x3c] sm:$0xf]
      %v1164 = vunpack.c.l.b16 %v1146
      %v1165 = vpack.c.b16 %v698, %v697
      %v1166 = vpack.c.b16 %v700, %v699
      %v1167 = vpack.c.b16 %v702, %v701
      %v1168 = vpack.c.b16 %v1164, %v703
      %v1189 = vunpack.c.l.b16 %v1148
      %v1190 = vunpack.c.l.b16 %v1149
      %v1191 = vunpack.c.l.b16 %v1150
      %v1192 = vunpack.c.l.b16 %v1151
      %v1193 = vunpack.c.l.b16 %v1152
      %v1194 = vunpack.c.l.b16 %v1153
      %v1195 = vunpack.c.l.b16 %v1154
      %v1196 = vunpack.c.l.b16 %v1155
      %v1197 = vunpack.c.l.b16 %v1156
      %v1198 = vunpack.c.l.b16 %v1157
      %v1199 = vunpack.c.l.b16 %v1158
      %v1200 = vunpack.c.l.b16 %v1159
      %v1201 = vunpack.c.l.b16 %v1160
      %v1202 = vunpack.c.l.b16 %v1161
      %v1203 = vunpack.c.l.b16 %v1162
      %v1204 = vunpack.c.l.b16 %v1163
      %v1205 = vpack.c.b16 %v1190, %v1189
      %v1206 = vpack.c.b16 %v1192, %v1191
      %v1207 = vpack.c.b16 %v1194, %v1193
      %v1208 = vpack.c.b16 %v1196, %v1195
      %v1209 = vpack.c.b16 %v1198, %v1197
      %v1210 = vpack.c.b16 %v1200, %v1199
      %v1211 = vpack.c.b16 %v1202, %v1201
      %v1212 = vpack.c.b16 %v1204, %v1203
      %1221 = vmatprep.subr.bf16.mxu0 0
      %1222 = vmatpush1.bf16.msra.mxu0 %v1212
      %1223 = vmatprep.subr.bf16.mxu0 0
      %1224 = vmatpush1.bf16.msra.mxu0 %v1211
      %1225 = vmatprep.subr.bf16.mxu0 0
      %1226 = vmatpush1.bf16.msra.mxu0 %v1210
      %1227 = vmatprep.subr.bf16.mxu0 0
      %1228 = vmatpush1.bf16.msra.mxu0 %v1209
      %1229 = vmatprep.subr.bf16.mxu0 0
      %1230 = vmatpush1.bf16.msra.mxu0 %v1208
      %1231 = vmatprep.subr.bf16.mxu0 0
      %1232 = vmatpush1.bf16.msra.mxu0 %v1207
      %1233 = vmatprep.subr.bf16.mxu0 0
      %1234 = vmatpush1.bf16.msra.mxu0 %v1206
      %1235 = vmatprep.subr.bf16.mxu0 0
      %1236 = vmatpush1.bf16.msra.mxu0 %v1205
      %1237 = vmatprep.subr.bf16.mxu0 0
      %1238 = vmatpush2.bf16.msra.mxu0 0
      %1239 = vmatprep.subr.bf16.mxu0 0
      %1240 = vmatpush2.bf16.msra.mxu0 0
      %1241 = vmatprep.subr.bf16.mxu0 0
      %1242 = vmatpush2.bf16.msra.mxu0 0
      %1243 = vmatprep.subr.bf16.mxu0 0
      %1244 = vmatpush2.bf16.msra.mxu0 0
      %1245 = vmatprep.subr.bf16.mxu0 0
      %1246 = vmatpush2.bf16.msra.mxu0 0
      %1247 = vmatprep.subr.bf16.mxu0 0
      %1248 = vmatpush2.bf16.msra.mxu0 0
      %1249 = vmatprep.subr.bf16.mxu0 0
      %1250 = vmatpush2.bf16.msra.mxu0 0
      %1251 = vmatprep.subr.bf16.mxu0 0
      %1252 = vmatpush2.bf16.msra.mxu0 0
      %1253 = vmatprep.mubr.bf16.mxu0 0
      %1254 = vmatmul.mubr.bf16.gmra.mxu0 %v1165
      %v1255 = vpop.f32.mrf.mxu0
      %v1256 = vadd.f32 0.0, %v1255
      %v1257 = vpop.f32.mrf.mxu0
      %v1258 = vpop.f32.mrf.mxu0
      %v1259 = vadd.f32 0.0, %v1258
      %v1260 = vpop.f32.mrf.mxu0
      %1261 = vmatprep.mubr.bf16.mxu0 0
      %1262 = vmatmul.mubr.bf16.gmra.mxu0 %v1166
      %v1263 = vpop.f32.mrf.mxu0
      %v1264 = vadd.f32 0.0, %v1263
      %v1265 = vpop.f32.mrf.mxu0
      %v1266 = vpop.f32.mrf.mxu0
      %v1267 = vadd.f32 0.0, %v1266
      %v1268 = vpop.f32.mrf.mxu0
      %1269 = vmatprep.mubr.bf16.mxu0 0
      %1270 = vmatmul.mubr.bf16.gmra.mxu0 %v1167
      %v1271 = vpop.f32.mrf.mxu0
      %v1272 = vadd.f32 0.0, %v1271
      %v1273 = vpop.f32.mrf.mxu0
      %v1274 = vpop.f32.mrf.mxu0
      %v1275 = vadd.f32 0.0, %v1274
      %v1276 = vpop.f32.mrf.mxu0
      %1277 = vmatprep.mubr.bf16.mxu0 0
      %1278 = vmatmul.mubr.bf16.gmra.mxu0 %v1168
      %v1279 = vpop.f32.mrf.mxu0
      %v1280 = vadd.f32 0.0, %v1279
      %v1281 = vpop.f32.mrf.mxu0
      %v1282 = vpop.f32.mrf.mxu0
      %v1283 = vadd.f32 0.0, %v1282
      %v1284 = vpop.f32.mrf.mxu0
      %1285 = vdwg.mxu0
      %v1286 = vadd.f32 %v1134, %v1256
      %v1287 = vadd.f32 %v1135, %v1259
      %v1288 = vadd.f32 %v1136, %v1264
      %v1289 = vadd.f32 %v1137, %v1267
      %v1290 = vadd.f32 %v1138, %v1272
      %v1291 = vadd.f32 %v1139, %v1275
      %v1292 = vadd.f32 %v1140, %v1280
      %v1293 = vadd.f32 %v1141, %v1283
      %s1294 = scalar_lea.vmem %s1, 384
      %v1295 = vld [vmem:[%s1294] sm:$0xf]
      %v1296 = vld [vmem:[%s1294 + $0x4] sm:$0xf]
      %v1297 = vld [vmem:[%s1294 + $0x8] sm:$0xf]
      %v1298 = vld [vmem:[%s1294 + $0xc] sm:$0xf]
      %v1299 = vld [vmem:[%s1294 + $0x10] sm:$0xf]
      %v1300 = vld [vmem:[%s1294 + $0x14] sm:$0xf]
      %v1301 = vld [vmem:[%s1294 + $0x18] sm:$0xf]
      %v1302 = vld [vmem:[%s1294 + $0x1c] sm:$0xf]
      %v1303 = vld [vmem:[%s1294 + $0x20] sm:$0xf]
      %v1304 = vld [vmem:[%s1294 + $0x24] sm:$0xf]
      %v1305 = vld [vmem:[%s1294 + $0x28] sm:$0xf]
      %v1306 = vld [vmem:[%s1294 + $0x2c] sm:$0xf]
      %v1307 = vld [vmem:[%s1294 + $0x30] sm:$0xf]
      %v1308 = vld [vmem:[%s1294 + $0x34] sm:$0xf]
      %v1309 = vld [vmem:[%s1294 + $0x38] sm:$0xf]
      %v1310 = vld [vmem:[%s1294 + $0x3c] sm:$0xf]
      %v1312 = vunpack.c.l.b16 %v220
      %v1313 = vpack.c.b16 %v1312, %v851
      %v1331 = vunpack.c.l.b16 %v1295
      %v1332 = vunpack.c.l.b16 %v1296
      %v1333 = vunpack.c.l.b16 %v1297
      %v1334 = vunpack.c.l.b16 %v1298
      %v1335 = vunpack.c.l.b16 %v1299
      %v1336 = vunpack.c.l.b16 %v1300
      %v1337 = vunpack.c.l.b16 %v1301
      %v1338 = vunpack.c.l.b16 %v1302
      %v1339 = vunpack.c.l.b16 %v1303
      %v1340 = vunpack.c.l.b16 %v1304
      %v1341 = vunpack.c.l.b16 %v1305
      %v1342 = vunpack.c.l.b16 %v1306
      %v1343 = vunpack.c.l.b16 %v1307
      %v1344 = vunpack.c.l.b16 %v1308
      %v1345 = vunpack.c.l.b16 %v1309
      %v1346 = vunpack.c.l.b16 %v1310
      %v1347 = vpack.c.b16 %v1332, %v1331
      %v1348 = vpack.c.b16 %v1334, %v1333
      %v1349 = vpack.c.b16 %v1336, %v1335
      %v1350 = vpack.c.b16 %v1338, %v1337
      %v1351 = vpack.c.b16 %v1340, %v1339
      %v1352 = vpack.c.b16 %v1342, %v1341
      %v1353 = vpack.c.b16 %v1344, %v1343
      %v1354 = vpack.c.b16 %v1346, %v1345
      %1363 = vmatprep.subr.bf16.mxu0 0
      %1364 = vmatpush1.bf16.msra.mxu0 %v1354
      %1365 = vmatprep.subr.bf16.mxu0 0
      %1366 = vmatpush1.bf16.msra.mxu0 %v1353
      %1367 = vmatprep.subr.bf16.mxu0 0
      %1368 = vmatpush1.bf16.msra.mxu0 %v1352
      %1369 = vmatprep.subr.bf16.mxu0 0
      %1370 = vmatpush1.bf16.msra.mxu0 %v1351
      %1371 = vmatprep.subr.bf16.mxu0 0
      %1372 = vmatpush1.bf16.msra.mxu0 %v1350
      %1373 = vmatprep.subr.bf16.mxu0 0
      %1374 = vmatpush1.bf16.msra.mxu0 %v1349
      %1375 = vmatprep.subr.bf16.mxu0 0
      %1376 = vmatpush1.bf16.msra.mxu0 %v1348
      %1377 = vmatprep.subr.bf16.mxu0 0
      %1378 = vmatpush1.bf16.msra.mxu0 %v1347
      %1379 = vmatprep.subr.bf16.mxu0 0
      %1380 = vmatpush2.bf16.msra.mxu0 0
      %1381 = vmatprep.subr.bf16.mxu0 0
      %1382 = vmatpush2.bf16.msra.mxu0 0
      %1383 = vmatprep.subr.bf16.mxu0 0
      %1384 = vmatpush2.bf16.msra.mxu0 0
      %1385 = vmatprep.subr.bf16.mxu0 0
      %1386 = vmatpush2.bf16.msra.mxu0 0
      %1387 = vmatprep.subr.bf16.mxu0 0
      %1388 = vmatpush2.bf16.msra.mxu0 0
      %1389 = vmatprep.subr.bf16.mxu0 0
      %1390 = vmatpush2.bf16.msra.mxu0 0
      %1391 = vmatprep.subr.bf16.mxu0 0
      %1392 = vmatpush2.bf16.msra.mxu0 0
      %1393 = vmatprep.subr.bf16.mxu0 0
      %1394 = vmatpush2.bf16.msra.mxu0 0
      %1395 = vmatprep.mubr.bf16.mxu0 0
      %1396 = vmatmul.mubr.bf16.gmra.mxu0 %v516
      %v1397 = vpop.f32.mrf.mxu0
      %v1398 = vadd.f32 0.0, %v1397
      %v1399 = vpop.f32.mrf.mxu0
      %v1400 = vpop.f32.mrf.mxu0
      %v1401 = vadd.f32 0.0, %v1400
      %v1402 = vpop.f32.mrf.mxu0
      %1403 = vmatprep.mubr.bf16.mxu0 0
      %1404 = vmatmul.mubr.bf16.gmra.mxu0 %v517
      %v1405 = vpop.f32.mrf.mxu0
      %v1406 = vadd.f32 0.0, %v1405
      %v1407 = vpop.f32.mrf.mxu0
      %v1408 = vpop.f32.mrf.mxu0
      %v1409 = vadd.f32 0.0, %v1408
      %v1410 = vpop.f32.mrf.mxu0
      %1411 = vmatprep.mubr.bf16.mxu0 0
      %1412 = vmatmul.mubr.bf16.gmra.mxu0 %v518
      %v1413 = vpop.f32.mrf.mxu0
      %v1414 = vadd.f32 0.0, %v1413
      %v1415 = vpop.f32.mrf.mxu0
      %v1416 = vpop.f32.mrf.mxu0
      %v1417 = vadd.f32 0.0, %v1416
      %v1418 = vpop.f32.mrf.mxu0
      %1419 = vmatprep.mubr.bf16.mxu0 0
      %1420 = vmatmul.mubr.bf16.gmra.mxu0 %v1313
      %v1421 = vpop.f32.mrf.mxu0
      %v1422 = vadd.f32 0.0, %v1421
      %v1423 = vpop.f32.mrf.mxu0
      %v1424 = vpop.f32.mrf.mxu0
      %v1425 = vadd.f32 0.0, %v1424
      %v1426 = vpop.f32.mrf.mxu0
      %1427 = vdwg.mxu0
      %v1428 = vadd.f32 %v1286, %v1398
      %v1429 = vadd.f32 %v1287, %v1401
      %v1430 = vadd.f32 %v1288, %v1406
      %v1431 = vadd.f32 %v1289, %v1409
      %v1432 = vadd.f32 %v1290, %v1414
      %v1433 = vadd.f32 %v1291, %v1417
      %v1434 = vadd.f32 %v1292, %v1422
      %v1435 = vadd.f32 %v1293, %v1425
      %v1437 = vshrl.u32 %v220, 16
      %v1439 = vrot.slane %v1437, 4
      %v1440 = vshll.u32 %v220, 16
      %v1442 = vrot.slane %v1440, 5
      %v1443 = vor.u32 %v1439, %v1442
      %v1444 = vrot.slane %v1443, 4
      %v1446 = vshll.u32 %v221, 16
      %v1448 = vrot.slane %v1446, 5
      %v1449 = vsel %vm240, %v1444, %v1448
      %s1450 = scalar_lea.vmem %s1, 448
      %v1451 = vld [vmem:[%s1450] sm:$0xf]
      %v1452 = vld [vmem:[%s1450 + $0x4] sm:$0xf]
      %v1453 = vld [vmem:[%s1450 + $0x8] sm:$0xf]
      %v1454 = vld [vmem:[%s1450 + $0xc] sm:$0xf]
      %v1455 = vld [vmem:[%s1450 + $0x10] sm:$0xf]
      %v1456 = vld [vmem:[%s1450 + $0x14] sm:$0xf]
      %v1457 = vld [vmem:[%s1450 + $0x18] sm:$0xf]
      %v1458 = vld [vmem:[%s1450 + $0x1c] sm:$0xf]
      %v1459 = vld [vmem:[%s1450 + $0x20] sm:$0xf]
      %v1460 = vld [vmem:[%s1450 + $0x24] sm:$0xf]
      %v1461 = vld [vmem:[%s1450 + $0x28] sm:$0xf]
      %v1462 = vld [vmem:[%s1450 + $0x2c] sm:$0xf]
      %v1463 = vld [vmem:[%s1450 + $0x30] sm:$0xf]
      %v1464 = vld [vmem:[%s1450 + $0x34] sm:$0xf]
      %v1465 = vld [vmem:[%s1450 + $0x38] sm:$0xf]
      %v1466 = vld [vmem:[%s1450 + $0x3c] sm:$0xf]
      %v1467 = vunpack.c.l.b16 %v1449
      %v1468 = vpack.c.b16 %v1467, %v1012
      %v1486 = vunpack.c.l.b16 %v1451
      %v1487 = vunpack.c.l.b16 %v1452
      %v1488 = vunpack.c.l.b16 %v1453
      %v1489 = vunpack.c.l.b16 %v1454
      %v1490 = vunpack.c.l.b16 %v1455
      %v1491 = vunpack.c.l.b16 %v1456
      %v1492 = vunpack.c.l.b16 %v1457
      %v1493 = vunpack.c.l.b16 %v1458
      %v1494 = vunpack.c.l.b16 %v1459
      %v1495 = vunpack.c.l.b16 %v1460
      %v1496 = vunpack.c.l.b16 %v1461
      %v1497 = vunpack.c.l.b16 %v1462
      %v1498 = vunpack.c.l.b16 %v1463
      %v1499 = vunpack.c.l.b16 %v1464
      %v1500 = vunpack.c.l.b16 %v1465
      %v1501 = vunpack.c.l.b16 %v1466
      %v1502 = vpack.c.b16 %v1487, %v1486
      %v1503 = vpack.c.b16 %v1489, %v1488
      %v1504 = vpack.c.b16 %v1491, %v1490
      %v1505 = vpack.c.b16 %v1493, %v1492
      %v1506 = vpack.c.b16 %v1495, %v1494
      %v1507 = vpack.c.b16 %v1497, %v1496
      %v1508 = vpack.c.b16 %v1499, %v1498
      %v1509 = vpack.c.b16 %v1501, %v1500
      %1518 = vmatprep.subr.bf16.mxu0 0
      %1519 = vmatpush1.bf16.msra.mxu0 %v1509
      %1520 = vmatprep.subr.bf16.mxu0 0
      %1521 = vmatpush1.bf16.msra.mxu0 %v1508
      %1522 = vmatprep.subr.bf16.mxu0 0
      %1523 = vmatpush1.bf16.msra.mxu0 %v1507
      %1524 = vmatprep.subr.bf16.mxu0 0
      %1525 = vmatpush1.bf16.msra.mxu0 %v1506
      %1526 = vmatprep.subr.bf16.mxu0 0
      %1527 = vmatpush1.bf16.msra.mxu0 %v1505
      %1528 = vmatprep.subr.bf16.mxu0 0
      %1529 = vmatpush1.bf16.msra.mxu0 %v1504
      %1530 = vmatprep.subr.bf16.mxu0 0
      %1531 = vmatpush1.bf16.msra.mxu0 %v1503
      %1532 = vmatprep.subr.bf16.mxu0 0
      %1533 = vmatpush1.bf16.msra.mxu0 %v1502
      %1534 = vmatprep.subr.bf16.mxu0 0
      %1535 = vmatpush2.bf16.msra.mxu0 0
      %1536 = vmatprep.subr.bf16.mxu0 0
      %1537 = vmatpush2.bf16.msra.mxu0 0
      %1538 = vmatprep.subr.bf16.mxu0 0
      %1539 = vmatpush2.bf16.msra.mxu0 0
      %1540 = vmatprep.subr.bf16.mxu0 0
      %1541 = vmatpush2.bf16.msra.mxu0 0
      %1542 = vmatprep.subr.bf16.mxu0 0
      %1543 = vmatpush2.bf16.msra.mxu0 0
      %1544 = vmatprep.subr.bf16.mxu0 0
      %1545 = vmatpush2.bf16.msra.mxu0 0
      %1546 = vmatprep.subr.bf16.mxu0 0
      %1547 = vmatpush2.bf16.msra.mxu0 0
      %1548 = vmatprep.subr.bf16.mxu0 0
      %1549 = vmatpush2.bf16.msra.mxu0 0
      %1550 = vmatprep.mubr.bf16.mxu0 0
      %1551 = vmatmul.mubr.bf16.gmra.mxu0 %v379
      %v1552 = vpop.f32.mrf.mxu0
      %v1553 = vadd.f32 0.0, %v1552
      %v1554 = vpop.f32.mrf.mxu0
      %v1555 = vpop.f32.mrf.mxu0
      %v1556 = vadd.f32 0.0, %v1555
      %v1557 = vpop.f32.mrf.mxu0
      %1558 = vmatprep.mubr.bf16.mxu0 0
      %1559 = vmatmul.mubr.bf16.gmra.mxu0 %v380
      %v1560 = vpop.f32.mrf.mxu0
      %v1561 = vadd.f32 0.0, %v1560
      %v1562 = vpop.f32.mrf.mxu0
      %v1563 = vpop.f32.mrf.mxu0
      %v1564 = vadd.f32 0.0, %v1563
      %v1565 = vpop.f32.mrf.mxu0
      %1566 = vmatprep.mubr.bf16.mxu0 0
      %1567 = vmatmul.mubr.bf16.gmra.mxu0 %v381
      %v1568 = vpop.f32.mrf.mxu0
      %v1569 = vadd.f32 0.0, %v1568
      %v1570 = vpop.f32.mrf.mxu0
      %v1571 = vpop.f32.mrf.mxu0
      %v1572 = vadd.f32 0.0, %v1571
      %v1573 = vpop.f32.mrf.mxu0
      %1574 = vmatprep.mubr.bf16.mxu0 0
      %1575 = vmatmul.mubr.bf16.gmra.mxu0 %v1468
      %v1576 = vpop.f32.mrf.mxu0
      %v1577 = vadd.f32 0.0, %v1576
      %v1578 = vpop.f32.mrf.mxu0
      %v1579 = vpop.f32.mrf.mxu0
      %v1580 = vadd.f32 0.0, %v1579
      %v1581 = vpop.f32.mrf.mxu0
      %1582 = vdwg.mxu0
      %v1583 = vadd.f32 %v1428, %v1553
      %v1584 = vadd.f32 %v1429, %v1556
      %v1585 = vadd.f32 %v1430, %v1561
      %v1586 = vadd.f32 %v1431, %v1564
      %v1587 = vadd.f32 %v1432, %v1569
      %v1588 = vadd.f32 %v1433, %v1572
      %v1589 = vadd.f32 %v1434, %v1577
      %v1590 = vadd.f32 %v1435, %v1580
      %v1592 = vrot.slane %v220, 5
      %v1593 = vrot.slane %v1592, 4
      %v1594 = vrot.slane %v221, 5
      %v1595 = vsel %vm646, %v1593, %v1594
      %s1596 = scalar_lea.vmem %s1, 512
      %v1597 = vld [vmem:[%s1596] sm:$0xf]
      %v1598 = vld [vmem:[%s1596 + $0x4] sm:$0xf]
      %v1599 = vld [vmem:[%s1596 + $0x8] sm:$0xf]
      %v1600 = vld [vmem:[%s1596 + $0xc] sm:$0xf]
      %v1601 = vld [vmem:[%s1596 + $0x10] sm:$0xf]
      %v1602 = vld [vmem:[%s1596 + $0x14] sm:$0xf]
      %v1603 = vld [vmem:[%s1596 + $0x18] sm:$0xf]
      %v1604 = vld [vmem:[%s1596 + $0x1c] sm:$0xf]
      %v1605 = vld [vmem:[%s1596 + $0x20] sm:$0xf]
      %v1606 = vld [vmem:[%s1596 + $0x24] sm:$0xf]
      %v1607 = vld [vmem:[%s1596 + $0x28] sm:$0xf]
      %v1608 = vld [vmem:[%s1596 + $0x2c] sm:$0xf]
      %v1609 = vld [vmem:[%s1596 + $0x30] sm:$0xf]
      %v1610 = vld [vmem:[%s1596 + $0x34] sm:$0xf]
      %v1611 = vld [vmem:[%s1596 + $0x38] sm:$0xf]
      %v1612 = vld [vmem:[%s1596 + $0x3c] sm:$0xf]
      %v1613 = vunpack.c.l.b16 %v1595
      %v1614 = vpack.c.b16 %v1613, %v1164
      %v1632 = vunpack.c.l.b16 %v1597
      %v1633 = vunpack.c.l.b16 %v1598
      %v1634 = vunpack.c.l.b16 %v1599
      %v1635 = vunpack.c.l.b16 %v1600
      %v1636 = vunpack.c.l.b16 %v1601
      %v1637 = vunpack.c.l.b16 %v1602
      %v1638 = vunpack.c.l.b16 %v1603
      %v1639 = vunpack.c.l.b16 %v1604
      %v1640 = vunpack.c.l.b16 %v1605
      %v1641 = vunpack.c.l.b16 %v1606
      %v1642 = vunpack.c.l.b16 %v1607
      %v1643 = vunpack.c.l.b16 %v1608
      %v1644 = vunpack.c.l.b16 %v1609
      %v1645 = vunpack.c.l.b16 %v1610
      %v1646 = vunpack.c.l.b16 %v1611
      %v1647 = vunpack.c.l.b16 %v1612
      %v1648 = vpack.c.b16 %v1633, %v1632
      %v1649 = vpack.c.b16 %v1635, %v1634
      %v1650 = vpack.c.b16 %v1637, %v1636
      %v1651 = vpack.c.b16 %v1639, %v1638
      %v1652 = vpack.c.b16 %v1641, %v1640
      %v1653 = vpack.c.b16 %v1643, %v1642
      %v1654 = vpack.c.b16 %v1645, %v1644
      %v1655 = vpack.c.b16 %v1647, %v1646
      %1664 = vmatprep.subr.bf16.mxu0 0
      %1665 = vmatpush1.bf16.msra.mxu0 %v1655
      %1666 = vmatprep.subr.bf16.mxu0 0
      %1667 = vmatpush1.bf16.msra.mxu0 %v1654
      %1668 = vmatprep.subr.bf16.mxu0 0
      %1669 = vmatpush1.bf16.msra.mxu0 %v1653
      %1670 = vmatprep.subr.bf16.mxu0 0
      %1671 = vmatpush1.bf16.msra.mxu0 %v1652
      %1672 = vmatprep.subr.bf16.mxu0 0
      %1673 = vmatpush1.bf16.msra.mxu0 %v1651
      %1674 = vmatprep.subr.bf16.mxu0 0
      %1675 = vmatpush1.bf16.msra.mxu0 %v1650
      %1676 = vmatprep.subr.bf16.mxu0 0
      %1677 = vmatpush1.bf16.msra.mxu0 %v1649
      %1678 = vmatprep.subr.bf16.mxu0 0
      %1679 = vmatpush1.bf16.msra.mxu0 %v1648
      %1680 = vmatprep.subr.bf16.mxu0 0
      %1681 = vmatpush2.bf16.msra.mxu0 0
      %1682 = vmatprep.subr.bf16.mxu0 0
      %1683 = vmatpush2.bf16.msra.mxu0 0
      %1684 = vmatprep.subr.bf16.mxu0 0
      %1685 = vmatpush2.bf16.msra.mxu0 0
      %1686 = vmatprep.subr.bf16.mxu0 0
      %1687 = vmatpush2.bf16.msra.mxu0 0
      %1688 = vmatprep.subr.bf16.mxu0 0
      %1689 = vmatpush2.bf16.msra.mxu0 0
      %1690 = vmatprep.subr.bf16.mxu0 0
      %1691 = vmatpush2.bf16.msra.mxu0 0
      %1692 = vmatprep.subr.bf16.mxu0 0
      %1693 = vmatpush2.bf16.msra.mxu0 0
      %1694 = vmatprep.subr.bf16.mxu0 0
      %1695 = vmatpush2.bf16.msra.mxu0 0
      %1696 = vmatprep.mubr.bf16.mxu0 0
      %1697 = vmatmul.mubr.bf16.gmra.mxu0 %v705
      %v1698 = vpop.f32.mrf.mxu0
      %v1699 = vadd.f32 0.0, %v1698
      %v1700 = vpop.f32.mrf.mxu0
      %v1701 = vpop.f32.mrf.mxu0
      %v1702 = vadd.f32 0.0, %v1701
      %v1703 = vpop.f32.mrf.mxu0
      %1704 = vmatprep.mubr.bf16.mxu0 0
      %1705 = vmatmul.mubr.bf16.gmra.mxu0 %v706
      %v1706 = vpop.f32.mrf.mxu0
      %v1707 = vadd.f32 0.0, %v1706
      %v1708 = vpop.f32.mrf.mxu0
      %v1709 = vpop.f32.mrf.mxu0
      %v1710 = vadd.f32 0.0, %v1709
      %v1711 = vpop.f32.mrf.mxu0
      %1712 = vmatprep.mubr.bf16.mxu0 0
      %1713 = vmatmul.mubr.bf16.gmra.mxu0 %v707
      %v1714 = vpop.f32.mrf.mxu0
      %v1715 = vadd.f32 0.0, %v1714
      %v1716 = vpop.f32.mrf.mxu0
      %v1717 = vpop.f32.mrf.mxu0
      %v1718 = vadd.f32 0.0, %v1717
      %v1719 = vpop.f32.mrf.mxu0
      %1720 = vmatprep.mubr.bf16.mxu0 0
      %1721 = vmatmul.mubr.bf16.gmra.mxu0 %v1614
      %v1722 = vpop.f32.mrf.mxu0
      %v1723 = vadd.f32 0.0, %v1722
      %v1724 = vpop.f32.mrf.mxu0
      %v1725 = vpop.f32.mrf.mxu0
      %v1726 = vadd.f32 0.0, %v1725
      %v1727 = vpop.f32.mrf.mxu0
      %1728 = vdwg.mxu0
      %v1729 = vadd.f32 %v1583, %v1699
      %v1730 = vadd.f32 %v1584, %v1702
      %v1731 = vadd.f32 %v1585, %v1707
      %v1732 = vadd.f32 %v1586, %v1710
      %v1733 = vadd.f32 %v1587, %v1715
      %v1734 = vadd.f32 %v1588, %v1718
      %v1735 = vadd.f32 %v1589, %v1723
      %v1736 = vadd.f32 %v1590, %v1726
      %v1737 = vld [vmem:[%s2] sm:$0x1]
      %v1739 = vlaneseq
      %v1740 = vshrl.u32 %v1739, 7
      %v1741 = vsub.s32 0, %v1740
      %v1742 = vrot.slane %v1737, %v1741
      %v1744 = vadd.f32 %v1729, %v1742
      %v1745 = vadd.f32 %v1730, %v1742
      %v1746 = vadd.f32 %v1731, %v1742
      %v1747 = vadd.f32 %v1732, %v1742
      %v1748 = vadd.f32 %v1733, %v1742
      %v1749 = vadd.f32 %v1734, %v1742
      %v1750 = vadd.f32 %v1735, %v1742
      %v1751 = vadd.f32 %v1736, %v1742
      %v1752 = vpack.c.bf16 %v1744, %v1744
      %v1753 = vpack.c.bf16 %v1745, %v1745
      %v1754 = vpack.c.bf16 %v1746, %v1746
      %v1755 = vpack.c.bf16 %v1747, %v1747
      %v1756 = vpack.c.bf16 %v1748, %v1748
      %v1757 = vpack.c.bf16 %v1749, %v1749
      %v1758 = vpack.c.bf16 %v1750, %v1750
      %v1759 = vpack.c.bf16 %v1751, %v1751
      %1760 = vst [vmem:[%s199] sm:$0xf] %v1752
      %1761 = vst [vmem:[%s199 + $0x4] sm:$0xf] %v1753
      %1762 = vst [vmem:[%s199 + $0x8] sm:$0xf] %v1754
      %1763 = vst [vmem:[%s199 + $0xc] sm:$0xf] %v1755
      %1764 = vst [vmem:[%s199 + $0x10] sm:$0xf] %v1756
      %1765 = vst [vmem:[%s199 + $0x14] sm:$0xf] %v1757
      %1766 = vst [vmem:[%s199 + $0x18] sm:$0xf] %v1758
      %1767 = vst [vmem:[%s199 + $0x1c] sm:$0xf] %v1759
      %s1768 = smul.u32 8, %s19
      %p1769 = scmp.lt.s32.totalorder %s18, 3
      %s1770 = scalar_select %p1769, %s18, 3
      %p1771 = scmp.lt.s32.totalorder %s1768, 7
      %s1772 = scalar_select %p1771, %s1768, 7
      %s1773 = smul.addr %s1770, 8
      %s1774 = sadd.s32 %s1772, %s1773
      %s1775 = smul.addr %s1774, 4
      %s1776 = scalar_lea.vmem %s3, %s1775
      // Predicated region
      $region33: #{a_call__.9} parent=31 // pred_check
        %p1777 = pneg %p116
      $region34: #{a_call__.9} parent=31 // pred_check_branch
        %1779 = sbr.rel (%p1777) target = $region36
      $region35: #{a_call__.9} parent=31 // pred_region
        %s1780 = smul.u32 8, %s19
      $region36: #{a_call__.9} parent=31 // pred_fallthru
        _
    $region32: #{a_call__.9} parent=5 // pred_fallthru
      _
    %p1781 = scmp.le.s32.totalorder 2, %s9
    // Predicated region
    $region37: #{a_call__.9} parent=5 // pred_check
      %p1782 = pneg %p1781
    $region38: #{a_call__.9} parent=5 // pred_check_branch
      %1784 = sbr.rel (%p1782) target = $region40
    $region39: #{a_call__.9} parent=5 // pred_region
      %s1785 = ssub.s32 %s9, 2
      // Predicated region
      $region41: #{a_call__.9} parent=39 // pred_check
        %p1786 = pneg %p122
      $region42: #{a_call__.9} parent=39 // pred_check_branch
        %1788 = sbr.rel (%p1786) target = $region44
      $region43: #{a_call__.9} parent=39 // pred_region
        %s1789 = smul.u32 8, %s21
        %p1790 = scmp.lt.s32.totalorder %s20, 3
        %s1791 = scalar_select %p1790, %s20, 3
        %p1792 = scmp.lt.s32.totalorder %s1789, 7
        %s1793 = scalar_select %p1792, %s1789, 7
        %s1794 = smul.addr %s1791, 8
        %s1795 = sadd.s32 %s1793, %s1794
        %s1796 = smul.addr %s1795, 4
        %s1797 = scalar_lea.vmem %s3, %s1796
      $region44: #{a_call__.9} parent=39 // pred_fallthru
        _
    $region40: #{a_call__.9} parent=5 // pred_fallthru
      _
  $region6: #{a_call__.9} parent=0 // loop_footer
    %s13 = sadd.s32 1, %s9
  $region7: #{a_call__.9} parent=0 // loop_footer_branch
    %8 = sbr.rel target = $region3
  $region8: #{a_call__.9} parent=0 // loop_exit
    _

// kernel: a_call__.10
$region0: #{a_call__.10}
  #allocation0 [shape = 'u32[]', space=smem, size = 0x4, offset = 0x4, fixed_abs, tag = 'smem constant byte address 0x4 - core index']
  #allocation1 [shape = 'u32[144,128]{1,0:T(1,128)}', space=vmem, size = 0x12000, scoped, tag = 'internal scratch']
  #allocation2 [shape = 'f32[1,64]{1,0:T(1,128)}', space=vmem, size = 0x200, scoped, tag = 'scratch operand']
  #allocation3 [shape = 'f32[64,64]{1,0:T(8,128)}', space=vmem, size = 0x8000, scoped, tag = 'scratch operand']
  #allocation4 [shape = 'f32[64,64]{1,0:T(8,128)}', space=vmem, size = 0x8000, scoped, tag = 'scratch operand']
  %s0 = inlined_call_operand.vmem [shape: bf16[4,256,64], index: 0, kind: input, shape index: {}, may-alias: {0,1}]
  %s1 = inlined_call_operand.vmem [shape: bf16[4,256,64], index: 1, kind: input, shape index: {}, may-alias: {0,1}]
  %s2 = inlined_call_operand.vmem [shape: f32[2,8,128], index: 2, kind: output, shape index: {0}]
  %s3 = inlined_call_operand.vmem [shape: f32[2,8,128], index: 3, kind: output, shape index: {1}]
  %4 = xla_tuple %s2, %s3
  %s5 = sld [smem:[#allocation0]]
  $region61: #{a_call__.10} parent=0
    _
  %s7 = ssub.s32 1, %s5
  %s8 = scalar_select 0, %s7, %s5
  loop: start=0, step=1, limit=4
  $region2: #{a_call__.10} parent=0 // loop_pre_header
    _
  $region3: #{a_call__.10} parent=0 // loop_header
    %s10 = sphi 0, %s14
    %p11 = scmp.ge.s32.totalorder %s10, 4
    %s17 = sphi 0, %s29
    %s18 = sphi 0, %s25
    %s19 = sphi 0, %s17
    %s20 = sphi 0, %s18
    %s21 = sphi 0, %s19
    %s22 = sphi 0, %s20
    %s34 = sphi 0, %s36
    %s37 = sphi 0, %s34
    %s38 = sphi 0, %s37
    %s54 = sphi 0, %s38
    %s64 = sphi 0, %s66
    %s67 = sphi 0, %s64
    %s68 = sphi 0, %s67
    %s84 = sphi 0, %s68
    %s90 = sphi 0, %s92
    %s93 = sphi 0, %s90
    %s94 = sphi 0, %s93
    %s110 = sphi 0, %s94
    %s116 = sphi 0, %s118
    %s119 = sphi 0, %s116
    %s120 = sphi 0, %s119
    %s136 = sphi 0, %s120
  $region4: #{a_call__.10} parent=0 // loop_header_branch
    %13 = sbr.rel (%p11) target = $region8
  $region5: #{a_call__.10} parent=0 // loop_body
    %s15 = ssub.s32 %s10, 1
    %s16 = ssub.s32 %s10, 2
    %s23 = sadd.s32 1, %s18
    %p24 = scmp.ge.s32.totalorder %s23, 1
    %s25 = scalar_select %p24, 0, %s23
    %s26 = sadd.s32 1, %s17
    %s27 = scalar_select %p24, %s26, %s17
    %p28 = scmp.ge.s32.totalorder %s27, 2
    %s29 = scalar_select %p28, 0, %s27
    %s30 = ssub.s32 %s17, %s29
    %s31 = ssub.s32 %s18, %s25
    %s32 = sor.u32 %s30, %s31
    %p33 = scmp.eq.s32.totalorder %s32, 0
    %s35 = sadd.s32 %s34, 1
    %s36 = scalar_select %p33, %s34, %s35
    %p39 = pneg %p33
    %p40 = scmp.eq.s32.totalorder %s10, 1
    %p41 = por %p39, %p40
    %p42 = scmp.ne.s32.totalorder %s34, %s37
    %p43 = scmp.eq.s32.totalorder %s10, 0
    %p44 = por %p42, %p43
    %p45 = scmp.ne.s32.totalorder %s34, %s37
    %p46 = scmp.eq.s32.totalorder %s15, 1
    %p47 = por %p45, %p46
    %p48 = scmp.ne.s32.totalorder %s37, %s38
    %p49 = scmp.eq.s32.totalorder %s15, 0
    %p50 = por %p48, %p49
    %p51 = scmp.ne.s32.totalorder %s37, %s38
    %p52 = scmp.eq.s32.totalorder %s16, 1
    %p53 = por %p51, %p52
    %p55 = scmp.ne.s32.totalorder %s38, %s54
    %p56 = scmp.eq.s32.totalorder %s16, 0
    %p57 = por %p55, %p56
    %s58 = sadd.s32 %s17, 2
    %s59 = sadd.s32 %s29, 2
    %s60 = ssub.s32 %s58, %s59
    %s61 = ssub.s32 %s18, %s25
    %s62 = sor.u32 %s60, %s61
    %p63 = scmp.eq.s32.totalorder %s62, 0
    %s65 = sadd.s32 %s64, 1
    %s66 = scalar_select %p63, %s64, %s65
    %p69 = pneg %p63
    %p70 = scmp.eq.s32.totalorder %s10, 1
    %p71 = por %p69, %p70
    %p72 = scmp.ne.s32.totalorder %s64, %s67
    %p73 = scmp.eq.s32.totalorder %s10, 0
    %p74 = por %p72, %p73
    %p75 = scmp.ne.s32.totalorder %s64, %s67
    %p76 = scmp.eq.s32.totalorder %s15, 1
    %p77 = por %p75, %p76
    %p78 = scmp.ne.s32.totalorder %s67, %s68
    %p79 = scmp.eq.s32.totalorder %s15, 0
    %p80 = por %p78, %p79
    %p81 = scmp.ne.s32.totalorder %s67, %s68
    %p82 = scmp.eq.s32.totalorder %s16, 1
    %p83 = por %p81, %p82
    %p85 = scmp.ne.s32.totalorder %s68, %s84
    %p86 = scmp.eq.s32.totalorder %s16, 0
    %p87 = por %p85, %p86
    %s88 = ssub.s32 %s17, %s29
    %p89 = scmp.eq.s32.totalorder %s88, 0
    %s91 = sadd.s32 %s90, 1
    %s92 = scalar_select %p89, %s90, %s91
    %p95 = pneg %p89
    %p96 = scmp.eq.s32.totalorder %s10, 1
    %p97 = por %p95, %p96
    %p98 = scmp.ne.s32.totalorder %s90, %s93
    %p99 = scmp.eq.s32.totalorder %s10, 0
    %p100 = por %p98, %p99
    %p101 = scmp.ne.s32.totalorder %s90, %s93
    %p102 = scmp.eq.s32.totalorder %s15, 1
    %p103 = por %p101, %p102
    %p104 = scmp.ne.s32.totalorder %s93, %s94
    %p105 = scmp.eq.s32.totalorder %s15, 0
    %p106 = por %p104, %p105
    %p107 = scmp.ne.s32.totalorder %s93, %s94
    %p108 = scmp.eq.s32.totalorder %s16, 1
    %p109 = por %p107, %p108
    %p111 = scmp.ne.s32.totalorder %s94, %s110
    %p112 = scmp.eq.s32.totalorder %s16, 0
    %p113 = por %p111, %p112
    %s114 = ssub.s32 %s17, %s29
    %p115 = scmp.eq.s32.totalorder %s114, 0
    %s117 = sadd.s32 %s116, 1
    %s118 = scalar_select %p115, %s116, %s117
    %p121 = pneg %p115
    %p122 = scmp.eq.s32.totalorder %s10, 1
    %p123 = por %p121, %p122
    %p124 = scmp.ne.s32.totalorder %s116, %s119
    %p125 = scmp.eq.s32.totalorder %s10, 0
    %p126 = por %p124, %p125
    %p127 = scmp.ne.s32.totalorder %s116, %s119
    %p128 = scmp.eq.s32.totalorder %s15, 1
    %p129 = por %p127, %p128
    %p130 = scmp.ne.s32.totalorder %s119, %s120
    %p131 = scmp.eq.s32.totalorder %s15, 0
    %p132 = por %p130, %p131
    %p133 = scmp.ne.s32.totalorder %s119, %s120
    %p134 = scmp.eq.s32.totalorder %s16, 1
    %p135 = por %p133, %p134
    %p137 = scmp.ne.s32.totalorder %s120, %s136
    %p138 = scmp.eq.s32.totalorder %s16, 0
    %p139 = por %p137, %p138
    %p140 = scmp.le.s32.totalorder 1, %s10
    %p141 = scmp.lt.s32.totalorder %s10, 3
    %p142 = pnand %p140, %p141
    %p143 = pneg %p142
    // Predicated region
    $region9: #{a_call__.10} parent=5 // pred_check
      _
    $region10: #{a_call__.10} parent=5 // pred_check_branch
      %145 = sbr.rel (%p142) target = $region12
    $region11: #{a_call__.10} parent=5 // pred_region
      %s146 = ssub.s32 %s10, 1
    $region12: #{a_call__.10} parent=5 // pred_fallthru
      _
    %p147 = scmp.lt.s32.totalorder %s10, 2
    // Predicated region
    $region13: #{a_call__.10} parent=5 // pred_check
      %p148 = pneg %p147
    $region14: #{a_call__.10} parent=5 // pred_check_branch
      %150 = sbr.rel (%p148) target = $region16
    $region15: #{a_call__.10} parent=5 // pred_region
      // Predicated region
      $region17: #{a_call__.10} parent=15 // pred_check
        %p151 = pneg %p44
      $region18: #{a_call__.10} parent=15 // pred_check_branch
        %153 = sbr.rel (%p151) target = $region20
      $region19: #{a_call__.10} parent=15 // pred_region
        %s154 = smul.u32 32, %s18
        %p155 = scmp.lt.s32.totalorder %s17, 3
        %s156 = scalar_select %p155, %s17, 3
        %p157 = scmp.lt.s32.totalorder %s154, 31
        %s158 = scalar_select %p157, %s154, 31
        %s159 = smul.addr %s156, 32
        %s160 = sadd.s32 %s158, %s159
        %s161 = smul.addr %s160, 4
        %s162 = scalar_lea.vmem %s0, %s161
        %s163 = smul.u32 32, %s18
      $region20: #{a_call__.10} parent=15 // pred_fallthru
        _
      // Predicated region
      $region21: #{a_call__.10} parent=15 // pred_check
        %p164 = pneg %p74
      $region22: #{a_call__.10} parent=15 // pred_check_branch
        %166 = sbr.rel (%p164) target = $region24
      $region23: #{a_call__.10} parent=15 // pred_region
        %s167 = sadd.s32 %s17, 2
        %s168 = smul.u32 32, %s18
        %p169 = scmp.lt.s32.totalorder %s167, 3
        %s170 = scalar_select %p169, %s167, 3
        %p171 = scmp.lt.s32.totalorder %s168, 31
        %s172 = scalar_select %p171, %s168, 31
        %s173 = smul.addr %s170, 32
        %s174 = sadd.s32 %s172, %s173
        %s175 = smul.addr %s174, 4
        %s176 = scalar_lea.vmem %s1, %s175
        %s177 = sadd.s32 %s17, 2
        %s178 = smul.u32 32, %s18
      $region24: #{a_call__.10} parent=15 // pred_fallthru
        _
    $region16: #{a_call__.10} parent=5 // pred_fallthru
      _
    %p179 = scmp.le.s32.totalorder 1, %s10
    %p180 = scmp.lt.s32.totalorder %s10, 3
    %p181 = pnand %p179, %p180
    %p182 = pneg %p181
    // Predicated region
    $region25: #{a_call__.10} parent=5 // pred_check
      _
    $region26: #{a_call__.10} parent=5 // pred_check_branch
      %184 = sbr.rel (%p181) target = $region28
    $region27: #{a_call__.10} parent=5 // pred_region
      %s185 = ssub.s32 %s10, 1
      %s186 = smul.u32 32, %s20
      %p187 = scmp.lt.s32.totalorder %s19, 3
      %s188 = scalar_select %p187, %s19, 3
      %p189 = scmp.lt.s32.totalorder %s186, 31
      %s190 = scalar_select %p189, %s186, 31
      %s191 = smul.addr %s188, 32
      %s192 = sadd.s32 %s190, %s191
      %s193 = smul.addr %s192, 4
      %s194 = scalar_lea.vmem %s0, %s193
      %p195 = pneg %p50
      %p196 = pneg %p47
      %s197 = sadd.s32 %s19, 2
      %s198 = smul.u32 32, %s20
      %p199 = scmp.lt.s32.totalorder %s197, 3
      %s200 = scalar_select %p199, %s197, 3
      %p201 = scmp.lt.s32.totalorder %s198, 31
      %s202 = scalar_select %p201, %s198, 31
      %s203 = smul.addr %s200, 32
      %s204 = sadd.s32 %s202, %s203
      %s205 = smul.addr %s204, 4
      %s206 = scalar_lea.vmem %s1, %s205
      %p207 = pneg %p80
      %p208 = pneg %p77
      %p209 = pneg %p106
      %p210 = pneg %p103
      %p211 = scmp.lt.s32.totalorder %s19, 1
      %s212 = scalar_select %p211, %s19, 1
      %s213 = smul.addr %s212, 8
      %s214 = scalar_lea.vmem %s2, %s213
      %p215 = pneg %p132
      %p216 = pneg %p129
      %p217 = scmp.lt.s32.totalorder %s19, 1
      %s218 = scalar_select %p217, %s19, 1
      %s219 = smul.addr %s218, 8
      %s220 = scalar_lea.vmem %s3, %s219
      %s221 = smul.u32 32, %s20
      %p222 = scmp.lt.s32.totalorder %s19, 3
      %s223 = scalar_select %p222, %s19, 3
      %p224 = scmp.lt.s32.totalorder %s221, 31
      %s225 = scalar_select %p224, %s221, 31
      %s226 = smul.addr %s223, 32
      %s227 = sadd.s32 %s225, %s226
      %s228 = smul.addr %s227, 4
      %s229 = scalar_lea.vmem %s0, %s228
      %s230 = smul.u32 32, %s20
      %s231 = sadd.s32 %s19, 2
      %s232 = smul.u32 32, %s20
      %p233 = scmp.lt.s32.totalorder %s231, 3
      %s234 = scalar_select %p233, %s231, 3
      %p235 = scmp.lt.s32.totalorder %s232, 31
      %s236 = scalar_select %p235, %s232, 31
      %s237 = smul.addr %s234, 32
      %s238 = sadd.s32 %s236, %s237
      %s239 = smul.addr %s238, 4
      %s240 = scalar_lea.vmem %s1, %s239
      %s241 = sadd.s32 %s19, 2
      %s242 = smul.u32 32, %s20
      %p243 = scmp.lt.s32.totalorder %s19, 1
      %s244 = scalar_select %p243, %s19, 1
      %s245 = smul.addr %s244, 8
      %s246 = scalar_lea.vmem %s2, %s245
      %p247 = scmp.lt.s32.totalorder %s19, 1
      %s248 = scalar_select %p247, %s19, 1
      %s249 = smul.addr %s248, 8
      %s250 = scalar_lea.vmem %s3, %s249
      %v252 = vld [vmem:[%s229] sm:$0xf]
      %v253 = vld [vmem:[%s229 + $0x4] sm:$0xf]
      %v254 = vld [vmem:[%s229 + $0x8] sm:$0xf]
      %v255 = vld [vmem:[%s229 + $0xc] sm:$0xf]
      %v256 = vld [vmem:[%s229 + $0x10] sm:$0xf]
      %v257 = vld [vmem:[%s229 + $0x14] sm:$0xf]
      %v258 = vld [vmem:[%s229 + $0x18] sm:$0xf]
      %v259 = vld [vmem:[%s229 + $0x1c] sm:$0xf]
      %v260 = vld [vmem:[%s229 + $0x20] sm:$0xf]
      %v261 = vld [vmem:[%s229 + $0x24] sm:$0xf]
      %v262 = vld [vmem:[%s229 + $0x28] sm:$0xf]
      %v263 = vld [vmem:[%s229 + $0x2c] sm:$0xf]
      %v264 = vld [vmem:[%s229 + $0x30] sm:$0xf]
      %v265 = vld [vmem:[%s229 + $0x34] sm:$0xf]
      %v266 = vld [vmem:[%s229 + $0x38] sm:$0xf]
      %v267 = vld [vmem:[%s229 + $0x3c] sm:$0xf]
      %v268 = vld [vmem:[%s229 + $0x40] sm:$0xf]
      %v269 = vld [vmem:[%s229 + $0x44] sm:$0xf]
      %v270 = vld [vmem:[%s229 + $0x48] sm:$0xf]
      %v271 = vld [vmem:[%s229 + $0x4c] sm:$0xf]
      %v272 = vld [vmem:[%s229 + $0x50] sm:$0xf]
      %v273 = vld [vmem:[%s229 + $0x54] sm:$0xf]
      %v274 = vld [vmem:[%s229 + $0x58] sm:$0xf]
      %v275 = vld [vmem:[%s229 + $0x5c] sm:$0xf]
      %v276 = vld [vmem:[%s229 + $0x60] sm:$0xf]
      %v277 = vld [vmem:[%s229 + $0x64] sm:$0xf]
      %v278 = vld [vmem:[%s229 + $0x68] sm:$0xf]
      %v279 = vld [vmem:[%s229 + $0x6c] sm:$0xf]
      %v280 = vld [vmem:[%s229 + $0x70] sm:$0xf]
      %v281 = vld [vmem:[%s229 + $0x74] sm:$0xf]
      %v282 = vld [vmem:[%s229 + $0x78] sm:$0xf]
      %v283 = vld [vmem:[%s229 + $0x7c] sm:$0xf]
      %v284 = vld [vmem:[%s240] sm:$0xf]
      %v285 = vld [vmem:[%s240 + $0x4] sm:$0xf]
      %v286 = vld [vmem:[%s240 + $0x8] sm:$0xf]
      %v287 = vld [vmem:[%s240 + $0xc] sm:$0xf]
      %v288 = vld [vmem:[%s240 + $0x10] sm:$0xf]
      %v289 = vld [vmem:[%s240 + $0x14] sm:$0xf]
      %v290 = vld [vmem:[%s240 + $0x18] sm:$0xf]
      %v291 = vld [vmem:[%s240 + $0x1c] sm:$0xf]
      %v292 = vld [vmem:[%s240 + $0x20] sm:$0xf]
      %v293 = vld [vmem:[%s240 + $0x24] sm:$0xf]
      %v294 = vld [vmem:[%s240 + $0x28] sm:$0xf]
      %v295 = vld [vmem:[%s240 + $0x2c] sm:$0xf]
      %v296 = vld [vmem:[%s240 + $0x30] sm:$0xf]
      %v297 = vld [vmem:[%s240 + $0x34] sm:$0xf]
      %v298 = vld [vmem:[%s240 + $0x38] sm:$0xf]
      %v299 = vld [vmem:[%s240 + $0x3c] sm:$0xf]
      %v300 = vld [vmem:[%s240 + $0x40] sm:$0xf]
      %v301 = vld [vmem:[%s240 + $0x44] sm:$0xf]
      %v302 = vld [vmem:[%s240 + $0x48] sm:$0xf]
      %v303 = vld [vmem:[%s240 + $0x4c] sm:$0xf]
      %v304 = vld [vmem:[%s240 + $0x50] sm:$0xf]
      %v305 = vld [vmem:[%s240 + $0x54] sm:$0xf]
      %v306 = vld [vmem:[%s240 + $0x58] sm:$0xf]
      %v307 = vld [vmem:[%s240 + $0x5c] sm:$0xf]
      %v308 = vld [vmem:[%s240 + $0x60] sm:$0xf]
      %v309 = vld [vmem:[%s240 + $0x64] sm:$0xf]
      %v310 = vld [vmem:[%s240 + $0x68] sm:$0xf]
      %v311 = vld [vmem:[%s240 + $0x6c] sm:$0xf]
      %v312 = vld [vmem:[%s240 + $0x70] sm:$0xf]
      %v313 = vld [vmem:[%s240 + $0x74] sm:$0xf]
      %v314 = vld [vmem:[%s240 + $0x78] sm:$0xf]
      %v315 = vld [vmem:[%s240 + $0x7c] sm:$0xf]
      %p316 = scmp.eq.s32.totalorder %s20, 0
      // Predicated region
      $region29: #{a_call__.10} parent=27 // pred_check
        %p317 = pneg %p316
      $region30: #{a_call__.10} parent=27 // pred_check_branch
        %319 = sbr.rel (%p317) target = $region32
      $region31: #{a_call__.10} parent=27 // pred_region
        %vm320 = vcmask 516096
        %321 = vst.msk [vmem:[#allocation2] sm:$0x1] %vm320, 0.0
      $region32: #{a_call__.10} parent=27 // pred_fallthru
        _
      %v322 = vunpack.c.l.bf16 %v252
      %v323 = vunpack.c.l.bf16 %v253
      %v324 = vunpack.c.l.bf16 %v254
      %v325 = vunpack.c.l.bf16 %v255
      %v326 = vunpack.c.l.bf16 %v256
      %v327 = vunpack.c.l.bf16 %v257
      %v328 = vunpack.c.l.bf16 %v258
      %v329 = vunpack.c.l.bf16 %v259
      %v330 = vunpack.c.l.bf16 %v260
      %v331 = vunpack.c.l.bf16 %v261
      %v332 = vunpack.c.l.bf16 %v262
      %v333 = vunpack.c.l.bf16 %v263
      %v334 = vunpack.c.l.bf16 %v264
      %v335 = vunpack.c.l.bf16 %v265
      %v336 = vunpack.c.l.bf16 %v266
      %v337 = vunpack.c.l.bf16 %v267
      %v338 = vunpack.c.l.bf16 %v268
      %v339 = vunpack.c.l.bf16 %v269
      %v340 = vunpack.c.l.bf16 %v270
      %v341 = vunpack.c.l.bf16 %v271
      %v342 = vunpack.c.l.bf16 %v272
      %v343 = vunpack.c.l.bf16 %v273
      %v344 = vunpack.c.l.bf16 %v274
      %v345 = vunpack.c.l.bf16 %v275
      %v346 = vunpack.c.l.bf16 %v276
      %v347 = vunpack.c.l.bf16 %v277
      %v348 = vunpack.c.l.bf16 %v278
      %v349 = vunpack.c.l.bf16 %v279
      %v350 = vunpack.c.l.bf16 %v280
      %v351 = vunpack.c.l.bf16 %v281
      %v352 = vunpack.c.l.bf16 %v282
      %v353 = vunpack.c.l.bf16 %v283
      %v354 = vunpack.c.l.bf16 %v284
      %v355 = vunpack.c.l.bf16 %v285
      %v356 = vunpack.c.l.bf16 %v286
      %v357 = vunpack.c.l.bf16 %v287
      %v358 = vunpack.c.l.bf16 %v288
      %v359 = vunpack.c.l.bf16 %v289
      %v360 = vunpack.c.l.bf16 %v290
      %v361 = vunpack.c.l.bf16 %v291
      %v362 = vunpack.c.l.bf16 %v292
      %v363 = vunpack.c.l.bf16 %v293
      %v364 = vunpack.c.l.bf16 %v294
      %v365 = vunpack.c.l.bf16 %v295
      %v366 = vunpack.c.l.bf16 %v296
      %v367 = vunpack.c.l.bf16 %v297
      %v368 = vunpack.c.l.bf16 %v298
      %v369 = vunpack.c.l.bf16 %v299
      %v370 = vunpack.c.l.bf16 %v300
      %v371 = vunpack.c.l.bf16 %v301
      %v372 = vunpack.c.l.bf16 %v302
      %v373 = vunpack.c.l.bf16 %v303
      %v374 = vunpack.c.l.bf16 %v304
      %v375 = vunpack.c.l.bf16 %v305
      %v376 = vunpack.c.l.bf16 %v306
      %v377 = vunpack.c.l.bf16 %v307
      %v378 = vunpack.c.l.bf16 %v308
      %v379 = vunpack.c.l.bf16 %v309
      %v380 = vunpack.c.l.bf16 %v310
      %v381 = vunpack.c.l.bf16 %v311
      %v382 = vunpack.c.l.bf16 %v312
      %v383 = vunpack.c.l.bf16 %v313
      %v384 = vunpack.c.l.bf16 %v314
      %v385 = vunpack.c.l.bf16 %v315
      %v386 = vsub.f32 %v322, %v354
      %v387 = vsub.f32 %v323, %v355
      %v388 = vsub.f32 %v324, %v356
      %v389 = vsub.f32 %v325, %v357
      %v390 = vsub.f32 %v326, %v358
      %v391 = vsub.f32 %v327, %v359
      %v392 = vsub.f32 %v328, %v360
      %v393 = vsub.f32 %v329, %v361
      %v394 = vsub.f32 %v330, %v362
      %v395 = vsub.f32 %v331, %v363
      %v396 = vsub.f32 %v332, %v364
      %v397 = vsub.f32 %v333, %v365
      %v398 = vsub.f32 %v334, %v366
      %v399 = vsub.f32 %v335, %v367
      %v400 = vsub.f32 %v336, %v368
      %v401 = vsub.f32 %v337, %v369
      %v402 = vsub.f32 %v338, %v370
      %v403 = vsub.f32 %v339, %v371
      %v404 = vsub.f32 %v340, %v372
      %v405 = vsub.f32 %v341, %v373
      %v406 = vsub.f32 %v342, %v374
      %v407 = vsub.f32 %v343, %v375
      %v408 = vsub.f32 %v344, %v376
      %v409 = vsub.f32 %v345, %v377
      %v410 = vsub.f32 %v346, %v378
      %v411 = vsub.f32 %v347, %v379
      %v412 = vsub.f32 %v348, %v380
      %v413 = vsub.f32 %v349, %v381
      %v414 = vsub.f32 %v350, %v382
      %v415 = vsub.f32 %v351, %v383
      %v416 = vsub.f32 %v352, %v384
      %v417 = vsub.f32 %v353, %v385
      %v418 = vand.u32 2147483647, %v386
      %v419 = vand.u32 2147483647, %v387
      %v420 = vand.u32 2147483647, %v388
      %v421 = vand.u32 2147483647, %v389
      %v422 = vand.u32 2147483647, %v390
      %v423 = vand.u32 2147483647, %v391
      %v424 = vand.u32 2147483647, %v392
      %v425 = vand.u32 2147483647, %v393
      %v426 = vand.u32 2147483647, %v394
      %v427 = vand.u32 2147483647, %v395
      %v428 = vand.u32 2147483647, %v396
      %v429 = vand.u32 2147483647, %v397
      %v430 = vand.u32 2147483647, %v398
      %v431 = vand.u32 2147483647, %v399
      %v432 = vand.u32 2147483647, %v400
      %v433 = vand.u32 2147483647, %v401
      %v434 = vand.u32 2147483647, %v402
      %v435 = vand.u32 2147483647, %v403
      %v436 = vand.u32 2147483647, %v404
      %v437 = vand.u32 2147483647, %v405
      %v438 = vand.u32 2147483647, %v406
      %v439 = vand.u32 2147483647, %v407
      %v440 = vand.u32 2147483647, %v408
      %v441 = vand.u32 2147483647, %v409
      %v442 = vand.u32 2147483647, %v410
      %v443 = vand.u32 2147483647, %v411
      %v444 = vand.u32 2147483647, %v412
      %v445 = vand.u32 2147483647, %v413
      %v446 = vand.u32 2147483647, %v414
      %v447 = vand.u32 2147483647, %v415
      %v448 = vand.u32 2147483647, %v416
      %v449 = vand.u32 2147483647, %v417
      %v450 = vld [vmem:[#allocation2] sm:$0x1]
      %vm451 = vcmask 523264
      %v452 = vsel %vm451, %v418, 0.0
      %v453 = vsel %vm451, %v419, 0.0
      %v454 = vadd.f32 %v452, %v453
      %v455 = vsel %vm451, %v420, 0.0
      %v456 = vadd.f32 %v454, %v455
      %v457 = vsel %vm451, %v421, 0.0
      %v458 = vadd.f32 %v456, %v457
      %v459 = vsel %vm451, %v422, 0.0
      %v460 = vadd.f32 %v458, %v459
      %v461 = vsel %vm451, %v423, 0.0
      %v462 = vadd.f32 %v460, %v461
      %v463 = vsel %vm451, %v424, 0.0
      %v464 = vadd.f32 %v462, %v463
      %v465 = vsel %vm451, %v425, 0.0
      %v466 = vadd.f32 %v464, %v465
      %v467 = vsel %vm451, %v426, 0.0
      %v468 = vadd.f32 %v466, %v467
      %v469 = vsel %vm451, %v427, 0.0
      %v470 = vadd.f32 %v468, %v469
      %v471 = vsel %vm451, %v428, 0.0
      %v472 = vadd.f32 %v470, %v471
      %v473 = vsel %vm451, %v429, 0.0
      %v474 = vadd.f32 %v472, %v473
      %v475 = vsel %vm451, %v430, 0.0
      %v476 = vadd.f32 %v474, %v475
      %v477 = vsel %vm451, %v431, 0.0
      %v478 = vadd.f32 %v476, %v477
      %v479 = vsel %vm451, %v432, 0.0
      %v480 = vadd.f32 %v478, %v479
      %v481 = vsel %vm451, %v433, 0.0
      %v482 = vadd.f32 %v480, %v481
      %v483 = vsel %vm451, %v434, 0.0
      %v484 = vadd.f32 %v482, %v483
      %v485 = vsel %vm451, %v435, 0.0
      %v486 = vadd.f32 %v484, %v485
      %v487 = vsel %vm451, %v436, 0.0
      %v488 = vadd.f32 %v486, %v487
      %v489 = vsel %vm451, %v437, 0.0
      %v490 = vadd.f32 %v488, %v489
      %v491 = vsel %vm451, %v438, 0.0
      %v492 = vadd.f32 %v490, %v491
      %v493 = vsel %vm451, %v439, 0.0
      %v494 = vadd.f32 %v492, %v493
      %v495 = vsel %vm451, %v440, 0.0
      %v496 = vadd.f32 %v494, %v495
      %v497 = vsel %vm451, %v441, 0.0
      %v498 = vadd.f32 %v496, %v497
      %v499 = vsel %vm451, %v442, 0.0
      %v500 = vadd.f32 %v498, %v499
      %v501 = vsel %vm451, %v443, 0.0
      %v502 = vadd.f32 %v500, %v501
      %v503 = vsel %vm451, %v444, 0.0
      %v504 = vadd.f32 %v502, %v503
      %v505 = vsel %vm451, %v445, 0.0
      %v506 = vadd.f32 %v504, %v505
      %v507 = vsel %vm451, %v446, 0.0
      %v508 = vadd.f32 %v506, %v507
      %v509 = vsel %vm451, %v447, 0.0
      %v510 = vadd.f32 %v508, %v509
      %v511 = vsel %vm451, %v448, 0.0
      %v512 = vadd.f32 %v510, %v511
      %v513 = vsel %vm451, %v449, 0.0
      %v514 = vadd.f32 %v512, %v513
      %v515 = vrot.slane %v514, 4
      %v516 = vadd.f32 %v514, %v515
      %v517 = vrot.slane %v516, 2
      %v518 = vadd.f32 %v516, %v517
      %v519 = vrot.slane %v518, 1
      %v520 = vadd.f32 %v518, %v519
      %v521 = vadd.f32 %v450, %v520
      %vm522 = vcmask 516096
      %523 = vst.msk [vmem:[#allocation2] sm:$0x1] %vm522, %v521
      // Predicated region
      $region33: #{a_call__.10} parent=27 // pred_check
        %p524 = pneg %p316
      $region34: #{a_call__.10} parent=27 // pred_check_branch
        %526 = sbr.rel (%p524) target = $region36
      $region35: #{a_call__.10} parent=27 // pred_region
        %v527 = vld [vmem:[#allocation2] sm:$0x1]
        %v528 = vsel %vm522, %v527, 0.0
        %529 = vadd.xlane.f32.xlu0 %v528
        %v530 = vpop.xlane.xlu0 %529
        %v531 = vrot.slane %v530, 4
        %v532 = vadd.f32 %v530, %v531
        %v533 = vrot.slane %v532, 2
        %v534 = vadd.f32 %v532, %v533
        %v535 = vrot.slane %v534, 1
        %v536 = vadd.f32 %v534, %v535
        %s537 = vtos %v536
        %v538 = vstv %s537
        %539 = vst [vmem:[%s246] sm:$0xff] %v538
        %540 = vst.msk [vmem:[#allocation3] sm:$0xff] %vm451, 0.0
        %541 = vst.msk [vmem:[#allocation3 + $0x8] sm:$0xff] %vm451, 0.0
        %542 = vst.msk [vmem:[#allocation3 + $0x10] sm:$0xff] %vm451, 0.0
        %543 = vst.msk [vmem:[#allocation3 + $0x18] sm:$0xff] %vm451, 0.0
        %544 = vst.msk [vmem:[#allocation3 + $0x20] sm:$0xff] %vm451, 0.0
        %545 = vst.msk [vmem:[#allocation3 + $0x28] sm:$0xff] %vm451, 0.0
        %546 = vst.msk [vmem:[#allocation3 + $0x30] sm:$0xff] %vm451, 0.0
        %547 = vst.msk [vmem:[#allocation3 + $0x38] sm:$0xff] %vm451, 0.0
        %548 = vst.msk [vmem:[#allocation4] sm:$0xff] %vm451, 0.0
        %549 = vst.msk [vmem:[#allocation4 + $0x8] sm:$0xff] %vm451, 0.0
        %550 = vst.msk [vmem:[#allocation4 + $0x10] sm:$0xff] %vm451, 0.0
        %551 = vst.msk [vmem:[#allocation4 + $0x18] sm:$0xff] %vm451, 0.0
        %552 = vst.msk [vmem:[#allocation4 + $0x20] sm:$0xff] %vm451, 0.0
        %553 = vst.msk [vmem:[#allocation4 + $0x28] sm:$0xff] %vm451, 0.0
        %554 = vst.msk [vmem:[#allocation4 + $0x30] sm:$0xff] %vm451, 0.0
        %555 = vst.msk [vmem:[#allocation4 + $0x38] sm:$0xff] %vm451, 0.0
      $region36: #{a_call__.10} parent=27 // pred_fallthru
        _
      %v556 = vld [vmem:[#allocation3] sm:$0xff]
      %v557 = vld [vmem:[#allocation3 + $0x8] sm:$0xff]
      %v558 = vld [vmem:[#allocation3 + $0x10] sm:$0xff]
      %v559 = vld [vmem:[#allocation3 + $0x18] sm:$0xff]
      %v560 = vld [vmem:[#allocation3 + $0x20] sm:$0xff]
      %v561 = vld [vmem:[#allocation3 + $0x28] sm:$0xff]
      %v562 = vld [vmem:[#allocation3 + $0x30] sm:$0xff]
      %v563 = vld [vmem:[#allocation3 + $0x38] sm:$0xff]
      %v596 = vunpack.c.l.b16 %v252
      %v597 = vunpack.c.l.b16 %v253
      %v598 = vunpack.c.l.b16 %v254
      %v599 = vunpack.c.l.b16 %v255
      %v600 = vunpack.c.l.b16 %v256
      %v601 = vunpack.c.l.b16 %v257
      %v602 = vunpack.c.l.b16 %v258
      %v603 = vunpack.c.l.b16 %v259
      %v604 = vunpack.c.l.b16 %v260
      %v605 = vunpack.c.l.b16 %v261
      %v606 = vunpack.c.l.b16 %v262
      %v607 = vunpack.c.l.b16 %v263
      %v608 = vunpack.c.l.b16 %v264
      %v609 = vunpack.c.l.b16 %v265
      %v610 = vunpack.c.l.b16 %v266
      %v611 = vunpack.c.l.b16 %v267
      %v612 = vunpack.c.l.b16 %v268
      %v613 = vunpack.c.l.b16 %v269
      %v614 = vunpack.c.l.b16 %v270
      %v615 = vunpack.c.l.b16 %v271
      %v616 = vunpack.c.l.b16 %v272
      %v617 = vunpack.c.l.b16 %v273
      %v618 = vunpack.c.l.b16 %v274
      %v619 = vunpack.c.l.b16 %v275
      %v620 = vunpack.c.l.b16 %v276
      %v621 = vunpack.c.l.b16 %v277
      %v622 = vunpack.c.l.b16 %v278
      %v623 = vunpack.c.l.b16 %v279
      %v624 = vunpack.c.l.b16 %v280
      %v625 = vunpack.c.l.b16 %v281
      %v626 = vunpack.c.l.b16 %v282
      %v627 = vunpack.c.l.b16 %v283
      %v628 = vpack.c.b16 %v597, %v596
      %v629 = vpack.c.b16 %v599, %v598
      %v630 = vpack.c.b16 %v601, %v600
      %v631 = vpack.c.b16 %v603, %v602
      %v632 = vpack.c.b16 %v605, %v604
      %v633 = vpack.c.b16 %v607, %v606
      %v634 = vpack.c.b16 %v609, %v608
      %v635 = vpack.c.b16 %v611, %v610
      %v636 = vpack.c.b16 %v613, %v612
      %v637 = vpack.c.b16 %v615, %v614
      %v638 = vpack.c.b16 %v617, %v616
      %v639 = vpack.c.b16 %v619, %v618
      %v640 = vpack.c.b16 %v621, %v620
      %v641 = vpack.c.b16 %v623, %v622
      %v642 = vpack.c.b16 %v625, %v624
      %v643 = vpack.c.b16 %v627, %v626
      %660 = vxpose.xlu0.c.b16.start [1/8] %v628, 128
      %661 = vxpose.xlu0.c.b16.cont [2/8] %v629, 128
      %662 = vxpose.xlu0.c.b16.cont [3/8] %v630, 128
      %663 = vxpose.xlu0.c.b16.cont [4/8] %v631, 128
      %664 = vxpose.xlu0.c.b16.cont [5/8] %v632, 128
      %665 = vxpose.xlu0.c.b16.cont [6/8] %v633, 128
      %666 = vxpose.xlu0.c.b16.cont [7/8] %v634, 128
      %667 = vxpose.xlu0.c.b16.end [8/8] %v635, 128
      %v668 = vpop.trf.xlu0
      %v669 = vpop.trf.xlu0
      %v670 = vpop.trf.xlu0
      %v671 = vpop.trf.xlu0
      %v672 = vpop.trf.xlu0
      %v673 = vpop.trf.xlu0
      %v674 = vpop.trf.xlu0
      %v675 = vpop.trf.xlu0
      %676 = vxpose.xlu0.c.b16.start [1/8] %v636, 128
      %677 = vxpose.xlu0.c.b16.cont [2/8] %v637, 128
      %678 = vxpose.xlu0.c.b16.cont [3/8] %v638, 128
      %679 = vxpose.xlu0.c.b16.cont [4/8] %v639, 128
      %680 = vxpose.xlu0.c.b16.cont [5/8] %v640, 128
      %681 = vxpose.xlu0.c.b16.cont [6/8] %v641, 128
      %682 = vxpose.xlu0.c.b16.cont [7/8] %v642, 128
      %683 = vxpose.xlu0.c.b16.end [8/8] %v643, 128
      %v684 = vpop.trf.xlu0
      %v685 = vpop.trf.xlu0
      %v686 = vpop.trf.xlu0
      %v687 = vpop.trf.xlu0
      %v688 = vpop.trf.xlu0
      %v689 = vpop.trf.xlu0
      %v690 = vpop.trf.xlu0
      %v691 = vpop.trf.xlu0
      %692 = vmatprep.subr.bf16.mxu0 0
      %693 = vmatpush1.bf16.msra.mxu0 %v635
      %694 = vmatprep.subr.bf16.mxu0 0
      %695 = vmatpush1.bf16.msra.mxu0 %v634
      %696 = vmatprep.subr.bf16.mxu0 0
      %697 = vmatpush1.bf16.msra.mxu0 %v633
      %698 = vmatprep.subr.bf16.mxu0 0
      %699 = vmatpush1.bf16.msra.mxu0 %v632
      %700 = vmatprep.subr.bf16.mxu0 0
      %701 = vmatpush1.bf16.msra.mxu0 %v631
      %702 = vmatprep.subr.bf16.mxu0 0
      %703 = vmatpush1.bf16.msra.mxu0 %v630
      %704 = vmatprep.subr.bf16.mxu0 0
      %705 = vmatpush1.bf16.msra.mxu0 %v629
      %706 = vmatprep.subr.bf16.mxu0 0
      %707 = vmatpush1.bf16.msra.mxu0 %v628
      %708 = vmatprep.subr.bf16.mxu0 0
      %709 = vmatpush2.bf16.msra.mxu0 %v643
      %710 = vmatprep.subr.bf16.mxu0 0
      %711 = vmatpush2.bf16.msra.mxu0 %v642
      %712 = vmatprep.subr.bf16.mxu0 0
      %713 = vmatpush2.bf16.msra.mxu0 %v641
      %714 = vmatprep.subr.bf16.mxu0 0
      %715 = vmatpush2.bf16.msra.mxu0 %v640
      %716 = vmatprep.subr.bf16.mxu0 0
      %717 = vmatpush2.bf16.msra.mxu0 %v639
      %718 = vmatprep.subr.bf16.mxu0 0
      %719 = vmatpush2.bf16.msra.mxu0 %v638
      %720 = vmatprep.subr.bf16.mxu0 0
      %721 = vmatpush2.bf16.msra.mxu0 %v637
      %722 = vmatprep.subr.bf16.mxu0 0
      %723 = vmatpush2.bf16.msra.mxu0 %v636
      %724 = vmatprep.mubr.bf16.mxu0 %v684
      %725 = vmatmul.mubr.bf16.gmra.mxu0 %v668
      %v726 = vpop.f32.mrf.mxu0
      %v727 = vadd.f32 0.0, %v726
      %v728 = vpop.f32.mrf.mxu0
      %v729 = vpop.f32.mrf.mxu0
      %v730 = vadd.f32 0.0, %v729
      %v731 = vpop.f32.mrf.mxu0
      %732 = vmatprep.mubr.bf16.mxu0 %v685
      %733 = vmatmul.mubr.bf16.gmra.mxu0 %v669
      %v734 = vpop.f32.mrf.mxu0
      %v735 = vadd.f32 0.0, %v734
      %v736 = vpop.f32.mrf.mxu0
      %v737 = vpop.f32.mrf.mxu0
      %v738 = vadd.f32 0.0, %v737
      %v739 = vpop.f32.mrf.mxu0
      %740 = vmatprep.mubr.bf16.mxu0 %v686
      %741 = vmatmul.mubr.bf16.gmra.mxu0 %v670
      %v742 = vpop.f32.mrf.mxu0
      %v743 = vadd.f32 0.0, %v742
      %v744 = vpop.f32.mrf.mxu0
      %v745 = vpop.f32.mrf.mxu0
      %v746 = vadd.f32 0.0, %v745
      %v747 = vpop.f32.mrf.mxu0
      %748 = vmatprep.mubr.bf16.mxu0 %v687
      %749 = vmatmul.mubr.bf16.gmra.mxu0 %v671
      %v750 = vpop.f32.mrf.mxu0
      %v751 = vadd.f32 0.0, %v750
      %v752 = vpop.f32.mrf.mxu0
      %v753 = vpop.f32.mrf.mxu0
      %v754 = vadd.f32 0.0, %v753
      %v755 = vpop.f32.mrf.mxu0
      %756 = vdwg.mxu0
      %v757 = vadd.f32 %v556, %v727
      %v758 = vadd.f32 %v557, %v730
      %v759 = vadd.f32 %v558, %v735
      %v760 = vadd.f32 %v559, %v738
      %v761 = vadd.f32 %v560, %v743
      %v762 = vadd.f32 %v561, %v746
      %v763 = vadd.f32 %v562, %v751
      %v764 = vadd.f32 %v563, %v754
      %765 = vst.msk [vmem:[#allocation3] sm:$0xff] %vm451, %v757
      %766 = vst.msk [vmem:[#allocation3 + $0x8] sm:$0xff] %vm451, %v758
      %767 = vst.msk [vmem:[#allocation3 + $0x10] sm:$0xff] %vm451, %v759
      %768 = vst.msk [vmem:[#allocation3 + $0x18] sm:$0xff] %vm451, %v760
      %769 = vst.msk [vmem:[#allocation3 + $0x20] sm:$0xff] %vm451, %v761
      %770 = vst.msk [vmem:[#allocation3 + $0x28] sm:$0xff] %vm451, %v762
      %771 = vst.msk [vmem:[#allocation3 + $0x30] sm:$0xff] %vm451, %v763
      %772 = vst.msk [vmem:[#allocation3 + $0x38] sm:$0xff] %vm451, %v764
      %v773 = vld [vmem:[#allocation4] sm:$0xff]
      %v774 = vld [vmem:[#allocation4 + $0x8] sm:$0xff]
      %v775 = vld [vmem:[#allocation4 + $0x10] sm:$0xff]
      %v776 = vld [vmem:[#allocation4 + $0x18] sm:$0xff]
      %v777 = vld [vmem:[#allocation4 + $0x20] sm:$0xff]
      %v778 = vld [vmem:[#allocation4 + $0x28] sm:$0xff]
      %v779 = vld [vmem:[#allocation4 + $0x30] sm:$0xff]
      %v780 = vld [vmem:[#allocation4 + $0x38] sm:$0xff]
      %v813 = vunpack.c.l.b16 %v284
      %v814 = vunpack.c.l.b16 %v285
      %v815 = vunpack.c.l.b16 %v286
      %v816 = vunpack.c.l.b16 %v287
      %v817 = vunpack.c.l.b16 %v288
      %v818 = vunpack.c.l.b16 %v289
      %v819 = vunpack.c.l.b16 %v290
      %v820 = vunpack.c.l.b16 %v291
      %v821 = vunpack.c.l.b16 %v292
      %v822 = vunpack.c.l.b16 %v293
      %v823 = vunpack.c.l.b16 %v294
      %v824 = vunpack.c.l.b16 %v295
      %v825 = vunpack.c.l.b16 %v296
      %v826 = vunpack.c.l.b16 %v297
      %v827 = vunpack.c.l.b16 %v298
      %v828 = vunpack.c.l.b16 %v299
      %v829 = vunpack.c.l.b16 %v300
      %v830 = vunpack.c.l.b16 %v301
      %v831 = vunpack.c.l.b16 %v302
      %v832 = vunpack.c.l.b16 %v303
      %v833 = vunpack.c.l.b16 %v304
      %v834 = vunpack.c.l.b16 %v305
      %v835 = vunpack.c.l.b16 %v306
      %v836 = vunpack.c.l.b16 %v307
      %v837 = vunpack.c.l.b16 %v308
      %v838 = vunpack.c.l.b16 %v309
      %v839 = vunpack.c.l.b16 %v310
      %v840 = vunpack.c.l.b16 %v311
      %v841 = vunpack.c.l.b16 %v312
      %v842 = vunpack.c.l.b16 %v313
      %v843 = vunpack.c.l.b16 %v314
      %v844 = vunpack.c.l.b16 %v315
      %v845 = vpack.c.b16 %v814, %v813
      %v846 = vpack.c.b16 %v816, %v815
      %v847 = vpack.c.b16 %v818, %v817
      %v848 = vpack.c.b16 %v820, %v819
      %v849 = vpack.c.b16 %v822, %v821
      %v850 = vpack.c.b16 %v824, %v823
      %v851 = vpack.c.b16 %v826, %v825
      %v852 = vpack.c.b16 %v828, %v827
      %v853 = vpack.c.b16 %v830, %v829
      %v854 = vpack.c.b16 %v832, %v831
      %v855 = vpack.c.b16 %v834, %v833
      %v856 = vpack.c.b16 %v836, %v835
      %v857 = vpack.c.b16 %v838, %v837
      %v858 = vpack.c.b16 %v840, %v839
      %v859 = vpack.c.b16 %v842, %v841
      %v860 = vpack.c.b16 %v844, %v843
      %877 = vxpose.xlu0.c.b16.start [1/8] %v845, 128
      %878 = vxpose.xlu0.c.b16.cont [2/8] %v846, 128
      %879 = vxpose.xlu0.c.b16.cont [3/8] %v847, 128
      %880 = vxpose.xlu0.c.b16.cont [4/8] %v848, 128
      %881 = vxpose.xlu0.c.b16.cont [5/8] %v849, 128
      %882 = vxpose.xlu0.c.b16.cont [6/8] %v850, 128
      %883 = vxpose.xlu0.c.b16.cont [7/8] %v851, 128
      %884 = vxpose.xlu0.c.b16.end [8/8] %v852, 128
      %v885 = vpop.trf.xlu0
      %v886 = vpop.trf.xlu0
      %v887 = vpop.trf.xlu0
      %v888 = vpop.trf.xlu0
      %v889 = vpop.trf.xlu0
      %v890 = vpop.trf.xlu0
      %v891 = vpop.trf.xlu0
      %v892 = vpop.trf.xlu0
      %893 = vxpose.xlu0.c.b16.start [1/8] %v853, 128
      %894 = vxpose.xlu0.c.b16.cont [2/8] %v854, 128
      %895 = vxpose.xlu0.c.b16.cont [3/8] %v855, 128
      %896 = vxpose.xlu0.c.b16.cont [4/8] %v856, 128
      %897 = vxpose.xlu0.c.b16.cont [5/8] %v857, 128
      %898 = vxpose.xlu0.c.b16.cont [6/8] %v858, 128
      %899 = vxpose.xlu0.c.b16.cont [7/8] %v859, 128
      %900 = vxpose.xlu0.c.b16.end [8/8] %v860, 128
      %v901 = vpop.trf.xlu0
      %v902 = vpop.trf.xlu0
      %v903 = vpop.trf.xlu0
      %v904 = vpop.trf.xlu0
      %v905 = vpop.trf.xlu0
      %v906 = vpop.trf.xlu0
      %v907 = vpop.trf.xlu0
      %v908 = vpop.trf.xlu0
      %909 = vmatprep.subr.bf16.mxu0 0
      %910 = vmatpush1.bf16.msra.mxu0 %v852
      %911 = vmatprep.subr.bf16.mxu0 0
      %912 = vmatpush1.bf16.msra.mxu0 %v851
      %913 = vmatprep.subr.bf16.mxu0 0
      %914 = vmatpush1.bf16.msra.mxu0 %v850
      %915 = vmatprep.subr.bf16.mxu0 0
      %916 = vmatpush1.bf16.msra.mxu0 %v849
      %917 = vmatprep.subr.bf16.mxu0 0
      %918 = vmatpush1.bf16.msra.mxu0 %v848
      %919 = vmatprep.subr.bf16.mxu0 0
      %920 = vmatpush1.bf16.msra.mxu0 %v847
      %921 = vmatprep.subr.bf16.mxu0 0
      %922 = vmatpush1.bf16.msra.mxu0 %v846
      %923 = vmatprep.subr.bf16.mxu0 0
      %924 = vmatpush1.bf16.msra.mxu0 %v845
      %925 = vmatprep.subr.bf16.mxu0 0
      %926 = vmatpush2.bf16.msra.mxu0 %v860
      %927 = vmatprep.subr.bf16.mxu0 0
      %928 = vmatpush2.bf16.msra.mxu0 %v859
      %929 = vmatprep.subr.bf16.mxu0 0
      %930 = vmatpush2.bf16.msra.mxu0 %v858
      %931 = vmatprep.subr.bf16.mxu0 0
      %932 = vmatpush2.bf16.msra.mxu0 %v857
      %933 = vmatprep.subr.bf16.mxu0 0
      %934 = vmatpush2.bf16.msra.mxu0 %v856
      %935 = vmatprep.subr.bf16.mxu0 0
      %936 = vmatpush2.bf16.msra.mxu0 %v855
      %937 = vmatprep.subr.bf16.mxu0 0
      %938 = vmatpush2.bf16.msra.mxu0 %v854
      %939 = vmatprep.subr.bf16.mxu0 0
      %940 = vmatpush2.bf16.msra.mxu0 %v853
      %941 = vmatprep.mubr.bf16.mxu0 %v901
      %942 = vmatmul.mubr.bf16.gmra.mxu0 %v885
      %v943 = vpop.f32.mrf.mxu0
      %v944 = vadd.f32 0.0, %v943
      %v945 = vpop.f32.mrf.mxu0
      %v946 = vpop.f32.mrf.mxu0
      %v947 = vadd.f32 0.0, %v946
      %v948 = vpop.f32.mrf.mxu0
      %949 = vmatprep.mubr.bf16.mxu0 %v902
      %950 = vmatmul.mubr.bf16.gmra.mxu0 %v886
      %v951 = vpop.f32.mrf.mxu0
      %v952 = vadd.f32 0.0, %v951
      %v953 = vpop.f32.mrf.mxu0
      %v954 = vpop.f32.mrf.mxu0
      %v955 = vadd.f32 0.0, %v954
      %v956 = vpop.f32.mrf.mxu0
      %957 = vmatprep.mubr.bf16.mxu0 %v903
      %958 = vmatmul.mubr.bf16.gmra.mxu0 %v887
      %v959 = vpop.f32.mrf.mxu0
      %v960 = vadd.f32 0.0, %v959
      %v961 = vpop.f32.mrf.mxu0
      %v962 = vpop.f32.mrf.mxu0
      %v963 = vadd.f32 0.0, %v962
      %v964 = vpop.f32.mrf.mxu0
      %965 = vmatprep.mubr.bf16.mxu0 %v904
      %966 = vmatmul.mubr.bf16.gmra.mxu0 %v888
      %v967 = vpop.f32.mrf.mxu0
      %v968 = vadd.f32 0.0, %v967
      %v969 = vpop.f32.mrf.mxu0
      %v970 = vpop.f32.mrf.mxu0
      %v971 = vadd.f32 0.0, %v970
      %v972 = vpop.f32.mrf.mxu0
      %973 = vdwg.mxu0
      %v974 = vadd.f32 %v773, %v944
      %v975 = vadd.f32 %v774, %v947
      %v976 = vadd.f32 %v775, %v952
      %v977 = vadd.f32 %v776, %v955
      %v978 = vadd.f32 %v777, %v960
      %v979 = vadd.f32 %v778, %v963
      %v980 = vadd.f32 %v779, %v968
      %v981 = vadd.f32 %v780, %v971
      %982 = vst.msk [vmem:[#allocation4] sm:$0xff] %vm451, %v974
      %983 = vst.msk [vmem:[#allocation4 + $0x8] sm:$0xff] %vm451, %v975
      %984 = vst.msk [vmem:[#allocation4 + $0x10] sm:$0xff] %vm451, %v976
      %985 = vst.msk [vmem:[#allocation4 + $0x18] sm:$0xff] %vm451, %v977
      %986 = vst.msk [vmem:[#allocation4 + $0x20] sm:$0xff] %vm451, %v978
      %987 = vst.msk [vmem:[#allocation4 + $0x28] sm:$0xff] %vm451, %v979
      %988 = vst.msk [vmem:[#allocation4 + $0x30] sm:$0xff] %vm451, %v980
      %989 = vst.msk [vmem:[#allocation4 + $0x38] sm:$0xff] %vm451, %v981
      // Predicated region
      $region37: #{a_call__.10} parent=27 // pred_check
        %p990 = pneg %p316
      $region38: #{a_call__.10} parent=27 // pred_check_branch
        %992 = sbr.rel (%p990) target = $region40
      $region39: #{a_call__.10} parent=27 // pred_region
        %v993 = vld [vmem:[#allocation3] sm:$0xff]
        %v994 = vld [vmem:[#allocation3 + $0x8] sm:$0xff]
        %v995 = vld [vmem:[#allocation3 + $0x10] sm:$0xff]
        %v996 = vld [vmem:[#allocation3 + $0x18] sm:$0xff]
        %v997 = vld [vmem:[#allocation3 + $0x20] sm:$0xff]
        %v998 = vld [vmem:[#allocation3 + $0x28] sm:$0xff]
        %v999 = vld [vmem:[#allocation3 + $0x30] sm:$0xff]
        %v1000 = vld [vmem:[#allocation3 + $0x38] sm:$0xff]
        %v1001 = vld [vmem:[#allocation4] sm:$0xff]
        %v1002 = vld [vmem:[#allocation4 + $0x8] sm:$0xff]
        %v1003 = vld [vmem:[#allocation4 + $0x10] sm:$0xff]
        %v1004 = vld [vmem:[#allocation4 + $0x18] sm:$0xff]
        %v1005 = vld [vmem:[#allocation4 + $0x20] sm:$0xff]
        %v1006 = vld [vmem:[#allocation4 + $0x28] sm:$0xff]
        %v1007 = vld [vmem:[#allocation4 + $0x30] sm:$0xff]
        %v1008 = vld [vmem:[#allocation4 + $0x38] sm:$0xff]
        %v1009 = vsub.f32 %v993, %v1001
        %v1010 = vsub.f32 %v994, %v1002
        %v1011 = vsub.f32 %v995, %v1003
        %v1012 = vsub.f32 %v996, %v1004
        %v1013 = vsub.f32 %v997, %v1005
        %v1014 = vsub.f32 %v998, %v1006
        %v1015 = vsub.f32 %v999, %v1007
        %v1016 = vsub.f32 %v1000, %v1008
        %v1017 = vmul.f32 %v1009, 6.1035156e-05
        %v1018 = vmul.f32 %v1010, 6.1035156e-05
        %v1019 = vmul.f32 %v1011, 6.1035156e-05
        %v1020 = vmul.f32 %v1012, 6.1035156e-05
        %v1021 = vmul.f32 %v1013, 6.1035156e-05
        %v1022 = vmul.f32 %v1014, 6.1035156e-05
        %v1023 = vmul.f32 %v1015, 6.1035156e-05
        %v1024 = vmul.f32 %v1016, 6.1035156e-05
        %v1025 = vand.u32 2147483647, %v1017
        %v1026 = vand.u32 2147483647, %v1018
        %v1027 = vand.u32 2147483647, %v1019
        %v1028 = vand.u32 2147483647, %v1020
        %v1029 = vand.u32 2147483647, %v1021
        %v1030 = vand.u32 2147483647, %v1022
        %v1031 = vand.u32 2147483647, %v1023
        %v1032 = vand.u32 2147483647, %v1024
        %v1033 = vsel %vm451, %v1025, 0.0
        %v1034 = vsel %vm451, %v1026, 0.0
        %v1035 = vadd.f32 %v1033, %v1034
        %v1036 = vsel %vm451, %v1027, 0.0
        %v1037 = vadd.f32 %v1035, %v1036
        %v1038 = vsel %vm451, %v1028, 0.0
        %v1039 = vadd.f32 %v1037, %v1038
        %v1040 = vsel %vm451, %v1029, 0.0
        %v1041 = vadd.f32 %v1039, %v1040
        %v1042 = vsel %vm451, %v1030, 0.0
        %v1043 = vadd.f32 %v1041, %v1042
        %v1044 = vsel %vm451, %v1031, 0.0
        %v1045 = vadd.f32 %v1043, %v1044
        %v1046 = vsel %vm451, %v1032, 0.0
        %v1047 = vadd.f32 %v1045, %v1046
        %1048 = vadd.xlane.f32.xlu0 %v1047
        %v1049 = vpop.xlane.xlu0 %1048
        %v1050 = vrot.slane %v1049, 4
        %v1051 = vadd.f32 %v1049, %v1050
        %v1052 = vrot.slane %v1051, 2
        %v1053 = vadd.f32 %v1051, %v1052
        %v1054 = vrot.slane %v1053, 1
        %v1055 = vadd.f32 %v1053, %v1054
        %s1056 = vtos %v1055
        %v1057 = vstv %s1056
        %1058 = vst [vmem:[%s250] sm:$0xff] %v1057
      $region40: #{a_call__.10} parent=27 // pred_fallthru
        _
      %p1059 = scmp.lt.s32.totalorder %s19, 1
      %s1060 = scalar_select %p1059, %s19, 1
      %s1061 = smul.addr %s1060, 8
      %s1062 = scalar_lea.vmem %s2, %s1061
      %p1063 = scmp.lt.s32.totalorder %s19, 1
      %s1064 = scalar_select %p1063, %s19, 1
      %s1065 = smul.addr %s1064, 8
      %s1066 = scalar_lea.vmem %s3, %s1065
      // Predicated region
      $region41: #{a_call__.10} parent=27 // pred_check
        %p1067 = pneg %p103
      $region42: #{a_call__.10} parent=27 // pred_check_branch
        %1069 = sbr.rel (%p1067) target = $region44
      $region43: #{a_call__.10} parent=27 // pred_region
        _
      $region44: #{a_call__.10} parent=27 // pred_fallthru
        _
      // Predicated region
      $region45: #{a_call__.10} parent=27 // pred_check
        %p1070 = pneg %p129
      $region46: #{a_call__.10} parent=27 // pred_check_branch
        %1072 = sbr.rel (%p1070) target = $region48
      $region47: #{a_call__.10} parent=27 // pred_region
        _
      $region48: #{a_call__.10} parent=27 // pred_fallthru
        _
    $region28: #{a_call__.10} parent=5 // pred_fallthru
      _
    %p1073 = scmp.le.s32.totalorder 2, %s10
    // Predicated region
    $region49: #{a_call__.10} parent=5 // pred_check
      %p1074 = pneg %p1073
    $region50: #{a_call__.10} parent=5 // pred_check_branch
      %1076 = sbr.rel (%p1074) target = $region52
    $region51: #{a_call__.10} parent=5 // pred_region
      %s1077 = ssub.s32 %s10, 2
      // Predicated region
      $region53: #{a_call__.10} parent=51 // pred_check
        %p1078 = pneg %p109
      $region54: #{a_call__.10} parent=51 // pred_check_branch
        %1080 = sbr.rel (%p1078) target = $region56
      $region55: #{a_call__.10} parent=51 // pred_region
        %p1081 = scmp.lt.s32.totalorder %s21, 1
        %s1082 = scalar_select %p1081, %s21, 1
        %s1083 = smul.addr %s1082, 8
        %s1084 = scalar_lea.vmem %s2, %s1083
      $region56: #{a_call__.10} parent=51 // pred_fallthru
        _
      // Predicated region
      $region57: #{a_call__.10} parent=51 // pred_check
        %p1085 = pneg %p135
      $region58: #{a_call__.10} parent=51 // pred_check_branch
        %1087 = sbr.rel (%p1085) target = $region60
      $region59: #{a_call__.10} parent=51 // pred_region
        %p1088 = scmp.lt.s32.totalorder %s21, 1
        %s1089 = scalar_select %p1088, %s21, 1
        %s1090 = smul.addr %s1089, 8
        %s1091 = scalar_lea.vmem %s3, %s1090
      $region60: #{a_call__.10} parent=51 // pred_fallthru
        _
    $region52: #{a_call__.10} parent=5 // pred_fallthru
      _
  $region6: #{a_call__.10} parent=0 // loop_footer
    %s14 = sadd.s32 1, %s10
  $region7: #{a_call__.10} parent=0 // loop_footer_branch
    %9 = sbr.rel target = $region3
  $region8: #{a_call__.10} parent=0 // loop_exit
    _

</llo_original>
